<compile_context>
chip_gen: v7x
topology: tpu7x:2x2x1
jax: 0.10.0
libtpu: 0.0.40
codegen_flags: <defaults>
</compile_context>

<pallas_src>
import math
import functools

import jax
import jax.numpy as jnp
from jax import lax
from jax.experimental import pallas as pl
from jax.experimental.pallas import tpu as pltpu

LN_EPS = 1e-5
PACK_LANES = 128          # every packed blob row is 128 lanes wide (lane dense)


# --------------------------- packed-blob layouts ---------------------------

def _misc_offsets(d):
    """Row offsets inside the misc blob [2d+13, 128] (must match init_params)."""
    base = 2 * d + 4
    return dict(head_w=0, cond_w=d, tenc_w=2 * d,
                enc_ng=base + 0, enc_nb=base + 1,
                dec_ng=base + 2, dec_nb=base + 3,
                head_b=base + 4, cond_b=base + 5, tenc_b=base + 6,
                div=base + 7, phase=base + 8)


def _enc_rows(d, dffp):
    """Row offsets inside one encoder-layer matrix blob [3d+dffp, 128]."""
    return dict(qkv=0, o=d, w1=2 * d, w2=3 * d, total=3 * d + dffp)


def _dec_rows(d, dffp):
    """Row offsets inside one decoder-layer matrix blob [6d+dffp, 128]."""
    return dict(sqkv=0, so=d, cq=2 * d, ckv=3 * d, co=4 * d,
                w1=5 * d, w2=6 * d, total=6 * d + dffp)


# ------------------------------- fused kernel -------------------------------

def _fused_transformer_kernel(src_ref, pos_ref, tors_ref, tf_ref,
                              enc_w_ref, enc_v_ref, dec_w_ref, dec_v_ref,
                              misc_ref, out_ref,
                              *, d, dffp, nhead, n_enc, n_dec,
                              has_cond, has_tors, eps):
    hd = d // nhead
    scale = 1.0 / math.sqrt(hd)
    mo = _misc_offsets(d)
    er = _enc_rows(d, dffp)
    dr = _dec_rows(d, dffp)

    misc = misc_ref[...]                               # [2d+13, 128] f32

    def vec(r0, width=d):                              # one packed vector row -> [1, width]
        return misc[r0:r0 + 1, :width]

    def ln(z, g, b):                                   # LayerNorm over the true d lanes, f32
        mu = jnp.mean(z, axis=-1, keepdims=True)
        zc = z - mu
        var = jnp.mean(zc * zc, axis=-1, keepdims=True)
        return zc * lax.rsqrt(var + eps) * g + b

    def attn(q, k, v, mask):
        """All heads in two batched einsums.  q:[Lq,d]  k,v:[Lk,d]  -> [Lq,d]."""
        qs = (q * scale).astype(jnp.bfloat16)
        kb = k.astype(jnp.bfloat16)
        vb = v.astype(jnp.bfloat16)
        qh = jnp.stack([qs[:, h * hd:(h + 1) * hd] for h in range(nhead)], axis=0)
        kh = jnp.stack([kb[:, h * hd:(h + 1) * hd] for h in range(nhead)], axis=0)
        vh = jnp.stack([vb[:, h * hd:(h + 1) * hd] for h in range(nhead)], axis=0)
        s = jnp.einsum('hqd,hkd->hqk', qh, kh,
                       preferred_element_type=jnp.float32)            # [H, Lq, Lk] f32
        if mask is not None:
            s = s + mask[None, :, :]
        m = jnp.max(s, axis=-1, keepdims=True)
        e = jnp.exp(s - m)
        p = e / jnp.sum(e, axis=-1, keepdims=True)     # exact divide (PyTorch parity)
        o = jnp.einsum('hqk,hkd->hqd', p.astype(jnp.bfloat16), vh,
                       preferred_element_type=jnp.float32)            # [H, Lq, hd]
        return jnp.concatenate([o[h] for h in range(nhead)], axis=-1)  # [Lq, d]

    # ---------------- prologue: pairwise-distance positional features ----------------
    x = src_ref[0]                                     # [S, d]  (atom emb + PE)
    p = pos_ref[0]                                     # [S, 3]
    diff = p[:, None, :] - p[None, :, :]               # [S, S, 3]
    dist = jnp.sqrt(jnp.sum(diff * diff, axis=-1))     # [S, S]
    # interleaved sin/cos via a single sin():  cos(x) = sin(x + pi/2) on odd lanes
    ang = (dist[:, :, None] * vec(mo['div'])[None, :, :]
           + vec(mo['phase'])[None, :, :])             # [S, S, d]
    x = x + jnp.mean(jnp.sin(ang), axis=1)             # mean over neighbours j

    # ---------------- prologue: torsion-constraint encoder ----------------
    if has_tors:
        tw = misc[mo['tenc_w']:mo['tenc_w'] + 4, :d]   # [4, d]
        x = x + (jnp.dot(tors_ref[0], tw, preferred_element_type=jnp.float32)
                 + vec(mo['tenc_b']))

    # ---------------- prologue: conditioning token ----------------
    if has_cond:
        cw = misc[mo['cond_w']:mo['cond_w'] + d, :d]   # [d, d]
        func = (jnp.dot(tf_ref[0], cw, preferred_element_type=jnp.float32)
                + vec(mo['cond_b']))                   # [1, d]
        x = jnp.concatenate([func, x], axis=0)         # [L, d]
    l_seq = x.shape[0]

    tgt0 = x                                           # tgt = src.clone()

    # causal mask built ONCE, reused by every decoder layer
    ri = lax.broadcasted_iota(jnp.int32, (l_seq, l_seq), 0)
    ci = lax.broadcasted_iota(jnp.int32, (l_seq, l_seq), 1)
    causal = jnp.where(ci <= ri, 0.0, -1e9).astype(jnp.float32)

    # ---------------- encoder stack ----------------
    for i in range(n_enc):
        wm = enc_w_ref[i]                              # bf16 [3d+dffp, 128]
        vv = enc_v_ref[i]                              # f32  [8, 128]
        qkv = (jnp.dot(x.astype(jnp.bfloat16), wm[er['qkv']:er['qkv'] + d, :],
                       preferred_element_type=jnp.float32) + vv[0:1, :])
        a = attn(qkv[:, :d], qkv[:, d:2 * d], qkv[:, 2 * d:3 * d], None)
        a = (jnp.dot(a.astype(jnp.bfloat16), wm[er['o']:er['o'] + d, :],
                     preferred_element_type=jnp.float32) + vv[1:2, :])
        x = ln(x + a[:, :d], vv[4:5, :d], vv[5:6, :d])
        h = jnp.maximum(jnp.dot(x.astype(jnp.bfloat16), wm[er['w1']:er['w1'] + d, :],
                                preferred_element_type=jnp.float32) + vv[2:3, :], 0.0)
        f = (jnp.dot(h.astype(jnp.bfloat16), wm[er['w2']:er['w2'] + dffp, :],
                     preferred_element_type=jnp.float32) + vv[3:4, :])
        x = ln(x + f[:, :d], vv[6:7, :d], vv[7:8, :d])
    memory = ln(x, vec(mo['enc_ng']), vec(mo['enc_nb']))
    mem_b = memory.astype(jnp.bfloat16)                # stays in VMEM / vregs

    # ---------------- decoder stack ----------------
    y = tgt0
    for i in range(n_dec):
        wm = dec_w_ref[i]                              # bf16 [6d+dffp, 128]
        vv = dec_v_ref[i]                              # f32  [13, 128]
        # causal self-attention
        qkv = (jnp.dot(y.astype(jnp.bfloat16), wm[dr['sqkv']:dr['sqkv'] + d, :],
                       preferred_element_type=jnp.float32) + vv[0:1, :])
        a = attn(qkv[:, :d], qkv[:, d:2 * d], qkv[:, 2 * d:3 * d], causal)
        a = (jnp.dot(a.astype(jnp.bfloat16), wm[dr['so']:dr['so'] + d, :],
                     preferred_element_type=jnp.float32) + vv[1:2, :])
        y = ln(y + a[:, :d], vv[7:8, :d], vv[8:9, :d])
        # cross-attention to encoder memory
        q = (jnp.dot(y.astype(jnp.bfloat16), wm[dr['cq']:dr['cq'] + d, :],
                     preferred_element_type=jnp.float32) + vv[2:3, :])
        kv = (jnp.dot(mem_b, wm[dr['ckv']:dr['ckv'] + d, :],
                      preferred_element_type=jnp.float32) + vv[3:4, :])
        a = attn(q[:, :d], kv[:, :d], kv[:, d:2 * d], None)
        a = (jnp.dot(a.astype(jnp.bfloat16), wm[dr['co']:dr['co'] + d, :],
                     preferred_element_type=jnp.float32) + vv[4:5, :])
        y = ln(y + a[:, :d], vv[9:10, :d], vv[10:11, :d])
        # feed-forward (hidden dim zero-padded to a 128-lane-dense dffp)
        h = jnp.maximum(jnp.dot(y.astype(jnp.bfloat16), wm[dr['w1']:dr['w1'] + d, :],
                                preferred_element_type=jnp.float32) + vv[5:6, :], 0.0)
        f = (jnp.dot(h.astype(jnp.bfloat16), wm[dr['w2']:dr['w2'] + dffp, :],
                     preferred_element_type=jnp.float32) + vv[6:7, :])
        y = ln(y + f[:, :d], vv[11:12, :d], vv[12:13, :d])
    out = ln(y, vec(mo['dec_ng']), vec(mo['dec_nb']))

    # fused output heads: atom(20)|pos(3)|bond(3)|torsion(4) in ONE lane-dense matmul
    heads = (jnp.dot(out, misc[mo['head_w']:mo['head_w'] + d, :],
                     preferred_element_type=jnp.float32) + vec(mo['head_b'], PACK_LANES))
    out_ref[0, :, :] = heads                           # [L, 128] lane-dense store


# ------------------------------- parameters -------------------------------

def init_params(key, d_model, nhead, n_enc, n_dec, dff, num_atom_types, max_len):
    d = d_model
    assert d % nhead == 0 and d % 2 == 0
    dffp = max(128, ((dff + 127) // 128) * 128)         # lane-dense FFN hidden dim
    n_out = num_atom_types + 10
    # packing layout assumes each matrix fits one 128-lane row block (demo sizes)
    assert 3 * d <= PACK_LANES and dffp <= PACK_LANES and n_out <= PACK_LANES

    keys = iter(jax.random.split(key, 256))

    def w(shape, scale=0.05):
        return jax.random.normal(next(keys), shape, dtype=jnp.float32) * scale

    zeros = lambda s: jnp.zeros(s, jnp.float32)
    ones = lambda s: jnp.ones(s, jnp.float32)

    def pad_c(a):                                       # pad columns to 128 lanes
        return jnp.pad(a, ((0, 0), (0, PACK_LANES - a.shape[1])))

    def row(v):                                         # 1-D vector -> one 128-wide row
        return pad_c(v.reshape(1, -1))

    # ---- encoder layers: matrices -> one bf16 blob, vectors -> one f32 blob ----
    enc_w, enc_v = [], []
    for _ in range(n_enc):
        w1 = jnp.pad(w((d, dff)), ((0, 0), (0, dffp - dff)))
        w2 = jnp.pad(w((dff, d)), ((0, dffp - dff), (0, 0)))
        enc_w.append(jnp.concatenate(
            [pad_c(w((d, 3 * d))), pad_c(w((d, d))), pad_c(w1), pad_c(w2)], axis=0))
        enc_v.append(jnp.concatenate(
            [row(zeros((3 * d,))), row(zeros((d,))), row(zeros((dffp,))), row(zeros((d,))),
             row(ones((d,))), row(zeros((d,))),          # ln1
             row(ones((d,))), row(zeros((d,)))], axis=0))  # ln2
    enc_w = jnp.stack(enc_w).astype(jnp.bfloat16)        # [n_enc, 3d+dffp, 128]
    enc_v = jnp.stack(enc_v)                             # [n_enc, 8, 128]

    # ---- decoder layers ----
    dec_w, dec_v = [], []
    for _ in range(n_dec):
        w1 = jnp.pad(w((d, dff)), ((0, 0), (0, dffp - dff)))
        w2 = jnp.pad(w((dff, d)), ((0, dffp - dff), (0, 0)))
        dec_w.append(jnp.concatenate(
            [pad_c(w((d, 3 * d))),                       # self-attn packed QKV
             pad_c(w((d, d))),                           # self-attn out proj
             pad_c(w((d, d))),                           # cross-attn Q proj
             pad_c(w((d, 2 * d))),                       # cross-attn packed KV
             pad_c(w((d, d))),                           # cross-attn out proj
             pad_c(w1), pad_c(w2)], axis=0))
        dec_v.append(jnp.concatenate(
            [row(zeros((3 * d,))), row(zeros((d,))), row(zeros((d,))),
             row(zeros((2 * d,))), row(zeros((d,))), row(zeros((dffp,))), row(zeros((d,))),
             row(ones((d,))), row(zeros((d,))),          # ln1
             row(ones((d,))), row(zeros((d,))),          # ln2
             row(ones((d,))), row(zeros((d,)))], axis=0))  # ln3
    dec_w = jnp.stack(dec_w).astype(jnp.bfloat16)        # [n_dec, 6d+dffp, 128]
    dec_v = jnp.stack(dec_v)                             # [n_dec, 13, 128]

    # ---- misc blob: heads / cond / torsion encoder / final norms / pos-enc rows ----
    head_w = jnp.concatenate([w((d, num_atom_types)), w((d, 3)),
                              w((d, 3)), w((d, 4))], axis=1)           # [d, n_out]
    cond_w = w((d, d))
    tenc_w = w((4, d))
    half = jnp.exp(jnp.arange(0, d, 2, dtype=jnp.float32) *
                   (-math.log(10000.0) / d))
    div_row = jnp.repeat(half, 2)                        # [d0,d0,d1,d1,...]
    phase_row = jnp.tile(jnp.array([0.0, math.pi / 2], jnp.float32), d // 2)
    misc = jnp.concatenate(
        [pad_c(head_w), pad_c(cond_w), pad_c(tenc_w),
         row(ones((d,))), row(zeros((d,))),              # encoder final norm
         row(ones((d,))), row(zeros((d,))),              # decoder final norm
         row(zeros((n_out,))),                           # head bias
         row(zeros((d,))),                               # condition-projection bias
         row(zeros((d,))),                               # torsion-encoder bias
         row(div_row), row(phase_row)], axis=0)
    assert misc.shape[0] == 2 * d + 13

    # sinusoidal positional-encoding buffer (PositionalEncoding.pe)
    position = jnp.arange(max_len, dtype=jnp.float32)[:, None]
    pe = jnp.zeros((max_len, d), jnp.float32)
    pe = pe.at[:, 0::2].set(jnp.sin(position * half))
    pe = pe.at[:, 1::2].set(jnp.cos(position * half))

    return {
        "atom_emb": w((num_atom_types, d), 0.1),
        "pe": pe,
        "enc_w": enc_w, "enc_v": enc_v,
        "dec_w": dec_w, "dec_v": dec_v,
        "misc": misc,
        # raw copies only needed for the rare num_torsions != seq_len fallback path
        "tenc_w": tenc_w, "tenc_b": zeros((d,)),
    }


# ------------------------------- forward pass -------------------------------

def transformer_generator_forward(params, template_atoms, template_positions,
                                  target_function=None, torsion_angles=None, mask=None,
                                  *, d_model, nhead, num_atom_types):
    if mask is not None:
        # TODO(synk): key_padding_mask branch of the PyTorch module not implemented.
        raise NotImplementedError("key_padding_mask not implemented")

    b, s = template_atoms.shape
    d = d_model

    # atom embedding + positional encoding (dropout == identity, eval mode)
    src0 = (jnp.take(params["atom_emb"], template_atoms, axis=0)
            + params["pe"][None, :s, :]).astype(jnp.float32)

    has_cond = target_function is not None
    has_tors = torsion_angles is not None and torsion_angles.shape[1] == s

    if torsion_angles is not None and not has_tors:
        # num_torsions != seq_len path: tiny linear, leave to XLA and fold into src0
        nt = torsion_angles.shape[1]
        n = min(nt, s)
        tfeat = (torsion_angles.reshape(b * nt, 4) @ params["tenc_w"]
                 + params["tenc_b"]).reshape(b, nt, d)
        src0 = src0.at[:, :n, :].add(tfeat[:, :n, :])

    l_seq = s + (1 if has_cond else 0)
    n_enc = params["enc_w"].shape[0]
    n_dec = params["dec_w"].shape[0]
    dffp = params["enc_w"].shape[1] - 3 * d

    tors_in = (torsion_angles if has_tors
               else jnp.zeros((b, s, 4), jnp.float32)).astype(jnp.float32)
    tf_in = (target_function.reshape(b, 1, d) if has_cond
             else jnp.zeros((b, 1, d), jnp.float32)).astype(jnp.float32)

    kernel = functools.partial(
        _fused_transformer_kernel,
        d=d, dffp=dffp, nhead=nhead, n_enc=n_enc, n_dec=n_dec,
        has_cond=has_cond, has_tors=has_tors, eps=LN_EPS)

    heads = pl.pallas_call(
        kernel,
        grid=(b,),
        in_specs=[
            pl.BlockSpec((1, s, d), lambda i: (i, 0, 0)),          # src (emb + PE)
            pl.BlockSpec((1, s, 3), lambda i: (i, 0, 0)),          # template positions
            pl.BlockSpec((1, s, 4), lambda i: (i, 0, 0)),          # torsion angles
            pl.BlockSpec((1, 1, d), lambda i: (i, 0, 0)),          # target function
            pl.BlockSpec(params["enc_w"].shape, lambda i: (0, 0, 0)),
            pl.BlockSpec(params["enc_v"].shape, lambda i: (0, 0, 0)),
            pl.BlockSpec(params["dec_w"].shape, lambda i: (0, 0, 0)),
            pl.BlockSpec(params["dec_v"].shape, lambda i: (0, 0, 0)),
            pl.BlockSpec(params["misc"].shape, lambda i: (0, 0)),
        ],
        out_specs=pl.BlockSpec((1, l_seq, PACK_LANES), lambda i: (i, 0, 0)),
        out_shape=jax.ShapeDtypeStruct((b, l_seq, PACK_LANES), jnp.float32),
        compiler_params=pltpu.CompilerParams(
            dimension_semantics=("parallel",)),                    # v7x: use both TCs
    )(src0, template_positions.astype(jnp.float32), tors_in, tf_in,
      params["enc_w"], params["enc_v"], params["dec_w"], params["dec_v"],
      params["misc"])

    na = num_atom_types
    atom_logits = heads[..., :na]
    positions = heads[..., na:na + 3]
    bonds = heads[..., na + 3:na + 6]
    tors = heads[..., na + 6:na + 10]

    # torsion constraints (tiny elementwise tail, plain JAX / XLA-fused)
    tors_rad = jnp.tanh(tors) * math.pi
    omega = tors_rad[..., 2:3]
    omega_c = jnp.sign(omega) * (0.9 * math.pi + 0.1 * jnp.abs(omega))
    tors_c = jnp.concatenate([tors_rad[..., :2], omega_c, tors_rad[..., 3:]], axis=-1)
    return atom_logits, positions, bonds, tors_c


# ----------------------------------- main -----------------------------------

if __name__ == "__main__":
    D_MODEL, NHEAD, N_ENC, N_DEC, DFF = 32, 4, 2, 2, 64
    NUM_ATOM_TYPES, MAX_LEN = 20, 64
    B, S = 2, 8

    key = jax.random.PRNGKey(0)
    k_par, k_at, k_pos, k_tf, k_ta = jax.random.split(key, 5)
    params = init_params(k_par, D_MODEL, NHEAD, N_ENC, N_DEC, DFF,
                         NUM_ATOM_TYPES, MAX_LEN)

    template_atoms = jax.random.randint(k_at, (B, S), 0, NUM_ATOM_TYPES, dtype=jnp.int32)
    template_positions = jax.random.normal(k_pos, (B, S, 3), dtype=jnp.float32) * 3.0
    target_function = jax.random.normal(k_tf, (B, D_MODEL), dtype=jnp.float32)
    torsion_angles = jax.random.normal(k_ta, (B, S, 4), dtype=jnp.float32)

    fwd = jax.jit(functools.partial(transformer_generator_forward,
                                    d_model=D_MODEL, nhead=NHEAD,
                                    num_atom_types=NUM_ATOM_TYPES))
    atom_logits, positions, bonds, torsions = fwd(
        params, template_atoms, template_positions, target_function, torsion_angles)
    jax.block_until_ready((atom_logits, positions, bonds, torsions))

    # target_function prepends one conditioning token -> seq length S+1
    assert atom_logits.shape == (B, S + 1, NUM_ATOM_TYPES)
    assert positions.shape == (B, S + 1, 3)
    assert bonds.shape == (B, S + 1, 3)
    assert torsions.shape == (B, S + 1, 4)
    assert bool(jnp.all(jnp.isfinite(atom_logits)))
    assert bool(jnp.all(jnp.isfinite(torsions)))
    print("KERNEL_OK")
</pallas_src>

<mosaic_0001>
module attributes {stable_mosaic.version = 11 : i64} {
  func.func @_fused_transformer_kernel(%arg0: i32, %arg1: memref<1x8x32xf32, #tpu.memory_space<vmem>>, %arg2: memref<1x8x3xf32, #tpu.memory_space<vmem>>, %arg3: memref<1x8x4xf32, #tpu.memory_space<vmem>>, %arg4: memref<1x1x32xf32, #tpu.memory_space<vmem>>, %arg5: memref<2x224x128xbf16, #tpu.memory_space<vmem>>, %arg6: memref<2x8x128xf32, #tpu.memory_space<vmem>>, %arg7: memref<2x320x128xbf16, #tpu.memory_space<vmem>>, %arg8: memref<2x13x128xf32, #tpu.memory_space<vmem>>, %arg9: memref<77x128xf32, #tpu.memory_space<vmem>>, %arg10: memref<1x9x128xf32, #tpu.memory_space<vmem>>) attributes {dimension_semantics = [#tpu.dimension_semantics<parallel>], iteration_bounds = array<i64: 2>, scalar_prefetch = 0 : i64, scratch_operands = 0 : i64, tpu.core_type = #tpu.core_type<tc>, window_params = [{transform_indices = @transform_0, window_bounds = array<i64: 1, 8, 32>}, {transform_indices = @transform_1, window_bounds = array<i64: 1, 8, 3>}, {transform_indices = @transform_2, window_bounds = array<i64: 1, 8, 4>}, {transform_indices = @transform_3, window_bounds = array<i64: 1, 1, 32>}, {pipeline_mode = #tpu.pipeline_mode<synchronous>, transform_indices = @transform_4, window_bounds = array<i64: 2, 224, 128>}, {pipeline_mode = #tpu.pipeline_mode<synchronous>, transform_indices = @transform_5, window_bounds = array<i64: 2, 8, 128>}, {pipeline_mode = #tpu.pipeline_mode<synchronous>, transform_indices = @transform_6, window_bounds = array<i64: 2, 320, 128>}, {pipeline_mode = #tpu.pipeline_mode<synchronous>, transform_indices = @transform_7, window_bounds = array<i64: 2, 13, 128>}, {pipeline_mode = #tpu.pipeline_mode<synchronous>, transform_indices = @transform_8, window_bounds = array<i64: 77, 128>}, {transform_indices = @transform_9, window_bounds = array<i64: 1, 9, 128>}]} {
    %c0 = arith.constant 0 : index
    %c0_0 = arith.constant 0 : index
    %0 = vector.load %arg9[%c0, %c0_0] : memref<77x128xf32, #tpu.memory_space<vmem>>, vector<77x128xf32>
    %c0_1 = arith.constant 0 : index
    %c0_2 = arith.constant 0 : index
    %c0_3 = arith.constant 0 : index
    %1 = vector.load %arg1[%c0_1, %c0_2, %c0_3] : memref<1x8x32xf32, #tpu.memory_space<vmem>>, vector<1x8x32xf32>
    %2 = vector.shape_cast %1 : vector<1x8x32xf32> to vector<8x32xf32>
    %c0_4 = arith.constant 0 : index
    %c0_5 = arith.constant 0 : index
    %c0_6 = arith.constant 0 : index
    %3 = vector.load %arg2[%c0_4, %c0_5, %c0_6] : memref<1x8x3xf32, #tpu.memory_space<vmem>>, vector<1x8x3xf32>
    %4 = vector.shape_cast %3 : vector<1x8x3xf32> to vector<8x3xf32>
    %5 = vector.shape_cast %4 : vector<8x3xf32> to vector<8x1x3xf32>
    %6 = vector.shape_cast %4 : vector<8x3xf32> to vector<1x8x3xf32>
    %7 = vector.broadcast %5 : vector<8x1x3xf32> to vector<8x8x3xf32>
    %8 = vector.broadcast %6 : vector<1x8x3xf32> to vector<8x8x3xf32>
    %9 = arith.subf %7, %8 : vector<8x8x3xf32>
    %10 = arith.mulf %9, %9 : vector<8x8x3xf32>
    %cst = arith.constant dense<0.000000e+00> : vector<8x8xf32>
    %11 = vector.multi_reduction <add>, %10, %cst [2] : vector<8x8x3xf32> to vector<8x8xf32>
    %12 = math.sqrt %11 : vector<8x8xf32>
    %13 = vector.shape_cast %12 : vector<8x8xf32> to vector<8x8x1xf32>
    %14 = vector.extract_strided_slice %0 {offsets = [75, 0], sizes = [1, 32], strides = [1, 1]} : vector<77x128xf32> to vector<1x32xf32>
    %15 = vector.shape_cast %14 : vector<1x32xf32> to vector<1x1x32xf32>
    %16 = vector.broadcast %13 : vector<8x8x1xf32> to vector<8x8x32xf32>
    %17 = vector.broadcast %15 : vector<1x1x32xf32> to vector<8x8x32xf32>
    %18 = arith.mulf %16, %17 : vector<8x8x32xf32>
    %19 = vector.extract_strided_slice %0 {offsets = [76, 0], sizes = [1, 32], strides = [1, 1]} : vector<77x128xf32> to vector<1x32xf32>
    %20 = vector.shape_cast %19 : vector<1x32xf32> to vector<1x1x32xf32>
    %21 = vector.broadcast %20 : vector<1x1x32xf32> to vector<8x8x32xf32>
    %22 = arith.addf %18, %21 : vector<8x8x32xf32>
    %23 = math.sin %22 : vector<8x8x32xf32>
    %cst_7 = arith.constant dense<0.000000e+00> : vector<8x32xf32>
    %24 = vector.multi_reduction <add>, %23, %cst_7 [1] : vector<8x8x32xf32> to vector<8x32xf32>
    %cst_8 = arith.constant 8.000000e+00 : f32
    %25 = vector.broadcast %cst_8 : f32 to vector<8x32xf32>
    %26 = arith.divf %24, %25 : vector<8x32xf32>
    %27 = arith.addf %2, %26 : vector<8x32xf32>
    %28 = vector.extract_strided_slice %0 {offsets = [64, 0], sizes = [4, 32], strides = [1, 1]} : vector<77x128xf32> to vector<4x32xf32>
    %c0_9 = arith.constant 0 : index
    %c0_10 = arith.constant 0 : index
    %c0_11 = arith.constant 0 : index
    %29 = vector.load %arg3[%c0_9, %c0_10, %c0_11] : memref<1x8x4xf32, #tpu.memory_space<vmem>>, vector<1x8x4xf32>
    %30 = vector.shape_cast %29 : vector<1x8x4xf32> to vector<8x4xf32>
    %cst_12 = arith.constant dense<0.000000e+00> : vector<8x32xf32>
    %31 = tpu.matmul %30, %28, %cst_12 {dimension_numbers = #tpu.dot_dimension_numbers<[1], [0], [0], [1], [0, 0, 1, 1], [], []>} : vector<8x4xf32>, vector<4x32xf32>, vector<8x32xf32> -> vector<8x32xf32>
    %32 = vector.extract_strided_slice %0 {offsets = [74, 0], sizes = [1, 32], strides = [1, 1]} : vector<77x128xf32> to vector<1x32xf32>
    %33 = vector.broadcast %32 : vector<1x32xf32> to vector<8x32xf32>
    %34 = arith.addf %31, %33 : vector<8x32xf32>
    %35 = arith.addf %27, %34 : vector<8x32xf32>
    %36 = vector.extract_strided_slice %0 {offsets = [32, 0], sizes = [32, 32], strides = [1, 1]} : vector<77x128xf32> to vector<32x32xf32>
    %c0_13 = arith.constant 0 : index
    %c0_14 = arith.constant 0 : index
    %c0_15 = arith.constant 0 : index
    %37 = vector.load %arg4[%c0_13, %c0_14, %c0_15] : memref<1x1x32xf32, #tpu.memory_space<vmem>>, vector<1x1x32xf32>
    %38 = vector.shape_cast %37 : vector<1x1x32xf32> to vector<1x32xf32>
    %cst_16 = arith.constant dense<0.000000e+00> : vector<1x32xf32>
    %39 = tpu.matmul %38, %36, %cst_16 {dimension_numbers = #tpu.dot_dimension_numbers<[1], [0], [0], [1], [0, 0, 1, 1], [], []>} : vector<1x32xf32>, vector<32x32xf32>, vector<1x32xf32> -> vector<1x32xf32>
    %40 = vector.extract_strided_slice %0 {offsets = [73, 0], sizes = [1, 32], strides = [1, 1]} : vector<77x128xf32> to vector<1x32xf32>
    %41 = arith.addf %39, %40 : vector<1x32xf32>
    %42 = tpu.concatenate %41, %35 in 0 : vector<1x32xf32>, vector<8x32xf32> -> vector<9x32xf32>
    %43 = tpu.iota {dimensions = array<i32: 0>} : vector<9x9xi32>
    %44 = tpu.iota {dimensions = array<i32: 1>} : vector<9x9xi32>
    %45 = arith.cmpi sle, %44, %43 : vector<9x9xi32>
    %cst_17 = arith.constant 0.000000e+00 : f32
    %cst_18 = arith.constant -1.000000e+09 : f32
    %46 = vector.broadcast %cst_17 : f32 to vector<9x9xf32>
    %47 = vector.broadcast %cst_18 : f32 to vector<9x9xf32>
    %48 = arith.select %45, %46, %47 : vector<9x9xi1>, vector<9x9xf32>
    %c0_19 = arith.constant 0 : index
    %c0_20 = arith.constant 0 : index
    %c0_21 = arith.constant 0 : index
    %49 = vector.load %arg5[%c0_19, %c0_20, %c0_21] : memref<2x224x128xbf16, #tpu.memory_space<vmem>>, vector<1x224x128xbf16>
    %50 = vector.shape_cast %49 : vector<1x224x128xbf16> to vector<224x128xbf16>
    %c0_22 = arith.constant 0 : index
    %c0_23 = arith.constant 0 : index
    %c0_24 = arith.constant 0 : index
    %51 = vector.load %arg6[%c0_22, %c0_23, %c0_24] : memref<2x8x128xf32, #tpu.memory_space<vmem>>, vector<1x8x128xf32>
    %52 = vector.shape_cast %51 : vector<1x8x128xf32> to vector<8x128xf32>
    %53 = arith.truncf %42 : vector<9x32xf32> to vector<9x32xbf16>
    %54 = vector.extract_strided_slice %50 {offsets = [0, 0], sizes = [32, 128], strides = [1, 1]} : vector<224x128xbf16> to vector<32x128xbf16>
    %cst_25 = arith.constant dense<0.000000e+00> : vector<9x128xf32>
    %55 = tpu.matmul %53, %54, %cst_25 {dimension_numbers = #tpu.dot_dimension_numbers<[1], [0], [0], [1], [0, 0, 1, 1], [], []>} : vector<9x32xbf16>, vector<32x128xbf16>, vector<9x128xf32> -> vector<9x128xf32>
    %56 = vector.extract_strided_slice %52 {offsets = [0, 0], sizes = [1, 128], strides = [1, 1]} : vector<8x128xf32> to vector<1x128xf32>
    %57 = vector.broadcast %56 : vector<1x128xf32> to vector<9x128xf32>
    %58 = arith.addf %55, %57 : vector<9x128xf32>
    %59 = vector.extract_strided_slice %58 {offsets = [0, 0], sizes = [9, 32], strides = [1, 1]} : vector<9x128xf32> to vector<9x32xf32>
    %60 = vector.extract_strided_slice %58 {offsets = [0, 32], sizes = [9, 32], strides = [1, 1]} : vector<9x128xf32> to vector<9x32xf32>
    %61 = vector.extract_strided_slice %58 {offsets = [0, 64], sizes = [9, 32], strides = [1, 1]} : vector<9x128xf32> to vector<9x32xf32>
    %cst_26 = arith.constant 0.353553385 : f32
    %62 = vector.broadcast %cst_26 : f32 to vector<9x32xf32>
    %63 = arith.mulf %59, %62 : vector<9x32xf32>
    %64 = arith.truncf %63 : vector<9x32xf32> to vector<9x32xbf16>
    %65 = arith.truncf %60 : vector<9x32xf32> to vector<9x32xbf16>
    %66 = arith.truncf %61 : vector<9x32xf32> to vector<9x32xbf16>
    %67 = vector.extract_strided_slice %64 {offsets = [0, 0], sizes = [9, 8], strides = [1, 1]} : vector<9x32xbf16> to vector<9x8xbf16>
    %68 = vector.extract_strided_slice %64 {offsets = [0, 8], sizes = [9, 8], strides = [1, 1]} : vector<9x32xbf16> to vector<9x8xbf16>
    %69 = vector.extract_strided_slice %64 {offsets = [0, 16], sizes = [9, 8], strides = [1, 1]} : vector<9x32xbf16> to vector<9x8xbf16>
    %70 = vector.extract_strided_slice %64 {offsets = [0, 24], sizes = [9, 8], strides = [1, 1]} : vector<9x32xbf16> to vector<9x8xbf16>
    %71 = vector.shape_cast %67 : vector<9x8xbf16> to vector<1x9x8xbf16>
    %72 = vector.shape_cast %68 : vector<9x8xbf16> to vector<1x9x8xbf16>
    %73 = vector.shape_cast %69 : vector<9x8xbf16> to vector<1x9x8xbf16>
    %74 = vector.shape_cast %70 : vector<9x8xbf16> to vector<1x9x8xbf16>
    %75 = tpu.concatenate %71, %72, %73, %74 in 0 : vector<1x9x8xbf16>, vector<1x9x8xbf16>, vector<1x9x8xbf16>, vector<1x9x8xbf16> -> vector<4x9x8xbf16>
    %76 = vector.extract_strided_slice %65 {offsets = [0, 0], sizes = [9, 8], strides = [1, 1]} : vector<9x32xbf16> to vector<9x8xbf16>
    %77 = vector.extract_strided_slice %65 {offsets = [0, 8], sizes = [9, 8], strides = [1, 1]} : vector<9x32xbf16> to vector<9x8xbf16>
    %78 = vector.extract_strided_slice %65 {offsets = [0, 16], sizes = [9, 8], strides = [1, 1]} : vector<9x32xbf16> to vector<9x8xbf16>
    %79 = vector.extract_strided_slice %65 {offsets = [0, 24], sizes = [9, 8], strides = [1, 1]} : vector<9x32xbf16> to vector<9x8xbf16>
    %80 = vector.shape_cast %76 : vector<9x8xbf16> to vector<1x9x8xbf16>
    %81 = vector.shape_cast %77 : vector<9x8xbf16> to vector<1x9x8xbf16>
    %82 = vector.shape_cast %78 : vector<9x8xbf16> to vector<1x9x8xbf16>
    %83 = vector.shape_cast %79 : vector<9x8xbf16> to vector<1x9x8xbf16>
    %84 = tpu.concatenate %80, %81, %82, %83 in 0 : vector<1x9x8xbf16>, vector<1x9x8xbf16>, vector<1x9x8xbf16>, vector<1x9x8xbf16> -> vector<4x9x8xbf16>
    %85 = vector.extract_strided_slice %66 {offsets = [0, 0], sizes = [9, 8], strides = [1, 1]} : vector<9x32xbf16> to vector<9x8xbf16>
    %86 = vector.extract_strided_slice %66 {offsets = [0, 8], sizes = [9, 8], strides = [1, 1]} : vector<9x32xbf16> to vector<9x8xbf16>
    %87 = vector.extract_strided_slice %66 {offsets = [0, 16], sizes = [9, 8], strides = [1, 1]} : vector<9x32xbf16> to vector<9x8xbf16>
    %88 = vector.extract_strided_slice %66 {offsets = [0, 24], sizes = [9, 8], strides = [1, 1]} : vector<9x32xbf16> to vector<9x8xbf16>
    %89 = vector.shape_cast %85 : vector<9x8xbf16> to vector<1x9x8xbf16>
    %90 = vector.shape_cast %86 : vector<9x8xbf16> to vector<1x9x8xbf16>
    %91 = vector.shape_cast %87 : vector<9x8xbf16> to vector<1x9x8xbf16>
    %92 = vector.shape_cast %88 : vector<9x8xbf16> to vector<1x9x8xbf16>
    %93 = tpu.concatenate %89, %90, %91, %92 in 0 : vector<1x9x8xbf16>, vector<1x9x8xbf16>, vector<1x9x8xbf16>, vector<1x9x8xbf16> -> vector<4x9x8xbf16>
    "tpu.trace_start"() <{level = 10 : i32, message = "hqd,hkd->hqk"}> : () -> ()
    %cst_27 = arith.constant dense<0.000000e+00> : vector<4x9x9xf32>
    %94 = tpu.matmul %75, %84, %cst_27 {dimension_numbers = #tpu.dot_dimension_numbers<[2], [2], [1], [1], [0, 0, 0, 1, 1, 1], [0], [0]>} : vector<4x9x8xbf16>, vector<4x9x8xbf16>, vector<4x9x9xf32> -> vector<4x9x9xf32>
    "tpu.trace_stop"() : () -> ()
    %cst_28 = arith.constant dense<0xFF800000> : vector<4x9xf32>
    %95 = vector.multi_reduction <maximumf>, %94, %cst_28 [2] : vector<4x9x9xf32> to vector<4x9xf32>
    %96 = vector.shape_cast %95 : vector<4x9xf32> to vector<4x9x1xf32>
    %97 = vector.broadcast %96 : vector<4x9x1xf32> to vector<4x9x9xf32>
    %98 = arith.subf %94, %97 : vector<4x9x9xf32>
    %99 = math.exp %98 : vector<4x9x9xf32>
    %cst_29 = arith.constant dense<0.000000e+00> : vector<4x9xf32>
    %100 = vector.multi_reduction <add>, %99, %cst_29 [2] : vector<4x9x9xf32> to vector<4x9xf32>
    %101 = vector.shape_cast %100 : vector<4x9xf32> to vector<4x9x1xf32>
    %102 = vector.broadcast %101 : vector<4x9x1xf32> to vector<4x9x9xf32>
    %103 = arith.divf %99, %102 : vector<4x9x9xf32>
    %104 = arith.truncf %103 : vector<4x9x9xf32> to vector<4x9x9xbf16>
    "tpu.trace_start"() <{level = 10 : i32, message = "hqk,hkd->hqd"}> : () -> ()
    %cst_30 = arith.constant dense<0.000000e+00> : vector<4x9x8xf32>
    %105 = tpu.matmul %104, %93, %cst_30 {dimension_numbers = #tpu.dot_dimension_numbers<[2], [1], [1], [2], [0, 0, 0, 1, 1, 2], [0], [0]>} : vector<4x9x9xbf16>, vector<4x9x8xbf16>, vector<4x9x8xf32> -> vector<4x9x8xf32>
    "tpu.trace_stop"() : () -> ()
    %106 = vector.extract_strided_slice %105 {offsets = [0, 0, 0], sizes = [1, 9, 8], strides = [1, 1, 1]} : vector<4x9x8xf32> to vector<1x9x8xf32>
    %107 = vector.shape_cast %106 : vector<1x9x8xf32> to vector<9x8xf32>
    %108 = vector.extract_strided_slice %105 {offsets = [1, 0, 0], sizes = [1, 9, 8], strides = [1, 1, 1]} : vector<4x9x8xf32> to vector<1x9x8xf32>
    %109 = vector.shape_cast %108 : vector<1x9x8xf32> to vector<9x8xf32>
    %110 = vector.extract_strided_slice %105 {offsets = [2, 0, 0], sizes = [1, 9, 8], strides = [1, 1, 1]} : vector<4x9x8xf32> to vector<1x9x8xf32>
    %111 = vector.shape_cast %110 : vector<1x9x8xf32> to vector<9x8xf32>
    %112 = vector.extract_strided_slice %105 {offsets = [3, 0, 0], sizes = [1, 9, 8], strides = [1, 1, 1]} : vector<4x9x8xf32> to vector<1x9x8xf32>
    %113 = vector.shape_cast %112 : vector<1x9x8xf32> to vector<9x8xf32>
    %114 = tpu.concatenate %107, %109, %111, %113 in 1 : vector<9x8xf32>, vector<9x8xf32>, vector<9x8xf32>, vector<9x8xf32> -> vector<9x32xf32>
    %115 = arith.truncf %114 : vector<9x32xf32> to vector<9x32xbf16>
    %116 = vector.extract_strided_slice %50 {offsets = [32, 0], sizes = [32, 128], strides = [1, 1]} : vector<224x128xbf16> to vector<32x128xbf16>
    %cst_31 = arith.constant dense<0.000000e+00> : vector<9x128xf32>
    %117 = tpu.matmul %115, %116, %cst_31 {dimension_numbers = #tpu.dot_dimension_numbers<[1], [0], [0], [1], [0, 0, 1, 1], [], []>} : vector<9x32xbf16>, vector<32x128xbf16>, vector<9x128xf32> -> vector<9x128xf32>
    %118 = vector.extract_strided_slice %52 {offsets = [1, 0], sizes = [1, 128], strides = [1, 1]} : vector<8x128xf32> to vector<1x128xf32>
    %119 = vector.broadcast %118 : vector<1x128xf32> to vector<9x128xf32>
    %120 = arith.addf %117, %119 : vector<9x128xf32>
    %121 = vector.extract_strided_slice %120 {offsets = [0, 0], sizes = [9, 32], strides = [1, 1]} : vector<9x128xf32> to vector<9x32xf32>
    %122 = arith.addf %42, %121 : vector<9x32xf32>
    %123 = vector.extract_strided_slice %52 {offsets = [4, 0], sizes = [1, 32], strides = [1, 1]} : vector<8x128xf32> to vector<1x32xf32>
    %124 = vector.extract_strided_slice %52 {offsets = [5, 0], sizes = [1, 32], strides = [1, 1]} : vector<8x128xf32> to vector<1x32xf32>
    %cst_32 = arith.constant dense<0.000000e+00> : vector<9xf32>
    %125 = vector.multi_reduction <add>, %122, %cst_32 [1] : vector<9x32xf32> to vector<9xf32>
    %126 = vector.shape_cast %125 : vector<9xf32> to vector<9x1xf32>
    %cst_33 = arith.constant 3.200000e+01 : f32
    %127 = vector.broadcast %cst_33 : f32 to vector<9x1xf32>
    %128 = arith.divf %126, %127 : vector<9x1xf32>
    %129 = vector.broadcast %128 : vector<9x1xf32> to vector<9x32xf32>
    %130 = arith.subf %122, %129 : vector<9x32xf32>
    %131 = arith.mulf %130, %130 : vector<9x32xf32>
    %cst_34 = arith.constant dense<0.000000e+00> : vector<9xf32>
    %132 = vector.multi_reduction <add>, %131, %cst_34 [1] : vector<9x32xf32> to vector<9xf32>
    %133 = vector.shape_cast %132 : vector<9xf32> to vector<9x1xf32>
    %cst_35 = arith.constant 3.200000e+01 : f32
    %134 = vector.broadcast %cst_35 : f32 to vector<9x1xf32>
    %135 = arith.divf %133, %134 : vector<9x1xf32>
    %cst_36 = arith.constant 9.99999974E-6 : f32
    %136 = vector.broadcast %cst_36 : f32 to vector<9x1xf32>
    %137 = arith.addf %135, %136 : vector<9x1xf32>
    %138 = math.rsqrt %137 : vector<9x1xf32>
    %139 = vector.broadcast %138 : vector<9x1xf32> to vector<9x32xf32>
    %140 = arith.mulf %130, %139 : vector<9x32xf32>
    %141 = vector.broadcast %123 : vector<1x32xf32> to vector<9x32xf32>
    %142 = arith.mulf %140, %141 : vector<9x32xf32>
    %143 = vector.broadcast %124 : vector<1x32xf32> to vector<9x32xf32>
    %144 = arith.addf %142, %143 : vector<9x32xf32>
    %145 = arith.truncf %144 : vector<9x32xf32> to vector<9x32xbf16>
    %146 = vector.extract_strided_slice %50 {offsets = [64, 0], sizes = [32, 128], strides = [1, 1]} : vector<224x128xbf16> to vector<32x128xbf16>
    %cst_37 = arith.constant dense<0.000000e+00> : vector<9x128xf32>
    %147 = tpu.matmul %145, %146, %cst_37 {dimension_numbers = #tpu.dot_dimension_numbers<[1], [0], [0], [1], [0, 0, 1, 1], [], []>} : vector<9x32xbf16>, vector<32x128xbf16>, vector<9x128xf32> -> vector<9x128xf32>
    %148 = vector.extract_strided_slice %52 {offsets = [2, 0], sizes = [1, 128], strides = [1, 1]} : vector<8x128xf32> to vector<1x128xf32>
    %149 = vector.broadcast %148 : vector<1x128xf32> to vector<9x128xf32>
    %150 = arith.addf %147, %149 : vector<9x128xf32>
    %cst_38 = arith.constant 0.000000e+00 : f32
    %151 = vector.broadcast %cst_38 : f32 to vector<9x128xf32>
    %152 = arith.maximumf %150, %151 : vector<9x128xf32>
    %153 = arith.truncf %152 : vector<9x128xf32> to vector<9x128xbf16>
    %154 = vector.extract_strided_slice %50 {offsets = [96, 0], sizes = [128, 128], strides = [1, 1]} : vector<224x128xbf16> to vector<128x128xbf16>
    %cst_39 = arith.constant dense<0.000000e+00> : vector<9x128xf32>
    %155 = tpu.matmul %153, %154, %cst_39 {dimension_numbers = #tpu.dot_dimension_numbers<[1], [0], [0], [1], [0, 0, 1, 1], [], []>} : vector<9x128xbf16>, vector<128x128xbf16>, vector<9x128xf32> -> vector<9x128xf32>
    %156 = vector.extract_strided_slice %52 {offsets = [3, 0], sizes = [1, 128], strides = [1, 1]} : vector<8x128xf32> to vector<1x128xf32>
    %157 = vector.broadcast %156 : vector<1x128xf32> to vector<9x128xf32>
    %158 = arith.addf %155, %157 : vector<9x128xf32>
    %159 = vector.extract_strided_slice %158 {offsets = [0, 0], sizes = [9, 32], strides = [1, 1]} : vector<9x128xf32> to vector<9x32xf32>
    %160 = arith.addf %144, %159 : vector<9x32xf32>
    %161 = vector.extract_strided_slice %52 {offsets = [6, 0], sizes = [1, 32], strides = [1, 1]} : vector<8x128xf32> to vector<1x32xf32>
    %162 = vector.extract_strided_slice %52 {offsets = [7, 0], sizes = [1, 32], strides = [1, 1]} : vector<8x128xf32> to vector<1x32xf32>
    %cst_40 = arith.constant dense<0.000000e+00> : vector<9xf32>
    %163 = vector.multi_reduction <add>, %160, %cst_40 [1] : vector<9x32xf32> to vector<9xf32>
    %164 = vector.shape_cast %163 : vector<9xf32> to vector<9x1xf32>
    %cst_41 = arith.constant 3.200000e+01 : f32
    %165 = vector.broadcast %cst_41 : f32 to vector<9x1xf32>
    %166 = arith.divf %164, %165 : vector<9x1xf32>
    %167 = vector.broadcast %166 : vector<9x1xf32> to vector<9x32xf32>
    %168 = arith.subf %160, %167 : vector<9x32xf32>
    %169 = arith.mulf %168, %168 : vector<9x32xf32>
    %cst_42 = arith.constant dense<0.000000e+00> : vector<9xf32>
    %170 = vector.multi_reduction <add>, %169, %cst_42 [1] : vector<9x32xf32> to vector<9xf32>
    %171 = vector.shape_cast %170 : vector<9xf32> to vector<9x1xf32>
    %cst_43 = arith.constant 3.200000e+01 : f32
    %172 = vector.broadcast %cst_43 : f32 to vector<9x1xf32>
    %173 = arith.divf %171, %172 : vector<9x1xf32>
    %cst_44 = arith.constant 9.99999974E-6 : f32
    %174 = vector.broadcast %cst_44 : f32 to vector<9x1xf32>
    %175 = arith.addf %173, %174 : vector<9x1xf32>
    %176 = math.rsqrt %175 : vector<9x1xf32>
    %177 = vector.broadcast %176 : vector<9x1xf32> to vector<9x32xf32>
    %178 = arith.mulf %168, %177 : vector<9x32xf32>
    %179 = vector.broadcast %161 : vector<1x32xf32> to vector<9x32xf32>
    %180 = arith.mulf %178, %179 : vector<9x32xf32>
    %181 = vector.broadcast %162 : vector<1x32xf32> to vector<9x32xf32>
    %182 = arith.addf %180, %181 : vector<9x32xf32>
    %c1 = arith.constant 1 : index
    %c0_45 = arith.constant 0 : index
    %c0_46 = arith.constant 0 : index
    %183 = vector.load %arg5[%c1, %c0_45, %c0_46] : memref<2x224x128xbf16, #tpu.memory_space<vmem>>, vector<1x224x128xbf16>
    %184 = vector.shape_cast %183 : vector<1x224x128xbf16> to vector<224x128xbf16>
    %c1_47 = arith.constant 1 : index
    %c0_48 = arith.constant 0 : index
    %c0_49 = arith.constant 0 : index
    %185 = vector.load %arg6[%c1_47, %c0_48, %c0_49] : memref<2x8x128xf32, #tpu.memory_space<vmem>>, vector<1x8x128xf32>
    %186 = vector.shape_cast %185 : vector<1x8x128xf32> to vector<8x128xf32>
    %187 = arith.truncf %182 : vector<9x32xf32> to vector<9x32xbf16>
    %188 = vector.extract_strided_slice %184 {offsets = [0, 0], sizes = [32, 128], strides = [1, 1]} : vector<224x128xbf16> to vector<32x128xbf16>
    %cst_50 = arith.constant dense<0.000000e+00> : vector<9x128xf32>
    %189 = tpu.matmul %187, %188, %cst_50 {dimension_numbers = #tpu.dot_dimension_numbers<[1], [0], [0], [1], [0, 0, 1, 1], [], []>} : vector<9x32xbf16>, vector<32x128xbf16>, vector<9x128xf32> -> vector<9x128xf32>
    %190 = vector.extract_strided_slice %186 {offsets = [0, 0], sizes = [1, 128], strides = [1, 1]} : vector<8x128xf32> to vector<1x128xf32>
    %191 = vector.broadcast %190 : vector<1x128xf32> to vector<9x128xf32>
    %192 = arith.addf %189, %191 : vector<9x128xf32>
    %193 = vector.extract_strided_slice %192 {offsets = [0, 0], sizes = [9, 32], strides = [1, 1]} : vector<9x128xf32> to vector<9x32xf32>
    %194 = vector.extract_strided_slice %192 {offsets = [0, 32], sizes = [9, 32], strides = [1, 1]} : vector<9x128xf32> to vector<9x32xf32>
    %195 = vector.extract_strided_slice %192 {offsets = [0, 64], sizes = [9, 32], strides = [1, 1]} : vector<9x128xf32> to vector<9x32xf32>
    %cst_51 = arith.constant 0.353553385 : f32
    %196 = vector.broadcast %cst_51 : f32 to vector<9x32xf32>
    %197 = arith.mulf %193, %196 : vector<9x32xf32>
    %198 = arith.truncf %197 : vector<9x32xf32> to vector<9x32xbf16>
    %199 = arith.truncf %194 : vector<9x32xf32> to vector<9x32xbf16>
    %200 = arith.truncf %195 : vector<9x32xf32> to vector<9x32xbf16>
    %201 = vector.extract_strided_slice %198 {offsets = [0, 0], sizes = [9, 8], strides = [1, 1]} : vector<9x32xbf16> to vector<9x8xbf16>
    %202 = vector.extract_strided_slice %198 {offsets = [0, 8], sizes = [9, 8], strides = [1, 1]} : vector<9x32xbf16> to vector<9x8xbf16>
    %203 = vector.extract_strided_slice %198 {offsets = [0, 16], sizes = [9, 8], strides = [1, 1]} : vector<9x32xbf16> to vector<9x8xbf16>
    %204 = vector.extract_strided_slice %198 {offsets = [0, 24], sizes = [9, 8], strides = [1, 1]} : vector<9x32xbf16> to vector<9x8xbf16>
    %205 = vector.shape_cast %201 : vector<9x8xbf16> to vector<1x9x8xbf16>
    %206 = vector.shape_cast %202 : vector<9x8xbf16> to vector<1x9x8xbf16>
    %207 = vector.shape_cast %203 : vector<9x8xbf16> to vector<1x9x8xbf16>
    %208 = vector.shape_cast %204 : vector<9x8xbf16> to vector<1x9x8xbf16>
    %209 = tpu.concatenate %205, %206, %207, %208 in 0 : vector<1x9x8xbf16>, vector<1x9x8xbf16>, vector<1x9x8xbf16>, vector<1x9x8xbf16> -> vector<4x9x8xbf16>
    %210 = vector.extract_strided_slice %199 {offsets = [0, 0], sizes = [9, 8], strides = [1, 1]} : vector<9x32xbf16> to vector<9x8xbf16>
    %211 = vector.extract_strided_slice %199 {offsets = [0, 8], sizes = [9, 8], strides = [1, 1]} : vector<9x32xbf16> to vector<9x8xbf16>
    %212 = vector.extract_strided_slice %199 {offsets = [0, 16], sizes = [9, 8], strides = [1, 1]} : vector<9x32xbf16> to vector<9x8xbf16>
    %213 = vector.extract_strided_slice %199 {offsets = [0, 24], sizes = [9, 8], strides = [1, 1]} : vector<9x32xbf16> to vector<9x8xbf16>
    %214 = vector.shape_cast %210 : vector<9x8xbf16> to vector<1x9x8xbf16>
    %215 = vector.shape_cast %211 : vector<9x8xbf16> to vector<1x9x8xbf16>
    %216 = vector.shape_cast %212 : vector<9x8xbf16> to vector<1x9x8xbf16>
    %217 = vector.shape_cast %213 : vector<9x8xbf16> to vector<1x9x8xbf16>
    %218 = tpu.concatenate %214, %215, %216, %217 in 0 : vector<1x9x8xbf16>, vector<1x9x8xbf16>, vector<1x9x8xbf16>, vector<1x9x8xbf16> -> vector<4x9x8xbf16>
    %219 = vector.extract_strided_slice %200 {offsets = [0, 0], sizes = [9, 8], strides = [1, 1]} : vector<9x32xbf16> to vector<9x8xbf16>
    %220 = vector.extract_strided_slice %200 {offsets = [0, 8], sizes = [9, 8], strides = [1, 1]} : vector<9x32xbf16> to vector<9x8xbf16>
    %221 = vector.extract_strided_slice %200 {offsets = [0, 16], sizes = [9, 8], strides = [1, 1]} : vector<9x32xbf16> to vector<9x8xbf16>
    %222 = vector.extract_strided_slice %200 {offsets = [0, 24], sizes = [9, 8], strides = [1, 1]} : vector<9x32xbf16> to vector<9x8xbf16>
    %223 = vector.shape_cast %219 : vector<9x8xbf16> to vector<1x9x8xbf16>
    %224 = vector.shape_cast %220 : vector<9x8xbf16> to vector<1x9x8xbf16>
    %225 = vector.shape_cast %221 : vector<9x8xbf16> to vector<1x9x8xbf16>
    %226 = vector.shape_cast %222 : vector<9x8xbf16> to vector<1x9x8xbf16>
    %227 = tpu.concatenate %223, %224, %225, %226 in 0 : vector<1x9x8xbf16>, vector<1x9x8xbf16>, vector<1x9x8xbf16>, vector<1x9x8xbf16> -> vector<4x9x8xbf16>
    "tpu.trace_start"() <{level = 10 : i32, message = "hqd,hkd->hqk"}> : () -> ()
    %cst_52 = arith.constant dense<0.000000e+00> : vector<4x9x9xf32>
    %228 = tpu.matmul %209, %218, %cst_52 {dimension_numbers = #tpu.dot_dimension_numbers<[2], [2], [1], [1], [0, 0, 0, 1, 1, 1], [0], [0]>} : vector<4x9x8xbf16>, vector<4x9x8xbf16>, vector<4x9x9xf32> -> vector<4x9x9xf32>
    "tpu.trace_stop"() : () -> ()
    %cst_53 = arith.constant dense<0xFF800000> : vector<4x9xf32>
    %229 = vector.multi_reduction <maximumf>, %228, %cst_53 [2] : vector<4x9x9xf32> to vector<4x9xf32>
    %230 = vector.shape_cast %229 : vector<4x9xf32> to vector<4x9x1xf32>
    %231 = vector.broadcast %230 : vector<4x9x1xf32> to vector<4x9x9xf32>
    %232 = arith.subf %228, %231 : vector<4x9x9xf32>
    %233 = math.exp %232 : vector<4x9x9xf32>
    %cst_54 = arith.constant dense<0.000000e+00> : vector<4x9xf32>
    %234 = vector.multi_reduction <add>, %233, %cst_54 [2] : vector<4x9x9xf32> to vector<4x9xf32>
    %235 = vector.shape_cast %234 : vector<4x9xf32> to vector<4x9x1xf32>
    %236 = vector.broadcast %235 : vector<4x9x1xf32> to vector<4x9x9xf32>
    %237 = arith.divf %233, %236 : vector<4x9x9xf32>
    %238 = arith.truncf %237 : vector<4x9x9xf32> to vector<4x9x9xbf16>
    "tpu.trace_start"() <{level = 10 : i32, message = "hqk,hkd->hqd"}> : () -> ()
    %cst_55 = arith.constant dense<0.000000e+00> : vector<4x9x8xf32>
    %239 = tpu.matmul %238, %227, %cst_55 {dimension_numbers = #tpu.dot_dimension_numbers<[2], [1], [1], [2], [0, 0, 0, 1, 1, 2], [0], [0]>} : vector<4x9x9xbf16>, vector<4x9x8xbf16>, vector<4x9x8xf32> -> vector<4x9x8xf32>
    "tpu.trace_stop"() : () -> ()
    %240 = vector.extract_strided_slice %239 {offsets = [0, 0, 0], sizes = [1, 9, 8], strides = [1, 1, 1]} : vector<4x9x8xf32> to vector<1x9x8xf32>
    %241 = vector.shape_cast %240 : vector<1x9x8xf32> to vector<9x8xf32>
    %242 = vector.extract_strided_slice %239 {offsets = [1, 0, 0], sizes = [1, 9, 8], strides = [1, 1, 1]} : vector<4x9x8xf32> to vector<1x9x8xf32>
    %243 = vector.shape_cast %242 : vector<1x9x8xf32> to vector<9x8xf32>
    %244 = vector.extract_strided_slice %239 {offsets = [2, 0, 0], sizes = [1, 9, 8], strides = [1, 1, 1]} : vector<4x9x8xf32> to vector<1x9x8xf32>
    %245 = vector.shape_cast %244 : vector<1x9x8xf32> to vector<9x8xf32>
    %246 = vector.extract_strided_slice %239 {offsets = [3, 0, 0], sizes = [1, 9, 8], strides = [1, 1, 1]} : vector<4x9x8xf32> to vector<1x9x8xf32>
    %247 = vector.shape_cast %246 : vector<1x9x8xf32> to vector<9x8xf32>
    %248 = tpu.concatenate %241, %243, %245, %247 in 1 : vector<9x8xf32>, vector<9x8xf32>, vector<9x8xf32>, vector<9x8xf32> -> vector<9x32xf32>
    %249 = arith.truncf %248 : vector<9x32xf32> to vector<9x32xbf16>
    %250 = vector.extract_strided_slice %184 {offsets = [32, 0], sizes = [32, 128], strides = [1, 1]} : vector<224x128xbf16> to vector<32x128xbf16>
    %cst_56 = arith.constant dense<0.000000e+00> : vector<9x128xf32>
    %251 = tpu.matmul %249, %250, %cst_56 {dimension_numbers = #tpu.dot_dimension_numbers<[1], [0], [0], [1], [0, 0, 1, 1], [], []>} : vector<9x32xbf16>, vector<32x128xbf16>, vector<9x128xf32> -> vector<9x128xf32>
    %252 = vector.extract_strided_slice %186 {offsets = [1, 0], sizes = [1, 128], strides = [1, 1]} : vector<8x128xf32> to vector<1x128xf32>
    %253 = vector.broadcast %252 : vector<1x128xf32> to vector<9x128xf32>
    %254 = arith.addf %251, %253 : vector<9x128xf32>
    %255 = vector.extract_strided_slice %254 {offsets = [0, 0], sizes = [9, 32], strides = [1, 1]} : vector<9x128xf32> to vector<9x32xf32>
    %256 = arith.addf %182, %255 : vector<9x32xf32>
    %257 = vector.extract_strided_slice %186 {offsets = [4, 0], sizes = [1, 32], strides = [1, 1]} : vector<8x128xf32> to vector<1x32xf32>
    %258 = vector.extract_strided_slice %186 {offsets = [5, 0], sizes = [1, 32], strides = [1, 1]} : vector<8x128xf32> to vector<1x32xf32>
    %cst_57 = arith.constant dense<0.000000e+00> : vector<9xf32>
    %259 = vector.multi_reduction <add>, %256, %cst_57 [1] : vector<9x32xf32> to vector<9xf32>
    %260 = vector.shape_cast %259 : vector<9xf32> to vector<9x1xf32>
    %cst_58 = arith.constant 3.200000e+01 : f32
    %261 = vector.broadcast %cst_58 : f32 to vector<9x1xf32>
    %262 = arith.divf %260, %261 : vector<9x1xf32>
    %263 = vector.broadcast %262 : vector<9x1xf32> to vector<9x32xf32>
    %264 = arith.subf %256, %263 : vector<9x32xf32>
    %265 = arith.mulf %264, %264 : vector<9x32xf32>
    %cst_59 = arith.constant dense<0.000000e+00> : vector<9xf32>
    %266 = vector.multi_reduction <add>, %265, %cst_59 [1] : vector<9x32xf32> to vector<9xf32>
    %267 = vector.shape_cast %266 : vector<9xf32> to vector<9x1xf32>
    %cst_60 = arith.constant 3.200000e+01 : f32
    %268 = vector.broadcast %cst_60 : f32 to vector<9x1xf32>
    %269 = arith.divf %267, %268 : vector<9x1xf32>
    %cst_61 = arith.constant 9.99999974E-6 : f32
    %270 = vector.broadcast %cst_61 : f32 to vector<9x1xf32>
    %271 = arith.addf %269, %270 : vector<9x1xf32>
    %272 = math.rsqrt %271 : vector<9x1xf32>
    %273 = vector.broadcast %272 : vector<9x1xf32> to vector<9x32xf32>
    %274 = arith.mulf %264, %273 : vector<9x32xf32>
    %275 = vector.broadcast %257 : vector<1x32xf32> to vector<9x32xf32>
    %276 = arith.mulf %274, %275 : vector<9x32xf32>
    %277 = vector.broadcast %258 : vector<1x32xf32> to vector<9x32xf32>
    %278 = arith.addf %276, %277 : vector<9x32xf32>
    %279 = arith.truncf %278 : vector<9x32xf32> to vector<9x32xbf16>
    %280 = vector.extract_strided_slice %184 {offsets = [64, 0], sizes = [32, 128], strides = [1, 1]} : vector<224x128xbf16> to vector<32x128xbf16>
    %cst_62 = arith.constant dense<0.000000e+00> : vector<9x128xf32>
    %281 = tpu.matmul %279, %280, %cst_62 {dimension_numbers = #tpu.dot_dimension_numbers<[1], [0], [0], [1], [0, 0, 1, 1], [], []>} : vector<9x32xbf16>, vector<32x128xbf16>, vector<9x128xf32> -> vector<9x128xf32>
    %282 = vector.extract_strided_slice %186 {offsets = [2, 0], sizes = [1, 128], strides = [1, 1]} : vector<8x128xf32> to vector<1x128xf32>
    %283 = vector.broadcast %282 : vector<1x128xf32> to vector<9x128xf32>
    %284 = arith.addf %281, %283 : vector<9x128xf32>
    %cst_63 = arith.constant 0.000000e+00 : f32
    %285 = vector.broadcast %cst_63 : f32 to vector<9x128xf32>
    %286 = arith.maximumf %284, %285 : vector<9x128xf32>
    %287 = arith.truncf %286 : vector<9x128xf32> to vector<9x128xbf16>
    %288 = vector.extract_strided_slice %184 {offsets = [96, 0], sizes = [128, 128], strides = [1, 1]} : vector<224x128xbf16> to vector<128x128xbf16>
    %cst_64 = arith.constant dense<0.000000e+00> : vector<9x128xf32>
    %289 = tpu.matmul %287, %288, %cst_64 {dimension_numbers = #tpu.dot_dimension_numbers<[1], [0], [0], [1], [0, 0, 1, 1], [], []>} : vector<9x128xbf16>, vector<128x128xbf16>, vector<9x128xf32> -> vector<9x128xf32>
    %290 = vector.extract_strided_slice %186 {offsets = [3, 0], sizes = [1, 128], strides = [1, 1]} : vector<8x128xf32> to vector<1x128xf32>
    %291 = vector.broadcast %290 : vector<1x128xf32> to vector<9x128xf32>
    %292 = arith.addf %289, %291 : vector<9x128xf32>
    %293 = vector.extract_strided_slice %292 {offsets = [0, 0], sizes = [9, 32], strides = [1, 1]} : vector<9x128xf32> to vector<9x32xf32>
    %294 = arith.addf %278, %293 : vector<9x32xf32>
    %295 = vector.extract_strided_slice %186 {offsets = [6, 0], sizes = [1, 32], strides = [1, 1]} : vector<8x128xf32> to vector<1x32xf32>
    %296 = vector.extract_strided_slice %186 {offsets = [7, 0], sizes = [1, 32], strides = [1, 1]} : vector<8x128xf32> to vector<1x32xf32>
    %cst_65 = arith.constant dense<0.000000e+00> : vector<9xf32>
    %297 = vector.multi_reduction <add>, %294, %cst_65 [1] : vector<9x32xf32> to vector<9xf32>
    %298 = vector.shape_cast %297 : vector<9xf32> to vector<9x1xf32>
    %cst_66 = arith.constant 3.200000e+01 : f32
    %299 = vector.broadcast %cst_66 : f32 to vector<9x1xf32>
    %300 = arith.divf %298, %299 : vector<9x1xf32>
    %301 = vector.broadcast %300 : vector<9x1xf32> to vector<9x32xf32>
    %302 = arith.subf %294, %301 : vector<9x32xf32>
    %303 = arith.mulf %302, %302 : vector<9x32xf32>
    %cst_67 = arith.constant dense<0.000000e+00> : vector<9xf32>
    %304 = vector.multi_reduction <add>, %303, %cst_67 [1] : vector<9x32xf32> to vector<9xf32>
    %305 = vector.shape_cast %304 : vector<9xf32> to vector<9x1xf32>
    %cst_68 = arith.constant 3.200000e+01 : f32
    %306 = vector.broadcast %cst_68 : f32 to vector<9x1xf32>
    %307 = arith.divf %305, %306 : vector<9x1xf32>
    %cst_69 = arith.constant 9.99999974E-6 : f32
    %308 = vector.broadcast %cst_69 : f32 to vector<9x1xf32>
    %309 = arith.addf %307, %308 : vector<9x1xf32>
    %310 = math.rsqrt %309 : vector<9x1xf32>
    %311 = vector.broadcast %310 : vector<9x1xf32> to vector<9x32xf32>
    %312 = arith.mulf %302, %311 : vector<9x32xf32>
    %313 = vector.broadcast %295 : vector<1x32xf32> to vector<9x32xf32>
    %314 = arith.mulf %312, %313 : vector<9x32xf32>
    %315 = vector.broadcast %296 : vector<1x32xf32> to vector<9x32xf32>
    %316 = arith.addf %314, %315 : vector<9x32xf32>
    %317 = vector.extract_strided_slice %0 {offsets = [68, 0], sizes = [1, 32], strides = [1, 1]} : vector<77x128xf32> to vector<1x32xf32>
    %318 = vector.extract_strided_slice %0 {offsets = [69, 0], sizes = [1, 32], strides = [1, 1]} : vector<77x128xf32> to vector<1x32xf32>
    %cst_70 = arith.constant dense<0.000000e+00> : vector<9xf32>
    %319 = vector.multi_reduction <add>, %316, %cst_70 [1] : vector<9x32xf32> to vector<9xf32>
    %320 = vector.shape_cast %319 : vector<9xf32> to vector<9x1xf32>
    %cst_71 = arith.constant 3.200000e+01 : f32
    %321 = vector.broadcast %cst_71 : f32 to vector<9x1xf32>
    %322 = arith.divf %320, %321 : vector<9x1xf32>
    %323 = vector.broadcast %322 : vector<9x1xf32> to vector<9x32xf32>
    %324 = arith.subf %316, %323 : vector<9x32xf32>
    %325 = arith.mulf %324, %324 : vector<9x32xf32>
    %cst_72 = arith.constant dense<0.000000e+00> : vector<9xf32>
    %326 = vector.multi_reduction <add>, %325, %cst_72 [1] : vector<9x32xf32> to vector<9xf32>
    %327 = vector.shape_cast %326 : vector<9xf32> to vector<9x1xf32>
    %cst_73 = arith.constant 3.200000e+01 : f32
    %328 = vector.broadcast %cst_73 : f32 to vector<9x1xf32>
    %329 = arith.divf %327, %328 : vector<9x1xf32>
    %cst_74 = arith.constant 9.99999974E-6 : f32
    %330 = vector.broadcast %cst_74 : f32 to vector<9x1xf32>
    %331 = arith.addf %329, %330 : vector<9x1xf32>
    %332 = math.rsqrt %331 : vector<9x1xf32>
    %333 = vector.broadcast %332 : vector<9x1xf32> to vector<9x32xf32>
    %334 = arith.mulf %324, %333 : vector<9x32xf32>
    %335 = vector.broadcast %317 : vector<1x32xf32> to vector<9x32xf32>
    %336 = arith.mulf %334, %335 : vector<9x32xf32>
    %337 = vector.broadcast %318 : vector<1x32xf32> to vector<9x32xf32>
    %338 = arith.addf %336, %337 : vector<9x32xf32>
    %339 = arith.truncf %338 : vector<9x32xf32> to vector<9x32xbf16>
    %c0_75 = arith.constant 0 : index
    %c0_76 = arith.constant 0 : index
    %c0_77 = arith.constant 0 : index
    %340 = vector.load %arg7[%c0_75, %c0_76, %c0_77] : memref<2x320x128xbf16, #tpu.memory_space<vmem>>, vector<1x320x128xbf16>
    %341 = vector.shape_cast %340 : vector<1x320x128xbf16> to vector<320x128xbf16>
    %c0_78 = arith.constant 0 : index
    %c0_79 = arith.constant 0 : index
    %c0_80 = arith.constant 0 : index
    %342 = vector.load %arg8[%c0_78, %c0_79, %c0_80] : memref<2x13x128xf32, #tpu.memory_space<vmem>>, vector<1x13x128xf32>
    %343 = vector.shape_cast %342 : vector<1x13x128xf32> to vector<13x128xf32>
    %344 = arith.truncf %42 : vector<9x32xf32> to vector<9x32xbf16>
    %345 = vector.extract_strided_slice %341 {offsets = [0, 0], sizes = [32, 128], strides = [1, 1]} : vector<320x128xbf16> to vector<32x128xbf16>
    %cst_81 = arith.constant dense<0.000000e+00> : vector<9x128xf32>
    %346 = tpu.matmul %344, %345, %cst_81 {dimension_numbers = #tpu.dot_dimension_numbers<[1], [0], [0], [1], [0, 0, 1, 1], [], []>} : vector<9x32xbf16>, vector<32x128xbf16>, vector<9x128xf32> -> vector<9x128xf32>
    %347 = vector.extract_strided_slice %343 {offsets = [0, 0], sizes = [1, 128], strides = [1, 1]} : vector<13x128xf32> to vector<1x128xf32>
    %348 = vector.broadcast %347 : vector<1x128xf32> to vector<9x128xf32>
    %349 = arith.addf %346, %348 : vector<9x128xf32>
    %350 = vector.extract_strided_slice %349 {offsets = [0, 0], sizes = [9, 32], strides = [1, 1]} : vector<9x128xf32> to vector<9x32xf32>
    %351 = vector.extract_strided_slice %349 {offsets = [0, 32], sizes = [9, 32], strides = [1, 1]} : vector<9x128xf32> to vector<9x32xf32>
    %352 = vector.extract_strided_slice %349 {offsets = [0, 64], sizes = [9, 32], strides = [1, 1]} : vector<9x128xf32> to vector<9x32xf32>
    %cst_82 = arith.constant 0.353553385 : f32
    %353 = vector.broadcast %cst_82 : f32 to vector<9x32xf32>
    %354 = arith.mulf %350, %353 : vector<9x32xf32>
    %355 = arith.truncf %354 : vector<9x32xf32> to vector<9x32xbf16>
    %356 = arith.truncf %351 : vector<9x32xf32> to vector<9x32xbf16>
    %357 = arith.truncf %352 : vector<9x32xf32> to vector<9x32xbf16>
    %358 = vector.extract_strided_slice %355 {offsets = [0, 0], sizes = [9, 8], strides = [1, 1]} : vector<9x32xbf16> to vector<9x8xbf16>
    %359 = vector.extract_strided_slice %355 {offsets = [0, 8], sizes = [9, 8], strides = [1, 1]} : vector<9x32xbf16> to vector<9x8xbf16>
    %360 = vector.extract_strided_slice %355 {offsets = [0, 16], sizes = [9, 8], strides = [1, 1]} : vector<9x32xbf16> to vector<9x8xbf16>
    %361 = vector.extract_strided_slice %355 {offsets = [0, 24], sizes = [9, 8], strides = [1, 1]} : vector<9x32xbf16> to vector<9x8xbf16>
    %362 = vector.shape_cast %358 : vector<9x8xbf16> to vector<1x9x8xbf16>
    %363 = vector.shape_cast %359 : vector<9x8xbf16> to vector<1x9x8xbf16>
    %364 = vector.shape_cast %360 : vector<9x8xbf16> to vector<1x9x8xbf16>
    %365 = vector.shape_cast %361 : vector<9x8xbf16> to vector<1x9x8xbf16>
    %366 = tpu.concatenate %362, %363, %364, %365 in 0 : vector<1x9x8xbf16>, vector<1x9x8xbf16>, vector<1x9x8xbf16>, vector<1x9x8xbf16> -> vector<4x9x8xbf16>
    %367 = vector.extract_strided_slice %356 {offsets = [0, 0], sizes = [9, 8], strides = [1, 1]} : vector<9x32xbf16> to vector<9x8xbf16>
    %368 = vector.extract_strided_slice %356 {offsets = [0, 8], sizes = [9, 8], strides = [1, 1]} : vector<9x32xbf16> to vector<9x8xbf16>
    %369 = vector.extract_strided_slice %356 {offsets = [0, 16], sizes = [9, 8], strides = [1, 1]} : vector<9x32xbf16> to vector<9x8xbf16>
    %370 = vector.extract_strided_slice %356 {offsets = [0, 24], sizes = [9, 8], strides = [1, 1]} : vector<9x32xbf16> to vector<9x8xbf16>
    %371 = vector.shape_cast %367 : vector<9x8xbf16> to vector<1x9x8xbf16>
    %372 = vector.shape_cast %368 : vector<9x8xbf16> to vector<1x9x8xbf16>
    %373 = vector.shape_cast %369 : vector<9x8xbf16> to vector<1x9x8xbf16>
    %374 = vector.shape_cast %370 : vector<9x8xbf16> to vector<1x9x8xbf16>
    %375 = tpu.concatenate %371, %372, %373, %374 in 0 : vector<1x9x8xbf16>, vector<1x9x8xbf16>, vector<1x9x8xbf16>, vector<1x9x8xbf16> -> vector<4x9x8xbf16>
    %376 = vector.extract_strided_slice %357 {offsets = [0, 0], sizes = [9, 8], strides = [1, 1]} : vector<9x32xbf16> to vector<9x8xbf16>
    %377 = vector.extract_strided_slice %357 {offsets = [0, 8], sizes = [9, 8], strides = [1, 1]} : vector<9x32xbf16> to vector<9x8xbf16>
    %378 = vector.extract_strided_slice %357 {offsets = [0, 16], sizes = [9, 8], strides = [1, 1]} : vector<9x32xbf16> to vector<9x8xbf16>
    %379 = vector.extract_strided_slice %357 {offsets = [0, 24], sizes = [9, 8], strides = [1, 1]} : vector<9x32xbf16> to vector<9x8xbf16>
    %380 = vector.shape_cast %376 : vector<9x8xbf16> to vector<1x9x8xbf16>
    %381 = vector.shape_cast %377 : vector<9x8xbf16> to vector<1x9x8xbf16>
    %382 = vector.shape_cast %378 : vector<9x8xbf16> to vector<1x9x8xbf16>
    %383 = vector.shape_cast %379 : vector<9x8xbf16> to vector<1x9x8xbf16>
    %384 = tpu.concatenate %380, %381, %382, %383 in 0 : vector<1x9x8xbf16>, vector<1x9x8xbf16>, vector<1x9x8xbf16>, vector<1x9x8xbf16> -> vector<4x9x8xbf16>
    "tpu.trace_start"() <{level = 10 : i32, message = "hqd,hkd->hqk"}> : () -> ()
    %cst_83 = arith.constant dense<0.000000e+00> : vector<4x9x9xf32>
    %385 = tpu.matmul %366, %375, %cst_83 {dimension_numbers = #tpu.dot_dimension_numbers<[2], [2], [1], [1], [0, 0, 0, 1, 1, 1], [0], [0]>} : vector<4x9x8xbf16>, vector<4x9x8xbf16>, vector<4x9x9xf32> -> vector<4x9x9xf32>
    "tpu.trace_stop"() : () -> ()
    %386 = vector.shape_cast %48 : vector<9x9xf32> to vector<1x9x9xf32>
    %387 = vector.broadcast %386 : vector<1x9x9xf32> to vector<4x9x9xf32>
    %388 = arith.addf %385, %387 : vector<4x9x9xf32>
    %cst_84 = arith.constant dense<0xFF800000> : vector<4x9xf32>
    %389 = vector.multi_reduction <maximumf>, %388, %cst_84 [2] : vector<4x9x9xf32> to vector<4x9xf32>
    %390 = vector.shape_cast %389 : vector<4x9xf32> to vector<4x9x1xf32>
    %391 = vector.broadcast %390 : vector<4x9x1xf32> to vector<4x9x9xf32>
    %392 = arith.subf %388, %391 : vector<4x9x9xf32>
    %393 = math.exp %392 : vector<4x9x9xf32>
    %cst_85 = arith.constant dense<0.000000e+00> : vector<4x9xf32>
    %394 = vector.multi_reduction <add>, %393, %cst_85 [2] : vector<4x9x9xf32> to vector<4x9xf32>
    %395 = vector.shape_cast %394 : vector<4x9xf32> to vector<4x9x1xf32>
    %396 = vector.broadcast %395 : vector<4x9x1xf32> to vector<4x9x9xf32>
    %397 = arith.divf %393, %396 : vector<4x9x9xf32>
    %398 = arith.truncf %397 : vector<4x9x9xf32> to vector<4x9x9xbf16>
    "tpu.trace_start"() <{level = 10 : i32, message = "hqk,hkd->hqd"}> : () -> ()
    %cst_86 = arith.constant dense<0.000000e+00> : vector<4x9x8xf32>
    %399 = tpu.matmul %398, %384, %cst_86 {dimension_numbers = #tpu.dot_dimension_numbers<[2], [1], [1], [2], [0, 0, 0, 1, 1, 2], [0], [0]>} : vector<4x9x9xbf16>, vector<4x9x8xbf16>, vector<4x9x8xf32> -> vector<4x9x8xf32>
    "tpu.trace_stop"() : () -> ()
    %400 = vector.extract_strided_slice %399 {offsets = [0, 0, 0], sizes = [1, 9, 8], strides = [1, 1, 1]} : vector<4x9x8xf32> to vector<1x9x8xf32>
    %401 = vector.shape_cast %400 : vector<1x9x8xf32> to vector<9x8xf32>
    %402 = vector.extract_strided_slice %399 {offsets = [1, 0, 0], sizes = [1, 9, 8], strides = [1, 1, 1]} : vector<4x9x8xf32> to vector<1x9x8xf32>
    %403 = vector.shape_cast %402 : vector<1x9x8xf32> to vector<9x8xf32>
    %404 = vector.extract_strided_slice %399 {offsets = [2, 0, 0], sizes = [1, 9, 8], strides = [1, 1, 1]} : vector<4x9x8xf32> to vector<1x9x8xf32>
    %405 = vector.shape_cast %404 : vector<1x9x8xf32> to vector<9x8xf32>
    %406 = vector.extract_strided_slice %399 {offsets = [3, 0, 0], sizes = [1, 9, 8], strides = [1, 1, 1]} : vector<4x9x8xf32> to vector<1x9x8xf32>
    %407 = vector.shape_cast %406 : vector<1x9x8xf32> to vector<9x8xf32>
    %408 = tpu.concatenate %401, %403, %405, %407 in 1 : vector<9x8xf32>, vector<9x8xf32>, vector<9x8xf32>, vector<9x8xf32> -> vector<9x32xf32>
    %409 = arith.truncf %408 : vector<9x32xf32> to vector<9x32xbf16>
    %410 = vector.extract_strided_slice %341 {offsets = [32, 0], sizes = [32, 128], strides = [1, 1]} : vector<320x128xbf16> to vector<32x128xbf16>
    %cst_87 = arith.constant dense<0.000000e+00> : vector<9x128xf32>
    %411 = tpu.matmul %409, %410, %cst_87 {dimension_numbers = #tpu.dot_dimension_numbers<[1], [0], [0], [1], [0, 0, 1, 1], [], []>} : vector<9x32xbf16>, vector<32x128xbf16>, vector<9x128xf32> -> vector<9x128xf32>
    %412 = vector.extract_strided_slice %343 {offsets = [1, 0], sizes = [1, 128], strides = [1, 1]} : vector<13x128xf32> to vector<1x128xf32>
    %413 = vector.broadcast %412 : vector<1x128xf32> to vector<9x128xf32>
    %414 = arith.addf %411, %413 : vector<9x128xf32>
    %415 = vector.extract_strided_slice %414 {offsets = [0, 0], sizes = [9, 32], strides = [1, 1]} : vector<9x128xf32> to vector<9x32xf32>
    %416 = arith.addf %42, %415 : vector<9x32xf32>
    %417 = vector.extract_strided_slice %343 {offsets = [7, 0], sizes = [1, 32], strides = [1, 1]} : vector<13x128xf32> to vector<1x32xf32>
    %418 = vector.extract_strided_slice %343 {offsets = [8, 0], sizes = [1, 32], strides = [1, 1]} : vector<13x128xf32> to vector<1x32xf32>
    %cst_88 = arith.constant dense<0.000000e+00> : vector<9xf32>
    %419 = vector.multi_reduction <add>, %416, %cst_88 [1] : vector<9x32xf32> to vector<9xf32>
    %420 = vector.shape_cast %419 : vector<9xf32> to vector<9x1xf32>
    %cst_89 = arith.constant 3.200000e+01 : f32
    %421 = vector.broadcast %cst_89 : f32 to vector<9x1xf32>
    %422 = arith.divf %420, %421 : vector<9x1xf32>
    %423 = vector.broadcast %422 : vector<9x1xf32> to vector<9x32xf32>
    %424 = arith.subf %416, %423 : vector<9x32xf32>
    %425 = arith.mulf %424, %424 : vector<9x32xf32>
    %cst_90 = arith.constant dense<0.000000e+00> : vector<9xf32>
    %426 = vector.multi_reduction <add>, %425, %cst_90 [1] : vector<9x32xf32> to vector<9xf32>
    %427 = vector.shape_cast %426 : vector<9xf32> to vector<9x1xf32>
    %cst_91 = arith.constant 3.200000e+01 : f32
    %428 = vector.broadcast %cst_91 : f32 to vector<9x1xf32>
    %429 = arith.divf %427, %428 : vector<9x1xf32>
    %cst_92 = arith.constant 9.99999974E-6 : f32
    %430 = vector.broadcast %cst_92 : f32 to vector<9x1xf32>
    %431 = arith.addf %429, %430 : vector<9x1xf32>
    %432 = math.rsqrt %431 : vector<9x1xf32>
    %433 = vector.broadcast %432 : vector<9x1xf32> to vector<9x32xf32>
    %434 = arith.mulf %424, %433 : vector<9x32xf32>
    %435 = vector.broadcast %417 : vector<1x32xf32> to vector<9x32xf32>
    %436 = arith.mulf %434, %435 : vector<9x32xf32>
    %437 = vector.broadcast %418 : vector<1x32xf32> to vector<9x32xf32>
    %438 = arith.addf %436, %437 : vector<9x32xf32>
    %439 = arith.truncf %438 : vector<9x32xf32> to vector<9x32xbf16>
    %440 = vector.extract_strided_slice %341 {offsets = [64, 0], sizes = [32, 128], strides = [1, 1]} : vector<320x128xbf16> to vector<32x128xbf16>
    %cst_93 = arith.constant dense<0.000000e+00> : vector<9x128xf32>
    %441 = tpu.matmul %439, %440, %cst_93 {dimension_numbers = #tpu.dot_dimension_numbers<[1], [0], [0], [1], [0, 0, 1, 1], [], []>} : vector<9x32xbf16>, vector<32x128xbf16>, vector<9x128xf32> -> vector<9x128xf32>
    %442 = vector.extract_strided_slice %343 {offsets = [2, 0], sizes = [1, 128], strides = [1, 1]} : vector<13x128xf32> to vector<1x128xf32>
    %443 = vector.broadcast %442 : vector<1x128xf32> to vector<9x128xf32>
    %444 = arith.addf %441, %443 : vector<9x128xf32>
    %445 = vector.extract_strided_slice %341 {offsets = [96, 0], sizes = [32, 128], strides = [1, 1]} : vector<320x128xbf16> to vector<32x128xbf16>
    %cst_94 = arith.constant dense<0.000000e+00> : vector<9x128xf32>
    %446 = tpu.matmul %339, %445, %cst_94 {dimension_numbers = #tpu.dot_dimension_numbers<[1], [0], [0], [1], [0, 0, 1, 1], [], []>} : vector<9x32xbf16>, vector<32x128xbf16>, vector<9x128xf32> -> vector<9x128xf32>
    %447 = vector.extract_strided_slice %343 {offsets = [3, 0], sizes = [1, 128], strides = [1, 1]} : vector<13x128xf32> to vector<1x128xf32>
    %448 = vector.broadcast %447 : vector<1x128xf32> to vector<9x128xf32>
    %449 = arith.addf %446, %448 : vector<9x128xf32>
    %450 = vector.extract_strided_slice %444 {offsets = [0, 0], sizes = [9, 32], strides = [1, 1]} : vector<9x128xf32> to vector<9x32xf32>
    %451 = vector.extract_strided_slice %449 {offsets = [0, 0], sizes = [9, 32], strides = [1, 1]} : vector<9x128xf32> to vector<9x32xf32>
    %452 = vector.extract_strided_slice %449 {offsets = [0, 32], sizes = [9, 32], strides = [1, 1]} : vector<9x128xf32> to vector<9x32xf32>
    %cst_95 = arith.constant 0.353553385 : f32
    %453 = vector.broadcast %cst_95 : f32 to vector<9x32xf32>
    %454 = arith.mulf %450, %453 : vector<9x32xf32>
    %455 = arith.truncf %454 : vector<9x32xf32> to vector<9x32xbf16>
    %456 = arith.truncf %451 : vector<9x32xf32> to vector<9x32xbf16>
    %457 = arith.truncf %452 : vector<9x32xf32> to vector<9x32xbf16>
    %458 = vector.extract_strided_slice %455 {offsets = [0, 0], sizes = [9, 8], strides = [1, 1]} : vector<9x32xbf16> to vector<9x8xbf16>
    %459 = vector.extract_strided_slice %455 {offsets = [0, 8], sizes = [9, 8], strides = [1, 1]} : vector<9x32xbf16> to vector<9x8xbf16>
    %460 = vector.extract_strided_slice %455 {offsets = [0, 16], sizes = [9, 8], strides = [1, 1]} : vector<9x32xbf16> to vector<9x8xbf16>
    %461 = vector.extract_strided_slice %455 {offsets = [0, 24], sizes = [9, 8], strides = [1, 1]} : vector<9x32xbf16> to vector<9x8xbf16>
    %462 = vector.shape_cast %458 : vector<9x8xbf16> to vector<1x9x8xbf16>
    %463 = vector.shape_cast %459 : vector<9x8xbf16> to vector<1x9x8xbf16>
    %464 = vector.shape_cast %460 : vector<9x8xbf16> to vector<1x9x8xbf16>
    %465 = vector.shape_cast %461 : vector<9x8xbf16> to vector<1x9x8xbf16>
    %466 = tpu.concatenate %462, %463, %464, %465 in 0 : vector<1x9x8xbf16>, vector<1x9x8xbf16>, vector<1x9x8xbf16>, vector<1x9x8xbf16> -> vector<4x9x8xbf16>
    %467 = vector.extract_strided_slice %456 {offsets = [0, 0], sizes = [9, 8], strides = [1, 1]} : vector<9x32xbf16> to vector<9x8xbf16>
    %468 = vector.extract_strided_slice %456 {offsets = [0, 8], sizes = [9, 8], strides = [1, 1]} : vector<9x32xbf16> to vector<9x8xbf16>
    %469 = vector.extract_strided_slice %456 {offsets = [0, 16], sizes = [9, 8], strides = [1, 1]} : vector<9x32xbf16> to vector<9x8xbf16>
    %470 = vector.extract_strided_slice %456 {offsets = [0, 24], sizes = [9, 8], strides = [1, 1]} : vector<9x32xbf16> to vector<9x8xbf16>
    %471 = vector.shape_cast %467 : vector<9x8xbf16> to vector<1x9x8xbf16>
    %472 = vector.shape_cast %468 : vector<9x8xbf16> to vector<1x9x8xbf16>
    %473 = vector.shape_cast %469 : vector<9x8xbf16> to vector<1x9x8xbf16>
    %474 = vector.shape_cast %470 : vector<9x8xbf16> to vector<1x9x8xbf16>
    %475 = tpu.concatenate %471, %472, %473, %474 in 0 : vector<1x9x8xbf16>, vector<1x9x8xbf16>, vector<1x9x8xbf16>, vector<1x9x8xbf16> -> vector<4x9x8xbf16>
    %476 = vector.extract_strided_slice %457 {offsets = [0, 0], sizes = [9, 8], strides = [1, 1]} : vector<9x32xbf16> to vector<9x8xbf16>
    %477 = vector.extract_strided_slice %457 {offsets = [0, 8], sizes = [9, 8], strides = [1, 1]} : vector<9x32xbf16> to vector<9x8xbf16>
    %478 = vector.extract_strided_slice %457 {offsets = [0, 16], sizes = [9, 8], strides = [1, 1]} : vector<9x32xbf16> to vector<9x8xbf16>
    %479 = vector.extract_strided_slice %457 {offsets = [0, 24], sizes = [9, 8], strides = [1, 1]} : vector<9x32xbf16> to vector<9x8xbf16>
    %480 = vector.shape_cast %476 : vector<9x8xbf16> to vector<1x9x8xbf16>
    %481 = vector.shape_cast %477 : vector<9x8xbf16> to vector<1x9x8xbf16>
    %482 = vector.shape_cast %478 : vector<9x8xbf16> to vector<1x9x8xbf16>
    %483 = vector.shape_cast %479 : vector<9x8xbf16> to vector<1x9x8xbf16>
    %484 = tpu.concatenate %480, %481, %482, %483 in 0 : vector<1x9x8xbf16>, vector<1x9x8xbf16>, vector<1x9x8xbf16>, vector<1x9x8xbf16> -> vector<4x9x8xbf16>
    "tpu.trace_start"() <{level = 10 : i32, message = "hqd,hkd->hqk"}> : () -> ()
    %cst_96 = arith.constant dense<0.000000e+00> : vector<4x9x9xf32>
    %485 = tpu.matmul %466, %475, %cst_96 {dimension_numbers = #tpu.dot_dimension_numbers<[2], [2], [1], [1], [0, 0, 0, 1, 1, 1], [0], [0]>} : vector<4x9x8xbf16>, vector<4x9x8xbf16>, vector<4x9x9xf32> -> vector<4x9x9xf32>
    "tpu.trace_stop"() : () -> ()
    %cst_97 = arith.constant dense<0xFF800000> : vector<4x9xf32>
    %486 = vector.multi_reduction <maximumf>, %485, %cst_97 [2] : vector<4x9x9xf32> to vector<4x9xf32>
    %487 = vector.shape_cast %486 : vector<4x9xf32> to vector<4x9x1xf32>
    %488 = vector.broadcast %487 : vector<4x9x1xf32> to vector<4x9x9xf32>
    %489 = arith.subf %485, %488 : vector<4x9x9xf32>
    %490 = math.exp %489 : vector<4x9x9xf32>
    %cst_98 = arith.constant dense<0.000000e+00> : vector<4x9xf32>
    %491 = vector.multi_reduction <add>, %490, %cst_98 [2] : vector<4x9x9xf32> to vector<4x9xf32>
    %492 = vector.shape_cast %491 : vector<4x9xf32> to vector<4x9x1xf32>
    %493 = vector.broadcast %492 : vector<4x9x1xf32> to vector<4x9x9xf32>
    %494 = arith.divf %490, %493 : vector<4x9x9xf32>
    %495 = arith.truncf %494 : vector<4x9x9xf32> to vector<4x9x9xbf16>
    "tpu.trace_start"() <{level = 10 : i32, message = "hqk,hkd->hqd"}> : () -> ()
    %cst_99 = arith.constant dense<0.000000e+00> : vector<4x9x8xf32>
    %496 = tpu.matmul %495, %484, %cst_99 {dimension_numbers = #tpu.dot_dimension_numbers<[2], [1], [1], [2], [0, 0, 0, 1, 1, 2], [0], [0]>} : vector<4x9x9xbf16>, vector<4x9x8xbf16>, vector<4x9x8xf32> -> vector<4x9x8xf32>
    "tpu.trace_stop"() : () -> ()
    %497 = vector.extract_strided_slice %496 {offsets = [0, 0, 0], sizes = [1, 9, 8], strides = [1, 1, 1]} : vector<4x9x8xf32> to vector<1x9x8xf32>
    %498 = vector.shape_cast %497 : vector<1x9x8xf32> to vector<9x8xf32>
    %499 = vector.extract_strided_slice %496 {offsets = [1, 0, 0], sizes = [1, 9, 8], strides = [1, 1, 1]} : vector<4x9x8xf32> to vector<1x9x8xf32>
    %500 = vector.shape_cast %499 : vector<1x9x8xf32> to vector<9x8xf32>
    %501 = vector.extract_strided_slice %496 {offsets = [2, 0, 0], sizes = [1, 9, 8], strides = [1, 1, 1]} : vector<4x9x8xf32> to vector<1x9x8xf32>
    %502 = vector.shape_cast %501 : vector<1x9x8xf32> to vector<9x8xf32>
    %503 = vector.extract_strided_slice %496 {offsets = [3, 0, 0], sizes = [1, 9, 8], strides = [1, 1, 1]} : vector<4x9x8xf32> to vector<1x9x8xf32>
    %504 = vector.shape_cast %503 : vector<1x9x8xf32> to vector<9x8xf32>
    %505 = tpu.concatenate %498, %500, %502, %504 in 1 : vector<9x8xf32>, vector<9x8xf32>, vector<9x8xf32>, vector<9x8xf32> -> vector<9x32xf32>
    %506 = arith.truncf %505 : vector<9x32xf32> to vector<9x32xbf16>
    %507 = vector.extract_strided_slice %341 {offsets = [128, 0], sizes = [32, 128], strides = [1, 1]} : vector<320x128xbf16> to vector<32x128xbf16>
    %cst_100 = arith.constant dense<0.000000e+00> : vector<9x128xf32>
    %508 = tpu.matmul %506, %507, %cst_100 {dimension_numbers = #tpu.dot_dimension_numbers<[1], [0], [0], [1], [0, 0, 1, 1], [], []>} : vector<9x32xbf16>, vector<32x128xbf16>, vector<9x128xf32> -> vector<9x128xf32>
    %509 = vector.extract_strided_slice %343 {offsets = [4, 0], sizes = [1, 128], strides = [1, 1]} : vector<13x128xf32> to vector<1x128xf32>
    %510 = vector.broadcast %509 : vector<1x128xf32> to vector<9x128xf32>
    %511 = arith.addf %508, %510 : vector<9x128xf32>
    %512 = vector.extract_strided_slice %511 {offsets = [0, 0], sizes = [9, 32], strides = [1, 1]} : vector<9x128xf32> to vector<9x32xf32>
    %513 = arith.addf %438, %512 : vector<9x32xf32>
    %514 = vector.extract_strided_slice %343 {offsets = [9, 0], sizes = [1, 32], strides = [1, 1]} : vector<13x128xf32> to vector<1x32xf32>
    %515 = vector.extract_strided_slice %343 {offsets = [10, 0], sizes = [1, 32], strides = [1, 1]} : vector<13x128xf32> to vector<1x32xf32>
    %cst_101 = arith.constant dense<0.000000e+00> : vector<9xf32>
    %516 = vector.multi_reduction <add>, %513, %cst_101 [1] : vector<9x32xf32> to vector<9xf32>
    %517 = vector.shape_cast %516 : vector<9xf32> to vector<9x1xf32>
    %cst_102 = arith.constant 3.200000e+01 : f32
    %518 = vector.broadcast %cst_102 : f32 to vector<9x1xf32>
    %519 = arith.divf %517, %518 : vector<9x1xf32>
    %520 = vector.broadcast %519 : vector<9x1xf32> to vector<9x32xf32>
    %521 = arith.subf %513, %520 : vector<9x32xf32>
    %522 = arith.mulf %521, %521 : vector<9x32xf32>
    %cst_103 = arith.constant dense<0.000000e+00> : vector<9xf32>
    %523 = vector.multi_reduction <add>, %522, %cst_103 [1] : vector<9x32xf32> to vector<9xf32>
    %524 = vector.shape_cast %523 : vector<9xf32> to vector<9x1xf32>
    %cst_104 = arith.constant 3.200000e+01 : f32
    %525 = vector.broadcast %cst_104 : f32 to vector<9x1xf32>
    %526 = arith.divf %524, %525 : vector<9x1xf32>
    %cst_105 = arith.constant 9.99999974E-6 : f32
    %527 = vector.broadcast %cst_105 : f32 to vector<9x1xf32>
    %528 = arith.addf %526, %527 : vector<9x1xf32>
    %529 = math.rsqrt %528 : vector<9x1xf32>
    %530 = vector.broadcast %529 : vector<9x1xf32> to vector<9x32xf32>
    %531 = arith.mulf %521, %530 : vector<9x32xf32>
    %532 = vector.broadcast %514 : vector<1x32xf32> to vector<9x32xf32>
    %533 = arith.mulf %531, %532 : vector<9x32xf32>
    %534 = vector.broadcast %515 : vector<1x32xf32> to vector<9x32xf32>
    %535 = arith.addf %533, %534 : vector<9x32xf32>
    %536 = arith.truncf %535 : vector<9x32xf32> to vector<9x32xbf16>
    %537 = vector.extract_strided_slice %341 {offsets = [160, 0], sizes = [32, 128], strides = [1, 1]} : vector<320x128xbf16> to vector<32x128xbf16>
    %cst_106 = arith.constant dense<0.000000e+00> : vector<9x128xf32>
    %538 = tpu.matmul %536, %537, %cst_106 {dimension_numbers = #tpu.dot_dimension_numbers<[1], [0], [0], [1], [0, 0, 1, 1], [], []>} : vector<9x32xbf16>, vector<32x128xbf16>, vector<9x128xf32> -> vector<9x128xf32>
    %539 = vector.extract_strided_slice %343 {offsets = [5, 0], sizes = [1, 128], strides = [1, 1]} : vector<13x128xf32> to vector<1x128xf32>
    %540 = vector.broadcast %539 : vector<1x128xf32> to vector<9x128xf32>
    %541 = arith.addf %538, %540 : vector<9x128xf32>
    %cst_107 = arith.constant 0.000000e+00 : f32
    %542 = vector.broadcast %cst_107 : f32 to vector<9x128xf32>
    %543 = arith.maximumf %541, %542 : vector<9x128xf32>
    %544 = arith.truncf %543 : vector<9x128xf32> to vector<9x128xbf16>
    %545 = vector.extract_strided_slice %341 {offsets = [192, 0], sizes = [128, 128], strides = [1, 1]} : vector<320x128xbf16> to vector<128x128xbf16>
    %cst_108 = arith.constant dense<0.000000e+00> : vector<9x128xf32>
    %546 = tpu.matmul %544, %545, %cst_108 {dimension_numbers = #tpu.dot_dimension_numbers<[1], [0], [0], [1], [0, 0, 1, 1], [], []>} : vector<9x128xbf16>, vector<128x128xbf16>, vector<9x128xf32> -> vector<9x128xf32>
    %547 = vector.extract_strided_slice %343 {offsets = [6, 0], sizes = [1, 128], strides = [1, 1]} : vector<13x128xf32> to vector<1x128xf32>
    %548 = vector.broadcast %547 : vector<1x128xf32> to vector<9x128xf32>
    %549 = arith.addf %546, %548 : vector<9x128xf32>
    %550 = vector.extract_strided_slice %549 {offsets = [0, 0], sizes = [9, 32], strides = [1, 1]} : vector<9x128xf32> to vector<9x32xf32>
    %551 = arith.addf %535, %550 : vector<9x32xf32>
    %552 = vector.extract_strided_slice %343 {offsets = [11, 0], sizes = [1, 32], strides = [1, 1]} : vector<13x128xf32> to vector<1x32xf32>
    %553 = vector.extract_strided_slice %343 {offsets = [12, 0], sizes = [1, 32], strides = [1, 1]} : vector<13x128xf32> to vector<1x32xf32>
    %cst_109 = arith.constant dense<0.000000e+00> : vector<9xf32>
    %554 = vector.multi_reduction <add>, %551, %cst_109 [1] : vector<9x32xf32> to vector<9xf32>
    %555 = vector.shape_cast %554 : vector<9xf32> to vector<9x1xf32>
    %cst_110 = arith.constant 3.200000e+01 : f32
    %556 = vector.broadcast %cst_110 : f32 to vector<9x1xf32>
    %557 = arith.divf %555, %556 : vector<9x1xf32>
    %558 = vector.broadcast %557 : vector<9x1xf32> to vector<9x32xf32>
    %559 = arith.subf %551, %558 : vector<9x32xf32>
    %560 = arith.mulf %559, %559 : vector<9x32xf32>
    %cst_111 = arith.constant dense<0.000000e+00> : vector<9xf32>
    %561 = vector.multi_reduction <add>, %560, %cst_111 [1] : vector<9x32xf32> to vector<9xf32>
    %562 = vector.shape_cast %561 : vector<9xf32> to vector<9x1xf32>
    %cst_112 = arith.constant 3.200000e+01 : f32
    %563 = vector.broadcast %cst_112 : f32 to vector<9x1xf32>
    %564 = arith.divf %562, %563 : vector<9x1xf32>
    %cst_113 = arith.constant 9.99999974E-6 : f32
    %565 = vector.broadcast %cst_113 : f32 to vector<9x1xf32>
    %566 = arith.addf %564, %565 : vector<9x1xf32>
    %567 = math.rsqrt %566 : vector<9x1xf32>
    %568 = vector.broadcast %567 : vector<9x1xf32> to vector<9x32xf32>
    %569 = arith.mulf %559, %568 : vector<9x32xf32>
    %570 = vector.broadcast %552 : vector<1x32xf32> to vector<9x32xf32>
    %571 = arith.mulf %569, %570 : vector<9x32xf32>
    %572 = vector.broadcast %553 : vector<1x32xf32> to vector<9x32xf32>
    %573 = arith.addf %571, %572 : vector<9x32xf32>
    %c1_114 = arith.constant 1 : index
    %c0_115 = arith.constant 0 : index
    %c0_116 = arith.constant 0 : index
    %574 = vector.load %arg7[%c1_114, %c0_115, %c0_116] : memref<2x320x128xbf16, #tpu.memory_space<vmem>>, vector<1x320x128xbf16>
    %575 = vector.shape_cast %574 : vector<1x320x128xbf16> to vector<320x128xbf16>
    %c1_117 = arith.constant 1 : index
    %c0_118 = arith.constant 0 : index
    %c0_119 = arith.constant 0 : index
    %576 = vector.load %arg8[%c1_117, %c0_118, %c0_119] : memref<2x13x128xf32, #tpu.memory_space<vmem>>, vector<1x13x128xf32>
    %577 = vector.shape_cast %576 : vector<1x13x128xf32> to vector<13x128xf32>
    %578 = arith.truncf %573 : vector<9x32xf32> to vector<9x32xbf16>
    %579 = vector.extract_strided_slice %575 {offsets = [0, 0], sizes = [32, 128], strides = [1, 1]} : vector<320x128xbf16> to vector<32x128xbf16>
    %cst_120 = arith.constant dense<0.000000e+00> : vector<9x128xf32>
    %580 = tpu.matmul %578, %579, %cst_120 {dimension_numbers = #tpu.dot_dimension_numbers<[1], [0], [0], [1], [0, 0, 1, 1], [], []>} : vector<9x32xbf16>, vector<32x128xbf16>, vector<9x128xf32> -> vector<9x128xf32>
    %581 = vector.extract_strided_slice %577 {offsets = [0, 0], sizes = [1, 128], strides = [1, 1]} : vector<13x128xf32> to vector<1x128xf32>
    %582 = vector.broadcast %581 : vector<1x128xf32> to vector<9x128xf32>
    %583 = arith.addf %580, %582 : vector<9x128xf32>
    %584 = vector.extract_strided_slice %583 {offsets = [0, 0], sizes = [9, 32], strides = [1, 1]} : vector<9x128xf32> to vector<9x32xf32>
    %585 = vector.extract_strided_slice %583 {offsets = [0, 32], sizes = [9, 32], strides = [1, 1]} : vector<9x128xf32> to vector<9x32xf32>
    %586 = vector.extract_strided_slice %583 {offsets = [0, 64], sizes = [9, 32], strides = [1, 1]} : vector<9x128xf32> to vector<9x32xf32>
    %cst_121 = arith.constant 0.353553385 : f32
    %587 = vector.broadcast %cst_121 : f32 to vector<9x32xf32>
    %588 = arith.mulf %584, %587 : vector<9x32xf32>
    %589 = arith.truncf %588 : vector<9x32xf32> to vector<9x32xbf16>
    %590 = arith.truncf %585 : vector<9x32xf32> to vector<9x32xbf16>
    %591 = arith.truncf %586 : vector<9x32xf32> to vector<9x32xbf16>
    %592 = vector.extract_strided_slice %589 {offsets = [0, 0], sizes = [9, 8], strides = [1, 1]} : vector<9x32xbf16> to vector<9x8xbf16>
    %593 = vector.extract_strided_slice %589 {offsets = [0, 8], sizes = [9, 8], strides = [1, 1]} : vector<9x32xbf16> to vector<9x8xbf16>
    %594 = vector.extract_strided_slice %589 {offsets = [0, 16], sizes = [9, 8], strides = [1, 1]} : vector<9x32xbf16> to vector<9x8xbf16>
    %595 = vector.extract_strided_slice %589 {offsets = [0, 24], sizes = [9, 8], strides = [1, 1]} : vector<9x32xbf16> to vector<9x8xbf16>
    %596 = vector.shape_cast %592 : vector<9x8xbf16> to vector<1x9x8xbf16>
    %597 = vector.shape_cast %593 : vector<9x8xbf16> to vector<1x9x8xbf16>
    %598 = vector.shape_cast %594 : vector<9x8xbf16> to vector<1x9x8xbf16>
    %599 = vector.shape_cast %595 : vector<9x8xbf16> to vector<1x9x8xbf16>
    %600 = tpu.concatenate %596, %597, %598, %599 in 0 : vector<1x9x8xbf16>, vector<1x9x8xbf16>, vector<1x9x8xbf16>, vector<1x9x8xbf16> -> vector<4x9x8xbf16>
    %601 = vector.extract_strided_slice %590 {offsets = [0, 0], sizes = [9, 8], strides = [1, 1]} : vector<9x32xbf16> to vector<9x8xbf16>
    %602 = vector.extract_strided_slice %590 {offsets = [0, 8], sizes = [9, 8], strides = [1, 1]} : vector<9x32xbf16> to vector<9x8xbf16>
    %603 = vector.extract_strided_slice %590 {offsets = [0, 16], sizes = [9, 8], strides = [1, 1]} : vector<9x32xbf16> to vector<9x8xbf16>
    %604 = vector.extract_strided_slice %590 {offsets = [0, 24], sizes = [9, 8], strides = [1, 1]} : vector<9x32xbf16> to vector<9x8xbf16>
    %605 = vector.shape_cast %601 : vector<9x8xbf16> to vector<1x9x8xbf16>
    %606 = vector.shape_cast %602 : vector<9x8xbf16> to vector<1x9x8xbf16>
    %607 = vector.shape_cast %603 : vector<9x8xbf16> to vector<1x9x8xbf16>
    %608 = vector.shape_cast %604 : vector<9x8xbf16> to vector<1x9x8xbf16>
    %609 = tpu.concatenate %605, %606, %607, %608 in 0 : vector<1x9x8xbf16>, vector<1x9x8xbf16>, vector<1x9x8xbf16>, vector<1x9x8xbf16> -> vector<4x9x8xbf16>
    %610 = vector.extract_strided_slice %591 {offsets = [0, 0], sizes = [9, 8], strides = [1, 1]} : vector<9x32xbf16> to vector<9x8xbf16>
    %611 = vector.extract_strided_slice %591 {offsets = [0, 8], sizes = [9, 8], strides = [1, 1]} : vector<9x32xbf16> to vector<9x8xbf16>
    %612 = vector.extract_strided_slice %591 {offsets = [0, 16], sizes = [9, 8], strides = [1, 1]} : vector<9x32xbf16> to vector<9x8xbf16>
    %613 = vector.extract_strided_slice %591 {offsets = [0, 24], sizes = [9, 8], strides = [1, 1]} : vector<9x32xbf16> to vector<9x8xbf16>
    %614 = vector.shape_cast %610 : vector<9x8xbf16> to vector<1x9x8xbf16>
    %615 = vector.shape_cast %611 : vector<9x8xbf16> to vector<1x9x8xbf16>
    %616 = vector.shape_cast %612 : vector<9x8xbf16> to vector<1x9x8xbf16>
    %617 = vector.shape_cast %613 : vector<9x8xbf16> to vector<1x9x8xbf16>
    %618 = tpu.concatenate %614, %615, %616, %617 in 0 : vector<1x9x8xbf16>, vector<1x9x8xbf16>, vector<1x9x8xbf16>, vector<1x9x8xbf16> -> vector<4x9x8xbf16>
    "tpu.trace_start"() <{level = 10 : i32, message = "hqd,hkd->hqk"}> : () -> ()
    %cst_122 = arith.constant dense<0.000000e+00> : vector<4x9x9xf32>
    %619 = tpu.matmul %600, %609, %cst_122 {dimension_numbers = #tpu.dot_dimension_numbers<[2], [2], [1], [1], [0, 0, 0, 1, 1, 1], [0], [0]>} : vector<4x9x8xbf16>, vector<4x9x8xbf16>, vector<4x9x9xf32> -> vector<4x9x9xf32>
    "tpu.trace_stop"() : () -> ()
    %620 = vector.shape_cast %48 : vector<9x9xf32> to vector<1x9x9xf32>
    %621 = vector.broadcast %620 : vector<1x9x9xf32> to vector<4x9x9xf32>
    %622 = arith.addf %619, %621 : vector<4x9x9xf32>
    %cst_123 = arith.constant dense<0xFF800000> : vector<4x9xf32>
    %623 = vector.multi_reduction <maximumf>, %622, %cst_123 [2] : vector<4x9x9xf32> to vector<4x9xf32>
    %624 = vector.shape_cast %623 : vector<4x9xf32> to vector<4x9x1xf32>
    %625 = vector.broadcast %624 : vector<4x9x1xf32> to vector<4x9x9xf32>
    %626 = arith.subf %622, %625 : vector<4x9x9xf32>
    %627 = math.exp %626 : vector<4x9x9xf32>
    %cst_124 = arith.constant dense<0.000000e+00> : vector<4x9xf32>
    %628 = vector.multi_reduction <add>, %627, %cst_124 [2] : vector<4x9x9xf32> to vector<4x9xf32>
    %629 = vector.shape_cast %628 : vector<4x9xf32> to vector<4x9x1xf32>
    %630 = vector.broadcast %629 : vector<4x9x1xf32> to vector<4x9x9xf32>
    %631 = arith.divf %627, %630 : vector<4x9x9xf32>
    %632 = arith.truncf %631 : vector<4x9x9xf32> to vector<4x9x9xbf16>
    "tpu.trace_start"() <{level = 10 : i32, message = "hqk,hkd->hqd"}> : () -> ()
    %cst_125 = arith.constant dense<0.000000e+00> : vector<4x9x8xf32>
    %633 = tpu.matmul %632, %618, %cst_125 {dimension_numbers = #tpu.dot_dimension_numbers<[2], [1], [1], [2], [0, 0, 0, 1, 1, 2], [0], [0]>} : vector<4x9x9xbf16>, vector<4x9x8xbf16>, vector<4x9x8xf32> -> vector<4x9x8xf32>
    "tpu.trace_stop"() : () -> ()
    %634 = vector.extract_strided_slice %633 {offsets = [0, 0, 0], sizes = [1, 9, 8], strides = [1, 1, 1]} : vector<4x9x8xf32> to vector<1x9x8xf32>
    %635 = vector.shape_cast %634 : vector<1x9x8xf32> to vector<9x8xf32>
    %636 = vector.extract_strided_slice %633 {offsets = [1, 0, 0], sizes = [1, 9, 8], strides = [1, 1, 1]} : vector<4x9x8xf32> to vector<1x9x8xf32>
    %637 = vector.shape_cast %636 : vector<1x9x8xf32> to vector<9x8xf32>
    %638 = vector.extract_strided_slice %633 {offsets = [2, 0, 0], sizes = [1, 9, 8], strides = [1, 1, 1]} : vector<4x9x8xf32> to vector<1x9x8xf32>
    %639 = vector.shape_cast %638 : vector<1x9x8xf32> to vector<9x8xf32>
    %640 = vector.extract_strided_slice %633 {offsets = [3, 0, 0], sizes = [1, 9, 8], strides = [1, 1, 1]} : vector<4x9x8xf32> to vector<1x9x8xf32>
    %641 = vector.shape_cast %640 : vector<1x9x8xf32> to vector<9x8xf32>
    %642 = tpu.concatenate %635, %637, %639, %641 in 1 : vector<9x8xf32>, vector<9x8xf32>, vector<9x8xf32>, vector<9x8xf32> -> vector<9x32xf32>
    %643 = arith.truncf %642 : vector<9x32xf32> to vector<9x32xbf16>
    %644 = vector.extract_strided_slice %575 {offsets = [32, 0], sizes = [32, 128], strides = [1, 1]} : vector<320x128xbf16> to vector<32x128xbf16>
    %cst_126 = arith.constant dense<0.000000e+00> : vector<9x128xf32>
    %645 = tpu.matmul %643, %644, %cst_126 {dimension_numbers = #tpu.dot_dimension_numbers<[1], [0], [0], [1], [0, 0, 1, 1], [], []>} : vector<9x32xbf16>, vector<32x128xbf16>, vector<9x128xf32> -> vector<9x128xf32>
    %646 = vector.extract_strided_slice %577 {offsets = [1, 0], sizes = [1, 128], strides = [1, 1]} : vector<13x128xf32> to vector<1x128xf32>
    %647 = vector.broadcast %646 : vector<1x128xf32> to vector<9x128xf32>
    %648 = arith.addf %645, %647 : vector<9x128xf32>
    %649 = vector.extract_strided_slice %648 {offsets = [0, 0], sizes = [9, 32], strides = [1, 1]} : vector<9x128xf32> to vector<9x32xf32>
    %650 = arith.addf %573, %649 : vector<9x32xf32>
    %651 = vector.extract_strided_slice %577 {offsets = [7, 0], sizes = [1, 32], strides = [1, 1]} : vector<13x128xf32> to vector<1x32xf32>
    %652 = vector.extract_strided_slice %577 {offsets = [8, 0], sizes = [1, 32], strides = [1, 1]} : vector<13x128xf32> to vector<1x32xf32>
    %cst_127 = arith.constant dense<0.000000e+00> : vector<9xf32>
    %653 = vector.multi_reduction <add>, %650, %cst_127 [1] : vector<9x32xf32> to vector<9xf32>
    %654 = vector.shape_cast %653 : vector<9xf32> to vector<9x1xf32>
    %cst_128 = arith.constant 3.200000e+01 : f32
    %655 = vector.broadcast %cst_128 : f32 to vector<9x1xf32>
    %656 = arith.divf %654, %655 : vector<9x1xf32>
    %657 = vector.broadcast %656 : vector<9x1xf32> to vector<9x32xf32>
    %658 = arith.subf %650, %657 : vector<9x32xf32>
    %659 = arith.mulf %658, %658 : vector<9x32xf32>
    %cst_129 = arith.constant dense<0.000000e+00> : vector<9xf32>
    %660 = vector.multi_reduction <add>, %659, %cst_129 [1] : vector<9x32xf32> to vector<9xf32>
    %661 = vector.shape_cast %660 : vector<9xf32> to vector<9x1xf32>
    %cst_130 = arith.constant 3.200000e+01 : f32
    %662 = vector.broadcast %cst_130 : f32 to vector<9x1xf32>
    %663 = arith.divf %661, %662 : vector<9x1xf32>
    %cst_131 = arith.constant 9.99999974E-6 : f32
    %664 = vector.broadcast %cst_131 : f32 to vector<9x1xf32>
    %665 = arith.addf %663, %664 : vector<9x1xf32>
    %666 = math.rsqrt %665 : vector<9x1xf32>
    %667 = vector.broadcast %666 : vector<9x1xf32> to vector<9x32xf32>
    %668 = arith.mulf %658, %667 : vector<9x32xf32>
    %669 = vector.broadcast %651 : vector<1x32xf32> to vector<9x32xf32>
    %670 = arith.mulf %668, %669 : vector<9x32xf32>
    %671 = vector.broadcast %652 : vector<1x32xf32> to vector<9x32xf32>
    %672 = arith.addf %670, %671 : vector<9x32xf32>
    %673 = arith.truncf %672 : vector<9x32xf32> to vector<9x32xbf16>
    %674 = vector.extract_strided_slice %575 {offsets = [64, 0], sizes = [32, 128], strides = [1, 1]} : vector<320x128xbf16> to vector<32x128xbf16>
    %cst_132 = arith.constant dense<0.000000e+00> : vector<9x128xf32>
    %675 = tpu.matmul %673, %674, %cst_132 {dimension_numbers = #tpu.dot_dimension_numbers<[1], [0], [0], [1], [0, 0, 1, 1], [], []>} : vector<9x32xbf16>, vector<32x128xbf16>, vector<9x128xf32> -> vector<9x128xf32>
    %676 = vector.extract_strided_slice %577 {offsets = [2, 0], sizes = [1, 128], strides = [1, 1]} : vector<13x128xf32> to vector<1x128xf32>
    %677 = vector.broadcast %676 : vector<1x128xf32> to vector<9x128xf32>
    %678 = arith.addf %675, %677 : vector<9x128xf32>
    %679 = vector.extract_strided_slice %575 {offsets = [96, 0], sizes = [32, 128], strides = [1, 1]} : vector<320x128xbf16> to vector<32x128xbf16>
    %cst_133 = arith.constant dense<0.000000e+00> : vector<9x128xf32>
    %680 = tpu.matmul %339, %679, %cst_133 {dimension_numbers = #tpu.dot_dimension_numbers<[1], [0], [0], [1], [0, 0, 1, 1], [], []>} : vector<9x32xbf16>, vector<32x128xbf16>, vector<9x128xf32> -> vector<9x128xf32>
    %681 = vector.extract_strided_slice %577 {offsets = [3, 0], sizes = [1, 128], strides = [1, 1]} : vector<13x128xf32> to vector<1x128xf32>
    %682 = vector.broadcast %681 : vector<1x128xf32> to vector<9x128xf32>
    %683 = arith.addf %680, %682 : vector<9x128xf32>
    %684 = vector.extract_strided_slice %678 {offsets = [0, 0], sizes = [9, 32], strides = [1, 1]} : vector<9x128xf32> to vector<9x32xf32>
    %685 = vector.extract_strided_slice %683 {offsets = [0, 0], sizes = [9, 32], strides = [1, 1]} : vector<9x128xf32> to vector<9x32xf32>
    %686 = vector.extract_strided_slice %683 {offsets = [0, 32], sizes = [9, 32], strides = [1, 1]} : vector<9x128xf32> to vector<9x32xf32>
    %cst_134 = arith.constant 0.353553385 : f32
    %687 = vector.broadcast %cst_134 : f32 to vector<9x32xf32>
    %688 = arith.mulf %684, %687 : vector<9x32xf32>
    %689 = arith.truncf %688 : vector<9x32xf32> to vector<9x32xbf16>
    %690 = arith.truncf %685 : vector<9x32xf32> to vector<9x32xbf16>
    %691 = arith.truncf %686 : vector<9x32xf32> to vector<9x32xbf16>
    %692 = vector.extract_strided_slice %689 {offsets = [0, 0], sizes = [9, 8], strides = [1, 1]} : vector<9x32xbf16> to vector<9x8xbf16>
    %693 = vector.extract_strided_slice %689 {offsets = [0, 8], sizes = [9, 8], strides = [1, 1]} : vector<9x32xbf16> to vector<9x8xbf16>
    %694 = vector.extract_strided_slice %689 {offsets = [0, 16], sizes = [9, 8], strides = [1, 1]} : vector<9x32xbf16> to vector<9x8xbf16>
    %695 = vector.extract_strided_slice %689 {offsets = [0, 24], sizes = [9, 8], strides = [1, 1]} : vector<9x32xbf16> to vector<9x8xbf16>
    %696 = vector.shape_cast %692 : vector<9x8xbf16> to vector<1x9x8xbf16>
    %697 = vector.shape_cast %693 : vector<9x8xbf16> to vector<1x9x8xbf16>
    %698 = vector.shape_cast %694 : vector<9x8xbf16> to vector<1x9x8xbf16>
    %699 = vector.shape_cast %695 : vector<9x8xbf16> to vector<1x9x8xbf16>
    %700 = tpu.concatenate %696, %697, %698, %699 in 0 : vector<1x9x8xbf16>, vector<1x9x8xbf16>, vector<1x9x8xbf16>, vector<1x9x8xbf16> -> vector<4x9x8xbf16>
    %701 = vector.extract_strided_slice %690 {offsets = [0, 0], sizes = [9, 8], strides = [1, 1]} : vector<9x32xbf16> to vector<9x8xbf16>
    %702 = vector.extract_strided_slice %690 {offsets = [0, 8], sizes = [9, 8], strides = [1, 1]} : vector<9x32xbf16> to vector<9x8xbf16>
    %703 = vector.extract_strided_slice %690 {offsets = [0, 16], sizes = [9, 8], strides = [1, 1]} : vector<9x32xbf16> to vector<9x8xbf16>
    %704 = vector.extract_strided_slice %690 {offsets = [0, 24], sizes = [9, 8], strides = [1, 1]} : vector<9x32xbf16> to vector<9x8xbf16>
    %705 = vector.shape_cast %701 : vector<9x8xbf16> to vector<1x9x8xbf16>
    %706 = vector.shape_cast %702 : vector<9x8xbf16> to vector<1x9x8xbf16>
    %707 = vector.shape_cast %703 : vector<9x8xbf16> to vector<1x9x8xbf16>
    %708 = vector.shape_cast %704 : vector<9x8xbf16> to vector<1x9x8xbf16>
    %709 = tpu.concatenate %705, %706, %707, %708 in 0 : vector<1x9x8xbf16>, vector<1x9x8xbf16>, vector<1x9x8xbf16>, vector<1x9x8xbf16> -> vector<4x9x8xbf16>
    %710 = vector.extract_strided_slice %691 {offsets = [0, 0], sizes = [9, 8], strides = [1, 1]} : vector<9x32xbf16> to vector<9x8xbf16>
    %711 = vector.extract_strided_slice %691 {offsets = [0, 8], sizes = [9, 8], strides = [1, 1]} : vector<9x32xbf16> to vector<9x8xbf16>
    %712 = vector.extract_strided_slice %691 {offsets = [0, 16], sizes = [9, 8], strides = [1, 1]} : vector<9x32xbf16> to vector<9x8xbf16>
    %713 = vector.extract_strided_slice %691 {offsets = [0, 24], sizes = [9, 8], strides = [1, 1]} : vector<9x32xbf16> to vector<9x8xbf16>
    %714 = vector.shape_cast %710 : vector<9x8xbf16> to vector<1x9x8xbf16>
    %715 = vector.shape_cast %711 : vector<9x8xbf16> to vector<1x9x8xbf16>
    %716 = vector.shape_cast %712 : vector<9x8xbf16> to vector<1x9x8xbf16>
    %717 = vector.shape_cast %713 : vector<9x8xbf16> to vector<1x9x8xbf16>
    %718 = tpu.concatenate %714, %715, %716, %717 in 0 : vector<1x9x8xbf16>, vector<1x9x8xbf16>, vector<1x9x8xbf16>, vector<1x9x8xbf16> -> vector<4x9x8xbf16>
    "tpu.trace_start"() <{level = 10 : i32, message = "hqd,hkd->hqk"}> : () -> ()
    %cst_135 = arith.constant dense<0.000000e+00> : vector<4x9x9xf32>
    %719 = tpu.matmul %700, %709, %cst_135 {dimension_numbers = #tpu.dot_dimension_numbers<[2], [2], [1], [1], [0, 0, 0, 1, 1, 1], [0], [0]>} : vector<4x9x8xbf16>, vector<4x9x8xbf16>, vector<4x9x9xf32> -> vector<4x9x9xf32>
    "tpu.trace_stop"() : () -> ()
    %cst_136 = arith.constant dense<0xFF800000> : vector<4x9xf32>
    %720 = vector.multi_reduction <maximumf>, %719, %cst_136 [2] : vector<4x9x9xf32> to vector<4x9xf32>
    %721 = vector.shape_cast %720 : vector<4x9xf32> to vector<4x9x1xf32>
    %722 = vector.broadcast %721 : vector<4x9x1xf32> to vector<4x9x9xf32>
    %723 = arith.subf %719, %722 : vector<4x9x9xf32>
    %724 = math.exp %723 : vector<4x9x9xf32>
    %cst_137 = arith.constant dense<0.000000e+00> : vector<4x9xf32>
    %725 = vector.multi_reduction <add>, %724, %cst_137 [2] : vector<4x9x9xf32> to vector<4x9xf32>
    %726 = vector.shape_cast %725 : vector<4x9xf32> to vector<4x9x1xf32>
    %727 = vector.broadcast %726 : vector<4x9x1xf32> to vector<4x9x9xf32>
    %728 = arith.divf %724, %727 : vector<4x9x9xf32>
    %729 = arith.truncf %728 : vector<4x9x9xf32> to vector<4x9x9xbf16>
    "tpu.trace_start"() <{level = 10 : i32, message = "hqk,hkd->hqd"}> : () -> ()
    %cst_138 = arith.constant dense<0.000000e+00> : vector<4x9x8xf32>
    %730 = tpu.matmul %729, %718, %cst_138 {dimension_numbers = #tpu.dot_dimension_numbers<[2], [1], [1], [2], [0, 0, 0, 1, 1, 2], [0], [0]>} : vector<4x9x9xbf16>, vector<4x9x8xbf16>, vector<4x9x8xf32> -> vector<4x9x8xf32>
    "tpu.trace_stop"() : () -> ()
    %731 = vector.extract_strided_slice %730 {offsets = [0, 0, 0], sizes = [1, 9, 8], strides = [1, 1, 1]} : vector<4x9x8xf32> to vector<1x9x8xf32>
    %732 = vector.shape_cast %731 : vector<1x9x8xf32> to vector<9x8xf32>
    %733 = vector.extract_strided_slice %730 {offsets = [1, 0, 0], sizes = [1, 9, 8], strides = [1, 1, 1]} : vector<4x9x8xf32> to vector<1x9x8xf32>
    %734 = vector.shape_cast %733 : vector<1x9x8xf32> to vector<9x8xf32>
    %735 = vector.extract_strided_slice %730 {offsets = [2, 0, 0], sizes = [1, 9, 8], strides = [1, 1, 1]} : vector<4x9x8xf32> to vector<1x9x8xf32>
    %736 = vector.shape_cast %735 : vector<1x9x8xf32> to vector<9x8xf32>
    %737 = vector.extract_strided_slice %730 {offsets = [3, 0, 0], sizes = [1, 9, 8], strides = [1, 1, 1]} : vector<4x9x8xf32> to vector<1x9x8xf32>
    %738 = vector.shape_cast %737 : vector<1x9x8xf32> to vector<9x8xf32>
    %739 = tpu.concatenate %732, %734, %736, %738 in 1 : vector<9x8xf32>, vector<9x8xf32>, vector<9x8xf32>, vector<9x8xf32> -> vector<9x32xf32>
    %740 = arith.truncf %739 : vector<9x32xf32> to vector<9x32xbf16>
    %741 = vector.extract_strided_slice %575 {offsets = [128, 0], sizes = [32, 128], strides = [1, 1]} : vector<320x128xbf16> to vector<32x128xbf16>
    %cst_139 = arith.constant dense<0.000000e+00> : vector<9x128xf32>
    %742 = tpu.matmul %740, %741, %cst_139 {dimension_numbers = #tpu.dot_dimension_numbers<[1], [0], [0], [1], [0, 0, 1, 1], [], []>} : vector<9x32xbf16>, vector<32x128xbf16>, vector<9x128xf32> -> vector<9x128xf32>
    %743 = vector.extract_strided_slice %577 {offsets = [4, 0], sizes = [1, 128], strides = [1, 1]} : vector<13x128xf32> to vector<1x128xf32>
    %744 = vector.broadcast %743 : vector<1x128xf32> to vector<9x128xf32>
    %745 = arith.addf %742, %744 : vector<9x128xf32>
    %746 = vector.extract_strided_slice %745 {offsets = [0, 0], sizes = [9, 32], strides = [1, 1]} : vector<9x128xf32> to vector<9x32xf32>
    %747 = arith.addf %672, %746 : vector<9x32xf32>
    %748 = vector.extract_strided_slice %577 {offsets = [9, 0], sizes = [1, 32], strides = [1, 1]} : vector<13x128xf32> to vector<1x32xf32>
    %749 = vector.extract_strided_slice %577 {offsets = [10, 0], sizes = [1, 32], strides = [1, 1]} : vector<13x128xf32> to vector<1x32xf32>
    %cst_140 = arith.constant dense<0.000000e+00> : vector<9xf32>
    %750 = vector.multi_reduction <add>, %747, %cst_140 [1] : vector<9x32xf32> to vector<9xf32>
    %751 = vector.shape_cast %750 : vector<9xf32> to vector<9x1xf32>
    %cst_141 = arith.constant 3.200000e+01 : f32
    %752 = vector.broadcast %cst_141 : f32 to vector<9x1xf32>
    %753 = arith.divf %751, %752 : vector<9x1xf32>
    %754 = vector.broadcast %753 : vector<9x1xf32> to vector<9x32xf32>
    %755 = arith.subf %747, %754 : vector<9x32xf32>
    %756 = arith.mulf %755, %755 : vector<9x32xf32>
    %cst_142 = arith.constant dense<0.000000e+00> : vector<9xf32>
    %757 = vector.multi_reduction <add>, %756, %cst_142 [1] : vector<9x32xf32> to vector<9xf32>
    %758 = vector.shape_cast %757 : vector<9xf32> to vector<9x1xf32>
    %cst_143 = arith.constant 3.200000e+01 : f32
    %759 = vector.broadcast %cst_143 : f32 to vector<9x1xf32>
    %760 = arith.divf %758, %759 : vector<9x1xf32>
    %cst_144 = arith.constant 9.99999974E-6 : f32
    %761 = vector.broadcast %cst_144 : f32 to vector<9x1xf32>
    %762 = arith.addf %760, %761 : vector<9x1xf32>
    %763 = math.rsqrt %762 : vector<9x1xf32>
    %764 = vector.broadcast %763 : vector<9x1xf32> to vector<9x32xf32>
    %765 = arith.mulf %755, %764 : vector<9x32xf32>
    %766 = vector.broadcast %748 : vector<1x32xf32> to vector<9x32xf32>
    %767 = arith.mulf %765, %766 : vector<9x32xf32>
    %768 = vector.broadcast %749 : vector<1x32xf32> to vector<9x32xf32>
    %769 = arith.addf %767, %768 : vector<9x32xf32>
    %770 = arith.truncf %769 : vector<9x32xf32> to vector<9x32xbf16>
    %771 = vector.extract_strided_slice %575 {offsets = [160, 0], sizes = [32, 128], strides = [1, 1]} : vector<320x128xbf16> to vector<32x128xbf16>
    %cst_145 = arith.constant dense<0.000000e+00> : vector<9x128xf32>
    %772 = tpu.matmul %770, %771, %cst_145 {dimension_numbers = #tpu.dot_dimension_numbers<[1], [0], [0], [1], [0, 0, 1, 1], [], []>} : vector<9x32xbf16>, vector<32x128xbf16>, vector<9x128xf32> -> vector<9x128xf32>
    %773 = vector.extract_strided_slice %577 {offsets = [5, 0], sizes = [1, 128], strides = [1, 1]} : vector<13x128xf32> to vector<1x128xf32>
    %774 = vector.broadcast %773 : vector<1x128xf32> to vector<9x128xf32>
    %775 = arith.addf %772, %774 : vector<9x128xf32>
    %cst_146 = arith.constant 0.000000e+00 : f32
    %776 = vector.broadcast %cst_146 : f32 to vector<9x128xf32>
    %777 = arith.maximumf %775, %776 : vector<9x128xf32>
    %778 = arith.truncf %777 : vector<9x128xf32> to vector<9x128xbf16>
    %779 = vector.extract_strided_slice %575 {offsets = [192, 0], sizes = [128, 128], strides = [1, 1]} : vector<320x128xbf16> to vector<128x128xbf16>
    %cst_147 = arith.constant dense<0.000000e+00> : vector<9x128xf32>
    %780 = tpu.matmul %778, %779, %cst_147 {dimension_numbers = #tpu.dot_dimension_numbers<[1], [0], [0], [1], [0, 0, 1, 1], [], []>} : vector<9x128xbf16>, vector<128x128xbf16>, vector<9x128xf32> -> vector<9x128xf32>
    %781 = vector.extract_strided_slice %577 {offsets = [6, 0], sizes = [1, 128], strides = [1, 1]} : vector<13x128xf32> to vector<1x128xf32>
    %782 = vector.broadcast %781 : vector<1x128xf32> to vector<9x128xf32>
    %783 = arith.addf %780, %782 : vector<9x128xf32>
    %784 = vector.extract_strided_slice %783 {offsets = [0, 0], sizes = [9, 32], strides = [1, 1]} : vector<9x128xf32> to vector<9x32xf32>
    %785 = arith.addf %769, %784 : vector<9x32xf32>
    %786 = vector.extract_strided_slice %577 {offsets = [11, 0], sizes = [1, 32], strides = [1, 1]} : vector<13x128xf32> to vector<1x32xf32>
    %787 = vector.extract_strided_slice %577 {offsets = [12, 0], sizes = [1, 32], strides = [1, 1]} : vector<13x128xf32> to vector<1x32xf32>
    %cst_148 = arith.constant dense<0.000000e+00> : vector<9xf32>
    %788 = vector.multi_reduction <add>, %785, %cst_148 [1] : vector<9x32xf32> to vector<9xf32>
    %789 = vector.shape_cast %788 : vector<9xf32> to vector<9x1xf32>
    %cst_149 = arith.constant 3.200000e+01 : f32
    %790 = vector.broadcast %cst_149 : f32 to vector<9x1xf32>
    %791 = arith.divf %789, %790 : vector<9x1xf32>
    %792 = vector.broadcast %791 : vector<9x1xf32> to vector<9x32xf32>
    %793 = arith.subf %785, %792 : vector<9x32xf32>
    %794 = arith.mulf %793, %793 : vector<9x32xf32>
    %cst_150 = arith.constant dense<0.000000e+00> : vector<9xf32>
    %795 = vector.multi_reduction <add>, %794, %cst_150 [1] : vector<9x32xf32> to vector<9xf32>
    %796 = vector.shape_cast %795 : vector<9xf32> to vector<9x1xf32>
    %cst_151 = arith.constant 3.200000e+01 : f32
    %797 = vector.broadcast %cst_151 : f32 to vector<9x1xf32>
    %798 = arith.divf %796, %797 : vector<9x1xf32>
    %cst_152 = arith.constant 9.99999974E-6 : f32
    %799 = vector.broadcast %cst_152 : f32 to vector<9x1xf32>
    %800 = arith.addf %798, %799 : vector<9x1xf32>
    %801 = math.rsqrt %800 : vector<9x1xf32>
    %802 = vector.broadcast %801 : vector<9x1xf32> to vector<9x32xf32>
    %803 = arith.mulf %793, %802 : vector<9x32xf32>
    %804 = vector.broadcast %786 : vector<1x32xf32> to vector<9x32xf32>
    %805 = arith.mulf %803, %804 : vector<9x32xf32>
    %806 = vector.broadcast %787 : vector<1x32xf32> to vector<9x32xf32>
    %807 = arith.addf %805, %806 : vector<9x32xf32>
    %808 = vector.extract_strided_slice %0 {offsets = [70, 0], sizes = [1, 32], strides = [1, 1]} : vector<77x128xf32> to vector<1x32xf32>
    %809 = vector.extract_strided_slice %0 {offsets = [71, 0], sizes = [1, 32], strides = [1, 1]} : vector<77x128xf32> to vector<1x32xf32>
    %cst_153 = arith.constant dense<0.000000e+00> : vector<9xf32>
    %810 = vector.multi_reduction <add>, %807, %cst_153 [1] : vector<9x32xf32> to vector<9xf32>
    %811 = vector.shape_cast %810 : vector<9xf32> to vector<9x1xf32>
    %cst_154 = arith.constant 3.200000e+01 : f32
    %812 = vector.broadcast %cst_154 : f32 to vector<9x1xf32>
    %813 = arith.divf %811, %812 : vector<9x1xf32>
    %814 = vector.broadcast %813 : vector<9x1xf32> to vector<9x32xf32>
    %815 = arith.subf %807, %814 : vector<9x32xf32>
    %816 = arith.mulf %815, %815 : vector<9x32xf32>
    %cst_155 = arith.constant dense<0.000000e+00> : vector<9xf32>
    %817 = vector.multi_reduction <add>, %816, %cst_155 [1] : vector<9x32xf32> to vector<9xf32>
    %818 = vector.shape_cast %817 : vector<9xf32> to vector<9x1xf32>
    %cst_156 = arith.constant 3.200000e+01 : f32
    %819 = vector.broadcast %cst_156 : f32 to vector<9x1xf32>
    %820 = arith.divf %818, %819 : vector<9x1xf32>
    %cst_157 = arith.constant 9.99999974E-6 : f32
    %821 = vector.broadcast %cst_157 : f32 to vector<9x1xf32>
    %822 = arith.addf %820, %821 : vector<9x1xf32>
    %823 = math.rsqrt %822 : vector<9x1xf32>
    %824 = vector.broadcast %823 : vector<9x1xf32> to vector<9x32xf32>
    %825 = arith.mulf %815, %824 : vector<9x32xf32>
    %826 = vector.broadcast %808 : vector<1x32xf32> to vector<9x32xf32>
    %827 = arith.mulf %825, %826 : vector<9x32xf32>
    %828 = vector.broadcast %809 : vector<1x32xf32> to vector<9x32xf32>
    %829 = arith.addf %827, %828 : vector<9x32xf32>
    %830 = vector.extract_strided_slice %0 {offsets = [0, 0], sizes = [32, 128], strides = [1, 1]} : vector<77x128xf32> to vector<32x128xf32>
    %cst_158 = arith.constant dense<0.000000e+00> : vector<9x128xf32>
    %831 = tpu.matmul %829, %830, %cst_158 {dimension_numbers = #tpu.dot_dimension_numbers<[1], [0], [0], [1], [0, 0, 1, 1], [], []>} : vector<9x32xf32>, vector<32x128xf32>, vector<9x128xf32> -> vector<9x128xf32>
    %832 = vector.extract_strided_slice %0 {offsets = [72, 0], sizes = [1, 128], strides = [1, 1]} : vector<77x128xf32> to vector<1x128xf32>
    %833 = vector.broadcast %832 : vector<1x128xf32> to vector<9x128xf32>
    %834 = arith.addf %831, %833 : vector<9x128xf32>
    %c0_159 = arith.constant 0 : index
    %c0_160 = arith.constant 0 : index
    %c0_161 = arith.constant 0 : index
    %835 = vector.load %arg10[%c0_159, %c0_160, %c0_161] : memref<1x9x128xf32, #tpu.memory_space<vmem>>, vector<1x9x128xf32>
    %836 = vector.shape_cast %835 : vector<1x9x128xf32> to vector<9x128xf32>
    %837 = vector.shape_cast %834 : vector<9x128xf32> to vector<1x9x128xf32>
    tpu.vector_store %arg10[%c0_159, %c0_160, %c0_161], %837 {strides = array<i32>} : memref<1x9x128xf32, #tpu.memory_space<vmem>>, vector<1x9x128xf32>,
    return
  }
  func.func @transform_0(%arg0: i32) -> (i32, i32, i32) {
    %c0_i32 = arith.constant 0 : i32
    %c0_i32_0 = arith.constant 0 : i32
    %c0_i32_1 = arith.constant 0 : i32
    return %arg0, %c0_i32, %c0_i32_0 : i32, i32, i32
  }
  func.func @transform_1(%arg0: i32) -> (i32, i32, i32) {
    %c0_i32 = arith.constant 0 : i32
    %c0_i32_0 = arith.constant 0 : i32
    %c0_i32_1 = arith.constant 0 : i32
    return %arg0, %c0_i32, %c0_i32_0 : i32, i32, i32
  }
  func.func @transform_2(%arg0: i32) -> (i32, i32, i32) {
    %c0_i32 = arith.constant 0 : i32
    %c0_i32_0 = arith.constant 0 : i32
    %c0_i32_1 = arith.constant 0 : i32
    return %arg0, %c0_i32, %c0_i32_0 : i32, i32, i32
  }
  func.func @transform_3(%arg0: i32) -> (i32, i32, i32) {
    %c0_i32 = arith.constant 0 : i32
    %c0_i32_0 = arith.constant 0 : i32
    %c0_i32_1 = arith.constant 0 : i32
    return %arg0, %c0_i32, %c0_i32_0 : i32, i32, i32
  }
  func.func @transform_4(%arg0: i32) -> (i32, i32, i32) {
    %c0_i32 = arith.constant 0 : i32
    %c0_i32_0 = arith.constant 0 : i32
    %c0_i32_1 = arith.constant 0 : i32
    %c0_i32_2 = arith.constant 0 : i32
    return %c0_i32, %c0_i32_0, %c0_i32_1 : i32, i32, i32
  }
  func.func @transform_5(%arg0: i32) -> (i32, i32, i32) {
    %c0_i32 = arith.constant 0 : i32
    %c0_i32_0 = arith.constant 0 : i32
    %c0_i32_1 = arith.constant 0 : i32
    %c0_i32_2 = arith.constant 0 : i32
    return %c0_i32, %c0_i32_0, %c0_i32_1 : i32, i32, i32
  }
  func.func @transform_6(%arg0: i32) -> (i32, i32, i32) {
    %c0_i32 = arith.constant 0 : i32
    %c0_i32_0 = arith.constant 0 : i32
    %c0_i32_1 = arith.constant 0 : i32
    %c0_i32_2 = arith.constant 0 : i32
    return %c0_i32, %c0_i32_0, %c0_i32_1 : i32, i32, i32
  }
  func.func @transform_7(%arg0: i32) -> (i32, i32, i32) {
    %c0_i32 = arith.constant 0 : i32
    %c0_i32_0 = arith.constant 0 : i32
    %c0_i32_1 = arith.constant 0 : i32
    %c0_i32_2 = arith.constant 0 : i32
    return %c0_i32, %c0_i32_0, %c0_i32_1 : i32, i32, i32
  }
  func.func @transform_8(%arg0: i32) -> (i32, i32) {
    %c0_i32 = arith.constant 0 : i32
    %c0_i32_0 = arith.constant 0 : i32
    %c0_i32_1 = arith.constant 0 : i32
    return %c0_i32, %c0_i32_0 : i32, i32
  }
  func.func @transform_9(%arg0: i32) -> (i32, i32, i32) {
    %c0_i32 = arith.constant 0 : i32
    %c0_i32_0 = arith.constant 0 : i32
    %c0_i32_1 = arith.constant 0 : i32
    return %arg0, %c0_i32, %c0_i32_0 : i32, i32, i32
  }
}

</mosaic_0001>

<llo_original>
// kernel: transformer_generator_forward.1
$region0: #{transformer_generator_forward.1}
  #allocation0 [shape = 'u32[]', space=smem, size = 0x4, offset = 0x4, fixed_abs, tag = 'smem constant byte address 0x4 - core index']
  #allocation1 [shape = 'u32[144,128]{1,0:T(1,128)}', space=vmem, size = 0x12000, scoped, tag = 'internal scratch']
  %s0 = inlined_call_operand.vmem [shape: f32[2,8,32], index: 0, kind: input, shape index: {}]
  %s1 = inlined_call_operand.vmem [shape: f32[2,8,3], index: 1, kind: input, shape index: {}]
  %s2 = inlined_call_operand.vmem [shape: f32[2,8,4], index: 2, kind: input, shape index: {}]
  %s3 = inlined_call_operand.vmem [shape: f32[2,1,32], index: 3, kind: input, shape index: {}]
  %s4 = inlined_call_operand.hbm [shape: bf16[2,224,128], index: 4, kind: input, shape index: {}]
  %s5 = inlined_call_operand.vmem [shape: f32[2,8,128], index: 5, kind: input, shape index: {}]
  %s6 = inlined_call_operand.vmem [shape: bf16[2,320,128], index: 6, kind: input, shape index: {}]
  %s7 = inlined_call_operand.vmem [shape: f32[2,13,128], index: 7, kind: input, shape index: {}]
  %s8 = inlined_call_operand.hbm [shape: f32[77,128], index: 8, kind: input, shape index: {}]
  %s9 = inlined_call_operand.vmem [shape: f32[2,9,128], index: 9, kind: output, shape index: {}]
  %s10 = sld [smem:[#allocation0]]
  $region77: #{transformer_generator_forward.1} parent=0
    _
  %s12 = ssub.s32 1, %s10
  %s13 = scalar_select 0, %s12, %s10
  $region1: #{transformer_generator_forward.1} parent=0
    #allocation2 [shape = 'u8[114688]{0}', space=vmem, size = 0x1c000, scoped, tag = 'input window, operand 4, single buffered']
    #allocation3 [shape = 's32[2]{0}', space=sflag, size = 0x8, scoped, tag = 'scoped memory for transformer_generator_forward.1']
    #allocation4 [shape = 'u8[40960]{0}', space=vmem, size = 0xa000, scoped, tag = 'input window, operand 8, single buffered']
    #allocation5 [shape = 's32[1]{0}', space=sflag, size = 0x4, scoped, tag = 'scoped memory for transformer_generator_forward.1']
    %14 = vsyncpa [#allocation3], 0
    %15 = vsyncpa [#allocation5], 0
    loop: start=0, step=1, limit=4
    $region2: #{transformer_generator_forward.1} parent=1 // loop_pre_header
      _
    $region3: #{transformer_generator_forward.1} parent=1 // loop_header
      %s17 = sphi 0, %s21
      %p18 = scmp.ge.s32.totalorder %s17, 4
      %s27 = sphi 0, %s29
      %s30 = sphi 0, %s27
      %s31 = sphi 0, %s30
      %s47 = sphi 0, %s31
      %s53 = sphi 0, %s55
      %s56 = sphi 0, %s53
      %s57 = sphi 0, %s56
      %s73 = sphi 0, %s57
      %s79 = sphi 0, %s81
      %s82 = sphi 0, %s79
      %s83 = sphi 0, %s82
      %s99 = sphi 0, %s83
      %s105 = sphi 0, %s107
      %s108 = sphi 0, %s105
      %s109 = sphi 0, %s108
      %s125 = sphi 0, %s109
      %s129 = sphi 0, %s129
      %s131 = sphi 0, %s129
      %s132 = sphi 0, %s131
      %s146 = sphi 0, %s132
      %s150 = sphi 0, %s150
      %s152 = sphi 0, %s150
      %s153 = sphi 0, %s152
      %s167 = sphi 0, %s153
      %s171 = sphi 0, %s171
      %s173 = sphi 0, %s171
      %s174 = sphi 0, %s173
      %s188 = sphi 0, %s174
      %s192 = sphi 0, %s192
      %s194 = sphi 0, %s192
      %s195 = sphi 0, %s194
      %s209 = sphi 0, %s195
      %s213 = sphi 0, %s213
      %s215 = sphi 0, %s213
      %s216 = sphi 0, %s215
      %s230 = sphi 0, %s216
      %s236 = sphi 0, %s238
      %s239 = sphi 0, %s236
      %s240 = sphi 0, %s239
      %s256 = sphi 0, %s240
    $region4: #{transformer_generator_forward.1} parent=1 // loop_header_branch
      %20 = sbr.rel (%p18) target = $region8
    $region5: #{transformer_generator_forward.1} parent=1 // loop_body
      %s22 = ssub.s32 %s17, 1
      %s23 = ssub.s32 %s17, 2
      %s24 = sadd.s32 %s17, 1
      %s25 = ssub.s32 %s17, %s24
      %p26 = scmp.eq.s32.totalorder %s25, 0
      %s28 = sadd.s32 %s27, 1
      %s29 = scalar_select %p26, %s27, %s28
      %p32 = pneg %p26
      %p33 = scmp.eq.s32.totalorder %s17, 1
      %p34 = por %p32, %p33
      %p35 = scmp.ne.s32.totalorder %s27, %s30
      %p36 = scmp.eq.s32.totalorder %s17, 0
      %p37 = por %p35, %p36
      %p38 = scmp.ne.s32.totalorder %s27, %s30
      %p39 = scmp.eq.s32.totalorder %s22, 1
      %p40 = por %p38, %p39
      %p41 = scmp.ne.s32.totalorder %s30, %s31
      %p42 = scmp.eq.s32.totalorder %s22, 0
      %p43 = por %p41, %p42
      %p44 = scmp.ne.s32.totalorder %s30, %s31
      %p45 = scmp.eq.s32.totalorder %s23, 1
      %p46 = por %p44, %p45
      %p48 = scmp.ne.s32.totalorder %s31, %s47
      %p49 = scmp.eq.s32.totalorder %s23, 0
      %p50 = por %p48, %p49
      %s51 = ssub.s32 %s17, %s24
      %p52 = scmp.eq.s32.totalorder %s51, 0
      %s54 = sadd.s32 %s53, 1
      %s55 = scalar_select %p52, %s53, %s54
      %p58 = pneg %p52
      %p59 = scmp.eq.s32.totalorder %s17, 1
      %p60 = por %p58, %p59
      %p61 = scmp.ne.s32.totalorder %s53, %s56
      %p62 = scmp.eq.s32.totalorder %s17, 0
      %p63 = por %p61, %p62
      %p64 = scmp.ne.s32.totalorder %s53, %s56
      %p65 = scmp.eq.s32.totalorder %s22, 1
      %p66 = por %p64, %p65
      %p67 = scmp.ne.s32.totalorder %s56, %s57
      %p68 = scmp.eq.s32.totalorder %s22, 0
      %p69 = por %p67, %p68
      %p70 = scmp.ne.s32.totalorder %s56, %s57
      %p71 = scmp.eq.s32.totalorder %s23, 1
      %p72 = por %p70, %p71
      %p74 = scmp.ne.s32.totalorder %s57, %s73
      %p75 = scmp.eq.s32.totalorder %s23, 0
      %p76 = por %p74, %p75
      %s77 = ssub.s32 %s17, %s24
      %p78 = scmp.eq.s32.totalorder %s77, 0
      %s80 = sadd.s32 %s79, 1
      %s81 = scalar_select %p78, %s79, %s80
      %p84 = pneg %p78
      %p85 = scmp.eq.s32.totalorder %s17, 1
      %p86 = por %p84, %p85
      %p87 = scmp.ne.s32.totalorder %s79, %s82
      %p88 = scmp.eq.s32.totalorder %s17, 0
      %p89 = por %p87, %p88
      %p90 = scmp.ne.s32.totalorder %s79, %s82
      %p91 = scmp.eq.s32.totalorder %s22, 1
      %p92 = por %p90, %p91
      %p93 = scmp.ne.s32.totalorder %s82, %s83
      %p94 = scmp.eq.s32.totalorder %s22, 0
      %p95 = por %p93, %p94
      %p96 = scmp.ne.s32.totalorder %s82, %s83
      %p97 = scmp.eq.s32.totalorder %s23, 1
      %p98 = por %p96, %p97
      %p100 = scmp.ne.s32.totalorder %s83, %s99
      %p101 = scmp.eq.s32.totalorder %s23, 0
      %p102 = por %p100, %p101
      %s103 = ssub.s32 %s17, %s24
      %p104 = scmp.eq.s32.totalorder %s103, 0
      %s106 = sadd.s32 %s105, 1
      %s107 = scalar_select %p104, %s105, %s106
      %p110 = pneg %p104
      %p111 = scmp.eq.s32.totalorder %s17, 1
      %p112 = por %p110, %p111
      %p113 = scmp.ne.s32.totalorder %s105, %s108
      %p114 = scmp.eq.s32.totalorder %s17, 0
      %p115 = por %p113, %p114
      %p116 = scmp.ne.s32.totalorder %s105, %s108
      %p117 = scmp.eq.s32.totalorder %s22, 1
      %p118 = por %p116, %p117
      %p119 = scmp.ne.s32.totalorder %s108, %s109
      %p120 = scmp.eq.s32.totalorder %s22, 0
      %p121 = por %p119, %p120
      %p122 = scmp.ne.s32.totalorder %s108, %s109
      %p123 = scmp.eq.s32.totalorder %s23, 1
      %p124 = por %p122, %p123
      %p126 = scmp.ne.s32.totalorder %s109, %s125
      %p127 = scmp.eq.s32.totalorder %s23, 0
      %p128 = por %p126, %p127
      %s130 = sadd.s32 %s129, 1
      %p133 = scmp.eq.s32.totalorder %s17, 1
      %p134 = scmp.ne.s32.totalorder %s129, %s131
      %p135 = scmp.eq.s32.totalorder %s17, 0
      %p136 = por %p134, %p135
      %p137 = scmp.ne.s32.totalorder %s129, %s131
      %p138 = scmp.eq.s32.totalorder %s22, 1
      %p139 = por %p137, %p138
      %p140 = scmp.ne.s32.totalorder %s131, %s132
      %p141 = scmp.eq.s32.totalorder %s22, 0
      %p142 = por %p140, %p141
      %p143 = scmp.ne.s32.totalorder %s131, %s132
      %p144 = scmp.eq.s32.totalorder %s23, 1
      %p145 = por %p143, %p144
      %p147 = scmp.ne.s32.totalorder %s132, %s146
      %p148 = scmp.eq.s32.totalorder %s23, 0
      %p149 = por %p147, %p148
      %s151 = sadd.s32 %s150, 1
      %p154 = scmp.eq.s32.totalorder %s17, 1
      %p155 = scmp.ne.s32.totalorder %s150, %s152
      %p156 = scmp.eq.s32.totalorder %s17, 0
      %p157 = por %p155, %p156
      %p158 = scmp.ne.s32.totalorder %s150, %s152
      %p159 = scmp.eq.s32.totalorder %s22, 1
      %p160 = por %p158, %p159
      %p161 = scmp.ne.s32.totalorder %s152, %s153
      %p162 = scmp.eq.s32.totalorder %s22, 0
      %p163 = por %p161, %p162
      %p164 = scmp.ne.s32.totalorder %s152, %s153
      %p165 = scmp.eq.s32.totalorder %s23, 1
      %p166 = por %p164, %p165
      %p168 = scmp.ne.s32.totalorder %s153, %s167
      %p169 = scmp.eq.s32.totalorder %s23, 0
      %p170 = por %p168, %p169
      %s172 = sadd.s32 %s171, 1
      %p175 = scmp.eq.s32.totalorder %s17, 1
      %p176 = scmp.ne.s32.totalorder %s171, %s173
      %p177 = scmp.eq.s32.totalorder %s17, 0
      %p178 = por %p176, %p177
      %p179 = scmp.ne.s32.totalorder %s171, %s173
      %p180 = scmp.eq.s32.totalorder %s22, 1
      %p181 = por %p179, %p180
      %p182 = scmp.ne.s32.totalorder %s173, %s174
      %p183 = scmp.eq.s32.totalorder %s22, 0
      %p184 = por %p182, %p183
      %p185 = scmp.ne.s32.totalorder %s173, %s174
      %p186 = scmp.eq.s32.totalorder %s23, 1
      %p187 = por %p185, %p186
      %p189 = scmp.ne.s32.totalorder %s174, %s188
      %p190 = scmp.eq.s32.totalorder %s23, 0
      %p191 = por %p189, %p190
      %s193 = sadd.s32 %s192, 1
      %p196 = scmp.eq.s32.totalorder %s17, 1
      %p197 = scmp.ne.s32.totalorder %s192, %s194
      %p198 = scmp.eq.s32.totalorder %s17, 0
      %p199 = por %p197, %p198
      %p200 = scmp.ne.s32.totalorder %s192, %s194
      %p201 = scmp.eq.s32.totalorder %s22, 1
      %p202 = por %p200, %p201
      %p203 = scmp.ne.s32.totalorder %s194, %s195
      %p204 = scmp.eq.s32.totalorder %s22, 0
      %p205 = por %p203, %p204
      %p206 = scmp.ne.s32.totalorder %s194, %s195
      %p207 = scmp.eq.s32.totalorder %s23, 1
      %p208 = por %p206, %p207
      %p210 = scmp.ne.s32.totalorder %s195, %s209
      %p211 = scmp.eq.s32.totalorder %s23, 0
      %p212 = por %p210, %p211
      %s214 = sadd.s32 %s213, 1
      %p217 = scmp.eq.s32.totalorder %s17, 1
      %p218 = scmp.ne.s32.totalorder %s213, %s215
      %p219 = scmp.eq.s32.totalorder %s17, 0
      %p220 = por %p218, %p219
      %p221 = scmp.ne.s32.totalorder %s213, %s215
      %p222 = scmp.eq.s32.totalorder %s22, 1
      %p223 = por %p221, %p222
      %p224 = scmp.ne.s32.totalorder %s215, %s216
      %p225 = scmp.eq.s32.totalorder %s22, 0
      %p226 = por %p224, %p225
      %p227 = scmp.ne.s32.totalorder %s215, %s216
      %p228 = scmp.eq.s32.totalorder %s23, 1
      %p229 = por %p227, %p228
      %p231 = scmp.ne.s32.totalorder %s216, %s230
      %p232 = scmp.eq.s32.totalorder %s23, 0
      %p233 = por %p231, %p232
      %s234 = ssub.s32 %s17, %s24
      %p235 = scmp.eq.s32.totalorder %s234, 0
      %s237 = sadd.s32 %s236, 1
      %s238 = scalar_select %p235, %s236, %s237
      %p241 = pneg %p235
      %p242 = scmp.eq.s32.totalorder %s17, 1
      %p243 = por %p241, %p242
      %p244 = scmp.ne.s32.totalorder %s236, %s239
      %p245 = scmp.eq.s32.totalorder %s17, 0
      %p246 = por %p244, %p245
      %p247 = scmp.ne.s32.totalorder %s236, %s239
      %p248 = scmp.eq.s32.totalorder %s22, 1
      %p249 = por %p247, %p248
      %p250 = scmp.ne.s32.totalorder %s239, %s240
      %p251 = scmp.eq.s32.totalorder %s22, 0
      %p252 = por %p250, %p251
      %p253 = scmp.ne.s32.totalorder %s239, %s240
      %p254 = scmp.eq.s32.totalorder %s23, 1
      %p255 = por %p253, %p254
      %p257 = scmp.ne.s32.totalorder %s240, %s256
      %p258 = scmp.eq.s32.totalorder %s23, 0
      %p259 = por %p257, %p258
      %p260 = scmp.le.s32.totalorder 1, %s17
      %p261 = scmp.lt.s32.totalorder %s17, 3
      %p262 = pnand %p260, %p261
      %p263 = pneg %p262
      // Predicated region
      $region9: #{transformer_generator_forward.1} parent=5 // pred_check
        _
      $region10: #{transformer_generator_forward.1} parent=5 // pred_check_branch
        %265 = sbr.rel (%p262) target = $region12
      $region11: #{transformer_generator_forward.1} parent=5 // pred_region
        %s266 = ssub.s32 %s17, 1
        // Predicated region
        $region13: #{transformer_generator_forward.1} parent=11 // pred_check
          %p267 = pneg %p142
        $region14: #{transformer_generator_forward.1} parent=11 // pred_check_branch
          %269 = sbr.rel (%p267) target = $region16
        $region15: #{transformer_generator_forward.1} parent=11 // pred_region
          %s271 = ssub.s32 3584, 3584
          %272 = vsyncadd [#allocation3], %s271
          %s273 = sshll.u32 [#allocation2], 4
          %s274 = int_to_ptr.vmem [resolvable:$true] %s273
          %279 = dma.hbm_to_vmem [thread:$0]  %s4, 3584, %s274, [#allocation3], 64, 64, 4
        $region16: #{transformer_generator_forward.1} parent=11 // pred_fallthru
          _
        // Predicated region
        $region17: #{transformer_generator_forward.1} parent=11 // pred_check
          %p280 = pneg %p163
        $region18: #{transformer_generator_forward.1} parent=11 // pred_check_branch
          %282 = sbr.rel (%p280) target = $region20
        $region19: #{transformer_generator_forward.1} parent=11 // pred_region
          _
        $region20: #{transformer_generator_forward.1} parent=11 // pred_fallthru
          _
        // Predicated region
        $region21: #{transformer_generator_forward.1} parent=11 // pred_check
          %p283 = pneg %p184
        $region22: #{transformer_generator_forward.1} parent=11 // pred_check_branch
          %285 = sbr.rel (%p283) target = $region24
        $region23: #{transformer_generator_forward.1} parent=11 // pred_region
          _
        $region24: #{transformer_generator_forward.1} parent=11 // pred_fallthru
          _
        // Predicated region
        $region25: #{transformer_generator_forward.1} parent=11 // pred_check
          %p286 = pneg %p205
        $region26: #{transformer_generator_forward.1} parent=11 // pred_check_branch
          %288 = sbr.rel (%p286) target = $region28
        $region27: #{transformer_generator_forward.1} parent=11 // pred_region
          _
        $region28: #{transformer_generator_forward.1} parent=11 // pred_fallthru
          _
        // Predicated region
        $region29: #{transformer_generator_forward.1} parent=11 // pred_check
          %p289 = pneg %p226
        $region30: #{transformer_generator_forward.1} parent=11 // pred_check_branch
          %291 = sbr.rel (%p289) target = $region32
        $region31: #{transformer_generator_forward.1} parent=11 // pred_region
          %s293 = ssub.s32 1280, 1280
          %294 = vsyncadd [#allocation5], %s293
          %s295 = sshll.u32 [#allocation4], 4
          %s296 = int_to_ptr.vmem [resolvable:$true] %s295
          %301 = dma.hbm_to_vmem [thread:$0]  %s8, 1280, %s296, [#allocation5], 128, 128, 8
        $region32: #{transformer_generator_forward.1} parent=11 // pred_fallthru
          _
      $region12: #{transformer_generator_forward.1} parent=5 // pred_fallthru
        _
      %p302 = scmp.lt.s32.totalorder %s17, 2
      // Predicated region
      $region33: #{transformer_generator_forward.1} parent=5 // pred_check
        %p303 = pneg %p302
      $region34: #{transformer_generator_forward.1} parent=5 // pred_check_branch
        %305 = sbr.rel (%p303) target = $region36
      $region35: #{transformer_generator_forward.1} parent=5 // pred_region
        // Predicated region
        $region37: #{transformer_generator_forward.1} parent=35 // pred_check
          %p306 = pneg %p37
        $region38: #{transformer_generator_forward.1} parent=35 // pred_check_branch
          %308 = sbr.rel (%p306) target = $region40
        $region39: #{transformer_generator_forward.1} parent=35 // pred_region
          %p309 = scmp.lt.s32.totalorder %s17, 1
          %s310 = scalar_select %p309, %s17, 1
          %s311 = smul.addr %s310, 8
          %s312 = scalar_lea.vmem %s0, %s311
        $region40: #{transformer_generator_forward.1} parent=35 // pred_fallthru
          _
        // Predicated region
        $region41: #{transformer_generator_forward.1} parent=35 // pred_check
          %p313 = pneg %p63
        $region42: #{transformer_generator_forward.1} parent=35 // pred_check_branch
          %315 = sbr.rel (%p313) target = $region44
        $region43: #{transformer_generator_forward.1} parent=35 // pred_region
          %p316 = scmp.lt.s32.totalorder %s17, 1
          %s317 = scalar_select %p316, %s17, 1
          %s318 = smul.addr %s317, 8
          %s319 = scalar_lea.vmem %s1, %s318
        $region44: #{transformer_generator_forward.1} parent=35 // pred_fallthru
          _
        // Predicated region
        $region45: #{transformer_generator_forward.1} parent=35 // pred_check
          %p320 = pneg %p89
        $region46: #{transformer_generator_forward.1} parent=35 // pred_check_branch
          %322 = sbr.rel (%p320) target = $region48
        $region47: #{transformer_generator_forward.1} parent=35 // pred_region
          %p323 = scmp.lt.s32.totalorder %s17, 1
          %s324 = scalar_select %p323, %s17, 1
          %s325 = smul.addr %s324, 8
          %s326 = scalar_lea.vmem %s2, %s325
        $region48: #{transformer_generator_forward.1} parent=35 // pred_fallthru
          _
        // Predicated region
        $region49: #{transformer_generator_forward.1} parent=35 // pred_check
          %p327 = pneg %p115
        $region50: #{transformer_generator_forward.1} parent=35 // pred_check_branch
          %329 = sbr.rel (%p327) target = $region52
        $region51: #{transformer_generator_forward.1} parent=35 // pred_region
          %p330 = scmp.lt.s32.totalorder %s17, 1
          %s331 = scalar_select %p330, %s17, 1
          %s332 = scalar_lea.vmem %s3, %s331
        $region52: #{transformer_generator_forward.1} parent=35 // pred_fallthru
          _
      $region36: #{transformer_generator_forward.1} parent=5 // pred_fallthru
        _
      %p333 = scmp.le.s32.totalorder 1, %s17
      %p334 = scmp.lt.s32.totalorder %s17, 3
      %p335 = pnand %p333, %p334
      %p336 = pneg %p335
      // Predicated region
      $region53: #{transformer_generator_forward.1} parent=5 // pred_check
        _
      $region54: #{transformer_generator_forward.1} parent=5 // pred_check_branch
        %338 = sbr.rel (%p335) target = $region56
      $region55: #{transformer_generator_forward.1} parent=5 // pred_region
        %s339 = ssub.s32 %s17, 1
        // Predicated region
        $region57: #{transformer_generator_forward.1} parent=55 // pred_check
          %p340 = pneg %p142
        $region58: #{transformer_generator_forward.1} parent=55 // pred_check_branch
          %342 = sbr.rel (%p340) target = $region60
        $region59: #{transformer_generator_forward.1} parent=55 // pred_region
          %343 = dma.done [#allocation3], 3584
        $region60: #{transformer_generator_forward.1} parent=55 // pred_fallthru
          _
        // Predicated region
        $region61: #{transformer_generator_forward.1} parent=55 // pred_check
          %p344 = pneg %p226
        $region62: #{transformer_generator_forward.1} parent=55 // pred_check_branch
          %346 = sbr.rel (%p344) target = $region64
        $region63: #{transformer_generator_forward.1} parent=55 // pred_region
          %347 = dma.done [#allocation5], 1280
        $region64: #{transformer_generator_forward.1} parent=55 // pred_fallthru
          _
        %p348 = scmp.lt.s32.totalorder %s22, 1
        %s349 = scalar_select %p348, %s22, 1
        %s350 = smul.addr %s349, 8
        %s351 = scalar_lea.vmem %s0, %s350
        %p352 = pneg %p43
        %p353 = pneg %p40
        %p354 = scmp.lt.s32.totalorder %s22, 1
        %s355 = scalar_select %p354, %s22, 1
        %s356 = smul.addr %s355, 8
        %s357 = scalar_lea.vmem %s1, %s356
        %p358 = pneg %p69
        %p359 = pneg %p66
        %p360 = scmp.lt.s32.totalorder %s22, 1
        %s361 = scalar_select %p360, %s22, 1
        %s362 = smul.addr %s361, 8
        %s363 = scalar_lea.vmem %s2, %s362
        %p364 = pneg %p95
        %p365 = pneg %p92
        %p366 = scmp.lt.s32.totalorder %s22, 1
        %s367 = scalar_select %p366, %s22, 1
        %s368 = scalar_lea.vmem %s3, %s367
        %p369 = pneg %p121
        %p370 = pneg %p118
        %p371 = pneg %p142
        %p372 = pneg %p139
        %p373 = pneg %p163
        %p374 = pneg %p160
        %p375 = pneg %p184
        %p376 = pneg %p181
        %p377 = pneg %p205
        %p378 = pneg %p202
        %p379 = pneg %p226
        %p380 = pneg %p223
        %p381 = pneg %p252
        %p382 = pneg %p249
        %p383 = scmp.lt.s32.totalorder %s22, 1
        %s384 = scalar_select %p383, %s22, 1
        %s385 = smul.addr %s384, 2
        %s386 = smul.addr %s385, 8
        %s387 = scalar_lea.vmem %s9, %s386
        %p388 = scmp.lt.s32.totalorder %s22, 1
        %s389 = scalar_select %p388, %s22, 1
        %s390 = smul.addr %s389, 8
        %s391 = scalar_lea.vmem %s0, %s390
        %p392 = scmp.lt.s32.totalorder %s22, 1
        %s393 = scalar_select %p392, %s22, 1
        %s394 = smul.addr %s393, 8
        %s395 = scalar_lea.vmem %s1, %s394
        %p396 = scmp.lt.s32.totalorder %s22, 1
        %s397 = scalar_select %p396, %s22, 1
        %s398 = smul.addr %s397, 8
        %s399 = scalar_lea.vmem %s2, %s398
        %p400 = scmp.lt.s32.totalorder %s22, 1
        %s401 = scalar_select %p400, %s22, 1
        %s402 = scalar_lea.vmem %s3, %s401
        %p403 = scmp.lt.s32.totalorder %s22, 1
        %s404 = scalar_select %p403, %s22, 1
        %s405 = smul.addr %s404, 2
        %s406 = smul.addr %s405, 8
        %s407 = scalar_lea.vmem %s9, %s406
        %v409 = vld [vmem:[#allocation4] sm:$0xff]
        %v410 = vld [vmem:[#allocation4 + $0x8] sm:$0xff]
        %v411 = vld [vmem:[#allocation4 + $0x10] sm:$0xff]
        %v412 = vld [vmem:[#allocation4 + $0x18] sm:$0xff]
        %v413 = vld [vmem:[#allocation4 + $0x20] sm:$0xff]
        %v414 = vld [vmem:[#allocation4 + $0x28] sm:$0xff]
        %v415 = vld [vmem:[#allocation4 + $0x30] sm:$0xff]
        %v416 = vld [vmem:[#allocation4 + $0x38] sm:$0xff]
        %v417 = vld [vmem:[#allocation4 + $0x40] sm:$0xff]
        %v418 = vld [vmem:[#allocation4 + $0x48] sm:$0x1f]
        %v419 = vld [vmem:[%s391] sm:$0xff]
        %v420 = vld [vmem:[%s395] sm:$0xff]
        %v422 = vcombine.high %v420, %v420
        %v424 = vunpack.c.l.s4 1966171168
        %v425 = vunpack.c.0.s8 %v424
        %v426 = vlaneseq
        %v427 = vshrl.u32 %v426, 7
        %v428 = vsub.s32 %v425, %v427
        %v429 = vrot.slane %v420, %v428
        %v431 = vunpack.c.l.s4 1966171168
        %v432 = vunpack.c.0.s8 %v431
        %v433 = vlaneseq
        %v434 = vshrl.u32 %v433, 7
        %v435 = vsub.s32 %v432, %v434
        %v436 = vrot.slane %v422, %v435
        %v437 = vcombine.high %v429, %v429
        %v438 = vcombine.high %v436, %v436
        %v440 = vunpack.c.l.s4 1966171168
        %v441 = vunpack.c.0.s8 %v440
        %v442 = vlaneseq
        %v443 = vshrl.u32 %v442, 7
        %v444 = vsub.s32 %v441, %v443
        %v445 = vrot.slane %v429, %v444
        %v447 = vunpack.c.l.s4 1966171168
        %v448 = vunpack.c.0.s8 %v447
        %v449 = vlaneseq
        %v450 = vshrl.u32 %v449, 7
        %v451 = vsub.s32 %v448, %v450
        %v452 = vrot.slane %v436, %v451
        %v454 = vunpack.c.l.s4 1966171168
        %v455 = vunpack.c.0.s8 %v454
        %v456 = vlaneseq
        %v457 = vshrl.u32 %v456, 7
        %v458 = vsub.s32 %v455, %v457
        %v459 = vrot.slane %v437, %v458
        %v461 = vunpack.c.l.s4 1966171168
        %v462 = vunpack.c.0.s8 %v461
        %v463 = vlaneseq
        %v464 = vshrl.u32 %v463, 7
        %v465 = vsub.s32 %v462, %v464
        %v466 = vrot.slane %v438, %v465
        %v467 = vcombine.high %v445, %v445
        %v468 = vcombine.high %v452, %v452
        %v469 = vcombine.high %v459, %v459
        %v470 = vcombine.high %v466, %v466
        %v471 = vlaneseq
        %v472 = vshrl.u32 %v471, 7
        %v473 = vsub.s32 0, %v472
        %v474 = vrot.slane %v445, %v473
        %v475 = vlaneseq
        %v476 = vshrl.u32 %v475, 7
        %v477 = vsub.s32 0, %v476
        %v478 = vrot.slane %v459, %v477
        %v479 = vlaneseq
        %v480 = vshrl.u32 %v479, 7
        %v481 = vsub.s32 0, %v480
        %v482 = vrot.slane %v467, %v481
        %v483 = vlaneseq
        %v484 = vshrl.u32 %v483, 7
        %v485 = vsub.s32 0, %v484
        %v486 = vrot.slane %v469, %v485
        %v487 = vlaneseq
        %v488 = vshrl.u32 %v487, 7
        %v489 = vsub.s32 0, %v488
        %v490 = vrot.slane %v452, %v489
        %v491 = vlaneseq
        %v492 = vshrl.u32 %v491, 7
        %v493 = vsub.s32 0, %v492
        %v494 = vrot.slane %v466, %v493
        %v495 = vlaneseq
        %v496 = vshrl.u32 %v495, 7
        %v497 = vsub.s32 0, %v496
        %v498 = vrot.slane %v468, %v497
        %v499 = vlaneseq
        %v500 = vshrl.u32 %v499, 7
        %v501 = vsub.s32 0, %v500
        %v502 = vrot.slane %v470, %v501
        %v511 = vsub.f32 %v474, %v420
        %v512 = vsub.f32 %v478, %v420
        %v513 = vsub.f32 %v482, %v420
        %v514 = vsub.f32 %v486, %v420
        %v515 = vsub.f32 %v490, %v420
        %v516 = vsub.f32 %v494, %v420
        %v517 = vsub.f32 %v498, %v420
        %v518 = vsub.f32 %v502, %v420
        %v519 = vmul.f32 %v511, %v511
        %v520 = vmul.f32 %v512, %v512
        %v521 = vmul.f32 %v513, %v513
        %v522 = vmul.f32 %v514, %v514
        %v523 = vmul.f32 %v515, %v515
        %v524 = vmul.f32 %v516, %v516
        %v525 = vmul.f32 %v517, %v517
        %v526 = vmul.f32 %v518, %v518
        %vm527 = vcmask 23552
        %v528 = vsel %vm527, %v519, 0.0
        %529 = vadd.xlane.f32.xlu0 %v528
        %v530 = vpop.xlane.xlu0 %529
        %v531 = vsel %vm527, %v520, 0.0
        %532 = vadd.xlane.f32.xlu0 %v531
        %v533 = vpop.xlane.xlu0 %532
        %v534 = vsel %vm527, %v521, 0.0
        %535 = vadd.xlane.f32.xlu0 %v534
        %v536 = vpop.xlane.xlu0 %535
        %v537 = vsel %vm527, %v522, 0.0
        %538 = vadd.xlane.f32.xlu0 %v537
        %v539 = vpop.xlane.xlu0 %538
        %v540 = vsel %vm527, %v523, 0.0
        %541 = vadd.xlane.f32.xlu0 %v540
        %v542 = vpop.xlane.xlu0 %541
        %v543 = vsel %vm527, %v524, 0.0
        %544 = vadd.xlane.f32.xlu0 %v543
        %v545 = vpop.xlane.xlu0 %544
        %v546 = vsel %vm527, %v525, 0.0
        %547 = vadd.xlane.f32.xlu0 %v546
        %v548 = vpop.xlane.xlu0 %547
        %v549 = vsel %vm527, %v526, 0.0
        %550 = vadd.xlane.f32.xlu0 %v549
        %v551 = vpop.xlane.xlu0 %550
        %v552 = vrsqrt.pop %v530
        %v553 = vmul.f32 %v530, %v552
        %vm554 = vcmp.eq.f32.partialorder %v530, inf
        %v555 = vsel %vm554, %v530, %v553
        %vm556 = vcmp.eq.f32.partialorder %v530, 0.0
        %v557 = vand.u32 %v530, 2147483648
        %v558 = vsel %vm556, %v557, %v555
        %v559 = vrsqrt.pop %v533
        %v560 = vmul.f32 %v533, %v559
        %vm561 = vcmp.eq.f32.partialorder %v533, inf
        %v562 = vsel %vm561, %v533, %v560
        %vm563 = vcmp.eq.f32.partialorder %v533, 0.0
        %v564 = vand.u32 %v533, 2147483648
        %v565 = vsel %vm563, %v564, %v562
        %v566 = vrsqrt.pop %v536
        %v567 = vmul.f32 %v536, %v566
        %vm568 = vcmp.eq.f32.partialorder %v536, inf
        %v569 = vsel %vm568, %v536, %v567
        %vm570 = vcmp.eq.f32.partialorder %v536, 0.0
        %v571 = vand.u32 %v536, 2147483648
        %v572 = vsel %vm570, %v571, %v569
        %v573 = vrsqrt.pop %v539
        %v574 = vmul.f32 %v539, %v573
        %vm575 = vcmp.eq.f32.partialorder %v539, inf
        %v576 = vsel %vm575, %v539, %v574
        %vm577 = vcmp.eq.f32.partialorder %v539, 0.0
        %v578 = vand.u32 %v539, 2147483648
        %v579 = vsel %vm577, %v578, %v576
        %v580 = vrsqrt.pop %v542
        %v581 = vmul.f32 %v542, %v580
        %vm582 = vcmp.eq.f32.partialorder %v542, inf
        %v583 = vsel %vm582, %v542, %v581
        %vm584 = vcmp.eq.f32.partialorder %v542, 0.0
        %v585 = vand.u32 %v542, 2147483648
        %v586 = vsel %vm584, %v585, %v583
        %v587 = vrsqrt.pop %v545
        %v588 = vmul.f32 %v545, %v587
        %vm589 = vcmp.eq.f32.partialorder %v545, inf
        %v590 = vsel %vm589, %v545, %v588
        %vm591 = vcmp.eq.f32.partialorder %v545, 0.0
        %v592 = vand.u32 %v545, 2147483648
        %v593 = vsel %vm591, %v592, %v590
        %v594 = vrsqrt.pop %v548
        %v595 = vmul.f32 %v548, %v594
        %vm596 = vcmp.eq.f32.partialorder %v548, inf
        %v597 = vsel %vm596, %v548, %v595
        %vm598 = vcmp.eq.f32.partialorder %v548, 0.0
        %v599 = vand.u32 %v548, 2147483648
        %v600 = vsel %vm598, %v599, %v597
        %v601 = vrsqrt.pop %v551
        %v602 = vmul.f32 %v551, %v601
        %vm603 = vcmp.eq.f32.partialorder %v551, inf
        %v604 = vsel %vm603, %v551, %v602
        %vm605 = vcmp.eq.f32.partialorder %v551, 0.0
        %v606 = vand.u32 %v551, 2147483648
        %v607 = vsel %vm605, %v606, %v604
        %v608 = vlaneseq
        %v609 = vshrl.u32 %v608, 7
        %v610 = vsub.s32 3, %v609
        %v611 = vrot.slane %v418, %v610
        %v612 = vmul.f32 %v558, %v611
        %v613 = vmul.f32 %v565, %v611
        %v614 = vmul.f32 %v572, %v611
        %v615 = vmul.f32 %v579, %v611
        %v616 = vmul.f32 %v586, %v611
        %v617 = vmul.f32 %v593, %v611
        %v618 = vmul.f32 %v600, %v611
        %v619 = vmul.f32 %v607, %v611
        %v620 = vlaneseq
        %v621 = vshrl.u32 %v620, 7
        %v622 = vsub.s32 4, %v621
        %v623 = vrot.slane %v418, %v622
        %v624 = vadd.f32 %v612, %v623
        %v625 = vadd.f32 %v613, %v623
        %v626 = vadd.f32 %v614, %v623
        %v627 = vadd.f32 %v615, %v623
        %v628 = vadd.f32 %v616, %v623
        %v629 = vadd.f32 %v617, %v623
        %v630 = vadd.f32 %v618, %v623
        %v631 = vadd.f32 %v619, %v623
        %v632 = vand.u32 2147483647, %v624
        %vm633 = vcmp.le.f32.partialorder %v632, 0.7853982
        %vm634 = vcmp.lt.s32.totalorder %v624, 0
        %v635 = vand.u32 %v624, 2139095040
        %v636 = vshrl.u32 %v635, 23
        %v637 = vsub.s32 %v636, 127
        %v638 = vand.u32 2147483647, %v624
        %v639 = vand.u32 %v638, 8388607
        %v640 = vor.u32 %v639, 8388608
        %v641 = vsub.s32 0, %v640
        %v642 = vadd.s32 %v637, 1
        %vm643 = vcmp.gt.s32.totalorder %v642, 0
        %v644 = vsel %vm643, %v642, 0
        %v645 = vshrl.u32 %v644, 5
        %v646 = vand.u32 %v644, 31
        %v647 = vsub.s32 32, %v646
        %v648 = vshrl.u32 683565275, %v647
        %v649 = vshll.u32 683565275, %v646
        %v650 = vshrl.u32 2475754826, %v647
        %v651 = vor.u32 %v649, %v650
        %v652 = vshll.u32 2475754826, %v646
        %v653 = vshrl.u32 2131351028, %v647
        %v654 = vor.u32 %v652, %v653
        %v655 = vshll.u32 2131351028, %v646
        %v656 = vshrl.u32 2102212464, %v647
        %v657 = vor.u32 %v655, %v656
        %v658 = vshll.u32 2102212464, %v646
        %v659 = vshrl.u32 920167782, %v647
        %v660 = vor.u32 %v658, %v659
        %v661 = vshll.u32 920167782, %v646
        %v662 = vshrl.u32 1326507024, %v647
        %v663 = vor.u32 %v661, %v662
        %vm664 = vcmp.lt.s32.totalorder %v645, 1
        %vm665 = vcmp.lt.s32.totalorder %v645, 2
        %vm666 = vcmp.lt.s32.totalorder %v645, 3
        %vm667 = vcmp.lt.s32.totalorder %v645, 4
        %v668 = vsel %vm664, %v648, %v651
        %v669 = vsel %vm667, %v657, 2102212464
        %v670 = vsel %vm666, %v654, %v669
        %v671 = vsel %vm665, %v668, %v670
        %v672 = vsel %vm664, %v651, %v654
        %v673 = vsel %vm667, %v660, 920167782
        %v674 = vsel %vm666, %v657, %v673
        %v675 = vsel %vm665, %v672, %v674
        %v676 = vsel %vm664, %v654, %v657
        %v677 = vsel %vm667, %v663, 1326507024
        %v678 = vsel %vm666, %v660, %v677
        %v679 = vsel %vm665, %v676, %v678
        %v680 = vshll.u32 %v640, 8
        %v681 = vmul.u32.u64.compose %v680, %v679
        %v682 = vextract.low.u32 %v681
        %v683 = vextract.high.u32 %v681
        %v684 = vmul.u32.u64.compose %v680, %v675
        %v685 = vextract.low.u32 %v684
        %v686 = vextract.high.u32 %v684
        %v687 = vmul.u32 %v680, %v671
        %v688 = vadd.s32 %v683, %v685
        %vm689 = vc.u32 %v683, %v685
        %v690 = vadd.s32 %v686, 1
        %v691 = vsel %vm689, %v690, %v686
        %v692 = vadd.s32 %v687, %v691
        %v693 = vadd.s32 %v692, 536870912
        %v694 = vshrl.u32 %v693, 30
        %v695 = vshll.u32 %v694, 30
        %v696 = vsub.s32 %v692, %v695
        %vm697 = vcmp.lt.s32.totalorder %v696, 0
        %v698 = vsub.s32 0, %v696
        %v699 = vsel %vm697, %v698, %v696
        %v700 = vclz %v699
        %v701 = vsub.s32 %v700, 2
        %vm702 = vcmp.gt.s32.totalorder 0, %v701
        %v703 = vsel %vm702, 0, %v701
        %v704 = vsub.s32 32, %v703
        %v705 = vshll.u32 %v696, %v703
        %v706 = vshrl.u32 %v688, %v704
        %v707 = vor.u32 %v705, %v706
        %v708 = vsub.s32 4294967266, %v703
        %v709 = vadd.s32 %v708, 127
        %v710 = vshll.u32 %v709, 23
        %v711 = vor.u32 4788187, %v710
        %v712 = vand.u32 2147483647, %v711
        %v714 = vcvt.s32.f32 %v707
        %v715 = vmul.f32 %v714, %v712
        %v716 = vxor.u32 %v715, 2147483648
        %v717 = vsel %vm634, %v716, %v715
        %v718 = vsub.s32 4, %v694
        %v719 = vsel %vm634, %v718, %v694
        %v720 = vsel %vm633, %v624, %v717
        %v721 = vsel %vm633, 0, %v719
        %v722 = vcosq.f32.pop %v720
        %v723 = vsinq.f32.pop %v720
        %vm724 = vweird.f32 %v624
        %v725 = vadd.s32 %v721, 3
        %v726 = vand.u32 %v725, 3
        %vm727 = vcmp.lt.s32.totalorder %v726, 2
        %vm728 = vcmp.eq.s32.totalorder %v726, 0
        %v729 = vxor.u32 %v723, 2147483648
        %v730 = vsel %vm728, %v722, %v729
        %vm731 = vcmp.eq.s32.totalorder %v726, 2
        %v732 = vxor.u32 %v722, 2147483648
        %v733 = vsel %vm731, %v732, %v723
        %v734 = vsel %vm727, %v730, %v733
        %v735 = vsel %vm724, nan, %v734
        %v736 = vand.u32 2147483647, %v625
        %vm737 = vcmp.le.f32.partialorder %v736, 0.7853982
        %vm738 = vcmp.lt.s32.totalorder %v625, 0
        %v739 = vand.u32 %v625, 2139095040
        %v740 = vshrl.u32 %v739, 23
        %v741 = vsub.s32 %v740, 127
        %v742 = vand.u32 2147483647, %v625
        %v743 = vand.u32 %v742, 8388607
        %v744 = vor.u32 %v743, 8388608
        %v745 = vsub.s32 0, %v744
        %v746 = vadd.s32 %v741, 1
        %vm747 = vcmp.gt.s32.totalorder %v746, 0
        %v748 = vsel %vm747, %v746, 0
        %v749 = vshrl.u32 %v748, 5
        %v750 = vand.u32 %v748, 31
        %v751 = vsub.s32 32, %v750
        %v752 = vshrl.u32 683565275, %v751
        %v753 = vshll.u32 683565275, %v750
        %v754 = vshrl.u32 2475754826, %v751
        %v755 = vor.u32 %v753, %v754
        %v756 = vshll.u32 2475754826, %v750
        %v757 = vshrl.u32 2131351028, %v751
        %v758 = vor.u32 %v756, %v757
        %v759 = vshll.u32 2131351028, %v750
        %v760 = vshrl.u32 2102212464, %v751
        %v761 = vor.u32 %v759, %v760
        %v762 = vshll.u32 2102212464, %v750
        %v763 = vshrl.u32 920167782, %v751
        %v764 = vor.u32 %v762, %v763
        %v765 = vshll.u32 920167782, %v750
        %v766 = vshrl.u32 1326507024, %v751
        %v767 = vor.u32 %v765, %v766
        %vm768 = vcmp.lt.s32.totalorder %v749, 1
        %vm769 = vcmp.lt.s32.totalorder %v749, 2
        %vm770 = vcmp.lt.s32.totalorder %v749, 3
        %vm771 = vcmp.lt.s32.totalorder %v749, 4
        %v772 = vsel %vm768, %v752, %v755
        %v773 = vsel %vm771, %v761, 2102212464
        %v774 = vsel %vm770, %v758, %v773
        %v775 = vsel %vm769, %v772, %v774
        %v776 = vsel %vm768, %v755, %v758
        %v777 = vsel %vm771, %v764, 920167782
        %v778 = vsel %vm770, %v761, %v777
        %v779 = vsel %vm769, %v776, %v778
        %v780 = vsel %vm768, %v758, %v761
        %v781 = vsel %vm771, %v767, 1326507024
        %v782 = vsel %vm770, %v764, %v781
        %v783 = vsel %vm769, %v780, %v782
        %v784 = vshll.u32 %v744, 8
        %v785 = vmul.u32.u64.compose %v784, %v783
        %v786 = vextract.low.u32 %v785
        %v787 = vextract.high.u32 %v785
        %v788 = vmul.u32.u64.compose %v784, %v779
        %v789 = vextract.low.u32 %v788
        %v790 = vextract.high.u32 %v788
        %v791 = vmul.u32 %v784, %v775
        %v792 = vadd.s32 %v787, %v789
        %vm793 = vc.u32 %v787, %v789
        %v794 = vadd.s32 %v790, 1
        %v795 = vsel %vm793, %v794, %v790
        %v796 = vadd.s32 %v791, %v795
        %v797 = vadd.s32 %v796, 536870912
        %v798 = vshrl.u32 %v797, 30
        %v799 = vshll.u32 %v798, 30
        %v800 = vsub.s32 %v796, %v799
        %vm801 = vcmp.lt.s32.totalorder %v800, 0
        %v802 = vsub.s32 0, %v800
        %v803 = vsel %vm801, %v802, %v800
        %v804 = vclz %v803
        %v805 = vsub.s32 %v804, 2
        %vm806 = vcmp.gt.s32.totalorder 0, %v805
        %v807 = vsel %vm806, 0, %v805
        %v808 = vsub.s32 32, %v807
        %v809 = vshll.u32 %v800, %v807
        %v810 = vshrl.u32 %v792, %v808
        %v811 = vor.u32 %v809, %v810
        %v812 = vsub.s32 4294967266, %v807
        %v813 = vadd.s32 %v812, 127
        %v814 = vshll.u32 %v813, 23
        %v815 = vor.u32 4788187, %v814
        %v816 = vand.u32 2147483647, %v815
        %v818 = vcvt.s32.f32 %v811
        %v819 = vmul.f32 %v818, %v816
        %v820 = vxor.u32 %v819, 2147483648
        %v821 = vsel %vm738, %v820, %v819
        %v822 = vsub.s32 4, %v798
        %v823 = vsel %vm738, %v822, %v798
        %v824 = vsel %vm737, %v625, %v821
        %v825 = vsel %vm737, 0, %v823
        %v826 = vcosq.f32.pop %v824
        %v827 = vsinq.f32.pop %v824
        %vm828 = vweird.f32 %v625
        %v829 = vadd.s32 %v825, 3
        %v830 = vand.u32 %v829, 3
        %vm831 = vcmp.lt.s32.totalorder %v830, 2
        %vm832 = vcmp.eq.s32.totalorder %v830, 0
        %v833 = vxor.u32 %v827, 2147483648
        %v834 = vsel %vm832, %v826, %v833
        %vm835 = vcmp.eq.s32.totalorder %v830, 2
        %v836 = vxor.u32 %v826, 2147483648
        %v837 = vsel %vm835, %v836, %v827
        %v838 = vsel %vm831, %v834, %v837
        %v839 = vsel %vm828, nan, %v838
        %v840 = vand.u32 2147483647, %v626
        %vm841 = vcmp.le.f32.partialorder %v840, 0.7853982
        %vm842 = vcmp.lt.s32.totalorder %v626, 0
        %v843 = vand.u32 %v626, 2139095040
        %v844 = vshrl.u32 %v843, 23
        %v845 = vsub.s32 %v844, 127
        %v846 = vand.u32 2147483647, %v626
        %v847 = vand.u32 %v846, 8388607
        %v848 = vor.u32 %v847, 8388608
        %v849 = vsub.s32 0, %v848
        %v850 = vadd.s32 %v845, 1
        %vm851 = vcmp.gt.s32.totalorder %v850, 0
        %v852 = vsel %vm851, %v850, 0
        %v853 = vshrl.u32 %v852, 5
        %v854 = vand.u32 %v852, 31
        %v855 = vsub.s32 32, %v854
        %v856 = vshrl.u32 683565275, %v855
        %v857 = vshll.u32 683565275, %v854
        %v858 = vshrl.u32 2475754826, %v855
        %v859 = vor.u32 %v857, %v858
        %v860 = vshll.u32 2475754826, %v854
        %v861 = vshrl.u32 2131351028, %v855
        %v862 = vor.u32 %v860, %v861
        %v863 = vshll.u32 2131351028, %v854
        %v864 = vshrl.u32 2102212464, %v855
        %v865 = vor.u32 %v863, %v864
        %v866 = vshll.u32 2102212464, %v854
        %v867 = vshrl.u32 920167782, %v855
        %v868 = vor.u32 %v866, %v867
        %v869 = vshll.u32 920167782, %v854
        %v870 = vshrl.u32 1326507024, %v855
        %v871 = vor.u32 %v869, %v870
        %vm872 = vcmp.lt.s32.totalorder %v853, 1
        %vm873 = vcmp.lt.s32.totalorder %v853, 2
        %vm874 = vcmp.lt.s32.totalorder %v853, 3
        %vm875 = vcmp.lt.s32.totalorder %v853, 4
        %v876 = vsel %vm872, %v856, %v859
        %v877 = vsel %vm875, %v865, 2102212464
        %v878 = vsel %vm874, %v862, %v877
        %v879 = vsel %vm873, %v876, %v878
        %v880 = vsel %vm872, %v859, %v862
        %v881 = vsel %vm875, %v868, 920167782
        %v882 = vsel %vm874, %v865, %v881
        %v883 = vsel %vm873, %v880, %v882
        %v884 = vsel %vm872, %v862, %v865
        %v885 = vsel %vm875, %v871, 1326507024
        %v886 = vsel %vm874, %v868, %v885
        %v887 = vsel %vm873, %v884, %v886
        %v888 = vshll.u32 %v848, 8
        %v889 = vmul.u32.u64.compose %v888, %v887
        %v890 = vextract.low.u32 %v889
        %v891 = vextract.high.u32 %v889
        %v892 = vmul.u32.u64.compose %v888, %v883
        %v893 = vextract.low.u32 %v892
        %v894 = vextract.high.u32 %v892
        %v895 = vmul.u32 %v888, %v879
        %v896 = vadd.s32 %v891, %v893
        %vm897 = vc.u32 %v891, %v893
        %v898 = vadd.s32 %v894, 1
        %v899 = vsel %vm897, %v898, %v894
        %v900 = vadd.s32 %v895, %v899
        %v901 = vadd.s32 %v900, 536870912
        %v902 = vshrl.u32 %v901, 30
        %v903 = vshll.u32 %v902, 30
        %v904 = vsub.s32 %v900, %v903
        %vm905 = vcmp.lt.s32.totalorder %v904, 0
        %v906 = vsub.s32 0, %v904
        %v907 = vsel %vm905, %v906, %v904
        %v908 = vclz %v907
        %v909 = vsub.s32 %v908, 2
        %vm910 = vcmp.gt.s32.totalorder 0, %v909
        %v911 = vsel %vm910, 0, %v909
        %v912 = vsub.s32 32, %v911
        %v913 = vshll.u32 %v904, %v911
        %v914 = vshrl.u32 %v896, %v912
        %v915 = vor.u32 %v913, %v914
        %v916 = vsub.s32 4294967266, %v911
        %v917 = vadd.s32 %v916, 127
        %v918 = vshll.u32 %v917, 23
        %v919 = vor.u32 4788187, %v918
        %v920 = vand.u32 2147483647, %v919
        %v922 = vcvt.s32.f32 %v915
        %v923 = vmul.f32 %v922, %v920
        %v924 = vxor.u32 %v923, 2147483648
        %v925 = vsel %vm842, %v924, %v923
        %v926 = vsub.s32 4, %v902
        %v927 = vsel %vm842, %v926, %v902
        %v928 = vsel %vm841, %v626, %v925
        %v929 = vsel %vm841, 0, %v927
        %v930 = vcosq.f32.pop %v928
        %v931 = vsinq.f32.pop %v928
        %vm932 = vweird.f32 %v626
        %v933 = vadd.s32 %v929, 3
        %v934 = vand.u32 %v933, 3
        %vm935 = vcmp.lt.s32.totalorder %v934, 2
        %vm936 = vcmp.eq.s32.totalorder %v934, 0
        %v937 = vxor.u32 %v931, 2147483648
        %v938 = vsel %vm936, %v930, %v937
        %vm939 = vcmp.eq.s32.totalorder %v934, 2
        %v940 = vxor.u32 %v930, 2147483648
        %v941 = vsel %vm939, %v940, %v931
        %v942 = vsel %vm935, %v938, %v941
        %v943 = vsel %vm932, nan, %v942
        %v944 = vand.u32 2147483647, %v627
        %vm945 = vcmp.le.f32.partialorder %v944, 0.7853982
        %vm946 = vcmp.lt.s32.totalorder %v627, 0
        %v947 = vand.u32 %v627, 2139095040
        %v948 = vshrl.u32 %v947, 23
        %v949 = vsub.s32 %v948, 127
        %v950 = vand.u32 2147483647, %v627
        %v951 = vand.u32 %v950, 8388607
        %v952 = vor.u32 %v951, 8388608
        %v953 = vsub.s32 0, %v952
        %v954 = vadd.s32 %v949, 1
        %vm955 = vcmp.gt.s32.totalorder %v954, 0
        %v956 = vsel %vm955, %v954, 0
        %v957 = vshrl.u32 %v956, 5
        %v958 = vand.u32 %v956, 31
        %v959 = vsub.s32 32, %v958
        %v960 = vshrl.u32 683565275, %v959
        %v961 = vshll.u32 683565275, %v958
        %v962 = vshrl.u32 2475754826, %v959
        %v963 = vor.u32 %v961, %v962
        %v964 = vshll.u32 2475754826, %v958
        %v965 = vshrl.u32 2131351028, %v959
        %v966 = vor.u32 %v964, %v965
        %v967 = vshll.u32 2131351028, %v958
        %v968 = vshrl.u32 2102212464, %v959
        %v969 = vor.u32 %v967, %v968
        %v970 = vshll.u32 2102212464, %v958
        %v971 = vshrl.u32 920167782, %v959
        %v972 = vor.u32 %v970, %v971
        %v973 = vshll.u32 920167782, %v958
        %v974 = vshrl.u32 1326507024, %v959
        %v975 = vor.u32 %v973, %v974
        %vm976 = vcmp.lt.s32.totalorder %v957, 1
        %vm977 = vcmp.lt.s32.totalorder %v957, 2
        %vm978 = vcmp.lt.s32.totalorder %v957, 3
        %vm979 = vcmp.lt.s32.totalorder %v957, 4
        %v980 = vsel %vm976, %v960, %v963
        %v981 = vsel %vm979, %v969, 2102212464
        %v982 = vsel %vm978, %v966, %v981
        %v983 = vsel %vm977, %v980, %v982
        %v984 = vsel %vm976, %v963, %v966
        %v985 = vsel %vm979, %v972, 920167782
        %v986 = vsel %vm978, %v969, %v985
        %v987 = vsel %vm977, %v984, %v986
        %v988 = vsel %vm976, %v966, %v969
        %v989 = vsel %vm979, %v975, 1326507024
        %v990 = vsel %vm978, %v972, %v989
        %v991 = vsel %vm977, %v988, %v990
        %v992 = vshll.u32 %v952, 8
        %v993 = vmul.u32.u64.compose %v992, %v991
        %v994 = vextract.low.u32 %v993
        %v995 = vextract.high.u32 %v993
        %v996 = vmul.u32.u64.compose %v992, %v987
        %v997 = vextract.low.u32 %v996
        %v998 = vextract.high.u32 %v996
        %v999 = vmul.u32 %v992, %v983
        %v1000 = vadd.s32 %v995, %v997
        %vm1001 = vc.u32 %v995, %v997
        %v1002 = vadd.s32 %v998, 1
        %v1003 = vsel %vm1001, %v1002, %v998
        %v1004 = vadd.s32 %v999, %v1003
        %v1005 = vadd.s32 %v1004, 536870912
        %v1006 = vshrl.u32 %v1005, 30
        %v1007 = vshll.u32 %v1006, 30
        %v1008 = vsub.s32 %v1004, %v1007
        %vm1009 = vcmp.lt.s32.totalorder %v1008, 0
        %v1010 = vsub.s32 0, %v1008
        %v1011 = vsel %vm1009, %v1010, %v1008
        %v1012 = vclz %v1011
        %v1013 = vsub.s32 %v1012, 2
        %vm1014 = vcmp.gt.s32.totalorder 0, %v1013
        %v1015 = vsel %vm1014, 0, %v1013
        %v1016 = vsub.s32 32, %v1015
        %v1017 = vshll.u32 %v1008, %v1015
        %v1018 = vshrl.u32 %v1000, %v1016
        %v1019 = vor.u32 %v1017, %v1018
        %v1020 = vsub.s32 4294967266, %v1015
        %v1021 = vadd.s32 %v1020, 127
        %v1022 = vshll.u32 %v1021, 23
        %v1023 = vor.u32 4788187, %v1022
        %v1024 = vand.u32 2147483647, %v1023
        %v1026 = vcvt.s32.f32 %v1019
        %v1027 = vmul.f32 %v1026, %v1024
        %v1028 = vxor.u32 %v1027, 2147483648
        %v1029 = vsel %vm946, %v1028, %v1027
        %v1030 = vsub.s32 4, %v1006
        %v1031 = vsel %vm946, %v1030, %v1006
        %v1032 = vsel %vm945, %v627, %v1029
        %v1033 = vsel %vm945, 0, %v1031
        %v1034 = vcosq.f32.pop %v1032
        %v1035 = vsinq.f32.pop %v1032
        %vm1036 = vweird.f32 %v627
        %v1037 = vadd.s32 %v1033, 3
        %v1038 = vand.u32 %v1037, 3
        %vm1039 = vcmp.lt.s32.totalorder %v1038, 2
        %vm1040 = vcmp.eq.s32.totalorder %v1038, 0
        %v1041 = vxor.u32 %v1035, 2147483648
        %v1042 = vsel %vm1040, %v1034, %v1041
        %vm1043 = vcmp.eq.s32.totalorder %v1038, 2
        %v1044 = vxor.u32 %v1034, 2147483648
        %v1045 = vsel %vm1043, %v1044, %v1035
        %v1046 = vsel %vm1039, %v1042, %v1045
        %v1047 = vsel %vm1036, nan, %v1046
        %v1048 = vand.u32 2147483647, %v628
        %vm1049 = vcmp.le.f32.partialorder %v1048, 0.7853982
        %vm1050 = vcmp.lt.s32.totalorder %v628, 0
        %v1051 = vand.u32 %v628, 2139095040
        %v1052 = vshrl.u32 %v1051, 23
        %v1053 = vsub.s32 %v1052, 127
        %v1054 = vand.u32 2147483647, %v628
        %v1055 = vand.u32 %v1054, 8388607
        %v1056 = vor.u32 %v1055, 8388608
        %v1057 = vsub.s32 0, %v1056
        %v1058 = vadd.s32 %v1053, 1
        %vm1059 = vcmp.gt.s32.totalorder %v1058, 0
        %v1060 = vsel %vm1059, %v1058, 0
        %v1061 = vshrl.u32 %v1060, 5
        %v1062 = vand.u32 %v1060, 31
        %v1063 = vsub.s32 32, %v1062
        %v1064 = vshrl.u32 683565275, %v1063
        %v1065 = vshll.u32 683565275, %v1062
        %v1066 = vshrl.u32 2475754826, %v1063
        %v1067 = vor.u32 %v1065, %v1066
        %v1068 = vshll.u32 2475754826, %v1062
        %v1069 = vshrl.u32 2131351028, %v1063
        %v1070 = vor.u32 %v1068, %v1069
        %v1071 = vshll.u32 2131351028, %v1062
        %v1072 = vshrl.u32 2102212464, %v1063
        %v1073 = vor.u32 %v1071, %v1072
        %v1074 = vshll.u32 2102212464, %v1062
        %v1075 = vshrl.u32 920167782, %v1063
        %v1076 = vor.u32 %v1074, %v1075
        %v1077 = vshll.u32 920167782, %v1062
        %v1078 = vshrl.u32 1326507024, %v1063
        %v1079 = vor.u32 %v1077, %v1078
        %vm1080 = vcmp.lt.s32.totalorder %v1061, 1
        %vm1081 = vcmp.lt.s32.totalorder %v1061, 2
        %vm1082 = vcmp.lt.s32.totalorder %v1061, 3
        %vm1083 = vcmp.lt.s32.totalorder %v1061, 4
        %v1084 = vsel %vm1080, %v1064, %v1067
        %v1085 = vsel %vm1083, %v1073, 2102212464
        %v1086 = vsel %vm1082, %v1070, %v1085
        %v1087 = vsel %vm1081, %v1084, %v1086
        %v1088 = vsel %vm1080, %v1067, %v1070
        %v1089 = vsel %vm1083, %v1076, 920167782
        %v1090 = vsel %vm1082, %v1073, %v1089
        %v1091 = vsel %vm1081, %v1088, %v1090
        %v1092 = vsel %vm1080, %v1070, %v1073
        %v1093 = vsel %vm1083, %v1079, 1326507024
        %v1094 = vsel %vm1082, %v1076, %v1093
        %v1095 = vsel %vm1081, %v1092, %v1094
        %v1096 = vshll.u32 %v1056, 8
        %v1097 = vmul.u32.u64.compose %v1096, %v1095
        %v1098 = vextract.low.u32 %v1097
        %v1099 = vextract.high.u32 %v1097
        %v1100 = vmul.u32.u64.compose %v1096, %v1091
        %v1101 = vextract.low.u32 %v1100
        %v1102 = vextract.high.u32 %v1100
        %v1103 = vmul.u32 %v1096, %v1087
        %v1104 = vadd.s32 %v1099, %v1101
        %vm1105 = vc.u32 %v1099, %v1101
        %v1106 = vadd.s32 %v1102, 1
        %v1107 = vsel %vm1105, %v1106, %v1102
        %v1108 = vadd.s32 %v1103, %v1107
        %v1109 = vadd.s32 %v1108, 536870912
        %v1110 = vshrl.u32 %v1109, 30
        %v1111 = vshll.u32 %v1110, 30
        %v1112 = vsub.s32 %v1108, %v1111
        %vm1113 = vcmp.lt.s32.totalorder %v1112, 0
        %v1114 = vsub.s32 0, %v1112
        %v1115 = vsel %vm1113, %v1114, %v1112
        %v1116 = vclz %v1115
        %v1117 = vsub.s32 %v1116, 2
        %vm1118 = vcmp.gt.s32.totalorder 0, %v1117
        %v1119 = vsel %vm1118, 0, %v1117
        %v1120 = vsub.s32 32, %v1119
        %v1121 = vshll.u32 %v1112, %v1119
        %v1122 = vshrl.u32 %v1104, %v1120
        %v1123 = vor.u32 %v1121, %v1122
        %v1124 = vsub.s32 4294967266, %v1119
        %v1125 = vadd.s32 %v1124, 127
        %v1126 = vshll.u32 %v1125, 23
        %v1127 = vor.u32 4788187, %v1126
        %v1128 = vand.u32 2147483647, %v1127
        %v1130 = vcvt.s32.f32 %v1123
        %v1131 = vmul.f32 %v1130, %v1128
        %v1132 = vxor.u32 %v1131, 2147483648
        %v1133 = vsel %vm1050, %v1132, %v1131
        %v1134 = vsub.s32 4, %v1110
        %v1135 = vsel %vm1050, %v1134, %v1110
        %v1136 = vsel %vm1049, %v628, %v1133
        %v1137 = vsel %vm1049, 0, %v1135
        %v1138 = vcosq.f32.pop %v1136
        %v1139 = vsinq.f32.pop %v1136
        %vm1140 = vweird.f32 %v628
        %v1141 = vadd.s32 %v1137, 3
        %v1142 = vand.u32 %v1141, 3
        %vm1143 = vcmp.lt.s32.totalorder %v1142, 2
        %vm1144 = vcmp.eq.s32.totalorder %v1142, 0
        %v1145 = vxor.u32 %v1139, 2147483648
        %v1146 = vsel %vm1144, %v1138, %v1145
        %vm1147 = vcmp.eq.s32.totalorder %v1142, 2
        %v1148 = vxor.u32 %v1138, 2147483648
        %v1149 = vsel %vm1147, %v1148, %v1139
        %v1150 = vsel %vm1143, %v1146, %v1149
        %v1151 = vsel %vm1140, nan, %v1150
        %v1152 = vand.u32 2147483647, %v629
        %vm1153 = vcmp.le.f32.partialorder %v1152, 0.7853982
        %vm1154 = vcmp.lt.s32.totalorder %v629, 0
        %v1155 = vand.u32 %v629, 2139095040
        %v1156 = vshrl.u32 %v1155, 23
        %v1157 = vsub.s32 %v1156, 127
        %v1158 = vand.u32 2147483647, %v629
        %v1159 = vand.u32 %v1158, 8388607
        %v1160 = vor.u32 %v1159, 8388608
        %v1161 = vsub.s32 0, %v1160
        %v1162 = vadd.s32 %v1157, 1
        %vm1163 = vcmp.gt.s32.totalorder %v1162, 0
        %v1164 = vsel %vm1163, %v1162, 0
        %v1165 = vshrl.u32 %v1164, 5
        %v1166 = vand.u32 %v1164, 31
        %v1167 = vsub.s32 32, %v1166
        %v1168 = vshrl.u32 683565275, %v1167
        %v1169 = vshll.u32 683565275, %v1166
        %v1170 = vshrl.u32 2475754826, %v1167
        %v1171 = vor.u32 %v1169, %v1170
        %v1172 = vshll.u32 2475754826, %v1166
        %v1173 = vshrl.u32 2131351028, %v1167
        %v1174 = vor.u32 %v1172, %v1173
        %v1175 = vshll.u32 2131351028, %v1166
        %v1176 = vshrl.u32 2102212464, %v1167
        %v1177 = vor.u32 %v1175, %v1176
        %v1178 = vshll.u32 2102212464, %v1166
        %v1179 = vshrl.u32 920167782, %v1167
        %v1180 = vor.u32 %v1178, %v1179
        %v1181 = vshll.u32 920167782, %v1166
        %v1182 = vshrl.u32 1326507024, %v1167
        %v1183 = vor.u32 %v1181, %v1182
        %vm1184 = vcmp.lt.s32.totalorder %v1165, 1
        %vm1185 = vcmp.lt.s32.totalorder %v1165, 2
        %vm1186 = vcmp.lt.s32.totalorder %v1165, 3
        %vm1187 = vcmp.lt.s32.totalorder %v1165, 4
        %v1188 = vsel %vm1184, %v1168, %v1171
        %v1189 = vsel %vm1187, %v1177, 2102212464
        %v1190 = vsel %vm1186, %v1174, %v1189
        %v1191 = vsel %vm1185, %v1188, %v1190
        %v1192 = vsel %vm1184, %v1171, %v1174
        %v1193 = vsel %vm1187, %v1180, 920167782
        %v1194 = vsel %vm1186, %v1177, %v1193
        %v1195 = vsel %vm1185, %v1192, %v1194
        %v1196 = vsel %vm1184, %v1174, %v1177
        %v1197 = vsel %vm1187, %v1183, 1326507024
        %v1198 = vsel %vm1186, %v1180, %v1197
        %v1199 = vsel %vm1185, %v1196, %v1198
        %v1200 = vshll.u32 %v1160, 8
        %v1201 = vmul.u32.u64.compose %v1200, %v1199
        %v1202 = vextract.low.u32 %v1201
        %v1203 = vextract.high.u32 %v1201
        %v1204 = vmul.u32.u64.compose %v1200, %v1195
        %v1205 = vextract.low.u32 %v1204
        %v1206 = vextract.high.u32 %v1204
        %v1207 = vmul.u32 %v1200, %v1191
        %v1208 = vadd.s32 %v1203, %v1205
        %vm1209 = vc.u32 %v1203, %v1205
        %v1210 = vadd.s32 %v1206, 1
        %v1211 = vsel %vm1209, %v1210, %v1206
        %v1212 = vadd.s32 %v1207, %v1211
        %v1213 = vadd.s32 %v1212, 536870912
        %v1214 = vshrl.u32 %v1213, 30
        %v1215 = vshll.u32 %v1214, 30
        %v1216 = vsub.s32 %v1212, %v1215
        %vm1217 = vcmp.lt.s32.totalorder %v1216, 0
        %v1218 = vsub.s32 0, %v1216
        %v1219 = vsel %vm1217, %v1218, %v1216
        %v1220 = vclz %v1219
        %v1221 = vsub.s32 %v1220, 2
        %vm1222 = vcmp.gt.s32.totalorder 0, %v1221
        %v1223 = vsel %vm1222, 0, %v1221
        %v1224 = vsub.s32 32, %v1223
        %v1225 = vshll.u32 %v1216, %v1223
        %v1226 = vshrl.u32 %v1208, %v1224
        %v1227 = vor.u32 %v1225, %v1226
        %v1228 = vsub.s32 4294967266, %v1223
        %v1229 = vadd.s32 %v1228, 127
        %v1230 = vshll.u32 %v1229, 23
        %v1231 = vor.u32 4788187, %v1230
        %v1232 = vand.u32 2147483647, %v1231
        %v1234 = vcvt.s32.f32 %v1227
        %v1235 = vmul.f32 %v1234, %v1232
        %v1236 = vxor.u32 %v1235, 2147483648
        %v1237 = vsel %vm1154, %v1236, %v1235
        %v1238 = vsub.s32 4, %v1214
        %v1239 = vsel %vm1154, %v1238, %v1214
        %v1240 = vsel %vm1153, %v629, %v1237
        %v1241 = vsel %vm1153, 0, %v1239
        %v1242 = vcosq.f32.pop %v1240
        %v1243 = vsinq.f32.pop %v1240
        %vm1244 = vweird.f32 %v629
        %v1245 = vadd.s32 %v1241, 3
        %v1246 = vand.u32 %v1245, 3
        %vm1247 = vcmp.lt.s32.totalorder %v1246, 2
        %vm1248 = vcmp.eq.s32.totalorder %v1246, 0
        %v1249 = vxor.u32 %v1243, 2147483648
        %v1250 = vsel %vm1248, %v1242, %v1249
        %vm1251 = vcmp.eq.s32.totalorder %v1246, 2
        %v1252 = vxor.u32 %v1242, 2147483648
        %v1253 = vsel %vm1251, %v1252, %v1243
        %v1254 = vsel %vm1247, %v1250, %v1253
        %v1255 = vsel %vm1244, nan, %v1254
        %v1256 = vand.u32 2147483647, %v630
        %vm1257 = vcmp.le.f32.partialorder %v1256, 0.7853982
        %vm1258 = vcmp.lt.s32.totalorder %v630, 0
        %v1259 = vand.u32 %v630, 2139095040
        %v1260 = vshrl.u32 %v1259, 23
        %v1261 = vsub.s32 %v1260, 127
        %v1262 = vand.u32 2147483647, %v630
        %v1263 = vand.u32 %v1262, 8388607
        %v1264 = vor.u32 %v1263, 8388608
        %v1265 = vsub.s32 0, %v1264
        %v1266 = vadd.s32 %v1261, 1
        %vm1267 = vcmp.gt.s32.totalorder %v1266, 0
        %v1268 = vsel %vm1267, %v1266, 0
        %v1269 = vshrl.u32 %v1268, 5
        %v1270 = vand.u32 %v1268, 31
        %v1271 = vsub.s32 32, %v1270
        %v1272 = vshrl.u32 683565275, %v1271
        %v1273 = vshll.u32 683565275, %v1270
        %v1274 = vshrl.u32 2475754826, %v1271
        %v1275 = vor.u32 %v1273, %v1274
        %v1276 = vshll.u32 2475754826, %v1270
        %v1277 = vshrl.u32 2131351028, %v1271
        %v1278 = vor.u32 %v1276, %v1277
        %v1279 = vshll.u32 2131351028, %v1270
        %v1280 = vshrl.u32 2102212464, %v1271
        %v1281 = vor.u32 %v1279, %v1280
        %v1282 = vshll.u32 2102212464, %v1270
        %v1283 = vshrl.u32 920167782, %v1271
        %v1284 = vor.u32 %v1282, %v1283
        %v1285 = vshll.u32 920167782, %v1270
        %v1286 = vshrl.u32 1326507024, %v1271
        %v1287 = vor.u32 %v1285, %v1286
        %vm1288 = vcmp.lt.s32.totalorder %v1269, 1
        %vm1289 = vcmp.lt.s32.totalorder %v1269, 2
        %vm1290 = vcmp.lt.s32.totalorder %v1269, 3
        %vm1291 = vcmp.lt.s32.totalorder %v1269, 4
        %v1292 = vsel %vm1288, %v1272, %v1275
        %v1293 = vsel %vm1291, %v1281, 2102212464
        %v1294 = vsel %vm1290, %v1278, %v1293
        %v1295 = vsel %vm1289, %v1292, %v1294
        %v1296 = vsel %vm1288, %v1275, %v1278
        %v1297 = vsel %vm1291, %v1284, 920167782
        %v1298 = vsel %vm1290, %v1281, %v1297
        %v1299 = vsel %vm1289, %v1296, %v1298
        %v1300 = vsel %vm1288, %v1278, %v1281
        %v1301 = vsel %vm1291, %v1287, 1326507024
        %v1302 = vsel %vm1290, %v1284, %v1301
        %v1303 = vsel %vm1289, %v1300, %v1302
        %v1304 = vshll.u32 %v1264, 8
        %v1305 = vmul.u32.u64.compose %v1304, %v1303
        %v1306 = vextract.low.u32 %v1305
        %v1307 = vextract.high.u32 %v1305
        %v1308 = vmul.u32.u64.compose %v1304, %v1299
        %v1309 = vextract.low.u32 %v1308
        %v1310 = vextract.high.u32 %v1308
        %v1311 = vmul.u32 %v1304, %v1295
        %v1312 = vadd.s32 %v1307, %v1309
        %vm1313 = vc.u32 %v1307, %v1309
        %v1314 = vadd.s32 %v1310, 1
        %v1315 = vsel %vm1313, %v1314, %v1310
        %v1316 = vadd.s32 %v1311, %v1315
        %v1317 = vadd.s32 %v1316, 536870912
        %v1318 = vshrl.u32 %v1317, 30
        %v1319 = vshll.u32 %v1318, 30
        %v1320 = vsub.s32 %v1316, %v1319
        %vm1321 = vcmp.lt.s32.totalorder %v1320, 0
        %v1322 = vsub.s32 0, %v1320
        %v1323 = vsel %vm1321, %v1322, %v1320
        %v1324 = vclz %v1323
        %v1325 = vsub.s32 %v1324, 2
        %vm1326 = vcmp.gt.s32.totalorder 0, %v1325
        %v1327 = vsel %vm1326, 0, %v1325
        %v1328 = vsub.s32 32, %v1327
        %v1329 = vshll.u32 %v1320, %v1327
        %v1330 = vshrl.u32 %v1312, %v1328
        %v1331 = vor.u32 %v1329, %v1330
        %v1332 = vsub.s32 4294967266, %v1327
        %v1333 = vadd.s32 %v1332, 127
        %v1334 = vshll.u32 %v1333, 23
        %v1335 = vor.u32 4788187, %v1334
        %v1336 = vand.u32 2147483647, %v1335
        %v1338 = vcvt.s32.f32 %v1331
        %v1339 = vmul.f32 %v1338, %v1336
        %v1340 = vxor.u32 %v1339, 2147483648
        %v1341 = vsel %vm1258, %v1340, %v1339
        %v1342 = vsub.s32 4, %v1318
        %v1343 = vsel %vm1258, %v1342, %v1318
        %v1344 = vsel %vm1257, %v630, %v1341
        %v1345 = vsel %vm1257, 0, %v1343
        %v1346 = vcosq.f32.pop %v1344
        %v1347 = vsinq.f32.pop %v1344
        %vm1348 = vweird.f32 %v630
        %v1349 = vadd.s32 %v1345, 3
        %v1350 = vand.u32 %v1349, 3
        %vm1351 = vcmp.lt.s32.totalorder %v1350, 2
        %vm1352 = vcmp.eq.s32.totalorder %v1350, 0
        %v1353 = vxor.u32 %v1347, 2147483648
        %v1354 = vsel %vm1352, %v1346, %v1353
        %vm1355 = vcmp.eq.s32.totalorder %v1350, 2
        %v1356 = vxor.u32 %v1346, 2147483648
        %v1357 = vsel %vm1355, %v1356, %v1347
        %v1358 = vsel %vm1351, %v1354, %v1357
        %v1359 = vsel %vm1348, nan, %v1358
        %v1360 = vand.u32 2147483647, %v631
        %vm1361 = vcmp.le.f32.partialorder %v1360, 0.7853982
        %vm1362 = vcmp.lt.s32.totalorder %v631, 0
        %v1363 = vand.u32 %v631, 2139095040
        %v1364 = vshrl.u32 %v1363, 23
        %v1365 = vsub.s32 %v1364, 127
        %v1366 = vand.u32 2147483647, %v631
        %v1367 = vand.u32 %v1366, 8388607
        %v1368 = vor.u32 %v1367, 8388608
        %v1369 = vsub.s32 0, %v1368
        %v1370 = vadd.s32 %v1365, 1
        %vm1371 = vcmp.gt.s32.totalorder %v1370, 0
        %v1372 = vsel %vm1371, %v1370, 0
        %v1373 = vshrl.u32 %v1372, 5
        %v1374 = vand.u32 %v1372, 31
        %v1375 = vsub.s32 32, %v1374
        %v1376 = vshrl.u32 683565275, %v1375
        %v1377 = vshll.u32 683565275, %v1374
        %v1378 = vshrl.u32 2475754826, %v1375
        %v1379 = vor.u32 %v1377, %v1378
        %v1380 = vshll.u32 2475754826, %v1374
        %v1381 = vshrl.u32 2131351028, %v1375
        %v1382 = vor.u32 %v1380, %v1381
        %v1383 = vshll.u32 2131351028, %v1374
        %v1384 = vshrl.u32 2102212464, %v1375
        %v1385 = vor.u32 %v1383, %v1384
        %v1386 = vshll.u32 2102212464, %v1374
        %v1387 = vshrl.u32 920167782, %v1375
        %v1388 = vor.u32 %v1386, %v1387
        %v1389 = vshll.u32 920167782, %v1374
        %v1390 = vshrl.u32 1326507024, %v1375
        %v1391 = vor.u32 %v1389, %v1390
        %vm1392 = vcmp.lt.s32.totalorder %v1373, 1
        %vm1393 = vcmp.lt.s32.totalorder %v1373, 2
        %vm1394 = vcmp.lt.s32.totalorder %v1373, 3
        %vm1395 = vcmp.lt.s32.totalorder %v1373, 4
        %v1396 = vsel %vm1392, %v1376, %v1379
        %v1397 = vsel %vm1395, %v1385, 2102212464
        %v1398 = vsel %vm1394, %v1382, %v1397
        %v1399 = vsel %vm1393, %v1396, %v1398
        %v1400 = vsel %vm1392, %v1379, %v1382
        %v1401 = vsel %vm1395, %v1388, 920167782
        %v1402 = vsel %vm1394, %v1385, %v1401
        %v1403 = vsel %vm1393, %v1400, %v1402
        %v1404 = vsel %vm1392, %v1382, %v1385
        %v1405 = vsel %vm1395, %v1391, 1326507024
        %v1406 = vsel %vm1394, %v1388, %v1405
        %v1407 = vsel %vm1393, %v1404, %v1406
        %v1408 = vshll.u32 %v1368, 8
        %v1409 = vmul.u32.u64.compose %v1408, %v1407
        %v1410 = vextract.low.u32 %v1409
        %v1411 = vextract.high.u32 %v1409
        %v1412 = vmul.u32.u64.compose %v1408, %v1403
        %v1413 = vextract.low.u32 %v1412
        %v1414 = vextract.high.u32 %v1412
        %v1415 = vmul.u32 %v1408, %v1399
        %v1416 = vadd.s32 %v1411, %v1413
        %vm1417 = vc.u32 %v1411, %v1413
        %v1418 = vadd.s32 %v1414, 1
        %v1419 = vsel %vm1417, %v1418, %v1414
        %v1420 = vadd.s32 %v1415, %v1419
        %v1421 = vadd.s32 %v1420, 536870912
        %v1422 = vshrl.u32 %v1421, 30
        %v1423 = vshll.u32 %v1422, 30
        %v1424 = vsub.s32 %v1420, %v1423
        %vm1425 = vcmp.lt.s32.totalorder %v1424, 0
        %v1426 = vsub.s32 0, %v1424
        %v1427 = vsel %vm1425, %v1426, %v1424
        %v1428 = vclz %v1427
        %v1429 = vsub.s32 %v1428, 2
        %vm1430 = vcmp.gt.s32.totalorder 0, %v1429
        %v1431 = vsel %vm1430, 0, %v1429
        %v1432 = vsub.s32 32, %v1431
        %v1433 = vshll.u32 %v1424, %v1431
        %v1434 = vshrl.u32 %v1416, %v1432
        %v1435 = vor.u32 %v1433, %v1434
        %v1436 = vsub.s32 4294967266, %v1431
        %v1437 = vadd.s32 %v1436, 127
        %v1438 = vshll.u32 %v1437, 23
        %v1439 = vor.u32 4788187, %v1438
        %v1440 = vand.u32 2147483647, %v1439
        %v1442 = vcvt.s32.f32 %v1435
        %v1443 = vmul.f32 %v1442, %v1440
        %v1444 = vxor.u32 %v1443, 2147483648
        %v1445 = vsel %vm1362, %v1444, %v1443
        %v1446 = vsub.s32 4, %v1422
        %v1447 = vsel %vm1362, %v1446, %v1422
        %v1448 = vsel %vm1361, %v631, %v1445
        %v1449 = vsel %vm1361, 0, %v1447
        %v1450 = vcosq.f32.pop %v1448
        %v1451 = vsinq.f32.pop %v1448
        %vm1452 = vweird.f32 %v631
        %v1453 = vadd.s32 %v1449, 3
        %v1454 = vand.u32 %v1453, 3
        %vm1455 = vcmp.lt.s32.totalorder %v1454, 2
        %vm1456 = vcmp.eq.s32.totalorder %v1454, 0
        %v1457 = vxor.u32 %v1451, 2147483648
        %v1458 = vsel %vm1456, %v1450, %v1457
        %vm1459 = vcmp.eq.s32.totalorder %v1454, 2
        %v1460 = vxor.u32 %v1450, 2147483648
        %v1461 = vsel %vm1459, %v1460, %v1451
        %v1462 = vsel %vm1455, %v1458, %v1461
        %v1463 = vsel %vm1452, nan, %v1462
        %vm1464 = vcmask 261120
        %v1465 = vsel %vm1464, %v735, 0.0
        %v1466 = vrot.slane %v1465, 4
        %v1467 = vadd.f32 %v1465, %v1466
        %v1468 = vrot.slane %v1467, 2
        %v1469 = vadd.f32 %v1467, %v1468
        %v1470 = vrot.slane %v1469, 1
        %v1471 = vadd.f32 %v1469, %v1470
        %v1472 = vsel %vm1464, %v839, 0.0
        %v1473 = vrot.slane %v1472, 4
        %v1474 = vadd.f32 %v1472, %v1473
        %v1475 = vrot.slane %v1474, 2
        %v1476 = vadd.f32 %v1474, %v1475
        %v1477 = vrot.slane %v1476, 1
        %v1478 = vadd.f32 %v1476, %v1477
        %v1479 = vsel %vm1464, %v943, 0.0
        %v1480 = vrot.slane %v1479, 4
        %v1481 = vadd.f32 %v1479, %v1480
        %v1482 = vrot.slane %v1481, 2
        %v1483 = vadd.f32 %v1481, %v1482
        %v1484 = vrot.slane %v1483, 1
        %v1485 = vadd.f32 %v1483, %v1484
        %v1486 = vsel %vm1464, %v1047, 0.0
        %v1487 = vrot.slane %v1486, 4
        %v1488 = vadd.f32 %v1486, %v1487
        %v1489 = vrot.slane %v1488, 2
        %v1490 = vadd.f32 %v1488, %v1489
        %v1491 = vrot.slane %v1490, 1
        %v1492 = vadd.f32 %v1490, %v1491
        %v1493 = vsel %vm1464, %v1151, 0.0
        %v1494 = vrot.slane %v1493, 4
        %v1495 = vadd.f32 %v1493, %v1494
        %v1496 = vrot.slane %v1495, 2
        %v1497 = vadd.f32 %v1495, %v1496
        %v1498 = vrot.slane %v1497, 1
        %v1499 = vadd.f32 %v1497, %v1498
        %v1500 = vsel %vm1464, %v1255, 0.0
        %v1501 = vrot.slane %v1500, 4
        %v1502 = vadd.f32 %v1500, %v1501
        %v1503 = vrot.slane %v1502, 2
        %v1504 = vadd.f32 %v1502, %v1503
        %v1505 = vrot.slane %v1504, 1
        %v1506 = vadd.f32 %v1504, %v1505
        %v1507 = vsel %vm1464, %v1359, 0.0
        %v1508 = vrot.slane %v1507, 4
        %v1509 = vadd.f32 %v1507, %v1508
        %v1510 = vrot.slane %v1509, 2
        %v1511 = vadd.f32 %v1509, %v1510
        %v1512 = vrot.slane %v1511, 1
        %v1513 = vadd.f32 %v1511, %v1512
        %v1514 = vsel %vm1464, %v1463, 0.0
        %v1515 = vrot.slane %v1514, 4
        %v1516 = vadd.f32 %v1514, %v1515
        %v1517 = vrot.slane %v1516, 2
        %v1518 = vadd.f32 %v1516, %v1517
        %v1519 = vrot.slane %v1518, 1
        %v1520 = vadd.f32 %v1518, %v1519
        %v1521 = vrcp.pop 8.0
        %v1522 = vmul.f32 %v1471, %v1521
        %v1523 = vmul.f32 %v1478, %v1521
        %v1524 = vmul.f32 %v1485, %v1521
        %v1525 = vmul.f32 %v1492, %v1521
        %v1526 = vmul.f32 %v1499, %v1521
        %v1527 = vmul.f32 %v1506, %v1521
        %v1528 = vmul.f32 %v1513, %v1521
        %v1529 = vmul.f32 %v1520, %v1521
        %vm1538 = vcmask 1041409
        %v1539 = vsel %vm1538, %v1523, %v1522
        %vm1540 = vcmask 1042434
        %v1541 = vsel %vm1540, %v1524, %v1539
        %vm1542 = vcmask 1043459
        %v1543 = vsel %vm1542, %v1525, %v1541
        %vm1544 = vcmask 1044484
        %v1545 = vsel %vm1544, %v1526, %v1543
        %vm1546 = vcmask 1045509
        %v1547 = vsel %vm1546, %v1527, %v1545
        %vm1548 = vcmask 1046534
        %v1549 = vsel %vm1548, %v1528, %v1547
        %vm1550 = vcmask 1047559
        %v1551 = vsel %vm1550, %v1529, %v1549
        %v1553 = vadd.f32 %v419, %v1551
        %v1554 = vld [vmem:[%s399] sm:$0xff]
        %v1555 = vlaneseq
        %v1556 = vshrl.u32 %v1555, 7
        %v1557 = vsub.s32 2, %v1556
        %v1558 = vrot.slane %v418, %v1557
        %vm1559 = vcmask 31744
        %v1561 = vsel %vm1559, %v1554, 0
        %vm1563 = vcmask 1043456
        %v1565 = vsel %vm1563, %v417, 0
        %1567 = vmatprep.subr.mxu0 0.0
        %1568 = vmatpush1.msra.mxu0 %v1565
        %1569 = vmatprep.subr.mxu0 0.0
        %1570 = vmatpush1.msra.mxu0 0.0
        %1571 = vmatprep.subr.mxu0 0.0
        %1572 = vmatpush1.msra.mxu0 0.0
        %1573 = vmatprep.subr.mxu0 0.0
        %1574 = vmatpush1.msra.mxu0 0.0
        %1575 = vmatprep.subr.mxu0 0.0
        %1576 = vmatpush1.msra.mxu0 0.0
        %1577 = vmatprep.subr.mxu0 0.0
        %1578 = vmatpush1.msra.mxu0 0.0
        %1579 = vmatprep.subr.mxu0 0.0
        %1580 = vmatpush1.msra.mxu0 0.0
        %1581 = vmatprep.subr.mxu0 0.0
        %1582 = vmatpush1.msra.mxu0 0.0
        %1583 = vmatprep.subr.mxu0 0.0
        %1584 = vmatpush1.msra.mxu0 0.0
        %1585 = vmatprep.subr.mxu0 0.0
        %1586 = vmatpush1.msra.mxu0 0.0
        %1587 = vmatprep.subr.mxu0 0.0
        %1588 = vmatpush1.msra.mxu0 0.0
        %1589 = vmatprep.subr.mxu0 0.0
        %1590 = vmatpush1.msra.mxu0 0.0
        %1591 = vmatprep.subr.mxu0 0.0
        %1592 = vmatpush1.msra.mxu0 0.0
        %1593 = vmatprep.subr.mxu0 0.0
        %1594 = vmatpush1.msra.mxu0 0.0
        %1595 = vmatprep.subr.mxu0 0.0
        %1596 = vmatpush1.msra.mxu0 0.0
        %1597 = vmatprep.subr.mxu0 0.0
        %1598 = vmatpush1.msra.mxu0 0.0
        %1599 = vmatprep.subr.mxu0 0.0
        %1600 = vmatpush1.msra.mxu0 0.0
        %1601 = vmatprep.subr.mxu0 0.0
        %1602 = vmatpush1.msra.mxu0 0.0
        %1603 = vmatprep.subr.mxu0 0.0
        %1604 = vmatpush1.msra.mxu0 0.0
        %1605 = vmatprep.subr.mxu0 0.0
        %1606 = vmatpush1.msra.mxu0 0.0
        %1607 = vmatprep.subr.mxu0 0.0
        %1608 = vmatpush1.msra.mxu0 0.0
        %1609 = vmatprep.subr.mxu0 0.0
        %1610 = vmatpush1.msra.mxu0 0.0
        %1611 = vmatprep.subr.mxu0 0.0
        %1612 = vmatpush1.msra.mxu0 0.0
        %1613 = vmatprep.subr.mxu0 0.0
        %1614 = vmatpush1.msra.mxu0 0.0
        %1615 = vmatprep.subr.mxu0 0.0
        %1616 = vmatpush1.msra.mxu0 0.0
        %1617 = vmatprep.subr.mxu0 0.0
        %1618 = vmatpush1.msra.mxu0 0.0
        %1619 = vmatprep.subr.mxu0 0.0
        %1620 = vmatpush1.msra.mxu0 0.0
        %1621 = vmatprep.subr.mxu0 0.0
        %1622 = vmatpush1.msra.mxu0 0.0
        %1623 = vmatprep.subr.mxu0 0.0
        %1624 = vmatpush1.msra.mxu0 0.0
        %1625 = vmatprep.subr.mxu0 0.0
        %1626 = vmatpush1.msra.mxu0 0.0
        %1627 = vmatprep.subr.mxu0 0.0
        %1628 = vmatpush1.msra.mxu0 0.0
        %1629 = vmatprep.subr.mxu0 0.0
        %1630 = vmatpush1.msra.mxu0 0.0
        %1631 = vmatprep.mubr.f32.mxu0 0.0
        %1632 = vmatmul.mubr.f32.gmra.mrb[0].mxu0 %v1561
        %v1633 = vpop.f32.mrb[0].mxu0
        %v1634 = vadd.f32 %v1558, %v1633
        %v1635 = vpop.f32.mrb[0].mxu0
        %1636 = vdwg.mxu0
        %v1637 = vadd.f32 %v1553, %v1634
        %v1638 = vld [vmem:[%s402] sm:$0x1]
        %v1640 = vrot.slane %v418, 1
        %v1643 = vsel %vm1464, %v1638, 0
        %1645 = vmatprep.subr.mxu0 0.0
        %1646 = vmatpush1.msra.mxu0 %v413
        %1647 = vmatprep.subr.mxu0 0.0
        %1648 = vmatpush1.msra.mxu0 %v414
        %1649 = vmatprep.subr.mxu0 0.0
        %1650 = vmatpush1.msra.mxu0 %v415
        %1651 = vmatprep.subr.mxu0 0.0
        %1652 = vmatpush1.msra.mxu0 %v416
        %1653 = vmatprep.subr.mxu0 0.0
        %1654 = vmatpush1.msra.mxu0 0.0
        %1655 = vmatprep.subr.mxu0 0.0
        %1656 = vmatpush1.msra.mxu0 0.0
        %1657 = vmatprep.subr.mxu0 0.0
        %1658 = vmatpush1.msra.mxu0 0.0
        %1659 = vmatprep.subr.mxu0 0.0
        %1660 = vmatpush1.msra.mxu0 0.0
        %1661 = vmatprep.subr.mxu0 0.0
        %1662 = vmatpush1.msra.mxu0 0.0
        %1663 = vmatprep.subr.mxu0 0.0
        %1664 = vmatpush1.msra.mxu0 0.0
        %1665 = vmatprep.subr.mxu0 0.0
        %1666 = vmatpush1.msra.mxu0 0.0
        %1667 = vmatprep.subr.mxu0 0.0
        %1668 = vmatpush1.msra.mxu0 0.0
        %1669 = vmatprep.subr.mxu0 0.0
        %1670 = vmatpush1.msra.mxu0 0.0
        %1671 = vmatprep.subr.mxu0 0.0
        %1672 = vmatpush1.msra.mxu0 0.0
        %1673 = vmatprep.subr.mxu0 0.0
        %1674 = vmatpush1.msra.mxu0 0.0
        %1675 = vmatprep.subr.mxu0 0.0
        %1676 = vmatpush1.msra.mxu0 0.0
        %1677 = vmatprep.subr.mxu0 0.0
        %1678 = vmatpush1.msra.mxu0 0.0
        %1679 = vmatprep.subr.mxu0 0.0
        %1680 = vmatpush1.msra.mxu0 0.0
        %1681 = vmatprep.subr.mxu0 0.0
        %1682 = vmatpush1.msra.mxu0 0.0
        %1683 = vmatprep.subr.mxu0 0.0
        %1684 = vmatpush1.msra.mxu0 0.0
        %1685 = vmatprep.subr.mxu0 0.0
        %1686 = vmatpush1.msra.mxu0 0.0
        %1687 = vmatprep.subr.mxu0 0.0
        %1688 = vmatpush1.msra.mxu0 0.0
        %1689 = vmatprep.subr.mxu0 0.0
        %1690 = vmatpush1.msra.mxu0 0.0
        %1691 = vmatprep.subr.mxu0 0.0
        %1692 = vmatpush1.msra.mxu0 0.0
        %1693 = vmatprep.subr.mxu0 0.0
        %1694 = vmatpush1.msra.mxu0 0.0
        %1695 = vmatprep.subr.mxu0 0.0
        %1696 = vmatpush1.msra.mxu0 0.0
        %1697 = vmatprep.subr.mxu0 0.0
        %1698 = vmatpush1.msra.mxu0 0.0
        %1699 = vmatprep.subr.mxu0 0.0
        %1700 = vmatpush1.msra.mxu0 0.0
        %1701 = vmatprep.subr.mxu0 0.0
        %1702 = vmatpush1.msra.mxu0 0.0
        %1703 = vmatprep.subr.mxu0 0.0
        %1704 = vmatpush1.msra.mxu0 0.0
        %1705 = vmatprep.subr.mxu0 0.0
        %1706 = vmatpush1.msra.mxu0 0.0
        %1707 = vmatprep.subr.mxu0 0.0
        %1708 = vmatpush1.msra.mxu0 0.0
        %1709 = vmatprep.mubr.f32.mxu0 0.0
        %1710 = vmatmul.mubr.f32.gmra.mrb[0].mxu0 %v1643
        %v1711 = vpop.f32.mrb[0].mxu0
        %v1712 = vadd.f32 %v1640, %v1711
        %v1713 = vpop.f32.mrb[0].mxu0
        %1714 = vdwg.mxu0
        %v1716 = vrot.slane %v1637, 7
        %vm1718 = vcmask 1040384
        %v1719 = vsel %vm1718, %v1712, %v1716
        %v1720 = vlaneseq
        %v1721 = vshrl.u32 %v1720, 7
        %v1722 = vadd.s32 %v1721, 8
        %v1723 = vlaneseq
        %v1724 = vand.u32 %v1723, 127
        %vm1725 = vcmp.le.s32.totalorder %v1724, %v1721
        %vm1726 = vcmp.le.s32.totalorder %v1724, %v1722
        %v1727 = vsel %vm1725, 0.0, -1e+09
        %v1728 = vsel %vm1726, 0.0, -1e+09
        %v1729 = vld [vmem:[#allocation2] sm:$0xf]
        %v1730 = vld [vmem:[#allocation2 + $0x4] sm:$0xf]
        %v1731 = vld [vmem:[#allocation2 + $0x8] sm:$0xf]
        %v1732 = vld [vmem:[#allocation2 + $0xc] sm:$0xf]
        %v1733 = vld [vmem:[#allocation2 + $0x10] sm:$0xf]
        %v1734 = vld [vmem:[#allocation2 + $0x14] sm:$0xf]
        %v1735 = vld [vmem:[#allocation2 + $0x18] sm:$0xf]
        %v1736 = vld [vmem:[#allocation2 + $0x1c] sm:$0xf]
        %v1737 = vld [vmem:[#allocation2 + $0x20] sm:$0xf]
        %v1738 = vld [vmem:[#allocation2 + $0x24] sm:$0xf]
        %v1739 = vld [vmem:[#allocation2 + $0x28] sm:$0xf]
        %v1740 = vld [vmem:[#allocation2 + $0x2c] sm:$0xf]
        %v1741 = vld [vmem:[#allocation2 + $0x30] sm:$0xf]
        %v1742 = vld [vmem:[#allocation2 + $0x34] sm:$0xf]
        %v1743 = vld [vmem:[#allocation2 + $0x38] sm:$0xf]
        %v1744 = vld [vmem:[#allocation2 + $0x3c] sm:$0xf]
        %v1745 = vld [vmem:[#allocation2 + $0x40] sm:$0xf]
        %v1746 = vld [vmem:[#allocation2 + $0x44] sm:$0xf]
        %v1747 = vld [vmem:[#allocation2 + $0x48] sm:$0xf]
        %v1748 = vld [vmem:[#allocation2 + $0x4c] sm:$0xf]
        %v1749 = vld [vmem:[#allocation2 + $0x50] sm:$0xf]
        %v1750 = vld [vmem:[#allocation2 + $0x54] sm:$0xf]
        %v1751 = vld [vmem:[#allocation2 + $0x58] sm:$0xf]
        %v1752 = vld [vmem:[#allocation2 + $0x5c] sm:$0xf]
        %v1753 = vld [vmem:[#allocation2 + $0x60] sm:$0xf]
        %v1754 = vld [vmem:[#allocation2 + $0x64] sm:$0xf]
        %v1755 = vld [vmem:[#allocation2 + $0x68] sm:$0xf]
        %v1756 = vld [vmem:[#allocation2 + $0x6c] sm:$0xf]
        %v1757 = vld [vmem:[%s5] sm:$0xff]
        %v1758 = vpack.c.bf16 %v1716, %v1719
        %v1759 = vlaneseq
        %v1760 = vshrl.u32 %v1759, 7
        %v1761 = vsub.s32 0, %v1760
        %v1762 = vrot.slane %v1757, %v1761
        %v1767 = vunpack.c.l.b16 %v1729
        %v1768 = vunpack.c.l.b16 %v1730
        %v1769 = vunpack.c.l.b16 %v1731
        %v1770 = vunpack.c.l.b16 %v1732
        %v1771 = vpack.c.b16 %v1768, %v1767
        %v1772 = vpack.c.b16 %v1770, %v1769
        %v1776 = vsel %vm1464, %v1758, 0
        %1778 = vmatprep.subr.bf16.mxu0 0
        %1779 = vmatpush1.bf16.msra.mxu0 %v1771
        %1780 = vmatprep.subr.bf16.mxu0 0
        %1781 = vmatpush1.bf16.msra.mxu0 %v1772
        %1782 = vmatprep.subr.bf16.mxu0 0
        %1783 = vmatpush1.bf16.msra.mxu0 0
        %1784 = vmatprep.subr.bf16.mxu0 0
        %1785 = vmatpush1.bf16.msra.mxu0 0
        %1786 = vmatprep.subr.bf16.mxu0 0
        %1787 = vmatpush1.bf16.msra.mxu0 0
        %1788 = vmatprep.subr.bf16.mxu0 0
        %1789 = vmatpush1.bf16.msra.mxu0 0
        %1790 = vmatprep.subr.bf16.mxu0 0
        %1791 = vmatpush1.bf16.msra.mxu0 0
        %1792 = vmatprep.subr.bf16.mxu0 0
        %1793 = vmatpush1.bf16.msra.mxu0 0
        %1794 = vmatprep.subr.bf16.mxu0 0
        %1795 = vmatpush1.bf16.msra.mxu0 0
        %1796 = vmatprep.subr.bf16.mxu0 0
        %1797 = vmatpush1.bf16.msra.mxu0 0
        %1798 = vmatprep.subr.bf16.mxu0 0
        %1799 = vmatpush1.bf16.msra.mxu0 0
        %1800 = vmatprep.subr.bf16.mxu0 0
        %1801 = vmatpush1.bf16.msra.mxu0 0
        %1802 = vmatprep.subr.bf16.mxu0 0
        %1803 = vmatpush1.bf16.msra.mxu0 0
        %1804 = vmatprep.subr.bf16.mxu0 0
        %1805 = vmatpush1.bf16.msra.mxu0 0
        %1806 = vmatprep.subr.bf16.mxu0 0
        %1807 = vmatpush1.bf16.msra.mxu0 0
        %1808 = vmatprep.subr.bf16.mxu0 0
        %1809 = vmatpush1.bf16.msra.mxu0 0
        %1810 = vmatprep.mubr.bf16.mxu0 0
        %1811 = vmatmul.mubr.bf16.gmra.mrb[0].mxu0 %v1776
        %v1812 = vpop.f32.mrb[0].mxu0
        %v1813 = vadd.f32 %v1762, %v1812
        %v1814 = vpop.f32.mrb[0].mxu0
        %v1815 = vpop.f32.mrb[0].mxu0
        %v1816 = vadd.f32 %v1762, %v1815
        %v1817 = vpop.f32.mrb[0].mxu0
        %1818 = vdwg.mxu0
        %v1819 = vmul.f32 %v1813, 0.35355338
        %v1820 = vmul.f32 %v1816, 0.35355338
        %v1821 = vpack.c.bf16 %v1820, %v1819
        %v1822 = vpack.c.bf16 %v1816, %v1813
        %1824 = vrot.lane.b32.xlu0 %v1821, 120
        %v1825 = vpop.permute.xlu0 %1824
        %1826 = vrot.lane.b32.xlu0 %v1821, 112
        %v1827 = vpop.permute.xlu0 %1826
        %1828 = vrot.lane.b32.xlu0 %v1821, 104
        %v1829 = vpop.permute.xlu0 %1828
        %1831 = vrot.lane.b32.xlu0 %v1822, 120
        %v1832 = vpop.permute.xlu0 %1831
        %1833 = vrot.lane.b32.xlu0 %v1822, 112
        %v1834 = vpop.permute.xlu0 %1833
        %1835 = vrot.lane.b32.xlu0 %v1822, 104
        %v1836 = vpop.permute.xlu0 %1835
        %1837 = vrot.lane.b32.xlu0 %v1822, 96
        %v1838 = vpop.permute.xlu0 %1837
        %vm1839 = vcmask 64512
        %v1841 = vsel %vm1839, %v1821, 0
        %v1844 = vsel %vm1839, %v1838, 0
        %1846 = vmatprep.subr.bf16.mxu0 0
        %1847 = vmatpush1.bf16.xpose.msra.mxu0 %v1844
        %1848 = vmatprep.subr.bf16.mxu0 0
        %1849 = vmatpush1.bf16.xpose.msra.mxu0 0
        %1850 = vmatprep.subr.bf16.mxu0 0
        %1851 = vmatpush1.bf16.xpose.msra.mxu0 0
        %1852 = vmatprep.subr.bf16.mxu0 0
        %1853 = vmatpush1.bf16.xpose.msra.mxu0 0
        %1854 = vmatprep.subr.bf16.mxu0 0
        %1855 = vmatpush1.bf16.xpose.msra.mxu0 0
        %1856 = vmatprep.subr.bf16.mxu0 0
        %1857 = vmatpush1.bf16.xpose.msra.mxu0 0
        %1858 = vmatprep.subr.bf16.mxu0 0
        %1859 = vmatpush1.bf16.xpose.msra.mxu0 0
        %1860 = vmatprep.subr.bf16.mxu0 0
        %1861 = vmatpush1.bf16.xpose.msra.mxu0 0
        %1862 = vmatprep.subr.bf16.mxu0 0
        %1863 = vmatpush1.bf16.xpose.msra.mxu0 0
        %1864 = vmatprep.subr.bf16.mxu0 0
        %1865 = vmatpush1.bf16.xpose.msra.mxu0 0
        %1866 = vmatprep.subr.bf16.mxu0 0
        %1867 = vmatpush1.bf16.xpose.msra.mxu0 0
        %1868 = vmatprep.subr.bf16.mxu0 0
        %1869 = vmatpush1.bf16.xpose.msra.mxu0 0
        %1870 = vmatprep.subr.bf16.mxu0 0
        %1871 = vmatpush1.bf16.xpose.msra.mxu0 0
        %1872 = vmatprep.subr.bf16.mxu0 0
        %1873 = vmatpush1.bf16.xpose.msra.mxu0 0
        %1874 = vmatprep.subr.bf16.mxu0 0
        %1875 = vmatpush1.bf16.xpose.msra.mxu0 0
        %1876 = vmatprep.subr.bf16.mxu0 0
        %1877 = vmatpush1.bf16.xpose.msra.mxu0 0
        %1878 = vmatprep.mubr.bf16.mxu0 0
        %1879 = vmatmul.mubr.bf16.gmra.mrb[0].mxu0 %v1841
        %v1880 = vpop.f32.mrb[0].mxu0
        %v1881 = vadd.f32 0.0, %v1880
        %v1882 = vpop.f32.mrb[0].mxu0
        %v1883 = vpop.f32.mrb[0].mxu0
        %v1884 = vadd.f32 0.0, %v1883
        %v1885 = vpop.f32.mrb[0].mxu0
        %1886 = vdwg.mxu0
        %1887 = vrot.lane.b32.xlu0 %v1832, 96
        %v1888 = vpop.permute.xlu0 %1887
        %v1890 = vsel %vm1839, %v1825, 0
        %v1893 = vsel %vm1839, %v1888, 0
        %1895 = vmatprep.subr.bf16.mxu0 0
        %1896 = vmatpush1.bf16.xpose.msra.mxu0 %v1893
        %1897 = vmatprep.subr.bf16.mxu0 0
        %1898 = vmatpush1.bf16.xpose.msra.mxu0 0
        %1899 = vmatprep.subr.bf16.mxu0 0
        %1900 = vmatpush1.bf16.xpose.msra.mxu0 0
        %1901 = vmatprep.subr.bf16.mxu0 0
        %1902 = vmatpush1.bf16.xpose.msra.mxu0 0
        %1903 = vmatprep.subr.bf16.mxu0 0
        %1904 = vmatpush1.bf16.xpose.msra.mxu0 0
        %1905 = vmatprep.subr.bf16.mxu0 0
        %1906 = vmatpush1.bf16.xpose.msra.mxu0 0
        %1907 = vmatprep.subr.bf16.mxu0 0
        %1908 = vmatpush1.bf16.xpose.msra.mxu0 0
        %1909 = vmatprep.subr.bf16.mxu0 0
        %1910 = vmatpush1.bf16.xpose.msra.mxu0 0
        %1911 = vmatprep.subr.bf16.mxu0 0
        %1912 = vmatpush1.bf16.xpose.msra.mxu0 0
        %1913 = vmatprep.subr.bf16.mxu0 0
        %1914 = vmatpush1.bf16.xpose.msra.mxu0 0
        %1915 = vmatprep.subr.bf16.mxu0 0
        %1916 = vmatpush1.bf16.xpose.msra.mxu0 0
        %1917 = vmatprep.subr.bf16.mxu0 0
        %1918 = vmatpush1.bf16.xpose.msra.mxu0 0
        %1919 = vmatprep.subr.bf16.mxu0 0
        %1920 = vmatpush1.bf16.xpose.msra.mxu0 0
        %1921 = vmatprep.subr.bf16.mxu0 0
        %1922 = vmatpush1.bf16.xpose.msra.mxu0 0
        %1923 = vmatprep.subr.bf16.mxu0 0
        %1924 = vmatpush1.bf16.xpose.msra.mxu0 0
        %1925 = vmatprep.subr.bf16.mxu0 0
        %1926 = vmatpush1.bf16.xpose.msra.mxu0 0
        %1927 = vmatprep.mubr.bf16.mxu0 0
        %1928 = vmatmul.mubr.bf16.gmra.mrb[0].mxu0 %v1890
        %v1929 = vpop.f32.mrb[0].mxu0
        %v1930 = vadd.f32 0.0, %v1929
        %v1931 = vpop.f32.mrb[0].mxu0
        %v1932 = vpop.f32.mrb[0].mxu0
        %v1933 = vadd.f32 0.0, %v1932
        %v1934 = vpop.f32.mrb[0].mxu0
        %1935 = vdwg.mxu0
        %1936 = vrot.lane.b32.xlu0 %v1834, 96
        %v1937 = vpop.permute.xlu0 %1936
        %v1939 = vsel %vm1839, %v1827, 0
        %v1942 = vsel %vm1839, %v1937, 0
        %1944 = vmatprep.subr.bf16.mxu0 0
        %1945 = vmatpush1.bf16.xpose.msra.mxu0 %v1942
        %1946 = vmatprep.subr.bf16.mxu0 0
        %1947 = vmatpush1.bf16.xpose.msra.mxu0 0
        %1948 = vmatprep.subr.bf16.mxu0 0
        %1949 = vmatpush1.bf16.xpose.msra.mxu0 0
        %1950 = vmatprep.subr.bf16.mxu0 0
        %1951 = vmatpush1.bf16.xpose.msra.mxu0 0
        %1952 = vmatprep.subr.bf16.mxu0 0
        %1953 = vmatpush1.bf16.xpose.msra.mxu0 0
        %1954 = vmatprep.subr.bf16.mxu0 0
        %1955 = vmatpush1.bf16.xpose.msra.mxu0 0
        %1956 = vmatprep.subr.bf16.mxu0 0
        %1957 = vmatpush1.bf16.xpose.msra.mxu0 0
        %1958 = vmatprep.subr.bf16.mxu0 0
        %1959 = vmatpush1.bf16.xpose.msra.mxu0 0
        %1960 = vmatprep.subr.bf16.mxu0 0
        %1961 = vmatpush1.bf16.xpose.msra.mxu0 0
        %1962 = vmatprep.subr.bf16.mxu0 0
        %1963 = vmatpush1.bf16.xpose.msra.mxu0 0
        %1964 = vmatprep.subr.bf16.mxu0 0
        %1965 = vmatpush1.bf16.xpose.msra.mxu0 0
        %1966 = vmatprep.subr.bf16.mxu0 0
        %1967 = vmatpush1.bf16.xpose.msra.mxu0 0
        %1968 = vmatprep.subr.bf16.mxu0 0
        %1969 = vmatpush1.bf16.xpose.msra.mxu0 0
        %1970 = vmatprep.subr.bf16.mxu0 0
        %1971 = vmatpush1.bf16.xpose.msra.mxu0 0
        %1972 = vmatprep.subr.bf16.mxu0 0
        %1973 = vmatpush1.bf16.xpose.msra.mxu0 0
        %1974 = vmatprep.subr.bf16.mxu0 0
        %1975 = vmatpush1.bf16.xpose.msra.mxu0 0
        %1976 = vmatprep.mubr.bf16.mxu0 0
        %1977 = vmatmul.mubr.bf16.gmra.mrb[0].mxu0 %v1939
        %v1978 = vpop.f32.mrb[0].mxu0
        %v1979 = vadd.f32 0.0, %v1978
        %v1980 = vpop.f32.mrb[0].mxu0
        %v1981 = vpop.f32.mrb[0].mxu0
        %v1982 = vadd.f32 0.0, %v1981
        %v1983 = vpop.f32.mrb[0].mxu0
        %1984 = vdwg.mxu0
        %1985 = vrot.lane.b32.xlu0 %v1836, 96
        %v1986 = vpop.permute.xlu0 %1985
        %v1988 = vsel %vm1839, %v1829, 0
        %v1991 = vsel %vm1839, %v1986, 0
        %1993 = vmatprep.subr.bf16.mxu0 0
        %1994 = vmatpush1.bf16.xpose.msra.mxu0 %v1991
        %1995 = vmatprep.subr.bf16.mxu0 0
        %1996 = vmatpush1.bf16.xpose.msra.mxu0 0
        %1997 = vmatprep.subr.bf16.mxu0 0
        %1998 = vmatpush1.bf16.xpose.msra.mxu0 0
        %1999 = vmatprep.subr.bf16.mxu0 0
        %2000 = vmatpush1.bf16.xpose.msra.mxu0 0
        %2001 = vmatprep.subr.bf16.mxu0 0
        %2002 = vmatpush1.bf16.xpose.msra.mxu0 0
        %2003 = vmatprep.subr.bf16.mxu0 0
        %2004 = vmatpush1.bf16.xpose.msra.mxu0 0
        %2005 = vmatprep.subr.bf16.mxu0 0
        %2006 = vmatpush1.bf16.xpose.msra.mxu0 0
        %2007 = vmatprep.subr.bf16.mxu0 0
        %2008 = vmatpush1.bf16.xpose.msra.mxu0 0
        %2009 = vmatprep.subr.bf16.mxu0 0
        %2010 = vmatpush1.bf16.xpose.msra.mxu0 0
        %2011 = vmatprep.subr.bf16.mxu0 0
        %2012 = vmatpush1.bf16.xpose.msra.mxu0 0
        %2013 = vmatprep.subr.bf16.mxu0 0
        %2014 = vmatpush1.bf16.xpose.msra.mxu0 0
        %2015 = vmatprep.subr.bf16.mxu0 0
        %2016 = vmatpush1.bf16.xpose.msra.mxu0 0
        %2017 = vmatprep.subr.bf16.mxu0 0
        %2018 = vmatpush1.bf16.xpose.msra.mxu0 0
        %2019 = vmatprep.subr.bf16.mxu0 0
        %2020 = vmatpush1.bf16.xpose.msra.mxu0 0
        %2021 = vmatprep.subr.bf16.mxu0 0
        %2022 = vmatpush1.bf16.xpose.msra.mxu0 0
        %2023 = vmatprep.subr.bf16.mxu0 0
        %2024 = vmatpush1.bf16.xpose.msra.mxu0 0
        %2025 = vmatprep.mubr.bf16.mxu0 0
        %2026 = vmatmul.mubr.bf16.gmra.mrb[0].mxu0 %v1988
        %v2027 = vpop.f32.mrb[0].mxu0
        %v2028 = vadd.f32 0.0, %v2027
        %v2029 = vpop.f32.mrb[0].mxu0
        %v2030 = vpop.f32.mrb[0].mxu0
        %v2031 = vadd.f32 0.0, %v2030
        %v2032 = vpop.f32.mrb[0].mxu0
        %2033 = vdwg.mxu0
        %vm2034 = vcmask 72704
        %v2035 = vsel %vm2034, %v1881, -inf
        %2036 = vmax.xlane.f32.xlu0 %v2035
        %v2037 = vpop.xlane.xlu0 %2036
        %vm2038 = vcmask 65536
        %v2039 = vsel %vm2038, %v1884, -inf
        %2040 = vmax.xlane.f32.xlu0 %v2039
        %v2041 = vpop.xlane.xlu0 %2040
        %v2042 = vsel %vm2034, %v1930, -inf
        %2043 = vmax.xlane.f32.xlu0 %v2042
        %v2044 = vpop.xlane.xlu0 %2043
        %v2045 = vsel %vm2038, %v1933, -inf
        %2046 = vmax.xlane.f32.xlu0 %v2045
        %v2047 = vpop.xlane.xlu0 %2046
        %v2048 = vsel %vm2034, %v1979, -inf
        %2049 = vmax.xlane.f32.xlu0 %v2048
        %v2050 = vpop.xlane.xlu0 %2049
        %v2051 = vsel %vm2038, %v1982, -inf
        %2052 = vmax.xlane.f32.xlu0 %v2051
        %v2053 = vpop.xlane.xlu0 %2052
        %v2054 = vsel %vm2034, %v2028, -inf
        %2055 = vmax.xlane.f32.xlu0 %v2054
        %v2056 = vpop.xlane.xlu0 %2055
        %v2057 = vsel %vm2038, %v2031, -inf
        %2058 = vmax.xlane.f32.xlu0 %v2057
        %v2059 = vpop.xlane.xlu0 %2058
        %v2060 = vsub.f32 %v1881, %v2037
        %v2061 = vsub.f32 %v1884, %v2041
        %v2062 = vsub.f32 %v1930, %v2044
        %v2063 = vsub.f32 %v1933, %v2047
        %v2064 = vsub.f32 %v1979, %v2050
        %v2065 = vsub.f32 %v1982, %v2053
        %v2066 = vsub.f32 %v2028, %v2056
        %v2067 = vsub.f32 %v2031, %v2059
        %v2068 = vmul.f32 %v2060, 1.442695
        %v2069 = vpow.pop %v2068
        %v2070 = vmul.f32 %v2061, 1.442695
        %v2071 = vpow.pop %v2070
        %v2072 = vmul.f32 %v2062, 1.442695
        %v2073 = vpow.pop %v2072
        %v2074 = vmul.f32 %v2063, 1.442695
        %v2075 = vpow.pop %v2074
        %v2076 = vmul.f32 %v2064, 1.442695
        %v2077 = vpow.pop %v2076
        %v2078 = vmul.f32 %v2065, 1.442695
        %v2079 = vpow.pop %v2078
        %v2080 = vmul.f32 %v2066, 1.442695
        %v2081 = vpow.pop %v2080
        %v2082 = vmul.f32 %v2067, 1.442695
        %v2083 = vpow.pop %v2082
        %v2084 = vsel %vm2034, %v2069, 0.0
        %2085 = vadd.xlane.f32.xlu0 %v2084
        %v2086 = vpop.xlane.xlu0 %2085
        %v2087 = vsel %vm2038, %v2071, 0.0
        %2088 = vadd.xlane.f32.xlu0 %v2087
        %v2089 = vpop.xlane.xlu0 %2088
        %v2090 = vsel %vm2034, %v2073, 0.0
        %2091 = vadd.xlane.f32.xlu0 %v2090
        %v2092 = vpop.xlane.xlu0 %2091
        %v2093 = vsel %vm2038, %v2075, 0.0
        %2094 = vadd.xlane.f32.xlu0 %v2093
        %v2095 = vpop.xlane.xlu0 %2094
        %v2096 = vsel %vm2034, %v2077, 0.0
        %2097 = vadd.xlane.f32.xlu0 %v2096
        %v2098 = vpop.xlane.xlu0 %2097
        %v2099 = vsel %vm2038, %v2079, 0.0
        %2100 = vadd.xlane.f32.xlu0 %v2099
        %v2101 = vpop.xlane.xlu0 %2100
        %v2102 = vsel %vm2034, %v2081, 0.0
        %2103 = vadd.xlane.f32.xlu0 %v2102
        %v2104 = vpop.xlane.xlu0 %2103
        %v2105 = vsel %vm2038, %v2083, 0.0
        %2106 = vadd.xlane.f32.xlu0 %v2105
        %v2107 = vpop.xlane.xlu0 %2106
        %v2108 = vrcp.pop %v2086
        %v2109 = vmul.f32 %v2069, %v2108
        %v2110 = vrcp.pop %v2089
        %v2111 = vmul.f32 %v2071, %v2110
        %v2112 = vrcp.pop %v2092
        %v2113 = vmul.f32 %v2073, %v2112
        %v2114 = vrcp.pop %v2095
        %v2115 = vmul.f32 %v2075, %v2114
        %v2116 = vrcp.pop %v2098
        %v2117 = vmul.f32 %v2077, %v2116
        %v2118 = vrcp.pop %v2101
        %v2119 = vmul.f32 %v2079, %v2118
        %v2120 = vrcp.pop %v2104
        %v2121 = vmul.f32 %v2081, %v2120
        %v2122 = vrcp.pop %v2107
        %v2123 = vmul.f32 %v2083, %v2122
        %v2124 = vpack.c.bf16 %v2111, %v2109
        %v2125 = vpack.c.bf16 %v2115, %v2113
        %v2126 = vpack.c.bf16 %v2119, %v2117
        %v2127 = vpack.c.bf16 %v2123, %v2121
        %2128 = vrot.lane.b32.xlu0 %v1822, 64
        %v2129 = vpop.permute.xlu0 %2128
        %v2131 = vsel %vm2034, %v2124, 0
        %vm2133 = vcmask 1044480
        %v2134 = vsel %vm1563, 4294967295, 65535
        %v2135 = vsel %vm2133, %v2134, 0
        %v2137 = vand.u32 %v2129, %v2135
        %2139 = vmatprep.subr.bf16.mxu0 0
        %2140 = vmatpush1.bf16.msra.mxu0 %v2137
        %2141 = vmatprep.subr.bf16.mxu0 0
        %2142 = vmatpush1.bf16.msra.mxu0 0
        %2143 = vmatprep.subr.bf16.mxu0 0
        %2144 = vmatpush1.bf16.msra.mxu0 0
        %2145 = vmatprep.subr.bf16.mxu0 0
        %2146 = vmatpush1.bf16.msra.mxu0 0
        %2147 = vmatprep.subr.bf16.mxu0 0
        %2148 = vmatpush1.bf16.msra.mxu0 0
        %2149 = vmatprep.subr.bf16.mxu0 0
        %2150 = vmatpush1.bf16.msra.mxu0 0
        %2151 = vmatprep.subr.bf16.mxu0 0
        %2152 = vmatpush1.bf16.msra.mxu0 0
        %2153 = vmatprep.subr.bf16.mxu0 0
        %2154 = vmatpush1.bf16.msra.mxu0 0
        %2155 = vmatprep.subr.bf16.mxu0 0
        %2156 = vmatpush1.bf16.msra.mxu0 0
        %2157 = vmatprep.subr.bf16.mxu0 0
        %2158 = vmatpush1.bf16.msra.mxu0 0
        %2159 = vmatprep.subr.bf16.mxu0 0
        %2160 = vmatpush1.bf16.msra.mxu0 0
        %2161 = vmatprep.subr.bf16.mxu0 0
        %2162 = vmatpush1.bf16.msra.mxu0 0
        %2163 = vmatprep.subr.bf16.mxu0 0
        %2164 = vmatpush1.bf16.msra.mxu0 0
        %2165 = vmatprep.subr.bf16.mxu0 0
        %2166 = vmatpush1.bf16.msra.mxu0 0
        %2167 = vmatprep.subr.bf16.mxu0 0
        %2168 = vmatpush1.bf16.msra.mxu0 0
        %2169 = vmatprep.subr.bf16.mxu0 0
        %2170 = vmatpush1.bf16.msra.mxu0 0
        %2171 = vmatprep.mubr.bf16.mxu0 0
        %2172 = vmatmul.mubr.bf16.gmra.mrb[0].mxu0 %v2131
        %v2173 = vpop.f32.mrb[0].mxu0
        %v2174 = vadd.f32 0.0, %v2173
        %v2175 = vpop.f32.mrb[0].mxu0
        %v2176 = vpop.f32.mrb[0].mxu0
        %v2177 = vadd.f32 0.0, %v2176
        %v2178 = vpop.f32.mrb[0].mxu0
        %2179 = vdwg.mxu0
        %2180 = vrot.lane.b32.xlu0 %v1832, 64
        %v2181 = vpop.permute.xlu0 %2180
        %v2183 = vsel %vm2034, %v2125, 0
        %v2186 = vand.u32 %v2181, %v2135
        %2188 = vmatprep.subr.bf16.mxu0 0
        %2189 = vmatpush1.bf16.msra.mxu0 %v2186
        %2190 = vmatprep.subr.bf16.mxu0 0
        %2191 = vmatpush1.bf16.msra.mxu0 0
        %2192 = vmatprep.subr.bf16.mxu0 0
        %2193 = vmatpush1.bf16.msra.mxu0 0
        %2194 = vmatprep.subr.bf16.mxu0 0
        %2195 = vmatpush1.bf16.msra.mxu0 0
        %2196 = vmatprep.subr.bf16.mxu0 0
        %2197 = vmatpush1.bf16.msra.mxu0 0
        %2198 = vmatprep.subr.bf16.mxu0 0
        %2199 = vmatpush1.bf16.msra.mxu0 0
        %2200 = vmatprep.subr.bf16.mxu0 0
        %2201 = vmatpush1.bf16.msra.mxu0 0
        %2202 = vmatprep.subr.bf16.mxu0 0
        %2203 = vmatpush1.bf16.msra.mxu0 0
        %2204 = vmatprep.subr.bf16.mxu0 0
        %2205 = vmatpush1.bf16.msra.mxu0 0
        %2206 = vmatprep.subr.bf16.mxu0 0
        %2207 = vmatpush1.bf16.msra.mxu0 0
        %2208 = vmatprep.subr.bf16.mxu0 0
        %2209 = vmatpush1.bf16.msra.mxu0 0
        %2210 = vmatprep.subr.bf16.mxu0 0
        %2211 = vmatpush1.bf16.msra.mxu0 0
        %2212 = vmatprep.subr.bf16.mxu0 0
        %2213 = vmatpush1.bf16.msra.mxu0 0
        %2214 = vmatprep.subr.bf16.mxu0 0
        %2215 = vmatpush1.bf16.msra.mxu0 0
        %2216 = vmatprep.subr.bf16.mxu0 0
        %2217 = vmatpush1.bf16.msra.mxu0 0
        %2218 = vmatprep.subr.bf16.mxu0 0
        %2219 = vmatpush1.bf16.msra.mxu0 0
        %2220 = vmatprep.mubr.bf16.mxu0 0
        %2221 = vmatmul.mubr.bf16.gmra.mrb[0].mxu0 %v2183
        %v2222 = vpop.f32.mrb[0].mxu0
        %v2223 = vadd.f32 0.0, %v2222
        %v2224 = vpop.f32.mrb[0].mxu0
        %v2225 = vpop.f32.mrb[0].mxu0
        %v2226 = vadd.f32 0.0, %v2225
        %v2227 = vpop.f32.mrb[0].mxu0
        %2228 = vdwg.mxu0
        %2229 = vrot.lane.b32.xlu0 %v1834, 64
        %v2230 = vpop.permute.xlu0 %2229
        %v2232 = vsel %vm2034, %v2126, 0
        %v2235 = vand.u32 %v2230, %v2135
        %2237 = vmatprep.subr.bf16.mxu0 0
        %2238 = vmatpush1.bf16.msra.mxu0 %v2235
        %2239 = vmatprep.subr.bf16.mxu0 0
        %2240 = vmatpush1.bf16.msra.mxu0 0
        %2241 = vmatprep.subr.bf16.mxu0 0
        %2242 = vmatpush1.bf16.msra.mxu0 0
        %2243 = vmatprep.subr.bf16.mxu0 0
        %2244 = vmatpush1.bf16.msra.mxu0 0
        %2245 = vmatprep.subr.bf16.mxu0 0
        %2246 = vmatpush1.bf16.msra.mxu0 0
        %2247 = vmatprep.subr.bf16.mxu0 0
        %2248 = vmatpush1.bf16.msra.mxu0 0
        %2249 = vmatprep.subr.bf16.mxu0 0
        %2250 = vmatpush1.bf16.msra.mxu0 0
        %2251 = vmatprep.subr.bf16.mxu0 0
        %2252 = vmatpush1.bf16.msra.mxu0 0
        %2253 = vmatprep.subr.bf16.mxu0 0
        %2254 = vmatpush1.bf16.msra.mxu0 0
        %2255 = vmatprep.subr.bf16.mxu0 0
        %2256 = vmatpush1.bf16.msra.mxu0 0
        %2257 = vmatprep.subr.bf16.mxu0 0
        %2258 = vmatpush1.bf16.msra.mxu0 0
        %2259 = vmatprep.subr.bf16.mxu0 0
        %2260 = vmatpush1.bf16.msra.mxu0 0
        %2261 = vmatprep.subr.bf16.mxu0 0
        %2262 = vmatpush1.bf16.msra.mxu0 0
        %2263 = vmatprep.subr.bf16.mxu0 0
        %2264 = vmatpush1.bf16.msra.mxu0 0
        %2265 = vmatprep.subr.bf16.mxu0 0
        %2266 = vmatpush1.bf16.msra.mxu0 0
        %2267 = vmatprep.subr.bf16.mxu0 0
        %2268 = vmatpush1.bf16.msra.mxu0 0
        %2269 = vmatprep.mubr.bf16.mxu0 0
        %2270 = vmatmul.mubr.bf16.gmra.mrb[0].mxu0 %v2232
        %v2271 = vpop.f32.mrb[0].mxu0
        %v2272 = vadd.f32 0.0, %v2271
        %v2273 = vpop.f32.mrb[0].mxu0
        %v2274 = vpop.f32.mrb[0].mxu0
        %v2275 = vadd.f32 0.0, %v2274
        %v2276 = vpop.f32.mrb[0].mxu0
        %2277 = vdwg.mxu0
        %2278 = vrot.lane.b32.xlu0 %v1836, 64
        %v2279 = vpop.permute.xlu0 %2278
        %v2281 = vsel %vm2034, %v2127, 0
        %v2284 = vand.u32 %v2279, %v2135
        %2286 = vmatprep.subr.bf16.mxu0 0
        %2287 = vmatpush1.bf16.msra.mxu0 %v2284
        %2288 = vmatprep.subr.bf16.mxu0 0
        %2289 = vmatpush1.bf16.msra.mxu0 0
        %2290 = vmatprep.subr.bf16.mxu0 0
        %2291 = vmatpush1.bf16.msra.mxu0 0
        %2292 = vmatprep.subr.bf16.mxu0 0
        %2293 = vmatpush1.bf16.msra.mxu0 0
        %2294 = vmatprep.subr.bf16.mxu0 0
        %2295 = vmatpush1.bf16.msra.mxu0 0
        %2296 = vmatprep.subr.bf16.mxu0 0
        %2297 = vmatpush1.bf16.msra.mxu0 0
        %2298 = vmatprep.subr.bf16.mxu0 0
        %2299 = vmatpush1.bf16.msra.mxu0 0
        %2300 = vmatprep.subr.bf16.mxu0 0
        %2301 = vmatpush1.bf16.msra.mxu0 0
        %2302 = vmatprep.subr.bf16.mxu0 0
        %2303 = vmatpush1.bf16.msra.mxu0 0
        %2304 = vmatprep.subr.bf16.mxu0 0
        %2305 = vmatpush1.bf16.msra.mxu0 0
        %2306 = vmatprep.subr.bf16.mxu0 0
        %2307 = vmatpush1.bf16.msra.mxu0 0
        %2308 = vmatprep.subr.bf16.mxu0 0
        %2309 = vmatpush1.bf16.msra.mxu0 0
        %2310 = vmatprep.subr.bf16.mxu0 0
        %2311 = vmatpush1.bf16.msra.mxu0 0
        %2312 = vmatprep.subr.bf16.mxu0 0
        %2313 = vmatpush1.bf16.msra.mxu0 0
        %2314 = vmatprep.subr.bf16.mxu0 0
        %2315 = vmatpush1.bf16.msra.mxu0 0
        %2316 = vmatprep.subr.bf16.mxu0 0
        %2317 = vmatpush1.bf16.msra.mxu0 0
        %2318 = vmatprep.mubr.bf16.mxu0 0
        %2319 = vmatmul.mubr.bf16.gmra.mrb[0].mxu0 %v2281
        %v2320 = vpop.f32.mrb[0].mxu0
        %v2321 = vadd.f32 0.0, %v2320
        %v2322 = vpop.f32.mrb[0].mxu0
        %v2323 = vpop.f32.mrb[0].mxu0
        %v2324 = vadd.f32 0.0, %v2323
        %v2325 = vpop.f32.mrb[0].mxu0
        %2326 = vdwg.mxu0
        %2329 = vrot.lane.b32.xlu0 %v2223, 8
        %v2330 = vpop.permute.xlu0 %2329
        %2331 = vrot.lane.b32.xlu0 %v2226, 8
        %v2332 = vpop.permute.xlu0 %2331
        %2337 = vrot.lane.b32.xlu0 %v2272, 16
        %v2338 = vpop.permute.xlu0 %2337
        %2339 = vrot.lane.b32.xlu0 %v2275, 16
        %v2340 = vpop.permute.xlu0 %2339
        %2345 = vrot.lane.b32.xlu0 %v2321, 24
        %v2346 = vpop.permute.xlu0 %2345
        %2347 = vrot.lane.b32.xlu0 %v2324, 24
        %v2348 = vpop.permute.xlu0 %2347
        %v2351 = vsel %vm1839, %v2174, %v2330
        %v2352 = vsel %vm1839, %v2177, %v2332
        %vm2353 = vcmask 130048
        %v2354 = vsel %vm2353, %v2351, %v2338
        %v2355 = vsel %vm2353, %v2352, %v2340
        %vm2356 = vcmask 195584
        %v2357 = vsel %vm2356, %v2354, %v2346
        %v2358 = vsel %vm2356, %v2355, %v2348
        %v2359 = vpack.c.bf16 %v2358, %v2357
        %v2360 = vlaneseq
        %v2361 = vshrl.u32 %v2360, 7
        %v2362 = vsub.s32 1, %v2361
        %v2363 = vrot.slane %v1757, %v2362
        %v2368 = vunpack.c.l.b16 %v1733
        %v2369 = vunpack.c.l.b16 %v1734
        %v2370 = vunpack.c.l.b16 %v1735
        %v2371 = vunpack.c.l.b16 %v1736
        %v2372 = vpack.c.b16 %v2369, %v2368
        %v2373 = vpack.c.b16 %v2371, %v2370
        %v2377 = vsel %vm1464, %v2359, 0
        %2379 = vmatprep.subr.bf16.mxu0 0
        %2380 = vmatpush1.bf16.msra.mxu0 %v2372
        %2381 = vmatprep.subr.bf16.mxu0 0
        %2382 = vmatpush1.bf16.msra.mxu0 %v2373
        %2383 = vmatprep.subr.bf16.mxu0 0
        %2384 = vmatpush1.bf16.msra.mxu0 0
        %2385 = vmatprep.subr.bf16.mxu0 0
        %2386 = vmatpush1.bf16.msra.mxu0 0
        %2387 = vmatprep.subr.bf16.mxu0 0
        %2388 = vmatpush1.bf16.msra.mxu0 0
        %2389 = vmatprep.subr.bf16.mxu0 0
        %2390 = vmatpush1.bf16.msra.mxu0 0
        %2391 = vmatprep.subr.bf16.mxu0 0
        %2392 = vmatpush1.bf16.msra.mxu0 0
        %2393 = vmatprep.subr.bf16.mxu0 0
        %2394 = vmatpush1.bf16.msra.mxu0 0
        %2395 = vmatprep.subr.bf16.mxu0 0
        %2396 = vmatpush1.bf16.msra.mxu0 0
        %2397 = vmatprep.subr.bf16.mxu0 0
        %2398 = vmatpush1.bf16.msra.mxu0 0
        %2399 = vmatprep.subr.bf16.mxu0 0
        %2400 = vmatpush1.bf16.msra.mxu0 0
        %2401 = vmatprep.subr.bf16.mxu0 0
        %2402 = vmatpush1.bf16.msra.mxu0 0
        %2403 = vmatprep.subr.bf16.mxu0 0
        %2404 = vmatpush1.bf16.msra.mxu0 0
        %2405 = vmatprep.subr.bf16.mxu0 0
        %2406 = vmatpush1.bf16.msra.mxu0 0
        %2407 = vmatprep.subr.bf16.mxu0 0
        %2408 = vmatpush1.bf16.msra.mxu0 0
        %2409 = vmatprep.subr.bf16.mxu0 0
        %2410 = vmatpush1.bf16.msra.mxu0 0
        %2411 = vmatprep.mubr.bf16.mxu0 0
        %2412 = vmatmul.mubr.bf16.gmra.mrb[0].mxu0 %v2377
        %v2413 = vpop.f32.mrb[0].mxu0
        %v2414 = vadd.f32 %v2363, %v2413
        %v2415 = vpop.f32.mrb[0].mxu0
        %v2416 = vpop.f32.mrb[0].mxu0
        %v2417 = vadd.f32 %v2363, %v2416
        %v2418 = vpop.f32.mrb[0].mxu0
        %2419 = vdwg.mxu0
        %v2420 = vadd.f32 %v1719, %v2414
        %v2421 = vadd.f32 %v1716, %v2417
        %v2422 = vsel %vm1464, %v2420, 0.0
        %2423 = vadd.xlane.f32.xlu0 %v2422
        %v2424 = vpop.xlane.xlu0 %2423
        %vm2425 = vcmask 253952
        %v2426 = vsel %vm2425, %v2421, 0.0
        %2427 = vadd.xlane.f32.xlu0 %v2426
        %v2428 = vpop.xlane.xlu0 %2427
        %v2429 = vrcp.pop 32.0
        %v2430 = vmul.f32 %v2424, %v2429
        %v2431 = vmul.f32 %v2428, %v2429
        %v2432 = vsub.f32 %v2420, %v2430
        %v2433 = vsub.f32 %v2421, %v2431
        %v2434 = vmul.f32 %v2432, %v2432
        %v2435 = vmul.f32 %v2433, %v2433
        %v2436 = vsel %vm1464, %v2434, 0.0
        %2437 = vadd.xlane.f32.xlu0 %v2436
        %v2438 = vpop.xlane.xlu0 %2437
        %v2439 = vsel %vm2425, %v2435, 0.0
        %2440 = vadd.xlane.f32.xlu0 %v2439
        %v2441 = vpop.xlane.xlu0 %2440
        %v2442 = vmul.f32 %v2438, %v2429
        %v2443 = vmul.f32 %v2441, %v2429
        %v2444 = vadd.f32 %v2442, 1e-05
        %v2445 = vadd.f32 %v2443, 1e-05
        %v2446 = vrsqrt.pop %v2444
        %v2447 = vrsqrt.pop %v2445
        %v2448 = vmul.f32 %v2432, %v2446
        %v2449 = vmul.f32 %v2433, %v2447
        %v2450 = vlaneseq
        %v2451 = vshrl.u32 %v2450, 7
        %v2452 = vsub.s32 4, %v2451
        %v2453 = vrot.slane %v1757, %v2452
        %v2454 = vmul.f32 %v2448, %v2453
        %v2455 = vmul.f32 %v2449, %v2453
        %v2456 = vlaneseq
        %v2457 = vshrl.u32 %v2456, 7
        %v2458 = vsub.s32 5, %v2457
        %v2459 = vrot.slane %v1757, %v2458
        %v2460 = vadd.f32 %v2454, %v2459
        %v2461 = vadd.f32 %v2455, %v2459
        %v2462 = vpack.c.bf16 %v2461, %v2460
        %v2463 = vlaneseq
        %v2464 = vshrl.u32 %v2463, 7
        %v2465 = vsub.s32 2, %v2464
        %v2466 = vrot.slane %v1757, %v2465
        %v2471 = vunpack.c.l.b16 %v1737
        %v2472 = vunpack.c.l.b16 %v1738
        %v2473 = vunpack.c.l.b16 %v1739
        %v2474 = vunpack.c.l.b16 %v1740
        %v2475 = vpack.c.b16 %v2472, %v2471
        %v2476 = vpack.c.b16 %v2474, %v2473
        %v2480 = vsel %vm1464, %v2462, 0
        %2482 = vmatprep.subr.bf16.mxu0 0
        %2483 = vmatpush1.bf16.msra.mxu0 %v2475
        %2484 = vmatprep.subr.bf16.mxu0 0
        %2485 = vmatpush1.bf16.msra.mxu0 %v2476
        %2486 = vmatprep.subr.bf16.mxu0 0
        %2487 = vmatpush1.bf16.msra.mxu0 0
        %2488 = vmatprep.subr.bf16.mxu0 0
        %2489 = vmatpush1.bf16.msra.mxu0 0
        %2490 = vmatprep.subr.bf16.mxu0 0
        %2491 = vmatpush1.bf16.msra.mxu0 0
        %2492 = vmatprep.subr.bf16.mxu0 0
        %2493 = vmatpush1.bf16.msra.mxu0 0
        %2494 = vmatprep.subr.bf16.mxu0 0
        %2495 = vmatpush1.bf16.msra.mxu0 0
        %2496 = vmatprep.subr.bf16.mxu0 0
        %2497 = vmatpush1.bf16.msra.mxu0 0
        %2498 = vmatprep.subr.bf16.mxu0 0
        %2499 = vmatpush1.bf16.msra.mxu0 0
        %2500 = vmatprep.subr.bf16.mxu0 0
        %2501 = vmatpush1.bf16.msra.mxu0 0
        %2502 = vmatprep.subr.bf16.mxu0 0
        %2503 = vmatpush1.bf16.msra.mxu0 0
        %2504 = vmatprep.subr.bf16.mxu0 0
        %2505 = vmatpush1.bf16.msra.mxu0 0
        %2506 = vmatprep.subr.bf16.mxu0 0
        %2507 = vmatpush1.bf16.msra.mxu0 0
        %2508 = vmatprep.subr.bf16.mxu0 0
        %2509 = vmatpush1.bf16.msra.mxu0 0
        %2510 = vmatprep.subr.bf16.mxu0 0
        %2511 = vmatpush1.bf16.msra.mxu0 0
        %2512 = vmatprep.subr.bf16.mxu0 0
        %2513 = vmatpush1.bf16.msra.mxu0 0
        %2514 = vmatprep.mubr.bf16.mxu0 0
        %2515 = vmatmul.mubr.bf16.gmra.mrb[0].mxu0 %v2480
        %v2516 = vpop.f32.mrb[0].mxu0
        %v2517 = vadd.f32 %v2466, %v2516
        %v2518 = vpop.f32.mrb[0].mxu0
        %v2519 = vpop.f32.mrb[0].mxu0
        %v2520 = vadd.f32 %v2466, %v2519
        %v2521 = vpop.f32.mrb[0].mxu0
        %2522 = vdwg.mxu0
        %v2523 = vmax.f32 %v2517, 0.0
        %v2524 = vmax.f32 %v2520, 0.0
        %v2525 = vpack.c.bf16 %v2524, %v2523
        %v2526 = vlaneseq
        %v2527 = vshrl.u32 %v2526, 7
        %v2528 = vsub.s32 3, %v2527
        %v2529 = vrot.slane %v1757, %v2528
        %v2546 = vunpack.c.l.b16 %v1741
        %v2547 = vunpack.c.l.b16 %v1742
        %v2548 = vunpack.c.l.b16 %v1743
        %v2549 = vunpack.c.l.b16 %v1744
        %v2550 = vunpack.c.l.b16 %v1745
        %v2551 = vunpack.c.l.b16 %v1746
        %v2552 = vunpack.c.l.b16 %v1747
        %v2553 = vunpack.c.l.b16 %v1748
        %v2554 = vunpack.c.l.b16 %v1749
        %v2555 = vunpack.c.l.b16 %v1750
        %v2556 = vunpack.c.l.b16 %v1751
        %v2557 = vunpack.c.l.b16 %v1752
        %v2558 = vunpack.c.l.b16 %v1753
        %v2559 = vunpack.c.l.b16 %v1754
        %v2560 = vunpack.c.l.b16 %v1755
        %v2561 = vunpack.c.l.b16 %v1756
        %v2562 = vpack.c.b16 %v2547, %v2546
        %v2563 = vpack.c.b16 %v2549, %v2548
        %v2564 = vpack.c.b16 %v2551, %v2550
        %v2565 = vpack.c.b16 %v2553, %v2552
        %v2566 = vpack.c.b16 %v2555, %v2554
        %v2567 = vpack.c.b16 %v2557, %v2556
        %v2568 = vpack.c.b16 %v2559, %v2558
        %v2569 = vpack.c.b16 %v2561, %v2560
        %2578 = vmatprep.subr.bf16.mxu0 0
        %2579 = vmatpush1.bf16.msra.mxu0 %v2562
        %2580 = vmatprep.subr.bf16.mxu0 0
        %2581 = vmatpush1.bf16.msra.mxu0 %v2563
        %2582 = vmatprep.subr.bf16.mxu0 0
        %2583 = vmatpush1.bf16.msra.mxu0 %v2564
        %2584 = vmatprep.subr.bf16.mxu0 0
        %2585 = vmatpush1.bf16.msra.mxu0 %v2565
        %2586 = vmatprep.subr.bf16.mxu0 0
        %2587 = vmatpush1.bf16.msra.mxu0 %v2566
        %2588 = vmatprep.subr.bf16.mxu0 0
        %2589 = vmatpush1.bf16.msra.mxu0 %v2567
        %2590 = vmatprep.subr.bf16.mxu0 0
        %2591 = vmatpush1.bf16.msra.mxu0 %v2568
        %2592 = vmatprep.subr.bf16.mxu0 0
        %2593 = vmatpush1.bf16.msra.mxu0 %v2569
        %2594 = vmatprep.subr.bf16.mxu0 0
        %2595 = vmatpush1.bf16.msra.mxu0 0
        %2596 = vmatprep.subr.bf16.mxu0 0
        %2597 = vmatpush1.bf16.msra.mxu0 0
        %2598 = vmatprep.subr.bf16.mxu0 0
        %2599 = vmatpush1.bf16.msra.mxu0 0
        %2600 = vmatprep.subr.bf16.mxu0 0
        %2601 = vmatpush1.bf16.msra.mxu0 0
        %2602 = vmatprep.subr.bf16.mxu0 0
        %2603 = vmatpush1.bf16.msra.mxu0 0
        %2604 = vmatprep.subr.bf16.mxu0 0
        %2605 = vmatpush1.bf16.msra.mxu0 0
        %2606 = vmatprep.subr.bf16.mxu0 0
        %2607 = vmatpush1.bf16.msra.mxu0 0
        %2608 = vmatprep.subr.bf16.mxu0 0
        %2609 = vmatpush1.bf16.msra.mxu0 0
        %2610 = vmatprep.mubr.bf16.mxu0 0
        %2611 = vmatmul.mubr.bf16.gmra.mrb[0].mxu0 %v2525
        %v2612 = vpop.f32.mrb[0].mxu0
        %v2613 = vadd.f32 %v2529, %v2612
        %v2614 = vpop.f32.mrb[0].mxu0
        %v2615 = vpop.f32.mrb[0].mxu0
        %v2616 = vadd.f32 %v2529, %v2615
        %v2617 = vpop.f32.mrb[0].mxu0
        %2618 = vdwg.mxu0
        %v2619 = vadd.f32 %v2460, %v2613
        %v2620 = vadd.f32 %v2461, %v2616
        %v2621 = vsel %vm1464, %v2619, 0.0
        %2622 = vadd.xlane.f32.xlu0 %v2621
        %v2623 = vpop.xlane.xlu0 %2622
        %v2624 = vsel %vm2425, %v2620, 0.0
        %2625 = vadd.xlane.f32.xlu0 %v2624
        %v2626 = vpop.xlane.xlu0 %2625
        %v2627 = vmul.f32 %v2623, %v2429
        %v2628 = vmul.f32 %v2626, %v2429
        %v2629 = vsub.f32 %v2619, %v2627
        %v2630 = vsub.f32 %v2620, %v2628
        %v2631 = vmul.f32 %v2629, %v2629
        %v2632 = vmul.f32 %v2630, %v2630
        %v2633 = vsel %vm1464, %v2631, 0.0
        %2634 = vadd.xlane.f32.xlu0 %v2633
        %v2635 = vpop.xlane.xlu0 %2634
        %v2636 = vsel %vm2425, %v2632, 0.0
        %2637 = vadd.xlane.f32.xlu0 %v2636
        %v2638 = vpop.xlane.xlu0 %2637
        %v2639 = vmul.f32 %v2635, %v2429
        %v2640 = vmul.f32 %v2638, %v2429
        %v2641 = vadd.f32 %v2639, 1e-05
        %v2642 = vadd.f32 %v2640, 1e-05
        %v2643 = vrsqrt.pop %v2641
        %v2644 = vrsqrt.pop %v2642
        %v2645 = vmul.f32 %v2629, %v2643
        %v2646 = vmul.f32 %v2630, %v2644
        %v2647 = vlaneseq
        %v2648 = vshrl.u32 %v2647, 7
        %v2649 = vsub.s32 6, %v2648
        %v2650 = vrot.slane %v1757, %v2649
        %v2651 = vmul.f32 %v2645, %v2650
        %v2652 = vmul.f32 %v2646, %v2650
        %v2653 = vlaneseq
        %v2654 = vshrl.u32 %v2653, 7
        %v2655 = vsub.s32 7, %v2654
        %v2656 = vrot.slane %v1757, %v2655
        %v2657 = vadd.f32 %v2651, %v2656
        %v2658 = vadd.f32 %v2652, %v2656
        %s2659 = scalar_lea.vmem [#allocation2], 112
        %v2660 = vld [vmem:[%s2659] sm:$0xf]
        %v2661 = vld [vmem:[%s2659 + $0x4] sm:$0xf]
        %v2662 = vld [vmem:[%s2659 + $0x8] sm:$0xf]
        %v2663 = vld [vmem:[%s2659 + $0xc] sm:$0xf]
        %v2664 = vld [vmem:[%s2659 + $0x10] sm:$0xf]
        %v2665 = vld [vmem:[%s2659 + $0x14] sm:$0xf]
        %v2666 = vld [vmem:[%s2659 + $0x18] sm:$0xf]
        %v2667 = vld [vmem:[%s2659 + $0x1c] sm:$0xf]
        %v2668 = vld [vmem:[%s2659 + $0x20] sm:$0xf]
        %v2669 = vld [vmem:[%s2659 + $0x24] sm:$0xf]
        %v2670 = vld [vmem:[%s2659 + $0x28] sm:$0xf]
        %v2671 = vld [vmem:[%s2659 + $0x2c] sm:$0xf]
        %v2672 = vld [vmem:[%s2659 + $0x30] sm:$0xf]
        %v2673 = vld [vmem:[%s2659 + $0x34] sm:$0xf]
        %v2674 = vld [vmem:[%s2659 + $0x38] sm:$0xf]
        %v2675 = vld [vmem:[%s2659 + $0x3c] sm:$0xf]
        %v2676 = vld [vmem:[%s2659 + $0x40] sm:$0xf]
        %v2677 = vld [vmem:[%s2659 + $0x44] sm:$0xf]
        %v2678 = vld [vmem:[%s2659 + $0x48] sm:$0xf]
        %v2679 = vld [vmem:[%s2659 + $0x4c] sm:$0xf]
        %v2680 = vld [vmem:[%s2659 + $0x50] sm:$0xf]
        %v2681 = vld [vmem:[%s2659 + $0x54] sm:$0xf]
        %v2682 = vld [vmem:[%s2659 + $0x58] sm:$0xf]
        %v2683 = vld [vmem:[%s2659 + $0x5c] sm:$0xf]
        %v2684 = vld [vmem:[%s2659 + $0x60] sm:$0xf]
        %v2685 = vld [vmem:[%s2659 + $0x64] sm:$0xf]
        %v2686 = vld [vmem:[%s2659 + $0x68] sm:$0xf]
        %v2687 = vld [vmem:[%s2659 + $0x6c] sm:$0xf]
        %s2688 = scalar_lea.vmem %s5, 8
        %v2689 = vld [vmem:[%s2688] sm:$0xff]
        %v2690 = vpack.c.bf16 %v2658, %v2657
        %v2691 = vlaneseq
        %v2692 = vshrl.u32 %v2691, 7
        %v2693 = vsub.s32 0, %v2692
        %v2694 = vrot.slane %v2689, %v2693
        %v2699 = vunpack.c.l.b16 %v2660
        %v2700 = vunpack.c.l.b16 %v2661
        %v2701 = vunpack.c.l.b16 %v2662
        %v2702 = vunpack.c.l.b16 %v2663
        %v2703 = vpack.c.b16 %v2700, %v2699
        %v2704 = vpack.c.b16 %v2702, %v2701
        %v2708 = vsel %vm1464, %v2690, 0
        %2710 = vmatprep.subr.bf16.mxu0 0
        %2711 = vmatpush1.bf16.msra.mxu0 %v2703
        %2712 = vmatprep.subr.bf16.mxu0 0
        %2713 = vmatpush1.bf16.msra.mxu0 %v2704
        %2714 = vmatprep.subr.bf16.mxu0 0
        %2715 = vmatpush1.bf16.msra.mxu0 0
        %2716 = vmatprep.subr.bf16.mxu0 0
        %2717 = vmatpush1.bf16.msra.mxu0 0
        %2718 = vmatprep.subr.bf16.mxu0 0
        %2719 = vmatpush1.bf16.msra.mxu0 0
        %2720 = vmatprep.subr.bf16.mxu0 0
        %2721 = vmatpush1.bf16.msra.mxu0 0
        %2722 = vmatprep.subr.bf16.mxu0 0
        %2723 = vmatpush1.bf16.msra.mxu0 0
        %2724 = vmatprep.subr.bf16.mxu0 0
        %2725 = vmatpush1.bf16.msra.mxu0 0
        %2726 = vmatprep.subr.bf16.mxu0 0
        %2727 = vmatpush1.bf16.msra.mxu0 0
        %2728 = vmatprep.subr.bf16.mxu0 0
        %2729 = vmatpush1.bf16.msra.mxu0 0
        %2730 = vmatprep.subr.bf16.mxu0 0
        %2731 = vmatpush1.bf16.msra.mxu0 0
        %2732 = vmatprep.subr.bf16.mxu0 0
        %2733 = vmatpush1.bf16.msra.mxu0 0
        %2734 = vmatprep.subr.bf16.mxu0 0
        %2735 = vmatpush1.bf16.msra.mxu0 0
        %2736 = vmatprep.subr.bf16.mxu0 0
        %2737 = vmatpush1.bf16.msra.mxu0 0
        %2738 = vmatprep.subr.bf16.mxu0 0
        %2739 = vmatpush1.bf16.msra.mxu0 0
        %2740 = vmatprep.subr.bf16.mxu0 0
        %2741 = vmatpush1.bf16.msra.mxu0 0
        %2742 = vmatprep.mubr.bf16.mxu0 0
        %2743 = vmatmul.mubr.bf16.gmra.mrb[0].mxu0 %v2708
        %v2744 = vpop.f32.mrb[0].mxu0
        %v2745 = vadd.f32 %v2694, %v2744
        %v2746 = vpop.f32.mrb[0].mxu0
        %v2747 = vpop.f32.mrb[0].mxu0
        %v2748 = vadd.f32 %v2694, %v2747
        %v2749 = vpop.f32.mrb[0].mxu0
        %2750 = vdwg.mxu0
        %v2751 = vmul.f32 %v2745, 0.35355338
        %v2752 = vmul.f32 %v2748, 0.35355338
        %v2753 = vpack.c.bf16 %v2752, %v2751
        %v2754 = vpack.c.bf16 %v2748, %v2745
        %2756 = vrot.lane.b32.xlu0 %v2753, 120
        %v2757 = vpop.permute.xlu0 %2756
        %2758 = vrot.lane.b32.xlu0 %v2753, 112
        %v2759 = vpop.permute.xlu0 %2758
        %2760 = vrot.lane.b32.xlu0 %v2753, 104
        %v2761 = vpop.permute.xlu0 %2760
        %2763 = vrot.lane.b32.xlu0 %v2754, 120
        %v2764 = vpop.permute.xlu0 %2763
        %2765 = vrot.lane.b32.xlu0 %v2754, 112
        %v2766 = vpop.permute.xlu0 %2765
        %2767 = vrot.lane.b32.xlu0 %v2754, 104
        %v2768 = vpop.permute.xlu0 %2767
        %2769 = vrot.lane.b32.xlu0 %v2754, 96
        %v2770 = vpop.permute.xlu0 %2769
        %v2772 = vsel %vm1839, %v2753, 0
        %v2775 = vsel %vm1839, %v2770, 0
        %2777 = vmatprep.subr.bf16.mxu0 0
        %2778 = vmatpush1.bf16.xpose.msra.mxu0 %v2775
        %2779 = vmatprep.subr.bf16.mxu0 0
        %2780 = vmatpush1.bf16.xpose.msra.mxu0 0
        %2781 = vmatprep.subr.bf16.mxu0 0
        %2782 = vmatpush1.bf16.xpose.msra.mxu0 0
        %2783 = vmatprep.subr.bf16.mxu0 0
        %2784 = vmatpush1.bf16.xpose.msra.mxu0 0
        %2785 = vmatprep.subr.bf16.mxu0 0
        %2786 = vmatpush1.bf16.xpose.msra.mxu0 0
        %2787 = vmatprep.subr.bf16.mxu0 0
        %2788 = vmatpush1.bf16.xpose.msra.mxu0 0
        %2789 = vmatprep.subr.bf16.mxu0 0
        %2790 = vmatpush1.bf16.xpose.msra.mxu0 0
        %2791 = vmatprep.subr.bf16.mxu0 0
        %2792 = vmatpush1.bf16.xpose.msra.mxu0 0
        %2793 = vmatprep.subr.bf16.mxu0 0
        %2794 = vmatpush1.bf16.xpose.msra.mxu0 0
        %2795 = vmatprep.subr.bf16.mxu0 0
        %2796 = vmatpush1.bf16.xpose.msra.mxu0 0
        %2797 = vmatprep.subr.bf16.mxu0 0
        %2798 = vmatpush1.bf16.xpose.msra.mxu0 0
        %2799 = vmatprep.subr.bf16.mxu0 0
        %2800 = vmatpush1.bf16.xpose.msra.mxu0 0
        %2801 = vmatprep.subr.bf16.mxu0 0
        %2802 = vmatpush1.bf16.xpose.msra.mxu0 0
        %2803 = vmatprep.subr.bf16.mxu0 0
        %2804 = vmatpush1.bf16.xpose.msra.mxu0 0
        %2805 = vmatprep.subr.bf16.mxu0 0
        %2806 = vmatpush1.bf16.xpose.msra.mxu0 0
        %2807 = vmatprep.subr.bf16.mxu0 0
        %2808 = vmatpush1.bf16.xpose.msra.mxu0 0
        %2809 = vmatprep.mubr.bf16.mxu0 0
        %2810 = vmatmul.mubr.bf16.gmra.mrb[0].mxu0 %v2772
        %v2811 = vpop.f32.mrb[0].mxu0
        %v2812 = vadd.f32 0.0, %v2811
        %v2813 = vpop.f32.mrb[0].mxu0
        %v2814 = vpop.f32.mrb[0].mxu0
        %v2815 = vadd.f32 0.0, %v2814
        %v2816 = vpop.f32.mrb[0].mxu0
        %2817 = vdwg.mxu0
        %2818 = vrot.lane.b32.xlu0 %v2764, 96
        %v2819 = vpop.permute.xlu0 %2818
        %v2821 = vsel %vm1839, %v2757, 0
        %v2824 = vsel %vm1839, %v2819, 0
        %2826 = vmatprep.subr.bf16.mxu0 0
        %2827 = vmatpush1.bf16.xpose.msra.mxu0 %v2824
        %2828 = vmatprep.subr.bf16.mxu0 0
        %2829 = vmatpush1.bf16.xpose.msra.mxu0 0
        %2830 = vmatprep.subr.bf16.mxu0 0
        %2831 = vmatpush1.bf16.xpose.msra.mxu0 0
        %2832 = vmatprep.subr.bf16.mxu0 0
        %2833 = vmatpush1.bf16.xpose.msra.mxu0 0
        %2834 = vmatprep.subr.bf16.mxu0 0
        %2835 = vmatpush1.bf16.xpose.msra.mxu0 0
        %2836 = vmatprep.subr.bf16.mxu0 0
        %2837 = vmatpush1.bf16.xpose.msra.mxu0 0
        %2838 = vmatprep.subr.bf16.mxu0 0
        %2839 = vmatpush1.bf16.xpose.msra.mxu0 0
        %2840 = vmatprep.subr.bf16.mxu0 0
        %2841 = vmatpush1.bf16.xpose.msra.mxu0 0
        %2842 = vmatprep.subr.bf16.mxu0 0
        %2843 = vmatpush1.bf16.xpose.msra.mxu0 0
        %2844 = vmatprep.subr.bf16.mxu0 0
        %2845 = vmatpush1.bf16.xpose.msra.mxu0 0
        %2846 = vmatprep.subr.bf16.mxu0 0
        %2847 = vmatpush1.bf16.xpose.msra.mxu0 0
        %2848 = vmatprep.subr.bf16.mxu0 0
        %2849 = vmatpush1.bf16.xpose.msra.mxu0 0
        %2850 = vmatprep.subr.bf16.mxu0 0
        %2851 = vmatpush1.bf16.xpose.msra.mxu0 0
        %2852 = vmatprep.subr.bf16.mxu0 0
        %2853 = vmatpush1.bf16.xpose.msra.mxu0 0
        %2854 = vmatprep.subr.bf16.mxu0 0
        %2855 = vmatpush1.bf16.xpose.msra.mxu0 0
        %2856 = vmatprep.subr.bf16.mxu0 0
        %2857 = vmatpush1.bf16.xpose.msra.mxu0 0
        %2858 = vmatprep.mubr.bf16.mxu0 0
        %2859 = vmatmul.mubr.bf16.gmra.mrb[0].mxu0 %v2821
        %v2860 = vpop.f32.mrb[0].mxu0
        %v2861 = vadd.f32 0.0, %v2860
        %v2862 = vpop.f32.mrb[0].mxu0
        %v2863 = vpop.f32.mrb[0].mxu0
        %v2864 = vadd.f32 0.0, %v2863
        %v2865 = vpop.f32.mrb[0].mxu0
        %2866 = vdwg.mxu0
        %2867 = vrot.lane.b32.xlu0 %v2766, 96
        %v2868 = vpop.permute.xlu0 %2867
        %v2870 = vsel %vm1839, %v2759, 0
        %v2873 = vsel %vm1839, %v2868, 0
        %2875 = vmatprep.subr.bf16.mxu0 0
        %2876 = vmatpush1.bf16.xpose.msra.mxu0 %v2873
        %2877 = vmatprep.subr.bf16.mxu0 0
        %2878 = vmatpush1.bf16.xpose.msra.mxu0 0
        %2879 = vmatprep.subr.bf16.mxu0 0
        %2880 = vmatpush1.bf16.xpose.msra.mxu0 0
        %2881 = vmatprep.subr.bf16.mxu0 0
        %2882 = vmatpush1.bf16.xpose.msra.mxu0 0
        %2883 = vmatprep.subr.bf16.mxu0 0
        %2884 = vmatpush1.bf16.xpose.msra.mxu0 0
        %2885 = vmatprep.subr.bf16.mxu0 0
        %2886 = vmatpush1.bf16.xpose.msra.mxu0 0
        %2887 = vmatprep.subr.bf16.mxu0 0
        %2888 = vmatpush1.bf16.xpose.msra.mxu0 0
        %2889 = vmatprep.subr.bf16.mxu0 0
        %2890 = vmatpush1.bf16.xpose.msra.mxu0 0
        %2891 = vmatprep.subr.bf16.mxu0 0
        %2892 = vmatpush1.bf16.xpose.msra.mxu0 0
        %2893 = vmatprep.subr.bf16.mxu0 0
        %2894 = vmatpush1.bf16.xpose.msra.mxu0 0
        %2895 = vmatprep.subr.bf16.mxu0 0
        %2896 = vmatpush1.bf16.xpose.msra.mxu0 0
        %2897 = vmatprep.subr.bf16.mxu0 0
        %2898 = vmatpush1.bf16.xpose.msra.mxu0 0
        %2899 = vmatprep.subr.bf16.mxu0 0
        %2900 = vmatpush1.bf16.xpose.msra.mxu0 0
        %2901 = vmatprep.subr.bf16.mxu0 0
        %2902 = vmatpush1.bf16.xpose.msra.mxu0 0
        %2903 = vmatprep.subr.bf16.mxu0 0
        %2904 = vmatpush1.bf16.xpose.msra.mxu0 0
        %2905 = vmatprep.subr.bf16.mxu0 0
        %2906 = vmatpush1.bf16.xpose.msra.mxu0 0
        %2907 = vmatprep.mubr.bf16.mxu0 0
        %2908 = vmatmul.mubr.bf16.gmra.mrb[0].mxu0 %v2870
        %v2909 = vpop.f32.mrb[0].mxu0
        %v2910 = vadd.f32 0.0, %v2909
        %v2911 = vpop.f32.mrb[0].mxu0
        %v2912 = vpop.f32.mrb[0].mxu0
        %v2913 = vadd.f32 0.0, %v2912
        %v2914 = vpop.f32.mrb[0].mxu0
        %2915 = vdwg.mxu0
        %2916 = vrot.lane.b32.xlu0 %v2768, 96
        %v2917 = vpop.permute.xlu0 %2916
        %v2919 = vsel %vm1839, %v2761, 0
        %v2922 = vsel %vm1839, %v2917, 0
        %2924 = vmatprep.subr.bf16.mxu0 0
        %2925 = vmatpush1.bf16.xpose.msra.mxu0 %v2922
        %2926 = vmatprep.subr.bf16.mxu0 0
        %2927 = vmatpush1.bf16.xpose.msra.mxu0 0
        %2928 = vmatprep.subr.bf16.mxu0 0
        %2929 = vmatpush1.bf16.xpose.msra.mxu0 0
        %2930 = vmatprep.subr.bf16.mxu0 0
        %2931 = vmatpush1.bf16.xpose.msra.mxu0 0
        %2932 = vmatprep.subr.bf16.mxu0 0
        %2933 = vmatpush1.bf16.xpose.msra.mxu0 0
        %2934 = vmatprep.subr.bf16.mxu0 0
        %2935 = vmatpush1.bf16.xpose.msra.mxu0 0
        %2936 = vmatprep.subr.bf16.mxu0 0
        %2937 = vmatpush1.bf16.xpose.msra.mxu0 0
        %2938 = vmatprep.subr.bf16.mxu0 0
        %2939 = vmatpush1.bf16.xpose.msra.mxu0 0
        %2940 = vmatprep.subr.bf16.mxu0 0
        %2941 = vmatpush1.bf16.xpose.msra.mxu0 0
        %2942 = vmatprep.subr.bf16.mxu0 0
        %2943 = vmatpush1.bf16.xpose.msra.mxu0 0
        %2944 = vmatprep.subr.bf16.mxu0 0
        %2945 = vmatpush1.bf16.xpose.msra.mxu0 0
        %2946 = vmatprep.subr.bf16.mxu0 0
        %2947 = vmatpush1.bf16.xpose.msra.mxu0 0
        %2948 = vmatprep.subr.bf16.mxu0 0
        %2949 = vmatpush1.bf16.xpose.msra.mxu0 0
        %2950 = vmatprep.subr.bf16.mxu0 0
        %2951 = vmatpush1.bf16.xpose.msra.mxu0 0
        %2952 = vmatprep.subr.bf16.mxu0 0
        %2953 = vmatpush1.bf16.xpose.msra.mxu0 0
        %2954 = vmatprep.subr.bf16.mxu0 0
        %2955 = vmatpush1.bf16.xpose.msra.mxu0 0
        %2956 = vmatprep.mubr.bf16.mxu0 0
        %2957 = vmatmul.mubr.bf16.gmra.mrb[0].mxu0 %v2919
        %v2958 = vpop.f32.mrb[0].mxu0
        %v2959 = vadd.f32 0.0, %v2958
        %v2960 = vpop.f32.mrb[0].mxu0
        %v2961 = vpop.f32.mrb[0].mxu0
        %v2962 = vadd.f32 0.0, %v2961
        %v2963 = vpop.f32.mrb[0].mxu0
        %2964 = vdwg.mxu0
        %v2965 = vsel %vm2034, %v2812, -inf
        %2966 = vmax.xlane.f32.xlu0 %v2965
        %v2967 = vpop.xlane.xlu0 %2966
        %v2968 = vsel %vm2038, %v2815, -inf
        %2969 = vmax.xlane.f32.xlu0 %v2968
        %v2970 = vpop.xlane.xlu0 %2969
        %v2971 = vsel %vm2034, %v2861, -inf
        %2972 = vmax.xlane.f32.xlu0 %v2971
        %v2973 = vpop.xlane.xlu0 %2972
        %v2974 = vsel %vm2038, %v2864, -inf
        %2975 = vmax.xlane.f32.xlu0 %v2974
        %v2976 = vpop.xlane.xlu0 %2975
        %v2977 = vsel %vm2034, %v2910, -inf
        %2978 = vmax.xlane.f32.xlu0 %v2977
        %v2979 = vpop.xlane.xlu0 %2978
        %v2980 = vsel %vm2038, %v2913, -inf
        %2981 = vmax.xlane.f32.xlu0 %v2980
        %v2982 = vpop.xlane.xlu0 %2981
        %v2983 = vsel %vm2034, %v2959, -inf
        %2984 = vmax.xlane.f32.xlu0 %v2983
        %v2985 = vpop.xlane.xlu0 %2984
        %v2986 = vsel %vm2038, %v2962, -inf
        %2987 = vmax.xlane.f32.xlu0 %v2986
        %v2988 = vpop.xlane.xlu0 %2987
        %v2989 = vsub.f32 %v2812, %v2967
        %v2990 = vsub.f32 %v2815, %v2970
        %v2991 = vsub.f32 %v2861, %v2973
        %v2992 = vsub.f32 %v2864, %v2976
        %v2993 = vsub.f32 %v2910, %v2979
        %v2994 = vsub.f32 %v2913, %v2982
        %v2995 = vsub.f32 %v2959, %v2985
        %v2996 = vsub.f32 %v2962, %v2988
        %v2997 = vmul.f32 %v2989, 1.442695
        %v2998 = vpow.pop %v2997
        %v2999 = vmul.f32 %v2990, 1.442695
        %v3000 = vpow.pop %v2999
        %v3001 = vmul.f32 %v2991, 1.442695
        %v3002 = vpow.pop %v3001
        %v3003 = vmul.f32 %v2992, 1.442695
        %v3004 = vpow.pop %v3003
        %v3005 = vmul.f32 %v2993, 1.442695
        %v3006 = vpow.pop %v3005
        %v3007 = vmul.f32 %v2994, 1.442695
        %v3008 = vpow.pop %v3007
        %v3009 = vmul.f32 %v2995, 1.442695
        %v3010 = vpow.pop %v3009
        %v3011 = vmul.f32 %v2996, 1.442695
        %v3012 = vpow.pop %v3011
        %v3013 = vsel %vm2034, %v2998, 0.0
        %3014 = vadd.xlane.f32.xlu0 %v3013
        %v3015 = vpop.xlane.xlu0 %3014
        %v3016 = vsel %vm2038, %v3000, 0.0
        %3017 = vadd.xlane.f32.xlu0 %v3016
        %v3018 = vpop.xlane.xlu0 %3017
        %v3019 = vsel %vm2034, %v3002, 0.0
        %3020 = vadd.xlane.f32.xlu0 %v3019
        %v3021 = vpop.xlane.xlu0 %3020
        %v3022 = vsel %vm2038, %v3004, 0.0
        %3023 = vadd.xlane.f32.xlu0 %v3022
        %v3024 = vpop.xlane.xlu0 %3023
        %v3025 = vsel %vm2034, %v3006, 0.0
        %3026 = vadd.xlane.f32.xlu0 %v3025
        %v3027 = vpop.xlane.xlu0 %3026
        %v3028 = vsel %vm2038, %v3008, 0.0
        %3029 = vadd.xlane.f32.xlu0 %v3028
        %v3030 = vpop.xlane.xlu0 %3029
        %v3031 = vsel %vm2034, %v3010, 0.0
        %3032 = vadd.xlane.f32.xlu0 %v3031
        %v3033 = vpop.xlane.xlu0 %3032
        %v3034 = vsel %vm2038, %v3012, 0.0
        %3035 = vadd.xlane.f32.xlu0 %v3034
        %v3036 = vpop.xlane.xlu0 %3035
        %v3037 = vrcp.pop %v3015
        %v3038 = vmul.f32 %v2998, %v3037
        %v3039 = vrcp.pop %v3018
        %v3040 = vmul.f32 %v3000, %v3039
        %v3041 = vrcp.pop %v3021
        %v3042 = vmul.f32 %v3002, %v3041
        %v3043 = vrcp.pop %v3024
        %v3044 = vmul.f32 %v3004, %v3043
        %v3045 = vrcp.pop %v3027
        %v3046 = vmul.f32 %v3006, %v3045
        %v3047 = vrcp.pop %v3030
        %v3048 = vmul.f32 %v3008, %v3047
        %v3049 = vrcp.pop %v3033
        %v3050 = vmul.f32 %v3010, %v3049
        %v3051 = vrcp.pop %v3036
        %v3052 = vmul.f32 %v3012, %v3051
        %v3053 = vpack.c.bf16 %v3040, %v3038
        %v3054 = vpack.c.bf16 %v3044, %v3042
        %v3055 = vpack.c.bf16 %v3048, %v3046
        %v3056 = vpack.c.bf16 %v3052, %v3050
        %3057 = vrot.lane.b32.xlu0 %v2754, 64
        %v3058 = vpop.permute.xlu0 %3057
        %v3060 = vsel %vm2034, %v3053, 0
        %v3063 = vand.u32 %v3058, %v2135
        %3065 = vmatprep.subr.bf16.mxu0 0
        %3066 = vmatpush1.bf16.msra.mxu0 %v3063
        %3067 = vmatprep.subr.bf16.mxu0 0
        %3068 = vmatpush1.bf16.msra.mxu0 0
        %3069 = vmatprep.subr.bf16.mxu0 0
        %3070 = vmatpush1.bf16.msra.mxu0 0
        %3071 = vmatprep.subr.bf16.mxu0 0
        %3072 = vmatpush1.bf16.msra.mxu0 0
        %3073 = vmatprep.subr.bf16.mxu0 0
        %3074 = vmatpush1.bf16.msra.mxu0 0
        %3075 = vmatprep.subr.bf16.mxu0 0
        %3076 = vmatpush1.bf16.msra.mxu0 0
        %3077 = vmatprep.subr.bf16.mxu0 0
        %3078 = vmatpush1.bf16.msra.mxu0 0
        %3079 = vmatprep.subr.bf16.mxu0 0
        %3080 = vmatpush1.bf16.msra.mxu0 0
        %3081 = vmatprep.subr.bf16.mxu0 0
        %3082 = vmatpush1.bf16.msra.mxu0 0
        %3083 = vmatprep.subr.bf16.mxu0 0
        %3084 = vmatpush1.bf16.msra.mxu0 0
        %3085 = vmatprep.subr.bf16.mxu0 0
        %3086 = vmatpush1.bf16.msra.mxu0 0
        %3087 = vmatprep.subr.bf16.mxu0 0
        %3088 = vmatpush1.bf16.msra.mxu0 0
        %3089 = vmatprep.subr.bf16.mxu0 0
        %3090 = vmatpush1.bf16.msra.mxu0 0
        %3091 = vmatprep.subr.bf16.mxu0 0
        %3092 = vmatpush1.bf16.msra.mxu0 0
        %3093 = vmatprep.subr.bf16.mxu0 0
        %3094 = vmatpush1.bf16.msra.mxu0 0
        %3095 = vmatprep.subr.bf16.mxu0 0
        %3096 = vmatpush1.bf16.msra.mxu0 0
        %3097 = vmatprep.mubr.bf16.mxu0 0
        %3098 = vmatmul.mubr.bf16.gmra.mrb[0].mxu0 %v3060
        %v3099 = vpop.f32.mrb[0].mxu0
        %v3100 = vadd.f32 0.0, %v3099
        %v3101 = vpop.f32.mrb[0].mxu0
        %v3102 = vpop.f32.mrb[0].mxu0
        %v3103 = vadd.f32 0.0, %v3102
        %v3104 = vpop.f32.mrb[0].mxu0
        %3105 = vdwg.mxu0
        %3106 = vrot.lane.b32.xlu0 %v2764, 64
        %v3107 = vpop.permute.xlu0 %3106
        %v3109 = vsel %vm2034, %v3054, 0
        %v3112 = vand.u32 %v3107, %v2135
        %3114 = vmatprep.subr.bf16.mxu0 0
        %3115 = vmatpush1.bf16.msra.mxu0 %v3112
        %3116 = vmatprep.subr.bf16.mxu0 0
        %3117 = vmatpush1.bf16.msra.mxu0 0
        %3118 = vmatprep.subr.bf16.mxu0 0
        %3119 = vmatpush1.bf16.msra.mxu0 0
        %3120 = vmatprep.subr.bf16.mxu0 0
        %3121 = vmatpush1.bf16.msra.mxu0 0
        %3122 = vmatprep.subr.bf16.mxu0 0
        %3123 = vmatpush1.bf16.msra.mxu0 0
        %3124 = vmatprep.subr.bf16.mxu0 0
        %3125 = vmatpush1.bf16.msra.mxu0 0
        %3126 = vmatprep.subr.bf16.mxu0 0
        %3127 = vmatpush1.bf16.msra.mxu0 0
        %3128 = vmatprep.subr.bf16.mxu0 0
        %3129 = vmatpush1.bf16.msra.mxu0 0
        %3130 = vmatprep.subr.bf16.mxu0 0
        %3131 = vmatpush1.bf16.msra.mxu0 0
        %3132 = vmatprep.subr.bf16.mxu0 0
        %3133 = vmatpush1.bf16.msra.mxu0 0
        %3134 = vmatprep.subr.bf16.mxu0 0
        %3135 = vmatpush1.bf16.msra.mxu0 0
        %3136 = vmatprep.subr.bf16.mxu0 0
        %3137 = vmatpush1.bf16.msra.mxu0 0
        %3138 = vmatprep.subr.bf16.mxu0 0
        %3139 = vmatpush1.bf16.msra.mxu0 0
        %3140 = vmatprep.subr.bf16.mxu0 0
        %3141 = vmatpush1.bf16.msra.mxu0 0
        %3142 = vmatprep.subr.bf16.mxu0 0
        %3143 = vmatpush1.bf16.msra.mxu0 0
        %3144 = vmatprep.subr.bf16.mxu0 0
        %3145 = vmatpush1.bf16.msra.mxu0 0
        %3146 = vmatprep.mubr.bf16.mxu0 0
        %3147 = vmatmul.mubr.bf16.gmra.mrb[0].mxu0 %v3109
        %v3148 = vpop.f32.mrb[0].mxu0
        %v3149 = vadd.f32 0.0, %v3148
        %v3150 = vpop.f32.mrb[0].mxu0
        %v3151 = vpop.f32.mrb[0].mxu0
        %v3152 = vadd.f32 0.0, %v3151
        %v3153 = vpop.f32.mrb[0].mxu0
        %3154 = vdwg.mxu0
        %3155 = vrot.lane.b32.xlu0 %v2766, 64
        %v3156 = vpop.permute.xlu0 %3155
        %v3158 = vsel %vm2034, %v3055, 0
        %v3161 = vand.u32 %v3156, %v2135
        %3163 = vmatprep.subr.bf16.mxu0 0
        %3164 = vmatpush1.bf16.msra.mxu0 %v3161
        %3165 = vmatprep.subr.bf16.mxu0 0
        %3166 = vmatpush1.bf16.msra.mxu0 0
        %3167 = vmatprep.subr.bf16.mxu0 0
        %3168 = vmatpush1.bf16.msra.mxu0 0
        %3169 = vmatprep.subr.bf16.mxu0 0
        %3170 = vmatpush1.bf16.msra.mxu0 0
        %3171 = vmatprep.subr.bf16.mxu0 0
        %3172 = vmatpush1.bf16.msra.mxu0 0
        %3173 = vmatprep.subr.bf16.mxu0 0
        %3174 = vmatpush1.bf16.msra.mxu0 0
        %3175 = vmatprep.subr.bf16.mxu0 0
        %3176 = vmatpush1.bf16.msra.mxu0 0
        %3177 = vmatprep.subr.bf16.mxu0 0
        %3178 = vmatpush1.bf16.msra.mxu0 0
        %3179 = vmatprep.subr.bf16.mxu0 0
        %3180 = vmatpush1.bf16.msra.mxu0 0
        %3181 = vmatprep.subr.bf16.mxu0 0
        %3182 = vmatpush1.bf16.msra.mxu0 0
        %3183 = vmatprep.subr.bf16.mxu0 0
        %3184 = vmatpush1.bf16.msra.mxu0 0
        %3185 = vmatprep.subr.bf16.mxu0 0
        %3186 = vmatpush1.bf16.msra.mxu0 0
        %3187 = vmatprep.subr.bf16.mxu0 0
        %3188 = vmatpush1.bf16.msra.mxu0 0
        %3189 = vmatprep.subr.bf16.mxu0 0
        %3190 = vmatpush1.bf16.msra.mxu0 0
        %3191 = vmatprep.subr.bf16.mxu0 0
        %3192 = vmatpush1.bf16.msra.mxu0 0
        %3193 = vmatprep.subr.bf16.mxu0 0
        %3194 = vmatpush1.bf16.msra.mxu0 0
        %3195 = vmatprep.mubr.bf16.mxu0 0
        %3196 = vmatmul.mubr.bf16.gmra.mrb[0].mxu0 %v3158
        %v3197 = vpop.f32.mrb[0].mxu0
        %v3198 = vadd.f32 0.0, %v3197
        %v3199 = vpop.f32.mrb[0].mxu0
        %v3200 = vpop.f32.mrb[0].mxu0
        %v3201 = vadd.f32 0.0, %v3200
        %v3202 = vpop.f32.mrb[0].mxu0
        %3203 = vdwg.mxu0
        %3204 = vrot.lane.b32.xlu0 %v2768, 64
        %v3205 = vpop.permute.xlu0 %3204
        %v3207 = vsel %vm2034, %v3056, 0
        %v3210 = vand.u32 %v3205, %v2135
        %3212 = vmatprep.subr.bf16.mxu0 0
        %3213 = vmatpush1.bf16.msra.mxu0 %v3210
        %3214 = vmatprep.subr.bf16.mxu0 0
        %3215 = vmatpush1.bf16.msra.mxu0 0
        %3216 = vmatprep.subr.bf16.mxu0 0
        %3217 = vmatpush1.bf16.msra.mxu0 0
        %3218 = vmatprep.subr.bf16.mxu0 0
        %3219 = vmatpush1.bf16.msra.mxu0 0
        %3220 = vmatprep.subr.bf16.mxu0 0
        %3221 = vmatpush1.bf16.msra.mxu0 0
        %3222 = vmatprep.subr.bf16.mxu0 0
        %3223 = vmatpush1.bf16.msra.mxu0 0
        %3224 = vmatprep.subr.bf16.mxu0 0
        %3225 = vmatpush1.bf16.msra.mxu0 0
        %3226 = vmatprep.subr.bf16.mxu0 0
        %3227 = vmatpush1.bf16.msra.mxu0 0
        %3228 = vmatprep.subr.bf16.mxu0 0
        %3229 = vmatpush1.bf16.msra.mxu0 0
        %3230 = vmatprep.subr.bf16.mxu0 0
        %3231 = vmatpush1.bf16.msra.mxu0 0
        %3232 = vmatprep.subr.bf16.mxu0 0
        %3233 = vmatpush1.bf16.msra.mxu0 0
        %3234 = vmatprep.subr.bf16.mxu0 0
        %3235 = vmatpush1.bf16.msra.mxu0 0
        %3236 = vmatprep.subr.bf16.mxu0 0
        %3237 = vmatpush1.bf16.msra.mxu0 0
        %3238 = vmatprep.subr.bf16.mxu0 0
        %3239 = vmatpush1.bf16.msra.mxu0 0
        %3240 = vmatprep.subr.bf16.mxu0 0
        %3241 = vmatpush1.bf16.msra.mxu0 0
        %3242 = vmatprep.subr.bf16.mxu0 0
        %3243 = vmatpush1.bf16.msra.mxu0 0
        %3244 = vmatprep.mubr.bf16.mxu0 0
        %3245 = vmatmul.mubr.bf16.gmra.mrb[0].mxu0 %v3207
        %v3246 = vpop.f32.mrb[0].mxu0
        %v3247 = vadd.f32 0.0, %v3246
        %v3248 = vpop.f32.mrb[0].mxu0
        %v3249 = vpop.f32.mrb[0].mxu0
        %v3250 = vadd.f32 0.0, %v3249
        %v3251 = vpop.f32.mrb[0].mxu0
        %3252 = vdwg.mxu0
        %3255 = vrot.lane.b32.xlu0 %v3149, 8
        %v3256 = vpop.permute.xlu0 %3255
        %3257 = vrot.lane.b32.xlu0 %v3152, 8
        %v3258 = vpop.permute.xlu0 %3257
        %3263 = vrot.lane.b32.xlu0 %v3198, 16
        %v3264 = vpop.permute.xlu0 %3263
        %3265 = vrot.lane.b32.xlu0 %v3201, 16
        %v3266 = vpop.permute.xlu0 %3265
        %3271 = vrot.lane.b32.xlu0 %v3247, 24
        %v3272 = vpop.permute.xlu0 %3271
        %3273 = vrot.lane.b32.xlu0 %v3250, 24
        %v3274 = vpop.permute.xlu0 %3273
        %v3277 = vsel %vm1839, %v3100, %v3256
        %v3278 = vsel %vm1839, %v3103, %v3258
        %v3279 = vsel %vm2353, %v3277, %v3264
        %v3280 = vsel %vm2353, %v3278, %v3266
        %v3281 = vsel %vm2356, %v3279, %v3272
        %v3282 = vsel %vm2356, %v3280, %v3274
        %v3283 = vpack.c.bf16 %v3282, %v3281
        %v3284 = vlaneseq
        %v3285 = vshrl.u32 %v3284, 7
        %v3286 = vsub.s32 1, %v3285
        %v3287 = vrot.slane %v2689, %v3286
        %v3292 = vunpack.c.l.b16 %v2664
        %v3293 = vunpack.c.l.b16 %v2665
        %v3294 = vunpack.c.l.b16 %v2666
        %v3295 = vunpack.c.l.b16 %v2667
        %v3296 = vpack.c.b16 %v3293, %v3292
        %v3297 = vpack.c.b16 %v3295, %v3294
        %v3301 = vsel %vm1464, %v3283, 0
        %3303 = vmatprep.subr.bf16.mxu0 0
        %3304 = vmatpush1.bf16.msra.mxu0 %v3296
        %3305 = vmatprep.subr.bf16.mxu0 0
        %3306 = vmatpush1.bf16.msra.mxu0 %v3297
        %3307 = vmatprep.subr.bf16.mxu0 0
        %3308 = vmatpush1.bf16.msra.mxu0 0
        %3309 = vmatprep.subr.bf16.mxu0 0
        %3310 = vmatpush1.bf16.msra.mxu0 0
        %3311 = vmatprep.subr.bf16.mxu0 0
        %3312 = vmatpush1.bf16.msra.mxu0 0
        %3313 = vmatprep.subr.bf16.mxu0 0
        %3314 = vmatpush1.bf16.msra.mxu0 0
        %3315 = vmatprep.subr.bf16.mxu0 0
        %3316 = vmatpush1.bf16.msra.mxu0 0
        %3317 = vmatprep.subr.bf16.mxu0 0
        %3318 = vmatpush1.bf16.msra.mxu0 0
        %3319 = vmatprep.subr.bf16.mxu0 0
        %3320 = vmatpush1.bf16.msra.mxu0 0
        %3321 = vmatprep.subr.bf16.mxu0 0
        %3322 = vmatpush1.bf16.msra.mxu0 0
        %3323 = vmatprep.subr.bf16.mxu0 0
        %3324 = vmatpush1.bf16.msra.mxu0 0
        %3325 = vmatprep.subr.bf16.mxu0 0
        %3326 = vmatpush1.bf16.msra.mxu0 0
        %3327 = vmatprep.subr.bf16.mxu0 0
        %3328 = vmatpush1.bf16.msra.mxu0 0
        %3329 = vmatprep.subr.bf16.mxu0 0
        %3330 = vmatpush1.bf16.msra.mxu0 0
        %3331 = vmatprep.subr.bf16.mxu0 0
        %3332 = vmatpush1.bf16.msra.mxu0 0
        %3333 = vmatprep.subr.bf16.mxu0 0
        %3334 = vmatpush1.bf16.msra.mxu0 0
        %3335 = vmatprep.mubr.bf16.mxu0 0
        %3336 = vmatmul.mubr.bf16.gmra.mrb[0].mxu0 %v3301
        %v3337 = vpop.f32.mrb[0].mxu0
        %v3338 = vadd.f32 %v3287, %v3337
        %v3339 = vpop.f32.mrb[0].mxu0
        %v3340 = vpop.f32.mrb[0].mxu0
        %v3341 = vadd.f32 %v3287, %v3340
        %v3342 = vpop.f32.mrb[0].mxu0
        %3343 = vdwg.mxu0
        %v3344 = vadd.f32 %v2657, %v3338
        %v3345 = vadd.f32 %v2658, %v3341
        %v3346 = vsel %vm1464, %v3344, 0.0
        %3347 = vadd.xlane.f32.xlu0 %v3346
        %v3348 = vpop.xlane.xlu0 %3347
        %v3349 = vsel %vm2425, %v3345, 0.0
        %3350 = vadd.xlane.f32.xlu0 %v3349
        %v3351 = vpop.xlane.xlu0 %3350
        %v3352 = vmul.f32 %v3348, %v2429
        %v3353 = vmul.f32 %v3351, %v2429
        %v3354 = vsub.f32 %v3344, %v3352
        %v3355 = vsub.f32 %v3345, %v3353
        %v3356 = vmul.f32 %v3354, %v3354
        %v3357 = vmul.f32 %v3355, %v3355
        %v3358 = vsel %vm1464, %v3356, 0.0
        %3359 = vadd.xlane.f32.xlu0 %v3358
        %v3360 = vpop.xlane.xlu0 %3359
        %v3361 = vsel %vm2425, %v3357, 0.0
        %3362 = vadd.xlane.f32.xlu0 %v3361
        %v3363 = vpop.xlane.xlu0 %3362
        %v3364 = vmul.f32 %v3360, %v2429
        %v3365 = vmul.f32 %v3363, %v2429
        %v3366 = vadd.f32 %v3364, 1e-05
        %v3367 = vadd.f32 %v3365, 1e-05
        %v3368 = vrsqrt.pop %v3366
        %v3369 = vrsqrt.pop %v3367
        %v3370 = vmul.f32 %v3354, %v3368
        %v3371 = vmul.f32 %v3355, %v3369
        %v3372 = vlaneseq
        %v3373 = vshrl.u32 %v3372, 7
        %v3374 = vsub.s32 4, %v3373
        %v3375 = vrot.slane %v2689, %v3374
        %v3376 = vmul.f32 %v3370, %v3375
        %v3377 = vmul.f32 %v3371, %v3375
        %v3378 = vlaneseq
        %v3379 = vshrl.u32 %v3378, 7
        %v3380 = vsub.s32 5, %v3379
        %v3381 = vrot.slane %v2689, %v3380
        %v3382 = vadd.f32 %v3376, %v3381
        %v3383 = vadd.f32 %v3377, %v3381
        %v3384 = vpack.c.bf16 %v3383, %v3382
        %v3385 = vlaneseq
        %v3386 = vshrl.u32 %v3385, 7
        %v3387 = vsub.s32 2, %v3386
        %v3388 = vrot.slane %v2689, %v3387
        %v3393 = vunpack.c.l.b16 %v2668
        %v3394 = vunpack.c.l.b16 %v2669
        %v3395 = vunpack.c.l.b16 %v2670
        %v3396 = vunpack.c.l.b16 %v2671
        %v3397 = vpack.c.b16 %v3394, %v3393
        %v3398 = vpack.c.b16 %v3396, %v3395
        %v3402 = vsel %vm1464, %v3384, 0
        %3404 = vmatprep.subr.bf16.mxu0 0
        %3405 = vmatpush1.bf16.msra.mxu0 %v3397
        %3406 = vmatprep.subr.bf16.mxu0 0
        %3407 = vmatpush1.bf16.msra.mxu0 %v3398
        %3408 = vmatprep.subr.bf16.mxu0 0
        %3409 = vmatpush1.bf16.msra.mxu0 0
        %3410 = vmatprep.subr.bf16.mxu0 0
        %3411 = vmatpush1.bf16.msra.mxu0 0
        %3412 = vmatprep.subr.bf16.mxu0 0
        %3413 = vmatpush1.bf16.msra.mxu0 0
        %3414 = vmatprep.subr.bf16.mxu0 0
        %3415 = vmatpush1.bf16.msra.mxu0 0
        %3416 = vmatprep.subr.bf16.mxu0 0
        %3417 = vmatpush1.bf16.msra.mxu0 0
        %3418 = vmatprep.subr.bf16.mxu0 0
        %3419 = vmatpush1.bf16.msra.mxu0 0
        %3420 = vmatprep.subr.bf16.mxu0 0
        %3421 = vmatpush1.bf16.msra.mxu0 0
        %3422 = vmatprep.subr.bf16.mxu0 0
        %3423 = vmatpush1.bf16.msra.mxu0 0
        %3424 = vmatprep.subr.bf16.mxu0 0
        %3425 = vmatpush1.bf16.msra.mxu0 0
        %3426 = vmatprep.subr.bf16.mxu0 0
        %3427 = vmatpush1.bf16.msra.mxu0 0
        %3428 = vmatprep.subr.bf16.mxu0 0
        %3429 = vmatpush1.bf16.msra.mxu0 0
        %3430 = vmatprep.subr.bf16.mxu0 0
        %3431 = vmatpush1.bf16.msra.mxu0 0
        %3432 = vmatprep.subr.bf16.mxu0 0
        %3433 = vmatpush1.bf16.msra.mxu0 0
        %3434 = vmatprep.subr.bf16.mxu0 0
        %3435 = vmatpush1.bf16.msra.mxu0 0
        %3436 = vmatprep.mubr.bf16.mxu0 0
        %3437 = vmatmul.mubr.bf16.gmra.mrb[0].mxu0 %v3402
        %v3438 = vpop.f32.mrb[0].mxu0
        %v3439 = vadd.f32 %v3388, %v3438
        %v3440 = vpop.f32.mrb[0].mxu0
        %v3441 = vpop.f32.mrb[0].mxu0
        %v3442 = vadd.f32 %v3388, %v3441
        %v3443 = vpop.f32.mrb[0].mxu0
        %3444 = vdwg.mxu0
        %v3445 = vmax.f32 %v3439, 0.0
        %v3446 = vmax.f32 %v3442, 0.0
        %v3447 = vpack.c.bf16 %v3446, %v3445
        %v3448 = vlaneseq
        %v3449 = vshrl.u32 %v3448, 7
        %v3450 = vsub.s32 3, %v3449
        %v3451 = vrot.slane %v2689, %v3450
        %v3468 = vunpack.c.l.b16 %v2672
        %v3469 = vunpack.c.l.b16 %v2673
        %v3470 = vunpack.c.l.b16 %v2674
        %v3471 = vunpack.c.l.b16 %v2675
        %v3472 = vunpack.c.l.b16 %v2676
        %v3473 = vunpack.c.l.b16 %v2677
        %v3474 = vunpack.c.l.b16 %v2678
        %v3475 = vunpack.c.l.b16 %v2679
        %v3476 = vunpack.c.l.b16 %v2680
        %v3477 = vunpack.c.l.b16 %v2681
        %v3478 = vunpack.c.l.b16 %v2682
        %v3479 = vunpack.c.l.b16 %v2683
        %v3480 = vunpack.c.l.b16 %v2684
        %v3481 = vunpack.c.l.b16 %v2685
        %v3482 = vunpack.c.l.b16 %v2686
        %v3483 = vunpack.c.l.b16 %v2687
        %v3484 = vpack.c.b16 %v3469, %v3468
        %v3485 = vpack.c.b16 %v3471, %v3470
        %v3486 = vpack.c.b16 %v3473, %v3472
        %v3487 = vpack.c.b16 %v3475, %v3474
        %v3488 = vpack.c.b16 %v3477, %v3476
        %v3489 = vpack.c.b16 %v3479, %v3478
        %v3490 = vpack.c.b16 %v3481, %v3480
        %v3491 = vpack.c.b16 %v3483, %v3482
        %3500 = vmatprep.subr.bf16.mxu0 0
        %3501 = vmatpush1.bf16.msra.mxu0 %v3484
        %3502 = vmatprep.subr.bf16.mxu0 0
        %3503 = vmatpush1.bf16.msra.mxu0 %v3485
        %3504 = vmatprep.subr.bf16.mxu0 0
        %3505 = vmatpush1.bf16.msra.mxu0 %v3486
        %3506 = vmatprep.subr.bf16.mxu0 0
        %3507 = vmatpush1.bf16.msra.mxu0 %v3487
        %3508 = vmatprep.subr.bf16.mxu0 0
        %3509 = vmatpush1.bf16.msra.mxu0 %v3488
        %3510 = vmatprep.subr.bf16.mxu0 0
        %3511 = vmatpush1.bf16.msra.mxu0 %v3489
        %3512 = vmatprep.subr.bf16.mxu0 0
        %3513 = vmatpush1.bf16.msra.mxu0 %v3490
        %3514 = vmatprep.subr.bf16.mxu0 0
        %3515 = vmatpush1.bf16.msra.mxu0 %v3491
        %3516 = vmatprep.subr.bf16.mxu0 0
        %3517 = vmatpush1.bf16.msra.mxu0 0
        %3518 = vmatprep.subr.bf16.mxu0 0
        %3519 = vmatpush1.bf16.msra.mxu0 0
        %3520 = vmatprep.subr.bf16.mxu0 0
        %3521 = vmatpush1.bf16.msra.mxu0 0
        %3522 = vmatprep.subr.bf16.mxu0 0
        %3523 = vmatpush1.bf16.msra.mxu0 0
        %3524 = vmatprep.subr.bf16.mxu0 0
        %3525 = vmatpush1.bf16.msra.mxu0 0
        %3526 = vmatprep.subr.bf16.mxu0 0
        %3527 = vmatpush1.bf16.msra.mxu0 0
        %3528 = vmatprep.subr.bf16.mxu0 0
        %3529 = vmatpush1.bf16.msra.mxu0 0
        %3530 = vmatprep.subr.bf16.mxu0 0
        %3531 = vmatpush1.bf16.msra.mxu0 0
        %3532 = vmatprep.mubr.bf16.mxu0 0
        %3533 = vmatmul.mubr.bf16.gmra.mrb[0].mxu0 %v3447
        %v3534 = vpop.f32.mrb[0].mxu0
        %v3535 = vadd.f32 %v3451, %v3534
        %v3536 = vpop.f32.mrb[0].mxu0
        %v3537 = vpop.f32.mrb[0].mxu0
        %v3538 = vadd.f32 %v3451, %v3537
        %v3539 = vpop.f32.mrb[0].mxu0
        %3540 = vdwg.mxu0
        %v3541 = vadd.f32 %v3382, %v3535
        %v3542 = vadd.f32 %v3383, %v3538
        %v3543 = vsel %vm1464, %v3541, 0.0
        %3544 = vadd.xlane.f32.xlu0 %v3543
        %v3545 = vpop.xlane.xlu0 %3544
        %v3546 = vsel %vm2425, %v3542, 0.0
        %3547 = vadd.xlane.f32.xlu0 %v3546
        %v3548 = vpop.xlane.xlu0 %3547
        %v3549 = vmul.f32 %v3545, %v2429
        %v3550 = vmul.f32 %v3548, %v2429
        %v3551 = vsub.f32 %v3541, %v3549
        %v3552 = vsub.f32 %v3542, %v3550
        %v3553 = vmul.f32 %v3551, %v3551
        %v3554 = vmul.f32 %v3552, %v3552
        %v3555 = vsel %vm1464, %v3553, 0.0
        %3556 = vadd.xlane.f32.xlu0 %v3555
        %v3557 = vpop.xlane.xlu0 %3556
        %v3558 = vsel %vm2425, %v3554, 0.0
        %3559 = vadd.xlane.f32.xlu0 %v3558
        %v3560 = vpop.xlane.xlu0 %3559
        %v3561 = vmul.f32 %v3557, %v2429
        %v3562 = vmul.f32 %v3560, %v2429
        %v3563 = vadd.f32 %v3561, 1e-05
        %v3564 = vadd.f32 %v3562, 1e-05
        %v3565 = vrsqrt.pop %v3563
        %v3566 = vrsqrt.pop %v3564
        %v3567 = vmul.f32 %v3551, %v3565
        %v3568 = vmul.f32 %v3552, %v3566
        %v3569 = vlaneseq
        %v3570 = vshrl.u32 %v3569, 7
        %v3571 = vsub.s32 6, %v3570
        %v3572 = vrot.slane %v2689, %v3571
        %v3573 = vmul.f32 %v3567, %v3572
        %v3574 = vmul.f32 %v3568, %v3572
        %v3575 = vlaneseq
        %v3576 = vshrl.u32 %v3575, 7
        %v3577 = vsub.s32 7, %v3576
        %v3578 = vrot.slane %v2689, %v3577
        %v3579 = vadd.f32 %v3573, %v3578
        %v3580 = vadd.f32 %v3574, %v3578
        %v3581 = vsel %vm1464, %v3579, 0.0
        %3582 = vadd.xlane.f32.xlu0 %v3581
        %v3583 = vpop.xlane.xlu0 %3582
        %v3584 = vsel %vm2425, %v3580, 0.0
        %3585 = vadd.xlane.f32.xlu0 %v3584
        %v3586 = vpop.xlane.xlu0 %3585
        %v3587 = vmul.f32 %v3583, %v2429
        %v3588 = vmul.f32 %v3586, %v2429
        %v3589 = vsub.f32 %v3579, %v3587
        %v3590 = vsub.f32 %v3580, %v3588
        %v3591 = vmul.f32 %v3589, %v3589
        %v3592 = vmul.f32 %v3590, %v3590
        %v3593 = vsel %vm1464, %v3591, 0.0
        %3594 = vadd.xlane.f32.xlu0 %v3593
        %v3595 = vpop.xlane.xlu0 %3594
        %v3596 = vsel %vm2425, %v3592, 0.0
        %3597 = vadd.xlane.f32.xlu0 %v3596
        %v3598 = vpop.xlane.xlu0 %3597
        %v3599 = vmul.f32 %v3595, %v2429
        %v3600 = vmul.f32 %v3598, %v2429
        %v3601 = vadd.f32 %v3599, 1e-05
        %v3602 = vadd.f32 %v3600, 1e-05
        %v3603 = vrsqrt.pop %v3601
        %v3604 = vrsqrt.pop %v3602
        %v3605 = vmul.f32 %v3589, %v3603
        %v3606 = vmul.f32 %v3590, %v3604
        %v3607 = vlaneseq
        %v3608 = vshrl.u32 %v3607, 7
        %v3609 = vsub.s32 4, %v3608
        %v3610 = vrot.slane %v417, %v3609
        %v3611 = vmul.f32 %v3605, %v3610
        %v3612 = vmul.f32 %v3606, %v3610
        %v3613 = vlaneseq
        %v3614 = vshrl.u32 %v3613, 7
        %v3615 = vsub.s32 5, %v3614
        %v3616 = vrot.slane %v417, %v3615
        %v3617 = vadd.f32 %v3611, %v3616
        %v3618 = vadd.f32 %v3612, %v3616
        %v3619 = vpack.c.bf16 %v3618, %v3617
        %v3620 = vld [vmem:[%s6] sm:$0xf]
        %v3621 = vld [vmem:[%s6 + $0x4] sm:$0xf]
        %v3622 = vld [vmem:[%s6 + $0x8] sm:$0xf]
        %v3623 = vld [vmem:[%s6 + $0xc] sm:$0xf]
        %v3624 = vld [vmem:[%s6 + $0x10] sm:$0xf]
        %v3625 = vld [vmem:[%s6 + $0x14] sm:$0xf]
        %v3626 = vld [vmem:[%s6 + $0x18] sm:$0xf]
        %v3627 = vld [vmem:[%s6 + $0x1c] sm:$0xf]
        %v3628 = vld [vmem:[%s6 + $0x20] sm:$0xf]
        %v3629 = vld [vmem:[%s6 + $0x24] sm:$0xf]
        %v3630 = vld [vmem:[%s6 + $0x28] sm:$0xf]
        %v3631 = vld [vmem:[%s6 + $0x2c] sm:$0xf]
        %v3632 = vld [vmem:[%s6 + $0x30] sm:$0xf]
        %v3633 = vld [vmem:[%s6 + $0x34] sm:$0xf]
        %v3634 = vld [vmem:[%s6 + $0x38] sm:$0xf]
        %v3635 = vld [vmem:[%s6 + $0x3c] sm:$0xf]
        %v3636 = vld [vmem:[%s6 + $0x40] sm:$0xf]
        %v3637 = vld [vmem:[%s6 + $0x44] sm:$0xf]
        %v3638 = vld [vmem:[%s6 + $0x48] sm:$0xf]
        %v3639 = vld [vmem:[%s6 + $0x4c] sm:$0xf]
        %v3640 = vld [vmem:[%s6 + $0x50] sm:$0xf]
        %v3641 = vld [vmem:[%s6 + $0x54] sm:$0xf]
        %v3642 = vld [vmem:[%s6 + $0x58] sm:$0xf]
        %v3643 = vld [vmem:[%s6 + $0x5c] sm:$0xf]
        %v3644 = vld [vmem:[%s6 + $0x60] sm:$0xf]
        %v3645 = vld [vmem:[%s6 + $0x64] sm:$0xf]
        %v3646 = vld [vmem:[%s6 + $0x68] sm:$0xf]
        %v3647 = vld [vmem:[%s6 + $0x6c] sm:$0xf]
        %v3648 = vld [vmem:[%s6 + $0x70] sm:$0xf]
        %v3649 = vld [vmem:[%s6 + $0x74] sm:$0xf]
        %v3650 = vld [vmem:[%s6 + $0x78] sm:$0xf]
        %v3651 = vld [vmem:[%s6 + $0x7c] sm:$0xf]
        %v3652 = vld [vmem:[%s6 + $0x80] sm:$0xf]
        %v3653 = vld [vmem:[%s6 + $0x84] sm:$0xf]
        %v3654 = vld [vmem:[%s6 + $0x88] sm:$0xf]
        %v3655 = vld [vmem:[%s6 + $0x8c] sm:$0xf]
        %v3656 = vld [vmem:[%s6 + $0x90] sm:$0xf]
        %v3657 = vld [vmem:[%s6 + $0x94] sm:$0xf]
        %v3658 = vld [vmem:[%s6 + $0x98] sm:$0xf]
        %v3659 = vld [vmem:[%s6 + $0x9c] sm:$0xf]
        %v3660 = vld [vmem:[%s7] sm:$0xff]
        %v3661 = vld [vmem:[%s7 + $0x8] sm:$0x1f]
        %v3662 = vlaneseq
        %v3663 = vshrl.u32 %v3662, 7
        %v3664 = vsub.s32 0, %v3663
        %v3665 = vrot.slane %v3660, %v3664
        %v3670 = vunpack.c.l.b16 %v3620
        %v3671 = vunpack.c.l.b16 %v3621
        %v3672 = vunpack.c.l.b16 %v3622
        %v3673 = vunpack.c.l.b16 %v3623
        %v3674 = vpack.c.b16 %v3671, %v3670
        %v3675 = vpack.c.b16 %v3673, %v3672
        %3678 = vmatprep.subr.bf16.mxu0 0
        %3679 = vmatpush1.bf16.msra.mxu0 %v3674
        %3680 = vmatprep.subr.bf16.mxu0 0
        %3681 = vmatpush1.bf16.msra.mxu0 %v3675
        %3682 = vmatprep.subr.bf16.mxu0 0
        %3683 = vmatpush1.bf16.msra.mxu0 0
        %3684 = vmatprep.subr.bf16.mxu0 0
        %3685 = vmatpush1.bf16.msra.mxu0 0
        %3686 = vmatprep.subr.bf16.mxu0 0
        %3687 = vmatpush1.bf16.msra.mxu0 0
        %3688 = vmatprep.subr.bf16.mxu0 0
        %3689 = vmatpush1.bf16.msra.mxu0 0
        %3690 = vmatprep.subr.bf16.mxu0 0
        %3691 = vmatpush1.bf16.msra.mxu0 0
        %3692 = vmatprep.subr.bf16.mxu0 0
        %3693 = vmatpush1.bf16.msra.mxu0 0
        %3694 = vmatprep.subr.bf16.mxu0 0
        %3695 = vmatpush1.bf16.msra.mxu0 0
        %3696 = vmatprep.subr.bf16.mxu0 0
        %3697 = vmatpush1.bf16.msra.mxu0 0
        %3698 = vmatprep.subr.bf16.mxu0 0
        %3699 = vmatpush1.bf16.msra.mxu0 0
        %3700 = vmatprep.subr.bf16.mxu0 0
        %3701 = vmatpush1.bf16.msra.mxu0 0
        %3702 = vmatprep.subr.bf16.mxu0 0
        %3703 = vmatpush1.bf16.msra.mxu0 0
        %3704 = vmatprep.subr.bf16.mxu0 0
        %3705 = vmatpush1.bf16.msra.mxu0 0
        %3706 = vmatprep.subr.bf16.mxu0 0
        %3707 = vmatpush1.bf16.msra.mxu0 0
        %3708 = vmatprep.subr.bf16.mxu0 0
        %3709 = vmatpush1.bf16.msra.mxu0 0
        %3710 = vmatprep.mubr.bf16.mxu0 0
        %3711 = vmatmul.mubr.bf16.gmra.mrb[0].mxu0 %v1776
        %v3712 = vpop.f32.mrb[0].mxu0
        %v3713 = vadd.f32 %v3665, %v3712
        %v3714 = vpop.f32.mrb[0].mxu0
        %v3715 = vpop.f32.mrb[0].mxu0
        %v3716 = vadd.f32 %v3665, %v3715
        %v3717 = vpop.f32.mrb[0].mxu0
        %3718 = vdwg.mxu0
        %v3719 = vmul.f32 %v3713, 0.35355338
        %v3720 = vmul.f32 %v3716, 0.35355338
        %v3721 = vpack.c.bf16 %v3720, %v3719
        %v3722 = vpack.c.bf16 %v3716, %v3713
        %3724 = vrot.lane.b32.xlu0 %v3721, 120
        %v3725 = vpop.permute.xlu0 %3724
        %3726 = vrot.lane.b32.xlu0 %v3721, 112
        %v3727 = vpop.permute.xlu0 %3726
        %3728 = vrot.lane.b32.xlu0 %v3721, 104
        %v3729 = vpop.permute.xlu0 %3728
        %3731 = vrot.lane.b32.xlu0 %v3722, 120
        %v3732 = vpop.permute.xlu0 %3731
        %3733 = vrot.lane.b32.xlu0 %v3722, 112
        %v3734 = vpop.permute.xlu0 %3733
        %3735 = vrot.lane.b32.xlu0 %v3722, 104
        %v3736 = vpop.permute.xlu0 %3735
        %3737 = vrot.lane.b32.xlu0 %v3722, 96
        %v3738 = vpop.permute.xlu0 %3737
        %v3740 = vsel %vm1839, %v3721, 0
        %v3743 = vsel %vm1839, %v3738, 0
        %3745 = vmatprep.subr.bf16.mxu0 0
        %3746 = vmatpush1.bf16.xpose.msra.mxu0 %v3743
        %3747 = vmatprep.subr.bf16.mxu0 0
        %3748 = vmatpush1.bf16.xpose.msra.mxu0 0
        %3749 = vmatprep.subr.bf16.mxu0 0
        %3750 = vmatpush1.bf16.xpose.msra.mxu0 0
        %3751 = vmatprep.subr.bf16.mxu0 0
        %3752 = vmatpush1.bf16.xpose.msra.mxu0 0
        %3753 = vmatprep.subr.bf16.mxu0 0
        %3754 = vmatpush1.bf16.xpose.msra.mxu0 0
        %3755 = vmatprep.subr.bf16.mxu0 0
        %3756 = vmatpush1.bf16.xpose.msra.mxu0 0
        %3757 = vmatprep.subr.bf16.mxu0 0
        %3758 = vmatpush1.bf16.xpose.msra.mxu0 0
        %3759 = vmatprep.subr.bf16.mxu0 0
        %3760 = vmatpush1.bf16.xpose.msra.mxu0 0
        %3761 = vmatprep.subr.bf16.mxu0 0
        %3762 = vmatpush1.bf16.xpose.msra.mxu0 0
        %3763 = vmatprep.subr.bf16.mxu0 0
        %3764 = vmatpush1.bf16.xpose.msra.mxu0 0
        %3765 = vmatprep.subr.bf16.mxu0 0
        %3766 = vmatpush1.bf16.xpose.msra.mxu0 0
        %3767 = vmatprep.subr.bf16.mxu0 0
        %3768 = vmatpush1.bf16.xpose.msra.mxu0 0
        %3769 = vmatprep.subr.bf16.mxu0 0
        %3770 = vmatpush1.bf16.xpose.msra.mxu0 0
        %3771 = vmatprep.subr.bf16.mxu0 0
        %3772 = vmatpush1.bf16.xpose.msra.mxu0 0
        %3773 = vmatprep.subr.bf16.mxu0 0
        %3774 = vmatpush1.bf16.xpose.msra.mxu0 0
        %3775 = vmatprep.subr.bf16.mxu0 0
        %3776 = vmatpush1.bf16.xpose.msra.mxu0 0
        %3777 = vmatprep.mubr.bf16.mxu0 0
        %3778 = vmatmul.mubr.bf16.gmra.mrb[0].mxu0 %v3740
        %v3779 = vpop.f32.mrb[0].mxu0
        %v3780 = vadd.f32 %v1727, %v3779
        %v3781 = vpop.f32.mrb[0].mxu0
        %v3782 = vpop.f32.mrb[0].mxu0
        %v3783 = vadd.f32 %v1728, %v3782
        %v3784 = vpop.f32.mrb[0].mxu0
        %3785 = vdwg.mxu0
        %3786 = vrot.lane.b32.xlu0 %v3732, 96
        %v3787 = vpop.permute.xlu0 %3786
        %v3789 = vsel %vm1839, %v3725, 0
        %v3792 = vsel %vm1839, %v3787, 0
        %3794 = vmatprep.subr.bf16.mxu0 0
        %3795 = vmatpush1.bf16.xpose.msra.mxu0 %v3792
        %3796 = vmatprep.subr.bf16.mxu0 0
        %3797 = vmatpush1.bf16.xpose.msra.mxu0 0
        %3798 = vmatprep.subr.bf16.mxu0 0
        %3799 = vmatpush1.bf16.xpose.msra.mxu0 0
        %3800 = vmatprep.subr.bf16.mxu0 0
        %3801 = vmatpush1.bf16.xpose.msra.mxu0 0
        %3802 = vmatprep.subr.bf16.mxu0 0
        %3803 = vmatpush1.bf16.xpose.msra.mxu0 0
        %3804 = vmatprep.subr.bf16.mxu0 0
        %3805 = vmatpush1.bf16.xpose.msra.mxu0 0
        %3806 = vmatprep.subr.bf16.mxu0 0
        %3807 = vmatpush1.bf16.xpose.msra.mxu0 0
        %3808 = vmatprep.subr.bf16.mxu0 0
        %3809 = vmatpush1.bf16.xpose.msra.mxu0 0
        %3810 = vmatprep.subr.bf16.mxu0 0
        %3811 = vmatpush1.bf16.xpose.msra.mxu0 0
        %3812 = vmatprep.subr.bf16.mxu0 0
        %3813 = vmatpush1.bf16.xpose.msra.mxu0 0
        %3814 = vmatprep.subr.bf16.mxu0 0
        %3815 = vmatpush1.bf16.xpose.msra.mxu0 0
        %3816 = vmatprep.subr.bf16.mxu0 0
        %3817 = vmatpush1.bf16.xpose.msra.mxu0 0
        %3818 = vmatprep.subr.bf16.mxu0 0
        %3819 = vmatpush1.bf16.xpose.msra.mxu0 0
        %3820 = vmatprep.subr.bf16.mxu0 0
        %3821 = vmatpush1.bf16.xpose.msra.mxu0 0
        %3822 = vmatprep.subr.bf16.mxu0 0
        %3823 = vmatpush1.bf16.xpose.msra.mxu0 0
        %3824 = vmatprep.subr.bf16.mxu0 0
        %3825 = vmatpush1.bf16.xpose.msra.mxu0 0
        %3826 = vmatprep.mubr.bf16.mxu0 0
        %3827 = vmatmul.mubr.bf16.gmra.mrb[0].mxu0 %v3789
        %v3828 = vpop.f32.mrb[0].mxu0
        %v3829 = vadd.f32 %v1727, %v3828
        %v3830 = vpop.f32.mrb[0].mxu0
        %v3831 = vpop.f32.mrb[0].mxu0
        %v3832 = vadd.f32 %v1728, %v3831
        %v3833 = vpop.f32.mrb[0].mxu0
        %3834 = vdwg.mxu0
        %3835 = vrot.lane.b32.xlu0 %v3734, 96
        %v3836 = vpop.permute.xlu0 %3835
        %v3838 = vsel %vm1839, %v3727, 0
        %v3841 = vsel %vm1839, %v3836, 0
        %3843 = vmatprep.subr.bf16.mxu0 0
        %3844 = vmatpush1.bf16.xpose.msra.mxu0 %v3841
        %3845 = vmatprep.subr.bf16.mxu0 0
        %3846 = vmatpush1.bf16.xpose.msra.mxu0 0
        %3847 = vmatprep.subr.bf16.mxu0 0
        %3848 = vmatpush1.bf16.xpose.msra.mxu0 0
        %3849 = vmatprep.subr.bf16.mxu0 0
        %3850 = vmatpush1.bf16.xpose.msra.mxu0 0
        %3851 = vmatprep.subr.bf16.mxu0 0
        %3852 = vmatpush1.bf16.xpose.msra.mxu0 0
        %3853 = vmatprep.subr.bf16.mxu0 0
        %3854 = vmatpush1.bf16.xpose.msra.mxu0 0
        %3855 = vmatprep.subr.bf16.mxu0 0
        %3856 = vmatpush1.bf16.xpose.msra.mxu0 0
        %3857 = vmatprep.subr.bf16.mxu0 0
        %3858 = vmatpush1.bf16.xpose.msra.mxu0 0
        %3859 = vmatprep.subr.bf16.mxu0 0
        %3860 = vmatpush1.bf16.xpose.msra.mxu0 0
        %3861 = vmatprep.subr.bf16.mxu0 0
        %3862 = vmatpush1.bf16.xpose.msra.mxu0 0
        %3863 = vmatprep.subr.bf16.mxu0 0
        %3864 = vmatpush1.bf16.xpose.msra.mxu0 0
        %3865 = vmatprep.subr.bf16.mxu0 0
        %3866 = vmatpush1.bf16.xpose.msra.mxu0 0
        %3867 = vmatprep.subr.bf16.mxu0 0
        %3868 = vmatpush1.bf16.xpose.msra.mxu0 0
        %3869 = vmatprep.subr.bf16.mxu0 0
        %3870 = vmatpush1.bf16.xpose.msra.mxu0 0
        %3871 = vmatprep.subr.bf16.mxu0 0
        %3872 = vmatpush1.bf16.xpose.msra.mxu0 0
        %3873 = vmatprep.subr.bf16.mxu0 0
        %3874 = vmatpush1.bf16.xpose.msra.mxu0 0
        %3875 = vmatprep.mubr.bf16.mxu0 0
        %3876 = vmatmul.mubr.bf16.gmra.mrb[0].mxu0 %v3838
        %v3877 = vpop.f32.mrb[0].mxu0
        %v3878 = vadd.f32 %v1727, %v3877
        %v3879 = vpop.f32.mrb[0].mxu0
        %v3880 = vpop.f32.mrb[0].mxu0
        %v3881 = vadd.f32 %v1728, %v3880
        %v3882 = vpop.f32.mrb[0].mxu0
        %3883 = vdwg.mxu0
        %3884 = vrot.lane.b32.xlu0 %v3736, 96
        %v3885 = vpop.permute.xlu0 %3884
        %v3887 = vsel %vm1839, %v3729, 0
        %v3890 = vsel %vm1839, %v3885, 0
        %3892 = vmatprep.subr.bf16.mxu0 0
        %3893 = vmatpush1.bf16.xpose.msra.mxu0 %v3890
        %3894 = vmatprep.subr.bf16.mxu0 0
        %3895 = vmatpush1.bf16.xpose.msra.mxu0 0
        %3896 = vmatprep.subr.bf16.mxu0 0
        %3897 = vmatpush1.bf16.xpose.msra.mxu0 0
        %3898 = vmatprep.subr.bf16.mxu0 0
        %3899 = vmatpush1.bf16.xpose.msra.mxu0 0
        %3900 = vmatprep.subr.bf16.mxu0 0
        %3901 = vmatpush1.bf16.xpose.msra.mxu0 0
        %3902 = vmatprep.subr.bf16.mxu0 0
        %3903 = vmatpush1.bf16.xpose.msra.mxu0 0
        %3904 = vmatprep.subr.bf16.mxu0 0
        %3905 = vmatpush1.bf16.xpose.msra.mxu0 0
        %3906 = vmatprep.subr.bf16.mxu0 0
        %3907 = vmatpush1.bf16.xpose.msra.mxu0 0
        %3908 = vmatprep.subr.bf16.mxu0 0
        %3909 = vmatpush1.bf16.xpose.msra.mxu0 0
        %3910 = vmatprep.subr.bf16.mxu0 0
        %3911 = vmatpush1.bf16.xpose.msra.mxu0 0
        %3912 = vmatprep.subr.bf16.mxu0 0
        %3913 = vmatpush1.bf16.xpose.msra.mxu0 0
        %3914 = vmatprep.subr.bf16.mxu0 0
        %3915 = vmatpush1.bf16.xpose.msra.mxu0 0
        %3916 = vmatprep.subr.bf16.mxu0 0
        %3917 = vmatpush1.bf16.xpose.msra.mxu0 0
        %3918 = vmatprep.subr.bf16.mxu0 0
        %3919 = vmatpush1.bf16.xpose.msra.mxu0 0
        %3920 = vmatprep.subr.bf16.mxu0 0
        %3921 = vmatpush1.bf16.xpose.msra.mxu0 0
        %3922 = vmatprep.subr.bf16.mxu0 0
        %3923 = vmatpush1.bf16.xpose.msra.mxu0 0
        %3924 = vmatprep.mubr.bf16.mxu0 0
        %3925 = vmatmul.mubr.bf16.gmra.mrb[0].mxu0 %v3887
        %v3926 = vpop.f32.mrb[0].mxu0
        %v3927 = vadd.f32 %v1727, %v3926
        %v3928 = vpop.f32.mrb[0].mxu0
        %v3929 = vpop.f32.mrb[0].mxu0
        %v3930 = vadd.f32 %v1728, %v3929
        %v3931 = vpop.f32.mrb[0].mxu0
        %3932 = vdwg.mxu0
        %v3933 = vsel %vm2034, %v3780, -inf
        %3934 = vmax.xlane.f32.xlu0 %v3933
        %v3935 = vpop.xlane.xlu0 %3934
        %v3936 = vsel %vm2038, %v3783, -inf
        %3937 = vmax.xlane.f32.xlu0 %v3936
        %v3938 = vpop.xlane.xlu0 %3937
        %v3939 = vsel %vm2034, %v3829, -inf
        %3940 = vmax.xlane.f32.xlu0 %v3939
        %v3941 = vpop.xlane.xlu0 %3940
        %v3942 = vsel %vm2038, %v3832, -inf
        %3943 = vmax.xlane.f32.xlu0 %v3942
        %v3944 = vpop.xlane.xlu0 %3943
        %v3945 = vsel %vm2034, %v3878, -inf
        %3946 = vmax.xlane.f32.xlu0 %v3945
        %v3947 = vpop.xlane.xlu0 %3946
        %v3948 = vsel %vm2038, %v3881, -inf
        %3949 = vmax.xlane.f32.xlu0 %v3948
        %v3950 = vpop.xlane.xlu0 %3949
        %v3951 = vsel %vm2034, %v3927, -inf
        %3952 = vmax.xlane.f32.xlu0 %v3951
        %v3953 = vpop.xlane.xlu0 %3952
        %v3954 = vsel %vm2038, %v3930, -inf
        %3955 = vmax.xlane.f32.xlu0 %v3954
        %v3956 = vpop.xlane.xlu0 %3955
        %v3957 = vsub.f32 %v3780, %v3935
        %v3958 = vsub.f32 %v3783, %v3938
        %v3959 = vsub.f32 %v3829, %v3941
        %v3960 = vsub.f32 %v3832, %v3944
        %v3961 = vsub.f32 %v3878, %v3947
        %v3962 = vsub.f32 %v3881, %v3950
        %v3963 = vsub.f32 %v3927, %v3953
        %v3964 = vsub.f32 %v3930, %v3956
        %v3965 = vmul.f32 %v3957, 1.442695
        %v3966 = vpow.pop %v3965
        %v3967 = vmul.f32 %v3958, 1.442695
        %v3968 = vpow.pop %v3967
        %v3969 = vmul.f32 %v3959, 1.442695
        %v3970 = vpow.pop %v3969
        %v3971 = vmul.f32 %v3960, 1.442695
        %v3972 = vpow.pop %v3971
        %v3973 = vmul.f32 %v3961, 1.442695
        %v3974 = vpow.pop %v3973
        %v3975 = vmul.f32 %v3962, 1.442695
        %v3976 = vpow.pop %v3975
        %v3977 = vmul.f32 %v3963, 1.442695
        %v3978 = vpow.pop %v3977
        %v3979 = vmul.f32 %v3964, 1.442695
        %v3980 = vpow.pop %v3979
        %v3981 = vsel %vm2034, %v3966, 0.0
        %3982 = vadd.xlane.f32.xlu0 %v3981
        %v3983 = vpop.xlane.xlu0 %3982
        %v3984 = vsel %vm2038, %v3968, 0.0
        %3985 = vadd.xlane.f32.xlu0 %v3984
        %v3986 = vpop.xlane.xlu0 %3985
        %v3987 = vsel %vm2034, %v3970, 0.0
        %3988 = vadd.xlane.f32.xlu0 %v3987
        %v3989 = vpop.xlane.xlu0 %3988
        %v3990 = vsel %vm2038, %v3972, 0.0
        %3991 = vadd.xlane.f32.xlu0 %v3990
        %v3992 = vpop.xlane.xlu0 %3991
        %v3993 = vsel %vm2034, %v3974, 0.0
        %3994 = vadd.xlane.f32.xlu0 %v3993
        %v3995 = vpop.xlane.xlu0 %3994
        %v3996 = vsel %vm2038, %v3976, 0.0
        %3997 = vadd.xlane.f32.xlu0 %v3996
        %v3998 = vpop.xlane.xlu0 %3997
        %v3999 = vsel %vm2034, %v3978, 0.0
        %4000 = vadd.xlane.f32.xlu0 %v3999
        %v4001 = vpop.xlane.xlu0 %4000
        %v4002 = vsel %vm2038, %v3980, 0.0
        %4003 = vadd.xlane.f32.xlu0 %v4002
        %v4004 = vpop.xlane.xlu0 %4003
        %v4005 = vrcp.pop %v3983
        %v4006 = vmul.f32 %v3966, %v4005
        %v4007 = vrcp.pop %v3986
        %v4008 = vmul.f32 %v3968, %v4007
        %v4009 = vrcp.pop %v3989
        %v4010 = vmul.f32 %v3970, %v4009
        %v4011 = vrcp.pop %v3992
        %v4012 = vmul.f32 %v3972, %v4011
        %v4013 = vrcp.pop %v3995
        %v4014 = vmul.f32 %v3974, %v4013
        %v4015 = vrcp.pop %v3998
        %v4016 = vmul.f32 %v3976, %v4015
        %v4017 = vrcp.pop %v4001
        %v4018 = vmul.f32 %v3978, %v4017
        %v4019 = vrcp.pop %v4004
        %v4020 = vmul.f32 %v3980, %v4019
        %v4021 = vpack.c.bf16 %v4008, %v4006
        %v4022 = vpack.c.bf16 %v4012, %v4010
        %v4023 = vpack.c.bf16 %v4016, %v4014
        %v4024 = vpack.c.bf16 %v4020, %v4018
        %4025 = vrot.lane.b32.xlu0 %v3722, 64
        %v4026 = vpop.permute.xlu0 %4025
        %v4028 = vsel %vm2034, %v4021, 0
        %v4031 = vand.u32 %v4026, %v2135
        %4033 = vmatprep.subr.bf16.mxu0 0
        %4034 = vmatpush1.bf16.msra.mxu0 %v4031
        %4035 = vmatprep.subr.bf16.mxu0 0
        %4036 = vmatpush1.bf16.msra.mxu0 0
        %4037 = vmatprep.subr.bf16.mxu0 0
        %4038 = vmatpush1.bf16.msra.mxu0 0
        %4039 = vmatprep.subr.bf16.mxu0 0
        %4040 = vmatpush1.bf16.msra.mxu0 0
        %4041 = vmatprep.subr.bf16.mxu0 0
        %4042 = vmatpush1.bf16.msra.mxu0 0
        %4043 = vmatprep.subr.bf16.mxu0 0
        %4044 = vmatpush1.bf16.msra.mxu0 0
        %4045 = vmatprep.subr.bf16.mxu0 0
        %4046 = vmatpush1.bf16.msra.mxu0 0
        %4047 = vmatprep.subr.bf16.mxu0 0
        %4048 = vmatpush1.bf16.msra.mxu0 0
        %4049 = vmatprep.subr.bf16.mxu0 0
        %4050 = vmatpush1.bf16.msra.mxu0 0
        %4051 = vmatprep.subr.bf16.mxu0 0
        %4052 = vmatpush1.bf16.msra.mxu0 0
        %4053 = vmatprep.subr.bf16.mxu0 0
        %4054 = vmatpush1.bf16.msra.mxu0 0
        %4055 = vmatprep.subr.bf16.mxu0 0
        %4056 = vmatpush1.bf16.msra.mxu0 0
        %4057 = vmatprep.subr.bf16.mxu0 0
        %4058 = vmatpush1.bf16.msra.mxu0 0
        %4059 = vmatprep.subr.bf16.mxu0 0
        %4060 = vmatpush1.bf16.msra.mxu0 0
        %4061 = vmatprep.subr.bf16.mxu0 0
        %4062 = vmatpush1.bf16.msra.mxu0 0
        %4063 = vmatprep.subr.bf16.mxu0 0
        %4064 = vmatpush1.bf16.msra.mxu0 0
        %4065 = vmatprep.mubr.bf16.mxu0 0
        %4066 = vmatmul.mubr.bf16.gmra.mrb[0].mxu0 %v4028
        %v4067 = vpop.f32.mrb[0].mxu0
        %v4068 = vadd.f32 0.0, %v4067
        %v4069 = vpop.f32.mrb[0].mxu0
        %v4070 = vpop.f32.mrb[0].mxu0
        %v4071 = vadd.f32 0.0, %v4070
        %v4072 = vpop.f32.mrb[0].mxu0
        %4073 = vdwg.mxu0
        %4074 = vrot.lane.b32.xlu0 %v3732, 64
        %v4075 = vpop.permute.xlu0 %4074
        %v4077 = vsel %vm2034, %v4022, 0
        %v4080 = vand.u32 %v4075, %v2135
        %4082 = vmatprep.subr.bf16.mxu0 0
        %4083 = vmatpush1.bf16.msra.mxu0 %v4080
        %4084 = vmatprep.subr.bf16.mxu0 0
        %4085 = vmatpush1.bf16.msra.mxu0 0
        %4086 = vmatprep.subr.bf16.mxu0 0
        %4087 = vmatpush1.bf16.msra.mxu0 0
        %4088 = vmatprep.subr.bf16.mxu0 0
        %4089 = vmatpush1.bf16.msra.mxu0 0
        %4090 = vmatprep.subr.bf16.mxu0 0
        %4091 = vmatpush1.bf16.msra.mxu0 0
        %4092 = vmatprep.subr.bf16.mxu0 0
        %4093 = vmatpush1.bf16.msra.mxu0 0
        %4094 = vmatprep.subr.bf16.mxu0 0
        %4095 = vmatpush1.bf16.msra.mxu0 0
        %4096 = vmatprep.subr.bf16.mxu0 0
        %4097 = vmatpush1.bf16.msra.mxu0 0
        %4098 = vmatprep.subr.bf16.mxu0 0
        %4099 = vmatpush1.bf16.msra.mxu0 0
        %4100 = vmatprep.subr.bf16.mxu0 0
        %4101 = vmatpush1.bf16.msra.mxu0 0
        %4102 = vmatprep.subr.bf16.mxu0 0
        %4103 = vmatpush1.bf16.msra.mxu0 0
        %4104 = vmatprep.subr.bf16.mxu0 0
        %4105 = vmatpush1.bf16.msra.mxu0 0
        %4106 = vmatprep.subr.bf16.mxu0 0
        %4107 = vmatpush1.bf16.msra.mxu0 0
        %4108 = vmatprep.subr.bf16.mxu0 0
        %4109 = vmatpush1.bf16.msra.mxu0 0
        %4110 = vmatprep.subr.bf16.mxu0 0
        %4111 = vmatpush1.bf16.msra.mxu0 0
        %4112 = vmatprep.subr.bf16.mxu0 0
        %4113 = vmatpush1.bf16.msra.mxu0 0
        %4114 = vmatprep.mubr.bf16.mxu0 0
        %4115 = vmatmul.mubr.bf16.gmra.mrb[0].mxu0 %v4077
        %v4116 = vpop.f32.mrb[0].mxu0
        %v4117 = vadd.f32 0.0, %v4116
        %v4118 = vpop.f32.mrb[0].mxu0
        %v4119 = vpop.f32.mrb[0].mxu0
        %v4120 = vadd.f32 0.0, %v4119
        %v4121 = vpop.f32.mrb[0].mxu0
        %4122 = vdwg.mxu0
        %4123 = vrot.lane.b32.xlu0 %v3734, 64
        %v4124 = vpop.permute.xlu0 %4123
        %v4126 = vsel %vm2034, %v4023, 0
        %v4129 = vand.u32 %v4124, %v2135
        %4131 = vmatprep.subr.bf16.mxu0 0
        %4132 = vmatpush1.bf16.msra.mxu0 %v4129
        %4133 = vmatprep.subr.bf16.mxu0 0
        %4134 = vmatpush1.bf16.msra.mxu0 0
        %4135 = vmatprep.subr.bf16.mxu0 0
        %4136 = vmatpush1.bf16.msra.mxu0 0
        %4137 = vmatprep.subr.bf16.mxu0 0
        %4138 = vmatpush1.bf16.msra.mxu0 0
        %4139 = vmatprep.subr.bf16.mxu0 0
        %4140 = vmatpush1.bf16.msra.mxu0 0
        %4141 = vmatprep.subr.bf16.mxu0 0
        %4142 = vmatpush1.bf16.msra.mxu0 0
        %4143 = vmatprep.subr.bf16.mxu0 0
        %4144 = vmatpush1.bf16.msra.mxu0 0
        %4145 = vmatprep.subr.bf16.mxu0 0
        %4146 = vmatpush1.bf16.msra.mxu0 0
        %4147 = vmatprep.subr.bf16.mxu0 0
        %4148 = vmatpush1.bf16.msra.mxu0 0
        %4149 = vmatprep.subr.bf16.mxu0 0
        %4150 = vmatpush1.bf16.msra.mxu0 0
        %4151 = vmatprep.subr.bf16.mxu0 0
        %4152 = vmatpush1.bf16.msra.mxu0 0
        %4153 = vmatprep.subr.bf16.mxu0 0
        %4154 = vmatpush1.bf16.msra.mxu0 0
        %4155 = vmatprep.subr.bf16.mxu0 0
        %4156 = vmatpush1.bf16.msra.mxu0 0
        %4157 = vmatprep.subr.bf16.mxu0 0
        %4158 = vmatpush1.bf16.msra.mxu0 0
        %4159 = vmatprep.subr.bf16.mxu0 0
        %4160 = vmatpush1.bf16.msra.mxu0 0
        %4161 = vmatprep.subr.bf16.mxu0 0
        %4162 = vmatpush1.bf16.msra.mxu0 0
        %4163 = vmatprep.mubr.bf16.mxu0 0
        %4164 = vmatmul.mubr.bf16.gmra.mrb[0].mxu0 %v4126
        %v4165 = vpop.f32.mrb[0].mxu0
        %v4166 = vadd.f32 0.0, %v4165
        %v4167 = vpop.f32.mrb[0].mxu0
        %v4168 = vpop.f32.mrb[0].mxu0
        %v4169 = vadd.f32 0.0, %v4168
        %v4170 = vpop.f32.mrb[0].mxu0
        %4171 = vdwg.mxu0
        %4172 = vrot.lane.b32.xlu0 %v3736, 64
        %v4173 = vpop.permute.xlu0 %4172
        %v4175 = vsel %vm2034, %v4024, 0
        %v4178 = vand.u32 %v4173, %v2135
        %4180 = vmatprep.subr.bf16.mxu0 0
        %4181 = vmatpush1.bf16.msra.mxu0 %v4178
        %4182 = vmatprep.subr.bf16.mxu0 0
        %4183 = vmatpush1.bf16.msra.mxu0 0
        %4184 = vmatprep.subr.bf16.mxu0 0
        %4185 = vmatpush1.bf16.msra.mxu0 0
        %4186 = vmatprep.subr.bf16.mxu0 0
        %4187 = vmatpush1.bf16.msra.mxu0 0
        %4188 = vmatprep.subr.bf16.mxu0 0
        %4189 = vmatpush1.bf16.msra.mxu0 0
        %4190 = vmatprep.subr.bf16.mxu0 0
        %4191 = vmatpush1.bf16.msra.mxu0 0
        %4192 = vmatprep.subr.bf16.mxu0 0
        %4193 = vmatpush1.bf16.msra.mxu0 0
        %4194 = vmatprep.subr.bf16.mxu0 0
        %4195 = vmatpush1.bf16.msra.mxu0 0
        %4196 = vmatprep.subr.bf16.mxu0 0
        %4197 = vmatpush1.bf16.msra.mxu0 0
        %4198 = vmatprep.subr.bf16.mxu0 0
        %4199 = vmatpush1.bf16.msra.mxu0 0
        %4200 = vmatprep.subr.bf16.mxu0 0
        %4201 = vmatpush1.bf16.msra.mxu0 0
        %4202 = vmatprep.subr.bf16.mxu0 0
        %4203 = vmatpush1.bf16.msra.mxu0 0
        %4204 = vmatprep.subr.bf16.mxu0 0
        %4205 = vmatpush1.bf16.msra.mxu0 0
        %4206 = vmatprep.subr.bf16.mxu0 0
        %4207 = vmatpush1.bf16.msra.mxu0 0
        %4208 = vmatprep.subr.bf16.mxu0 0
        %4209 = vmatpush1.bf16.msra.mxu0 0
        %4210 = vmatprep.subr.bf16.mxu0 0
        %4211 = vmatpush1.bf16.msra.mxu0 0
        %4212 = vmatprep.mubr.bf16.mxu0 0
        %4213 = vmatmul.mubr.bf16.gmra.mrb[0].mxu0 %v4175
        %v4214 = vpop.f32.mrb[0].mxu0
        %v4215 = vadd.f32 0.0, %v4214
        %v4216 = vpop.f32.mrb[0].mxu0
        %v4217 = vpop.f32.mrb[0].mxu0
        %v4218 = vadd.f32 0.0, %v4217
        %v4219 = vpop.f32.mrb[0].mxu0
        %4220 = vdwg.mxu0
        %4223 = vrot.lane.b32.xlu0 %v4117, 8
        %v4224 = vpop.permute.xlu0 %4223
        %4225 = vrot.lane.b32.xlu0 %v4120, 8
        %v4226 = vpop.permute.xlu0 %4225
        %4231 = vrot.lane.b32.xlu0 %v4166, 16
        %v4232 = vpop.permute.xlu0 %4231
        %4233 = vrot.lane.b32.xlu0 %v4169, 16
        %v4234 = vpop.permute.xlu0 %4233
        %4239 = vrot.lane.b32.xlu0 %v4215, 24
        %v4240 = vpop.permute.xlu0 %4239
        %4241 = vrot.lane.b32.xlu0 %v4218, 24
        %v4242 = vpop.permute.xlu0 %4241
        %v4245 = vsel %vm1839, %v4068, %v4224
        %v4246 = vsel %vm1839, %v4071, %v4226
        %v4247 = vsel %vm2353, %v4245, %v4232
        %v4248 = vsel %vm2353, %v4246, %v4234
        %v4249 = vsel %vm2356, %v4247, %v4240
        %v4250 = vsel %vm2356, %v4248, %v4242
        %v4251 = vpack.c.bf16 %v4250, %v4249
        %v4252 = vlaneseq
        %v4253 = vshrl.u32 %v4252, 7
        %v4254 = vsub.s32 1, %v4253
        %v4255 = vrot.slane %v3660, %v4254
        %v4260 = vunpack.c.l.b16 %v3624
        %v4261 = vunpack.c.l.b16 %v3625
        %v4262 = vunpack.c.l.b16 %v3626
        %v4263 = vunpack.c.l.b16 %v3627
        %v4264 = vpack.c.b16 %v4261, %v4260
        %v4265 = vpack.c.b16 %v4263, %v4262
        %v4269 = vsel %vm1464, %v4251, 0
        %4271 = vmatprep.subr.bf16.mxu0 0
        %4272 = vmatpush1.bf16.msra.mxu0 %v4264
        %4273 = vmatprep.subr.bf16.mxu0 0
        %4274 = vmatpush1.bf16.msra.mxu0 %v4265
        %4275 = vmatprep.subr.bf16.mxu0 0
        %4276 = vmatpush1.bf16.msra.mxu0 0
        %4277 = vmatprep.subr.bf16.mxu0 0
        %4278 = vmatpush1.bf16.msra.mxu0 0
        %4279 = vmatprep.subr.bf16.mxu0 0
        %4280 = vmatpush1.bf16.msra.mxu0 0
        %4281 = vmatprep.subr.bf16.mxu0 0
        %4282 = vmatpush1.bf16.msra.mxu0 0
        %4283 = vmatprep.subr.bf16.mxu0 0
        %4284 = vmatpush1.bf16.msra.mxu0 0
        %4285 = vmatprep.subr.bf16.mxu0 0
        %4286 = vmatpush1.bf16.msra.mxu0 0
        %4287 = vmatprep.subr.bf16.mxu0 0
        %4288 = vmatpush1.bf16.msra.mxu0 0
        %4289 = vmatprep.subr.bf16.mxu0 0
        %4290 = vmatpush1.bf16.msra.mxu0 0
        %4291 = vmatprep.subr.bf16.mxu0 0
        %4292 = vmatpush1.bf16.msra.mxu0 0
        %4293 = vmatprep.subr.bf16.mxu0 0
        %4294 = vmatpush1.bf16.msra.mxu0 0
        %4295 = vmatprep.subr.bf16.mxu0 0
        %4296 = vmatpush1.bf16.msra.mxu0 0
        %4297 = vmatprep.subr.bf16.mxu0 0
        %4298 = vmatpush1.bf16.msra.mxu0 0
        %4299 = vmatprep.subr.bf16.mxu0 0
        %4300 = vmatpush1.bf16.msra.mxu0 0
        %4301 = vmatprep.subr.bf16.mxu0 0
        %4302 = vmatpush1.bf16.msra.mxu0 0
        %4303 = vmatprep.mubr.bf16.mxu0 0
        %4304 = vmatmul.mubr.bf16.gmra.mrb[0].mxu0 %v4269
        %v4305 = vpop.f32.mrb[0].mxu0
        %v4306 = vadd.f32 %v4255, %v4305
        %v4307 = vpop.f32.mrb[0].mxu0
        %v4308 = vpop.f32.mrb[0].mxu0
        %v4309 = vadd.f32 %v4255, %v4308
        %v4310 = vpop.f32.mrb[0].mxu0
        %4311 = vdwg.mxu0
        %v4312 = vadd.f32 %v1719, %v4306
        %v4313 = vadd.f32 %v1716, %v4309
        %v4314 = vsel %vm1464, %v4312, 0.0
        %4315 = vadd.xlane.f32.xlu0 %v4314
        %v4316 = vpop.xlane.xlu0 %4315
        %v4317 = vsel %vm2425, %v4313, 0.0
        %4318 = vadd.xlane.f32.xlu0 %v4317
        %v4319 = vpop.xlane.xlu0 %4318
        %v4320 = vmul.f32 %v4316, %v2429
        %v4321 = vmul.f32 %v4319, %v2429
        %v4322 = vsub.f32 %v4312, %v4320
        %v4323 = vsub.f32 %v4313, %v4321
        %v4324 = vmul.f32 %v4322, %v4322
        %v4325 = vmul.f32 %v4323, %v4323
        %v4326 = vsel %vm1464, %v4324, 0.0
        %4327 = vadd.xlane.f32.xlu0 %v4326
        %v4328 = vpop.xlane.xlu0 %4327
        %v4329 = vsel %vm2425, %v4325, 0.0
        %4330 = vadd.xlane.f32.xlu0 %v4329
        %v4331 = vpop.xlane.xlu0 %4330
        %v4332 = vmul.f32 %v4328, %v2429
        %v4333 = vmul.f32 %v4331, %v2429
        %v4334 = vadd.f32 %v4332, 1e-05
        %v4335 = vadd.f32 %v4333, 1e-05
        %v4336 = vrsqrt.pop %v4334
        %v4337 = vrsqrt.pop %v4335
        %v4338 = vmul.f32 %v4322, %v4336
        %v4339 = vmul.f32 %v4323, %v4337
        %v4340 = vlaneseq
        %v4341 = vshrl.u32 %v4340, 7
        %v4342 = vsub.s32 7, %v4341
        %v4343 = vrot.slane %v3660, %v4342
        %v4344 = vmul.f32 %v4338, %v4343
        %v4345 = vmul.f32 %v4339, %v4343
        %v4346 = vlaneseq
        %v4347 = vshrl.u32 %v4346, 7
        %v4348 = vsub.s32 0, %v4347
        %v4349 = vrot.slane %v3661, %v4348
        %v4350 = vadd.f32 %v4344, %v4349
        %v4351 = vadd.f32 %v4345, %v4349
        %v4352 = vpack.c.bf16 %v4351, %v4350
        %v4353 = vlaneseq
        %v4354 = vshrl.u32 %v4353, 7
        %v4355 = vsub.s32 2, %v4354
        %v4356 = vrot.slane %v3660, %v4355
        %v4361 = vunpack.c.l.b16 %v3628
        %v4362 = vunpack.c.l.b16 %v3629
        %v4363 = vunpack.c.l.b16 %v3630
        %v4364 = vunpack.c.l.b16 %v3631
        %v4365 = vpack.c.b16 %v4362, %v4361
        %v4366 = vpack.c.b16 %v4364, %v4363
        %v4370 = vsel %vm1464, %v4352, 0
        %4372 = vmatprep.subr.bf16.mxu0 0
        %4373 = vmatpush1.bf16.msra.mxu0 %v4365
        %4374 = vmatprep.subr.bf16.mxu0 0
        %4375 = vmatpush1.bf16.msra.mxu0 %v4366
        %4376 = vmatprep.subr.bf16.mxu0 0
        %4377 = vmatpush1.bf16.msra.mxu0 0
        %4378 = vmatprep.subr.bf16.mxu0 0
        %4379 = vmatpush1.bf16.msra.mxu0 0
        %4380 = vmatprep.subr.bf16.mxu0 0
        %4381 = vmatpush1.bf16.msra.mxu0 0
        %4382 = vmatprep.subr.bf16.mxu0 0
        %4383 = vmatpush1.bf16.msra.mxu0 0
        %4384 = vmatprep.subr.bf16.mxu0 0
        %4385 = vmatpush1.bf16.msra.mxu0 0
        %4386 = vmatprep.subr.bf16.mxu0 0
        %4387 = vmatpush1.bf16.msra.mxu0 0
        %4388 = vmatprep.subr.bf16.mxu0 0
        %4389 = vmatpush1.bf16.msra.mxu0 0
        %4390 = vmatprep.subr.bf16.mxu0 0
        %4391 = vmatpush1.bf16.msra.mxu0 0
        %4392 = vmatprep.subr.bf16.mxu0 0
        %4393 = vmatpush1.bf16.msra.mxu0 0
        %4394 = vmatprep.subr.bf16.mxu0 0
        %4395 = vmatpush1.bf16.msra.mxu0 0
        %4396 = vmatprep.subr.bf16.mxu0 0
        %4397 = vmatpush1.bf16.msra.mxu0 0
        %4398 = vmatprep.subr.bf16.mxu0 0
        %4399 = vmatpush1.bf16.msra.mxu0 0
        %4400 = vmatprep.subr.bf16.mxu0 0
        %4401 = vmatpush1.bf16.msra.mxu0 0
        %4402 = vmatprep.subr.bf16.mxu0 0
        %4403 = vmatpush1.bf16.msra.mxu0 0
        %4404 = vmatprep.mubr.bf16.mxu0 0
        %4405 = vmatmul.mubr.bf16.gmra.mrb[0].mxu0 %v4370
        %v4406 = vpop.f32.mrb[0].mxu0
        %v4407 = vadd.f32 %v4356, %v4406
        %v4408 = vpop.f32.mrb[0].mxu0
        %v4409 = vpop.f32.mrb[0].mxu0
        %v4410 = vadd.f32 %v4356, %v4409
        %v4411 = vpop.f32.mrb[0].mxu0
        %4412 = vdwg.mxu0
        %v4413 = vlaneseq
        %v4414 = vshrl.u32 %v4413, 7
        %v4415 = vsub.s32 3, %v4414
        %v4416 = vrot.slane %v3660, %v4415
        %v4421 = vunpack.c.l.b16 %v3632
        %v4422 = vunpack.c.l.b16 %v3633
        %v4423 = vunpack.c.l.b16 %v3634
        %v4424 = vunpack.c.l.b16 %v3635
        %v4425 = vpack.c.b16 %v4422, %v4421
        %v4426 = vpack.c.b16 %v4424, %v4423
        %v4430 = vsel %vm1464, %v3619, 0
        %4432 = vmatprep.subr.bf16.mxu0 0
        %4433 = vmatpush1.bf16.msra.mxu0 %v4425
        %4434 = vmatprep.subr.bf16.mxu0 0
        %4435 = vmatpush1.bf16.msra.mxu0 %v4426
        %4436 = vmatprep.subr.bf16.mxu0 0
        %4437 = vmatpush1.bf16.msra.mxu0 0
        %4438 = vmatprep.subr.bf16.mxu0 0
        %4439 = vmatpush1.bf16.msra.mxu0 0
        %4440 = vmatprep.subr.bf16.mxu0 0
        %4441 = vmatpush1.bf16.msra.mxu0 0
        %4442 = vmatprep.subr.bf16.mxu0 0
        %4443 = vmatpush1.bf16.msra.mxu0 0
        %4444 = vmatprep.subr.bf16.mxu0 0
        %4445 = vmatpush1.bf16.msra.mxu0 0
        %4446 = vmatprep.subr.bf16.mxu0 0
        %4447 = vmatpush1.bf16.msra.mxu0 0
        %4448 = vmatprep.subr.bf16.mxu0 0
        %4449 = vmatpush1.bf16.msra.mxu0 0
        %4450 = vmatprep.subr.bf16.mxu0 0
        %4451 = vmatpush1.bf16.msra.mxu0 0
        %4452 = vmatprep.subr.bf16.mxu0 0
        %4453 = vmatpush1.bf16.msra.mxu0 0
        %4454 = vmatprep.subr.bf16.mxu0 0
        %4455 = vmatpush1.bf16.msra.mxu0 0
        %4456 = vmatprep.subr.bf16.mxu0 0
        %4457 = vmatpush1.bf16.msra.mxu0 0
        %4458 = vmatprep.subr.bf16.mxu0 0
        %4459 = vmatpush1.bf16.msra.mxu0 0
        %4460 = vmatprep.subr.bf16.mxu0 0
        %4461 = vmatpush1.bf16.msra.mxu0 0
        %4462 = vmatprep.subr.bf16.mxu0 0
        %4463 = vmatpush1.bf16.msra.mxu0 0
        %4464 = vmatprep.mubr.bf16.mxu0 0
        %4465 = vmatmul.mubr.bf16.gmra.mrb[0].mxu0 %v4430
        %v4466 = vpop.f32.mrb[0].mxu0
        %v4467 = vadd.f32 %v4416, %v4466
        %v4468 = vpop.f32.mrb[0].mxu0
        %v4469 = vpop.f32.mrb[0].mxu0
        %v4470 = vadd.f32 %v4416, %v4469
        %v4471 = vpop.f32.mrb[0].mxu0
        %4472 = vdwg.mxu0
        %v4473 = vmul.f32 %v4407, 0.35355338
        %v4474 = vmul.f32 %v4410, 0.35355338
        %v4475 = vpack.c.bf16 %v4474, %v4473
        %v4476 = vpack.c.bf16 %v4470, %v4467
        %4478 = vrot.lane.b32.xlu0 %v4475, 120
        %v4479 = vpop.permute.xlu0 %4478
        %4480 = vrot.lane.b32.xlu0 %v4475, 112
        %v4481 = vpop.permute.xlu0 %4480
        %4482 = vrot.lane.b32.xlu0 %v4475, 104
        %v4483 = vpop.permute.xlu0 %4482
        %4485 = vrot.lane.b32.xlu0 %v4476, 120
        %v4486 = vpop.permute.xlu0 %4485
        %4487 = vrot.lane.b32.xlu0 %v4476, 112
        %v4488 = vpop.permute.xlu0 %4487
        %4489 = vrot.lane.b32.xlu0 %v4476, 104
        %v4490 = vpop.permute.xlu0 %4489
        %v4492 = vsel %vm1839, %v4475, 0
        %v4495 = vsel %vm1839, %v4476, 0
        %4497 = vmatprep.subr.bf16.mxu0 0
        %4498 = vmatpush1.bf16.xpose.msra.mxu0 %v4495
        %4499 = vmatprep.subr.bf16.mxu0 0
        %4500 = vmatpush1.bf16.xpose.msra.mxu0 0
        %4501 = vmatprep.subr.bf16.mxu0 0
        %4502 = vmatpush1.bf16.xpose.msra.mxu0 0
        %4503 = vmatprep.subr.bf16.mxu0 0
        %4504 = vmatpush1.bf16.xpose.msra.mxu0 0
        %4505 = vmatprep.subr.bf16.mxu0 0
        %4506 = vmatpush1.bf16.xpose.msra.mxu0 0
        %4507 = vmatprep.subr.bf16.mxu0 0
        %4508 = vmatpush1.bf16.xpose.msra.mxu0 0
        %4509 = vmatprep.subr.bf16.mxu0 0
        %4510 = vmatpush1.bf16.xpose.msra.mxu0 0
        %4511 = vmatprep.subr.bf16.mxu0 0
        %4512 = vmatpush1.bf16.xpose.msra.mxu0 0
        %4513 = vmatprep.subr.bf16.mxu0 0
        %4514 = vmatpush1.bf16.xpose.msra.mxu0 0
        %4515 = vmatprep.subr.bf16.mxu0 0
        %4516 = vmatpush1.bf16.xpose.msra.mxu0 0
        %4517 = vmatprep.subr.bf16.mxu0 0
        %4518 = vmatpush1.bf16.xpose.msra.mxu0 0
        %4519 = vmatprep.subr.bf16.mxu0 0
        %4520 = vmatpush1.bf16.xpose.msra.mxu0 0
        %4521 = vmatprep.subr.bf16.mxu0 0
        %4522 = vmatpush1.bf16.xpose.msra.mxu0 0
        %4523 = vmatprep.subr.bf16.mxu0 0
        %4524 = vmatpush1.bf16.xpose.msra.mxu0 0
        %4525 = vmatprep.subr.bf16.mxu0 0
        %4526 = vmatpush1.bf16.xpose.msra.mxu0 0
        %4527 = vmatprep.subr.bf16.mxu0 0
        %4528 = vmatpush1.bf16.xpose.msra.mxu0 0
        %4529 = vmatprep.mubr.bf16.mxu0 0
        %4530 = vmatmul.mubr.bf16.gmra.mrb[0].mxu0 %v4492
        %v4531 = vpop.f32.mrb[0].mxu0
        %v4532 = vadd.f32 0.0, %v4531
        %v4533 = vpop.f32.mrb[0].mxu0
        %v4534 = vpop.f32.mrb[0].mxu0
        %v4535 = vadd.f32 0.0, %v4534
        %v4536 = vpop.f32.mrb[0].mxu0
        %4537 = vdwg.mxu0
        %v4539 = vsel %vm1839, %v4479, 0
        %v4542 = vsel %vm1839, %v4486, 0
        %4544 = vmatprep.subr.bf16.mxu0 0
        %4545 = vmatpush1.bf16.xpose.msra.mxu0 %v4542
        %4546 = vmatprep.subr.bf16.mxu0 0
        %4547 = vmatpush1.bf16.xpose.msra.mxu0 0
        %4548 = vmatprep.subr.bf16.mxu0 0
        %4549 = vmatpush1.bf16.xpose.msra.mxu0 0
        %4550 = vmatprep.subr.bf16.mxu0 0
        %4551 = vmatpush1.bf16.xpose.msra.mxu0 0
        %4552 = vmatprep.subr.bf16.mxu0 0
        %4553 = vmatpush1.bf16.xpose.msra.mxu0 0
        %4554 = vmatprep.subr.bf16.mxu0 0
        %4555 = vmatpush1.bf16.xpose.msra.mxu0 0
        %4556 = vmatprep.subr.bf16.mxu0 0
        %4557 = vmatpush1.bf16.xpose.msra.mxu0 0
        %4558 = vmatprep.subr.bf16.mxu0 0
        %4559 = vmatpush1.bf16.xpose.msra.mxu0 0
        %4560 = vmatprep.subr.bf16.mxu0 0
        %4561 = vmatpush1.bf16.xpose.msra.mxu0 0
        %4562 = vmatprep.subr.bf16.mxu0 0
        %4563 = vmatpush1.bf16.xpose.msra.mxu0 0
        %4564 = vmatprep.subr.bf16.mxu0 0
        %4565 = vmatpush1.bf16.xpose.msra.mxu0 0
        %4566 = vmatprep.subr.bf16.mxu0 0
        %4567 = vmatpush1.bf16.xpose.msra.mxu0 0
        %4568 = vmatprep.subr.bf16.mxu0 0
        %4569 = vmatpush1.bf16.xpose.msra.mxu0 0
        %4570 = vmatprep.subr.bf16.mxu0 0
        %4571 = vmatpush1.bf16.xpose.msra.mxu0 0
        %4572 = vmatprep.subr.bf16.mxu0 0
        %4573 = vmatpush1.bf16.xpose.msra.mxu0 0
        %4574 = vmatprep.subr.bf16.mxu0 0
        %4575 = vmatpush1.bf16.xpose.msra.mxu0 0
        %4576 = vmatprep.mubr.bf16.mxu0 0
        %4577 = vmatmul.mubr.bf16.gmra.mrb[0].mxu0 %v4539
        %v4578 = vpop.f32.mrb[0].mxu0
        %v4579 = vadd.f32 0.0, %v4578
        %v4580 = vpop.f32.mrb[0].mxu0
        %v4581 = vpop.f32.mrb[0].mxu0
        %v4582 = vadd.f32 0.0, %v4581
        %v4583 = vpop.f32.mrb[0].mxu0
        %4584 = vdwg.mxu0
        %v4586 = vsel %vm1839, %v4481, 0
        %v4589 = vsel %vm1839, %v4488, 0
        %4591 = vmatprep.subr.bf16.mxu0 0
        %4592 = vmatpush1.bf16.xpose.msra.mxu0 %v4589
        %4593 = vmatprep.subr.bf16.mxu0 0
        %4594 = vmatpush1.bf16.xpose.msra.mxu0 0
        %4595 = vmatprep.subr.bf16.mxu0 0
        %4596 = vmatpush1.bf16.xpose.msra.mxu0 0
        %4597 = vmatprep.subr.bf16.mxu0 0
        %4598 = vmatpush1.bf16.xpose.msra.mxu0 0
        %4599 = vmatprep.subr.bf16.mxu0 0
        %4600 = vmatpush1.bf16.xpose.msra.mxu0 0
        %4601 = vmatprep.subr.bf16.mxu0 0
        %4602 = vmatpush1.bf16.xpose.msra.mxu0 0
        %4603 = vmatprep.subr.bf16.mxu0 0
        %4604 = vmatpush1.bf16.xpose.msra.mxu0 0
        %4605 = vmatprep.subr.bf16.mxu0 0
        %4606 = vmatpush1.bf16.xpose.msra.mxu0 0
        %4607 = vmatprep.subr.bf16.mxu0 0
        %4608 = vmatpush1.bf16.xpose.msra.mxu0 0
        %4609 = vmatprep.subr.bf16.mxu0 0
        %4610 = vmatpush1.bf16.xpose.msra.mxu0 0
        %4611 = vmatprep.subr.bf16.mxu0 0
        %4612 = vmatpush1.bf16.xpose.msra.mxu0 0
        %4613 = vmatprep.subr.bf16.mxu0 0
        %4614 = vmatpush1.bf16.xpose.msra.mxu0 0
        %4615 = vmatprep.subr.bf16.mxu0 0
        %4616 = vmatpush1.bf16.xpose.msra.mxu0 0
        %4617 = vmatprep.subr.bf16.mxu0 0
        %4618 = vmatpush1.bf16.xpose.msra.mxu0 0
        %4619 = vmatprep.subr.bf16.mxu0 0
        %4620 = vmatpush1.bf16.xpose.msra.mxu0 0
        %4621 = vmatprep.subr.bf16.mxu0 0
        %4622 = vmatpush1.bf16.xpose.msra.mxu0 0
        %4623 = vmatprep.mubr.bf16.mxu0 0
        %4624 = vmatmul.mubr.bf16.gmra.mrb[0].mxu0 %v4586
        %v4625 = vpop.f32.mrb[0].mxu0
        %v4626 = vadd.f32 0.0, %v4625
        %v4627 = vpop.f32.mrb[0].mxu0
        %v4628 = vpop.f32.mrb[0].mxu0
        %v4629 = vadd.f32 0.0, %v4628
        %v4630 = vpop.f32.mrb[0].mxu0
        %4631 = vdwg.mxu0
        %v4633 = vsel %vm1839, %v4483, 0
        %v4636 = vsel %vm1839, %v4490, 0
        %4638 = vmatprep.subr.bf16.mxu0 0
        %4639 = vmatpush1.bf16.xpose.msra.mxu0 %v4636
        %4640 = vmatprep.subr.bf16.mxu0 0
        %4641 = vmatpush1.bf16.xpose.msra.mxu0 0
        %4642 = vmatprep.subr.bf16.mxu0 0
        %4643 = vmatpush1.bf16.xpose.msra.mxu0 0
        %4644 = vmatprep.subr.bf16.mxu0 0
        %4645 = vmatpush1.bf16.xpose.msra.mxu0 0
        %4646 = vmatprep.subr.bf16.mxu0 0
        %4647 = vmatpush1.bf16.xpose.msra.mxu0 0
        %4648 = vmatprep.subr.bf16.mxu0 0
        %4649 = vmatpush1.bf16.xpose.msra.mxu0 0
        %4650 = vmatprep.subr.bf16.mxu0 0
        %4651 = vmatpush1.bf16.xpose.msra.mxu0 0
        %4652 = vmatprep.subr.bf16.mxu0 0
        %4653 = vmatpush1.bf16.xpose.msra.mxu0 0
        %4654 = vmatprep.subr.bf16.mxu0 0
        %4655 = vmatpush1.bf16.xpose.msra.mxu0 0
        %4656 = vmatprep.subr.bf16.mxu0 0
        %4657 = vmatpush1.bf16.xpose.msra.mxu0 0
        %4658 = vmatprep.subr.bf16.mxu0 0
        %4659 = vmatpush1.bf16.xpose.msra.mxu0 0
        %4660 = vmatprep.subr.bf16.mxu0 0
        %4661 = vmatpush1.bf16.xpose.msra.mxu0 0
        %4662 = vmatprep.subr.bf16.mxu0 0
        %4663 = vmatpush1.bf16.xpose.msra.mxu0 0
        %4664 = vmatprep.subr.bf16.mxu0 0
        %4665 = vmatpush1.bf16.xpose.msra.mxu0 0
        %4666 = vmatprep.subr.bf16.mxu0 0
        %4667 = vmatpush1.bf16.xpose.msra.mxu0 0
        %4668 = vmatprep.subr.bf16.mxu0 0
        %4669 = vmatpush1.bf16.xpose.msra.mxu0 0
        %4670 = vmatprep.mubr.bf16.mxu0 0
        %4671 = vmatmul.mubr.bf16.gmra.mrb[0].mxu0 %v4633
        %v4672 = vpop.f32.mrb[0].mxu0
        %v4673 = vadd.f32 0.0, %v4672
        %v4674 = vpop.f32.mrb[0].mxu0
        %v4675 = vpop.f32.mrb[0].mxu0
        %v4676 = vadd.f32 0.0, %v4675
        %v4677 = vpop.f32.mrb[0].mxu0
        %4678 = vdwg.mxu0
        %v4679 = vsel %vm2034, %v4532, -inf
        %4680 = vmax.xlane.f32.xlu0 %v4679
        %v4681 = vpop.xlane.xlu0 %4680
        %v4682 = vsel %vm2038, %v4535, -inf
        %4683 = vmax.xlane.f32.xlu0 %v4682
        %v4684 = vpop.xlane.xlu0 %4683
        %v4685 = vsel %vm2034, %v4579, -inf
        %4686 = vmax.xlane.f32.xlu0 %v4685
        %v4687 = vpop.xlane.xlu0 %4686
        %v4688 = vsel %vm2038, %v4582, -inf
        %4689 = vmax.xlane.f32.xlu0 %v4688
        %v4690 = vpop.xlane.xlu0 %4689
        %v4691 = vsel %vm2034, %v4626, -inf
        %4692 = vmax.xlane.f32.xlu0 %v4691
        %v4693 = vpop.xlane.xlu0 %4692
        %v4694 = vsel %vm2038, %v4629, -inf
        %4695 = vmax.xlane.f32.xlu0 %v4694
        %v4696 = vpop.xlane.xlu0 %4695
        %v4697 = vsel %vm2034, %v4673, -inf
        %4698 = vmax.xlane.f32.xlu0 %v4697
        %v4699 = vpop.xlane.xlu0 %4698
        %v4700 = vsel %vm2038, %v4676, -inf
        %4701 = vmax.xlane.f32.xlu0 %v4700
        %v4702 = vpop.xlane.xlu0 %4701
        %v4703 = vsub.f32 %v4532, %v4681
        %v4704 = vsub.f32 %v4535, %v4684
        %v4705 = vsub.f32 %v4579, %v4687
        %v4706 = vsub.f32 %v4582, %v4690
        %v4707 = vsub.f32 %v4626, %v4693
        %v4708 = vsub.f32 %v4629, %v4696
        %v4709 = vsub.f32 %v4673, %v4699
        %v4710 = vsub.f32 %v4676, %v4702
        %v4711 = vmul.f32 %v4703, 1.442695
        %v4712 = vpow.pop %v4711
        %v4713 = vmul.f32 %v4704, 1.442695
        %v4714 = vpow.pop %v4713
        %v4715 = vmul.f32 %v4705, 1.442695
        %v4716 = vpow.pop %v4715
        %v4717 = vmul.f32 %v4706, 1.442695
        %v4718 = vpow.pop %v4717
        %v4719 = vmul.f32 %v4707, 1.442695
        %v4720 = vpow.pop %v4719
        %v4721 = vmul.f32 %v4708, 1.442695
        %v4722 = vpow.pop %v4721
        %v4723 = vmul.f32 %v4709, 1.442695
        %v4724 = vpow.pop %v4723
        %v4725 = vmul.f32 %v4710, 1.442695
        %v4726 = vpow.pop %v4725
        %v4727 = vsel %vm2034, %v4712, 0.0
        %4728 = vadd.xlane.f32.xlu0 %v4727
        %v4729 = vpop.xlane.xlu0 %4728
        %v4730 = vsel %vm2038, %v4714, 0.0
        %4731 = vadd.xlane.f32.xlu0 %v4730
        %v4732 = vpop.xlane.xlu0 %4731
        %v4733 = vsel %vm2034, %v4716, 0.0
        %4734 = vadd.xlane.f32.xlu0 %v4733
        %v4735 = vpop.xlane.xlu0 %4734
        %v4736 = vsel %vm2038, %v4718, 0.0
        %4737 = vadd.xlane.f32.xlu0 %v4736
        %v4738 = vpop.xlane.xlu0 %4737
        %v4739 = vsel %vm2034, %v4720, 0.0
        %4740 = vadd.xlane.f32.xlu0 %v4739
        %v4741 = vpop.xlane.xlu0 %4740
        %v4742 = vsel %vm2038, %v4722, 0.0
        %4743 = vadd.xlane.f32.xlu0 %v4742
        %v4744 = vpop.xlane.xlu0 %4743
        %v4745 = vsel %vm2034, %v4724, 0.0
        %4746 = vadd.xlane.f32.xlu0 %v4745
        %v4747 = vpop.xlane.xlu0 %4746
        %v4748 = vsel %vm2038, %v4726, 0.0
        %4749 = vadd.xlane.f32.xlu0 %v4748
        %v4750 = vpop.xlane.xlu0 %4749
        %v4751 = vrcp.pop %v4729
        %v4752 = vmul.f32 %v4712, %v4751
        %v4753 = vrcp.pop %v4732
        %v4754 = vmul.f32 %v4714, %v4753
        %v4755 = vrcp.pop %v4735
        %v4756 = vmul.f32 %v4716, %v4755
        %v4757 = vrcp.pop %v4738
        %v4758 = vmul.f32 %v4718, %v4757
        %v4759 = vrcp.pop %v4741
        %v4760 = vmul.f32 %v4720, %v4759
        %v4761 = vrcp.pop %v4744
        %v4762 = vmul.f32 %v4722, %v4761
        %v4763 = vrcp.pop %v4747
        %v4764 = vmul.f32 %v4724, %v4763
        %v4765 = vrcp.pop %v4750
        %v4766 = vmul.f32 %v4726, %v4765
        %v4767 = vpack.c.bf16 %v4754, %v4752
        %v4768 = vpack.c.bf16 %v4758, %v4756
        %v4769 = vpack.c.bf16 %v4762, %v4760
        %v4770 = vpack.c.bf16 %v4766, %v4764
        %4771 = vrot.lane.b32.xlu0 %v4476, 96
        %v4772 = vpop.permute.xlu0 %4771
        %v4774 = vsel %vm2034, %v4767, 0
        %v4777 = vand.u32 %v4772, %v2135
        %4779 = vmatprep.subr.bf16.mxu0 0
        %4780 = vmatpush1.bf16.msra.mxu0 %v4777
        %4781 = vmatprep.subr.bf16.mxu0 0
        %4782 = vmatpush1.bf16.msra.mxu0 0
        %4783 = vmatprep.subr.bf16.mxu0 0
        %4784 = vmatpush1.bf16.msra.mxu0 0
        %4785 = vmatprep.subr.bf16.mxu0 0
        %4786 = vmatpush1.bf16.msra.mxu0 0
        %4787 = vmatprep.subr.bf16.mxu0 0
        %4788 = vmatpush1.bf16.msra.mxu0 0
        %4789 = vmatprep.subr.bf16.mxu0 0
        %4790 = vmatpush1.bf16.msra.mxu0 0
        %4791 = vmatprep.subr.bf16.mxu0 0
        %4792 = vmatpush1.bf16.msra.mxu0 0
        %4793 = vmatprep.subr.bf16.mxu0 0
        %4794 = vmatpush1.bf16.msra.mxu0 0
        %4795 = vmatprep.subr.bf16.mxu0 0
        %4796 = vmatpush1.bf16.msra.mxu0 0
        %4797 = vmatprep.subr.bf16.mxu0 0
        %4798 = vmatpush1.bf16.msra.mxu0 0
        %4799 = vmatprep.subr.bf16.mxu0 0
        %4800 = vmatpush1.bf16.msra.mxu0 0
        %4801 = vmatprep.subr.bf16.mxu0 0
        %4802 = vmatpush1.bf16.msra.mxu0 0
        %4803 = vmatprep.subr.bf16.mxu0 0
        %4804 = vmatpush1.bf16.msra.mxu0 0
        %4805 = vmatprep.subr.bf16.mxu0 0
        %4806 = vmatpush1.bf16.msra.mxu0 0
        %4807 = vmatprep.subr.bf16.mxu0 0
        %4808 = vmatpush1.bf16.msra.mxu0 0
        %4809 = vmatprep.subr.bf16.mxu0 0
        %4810 = vmatpush1.bf16.msra.mxu0 0
        %4811 = vmatprep.mubr.bf16.mxu0 0
        %4812 = vmatmul.mubr.bf16.gmra.mrb[0].mxu0 %v4774
        %v4813 = vpop.f32.mrb[0].mxu0
        %v4814 = vadd.f32 0.0, %v4813
        %v4815 = vpop.f32.mrb[0].mxu0
        %v4816 = vpop.f32.mrb[0].mxu0
        %v4817 = vadd.f32 0.0, %v4816
        %v4818 = vpop.f32.mrb[0].mxu0
        %4819 = vdwg.mxu0
        %4820 = vrot.lane.b32.xlu0 %v4486, 96
        %v4821 = vpop.permute.xlu0 %4820
        %v4823 = vsel %vm2034, %v4768, 0
        %v4826 = vand.u32 %v4821, %v2135
        %4828 = vmatprep.subr.bf16.mxu0 0
        %4829 = vmatpush1.bf16.msra.mxu0 %v4826
        %4830 = vmatprep.subr.bf16.mxu0 0
        %4831 = vmatpush1.bf16.msra.mxu0 0
        %4832 = vmatprep.subr.bf16.mxu0 0
        %4833 = vmatpush1.bf16.msra.mxu0 0
        %4834 = vmatprep.subr.bf16.mxu0 0
        %4835 = vmatpush1.bf16.msra.mxu0 0
        %4836 = vmatprep.subr.bf16.mxu0 0
        %4837 = vmatpush1.bf16.msra.mxu0 0
        %4838 = vmatprep.subr.bf16.mxu0 0
        %4839 = vmatpush1.bf16.msra.mxu0 0
        %4840 = vmatprep.subr.bf16.mxu0 0
        %4841 = vmatpush1.bf16.msra.mxu0 0
        %4842 = vmatprep.subr.bf16.mxu0 0
        %4843 = vmatpush1.bf16.msra.mxu0 0
        %4844 = vmatprep.subr.bf16.mxu0 0
        %4845 = vmatpush1.bf16.msra.mxu0 0
        %4846 = vmatprep.subr.bf16.mxu0 0
        %4847 = vmatpush1.bf16.msra.mxu0 0
        %4848 = vmatprep.subr.bf16.mxu0 0
        %4849 = vmatpush1.bf16.msra.mxu0 0
        %4850 = vmatprep.subr.bf16.mxu0 0
        %4851 = vmatpush1.bf16.msra.mxu0 0
        %4852 = vmatprep.subr.bf16.mxu0 0
        %4853 = vmatpush1.bf16.msra.mxu0 0
        %4854 = vmatprep.subr.bf16.mxu0 0
        %4855 = vmatpush1.bf16.msra.mxu0 0
        %4856 = vmatprep.subr.bf16.mxu0 0
        %4857 = vmatpush1.bf16.msra.mxu0 0
        %4858 = vmatprep.subr.bf16.mxu0 0
        %4859 = vmatpush1.bf16.msra.mxu0 0
        %4860 = vmatprep.mubr.bf16.mxu0 0
        %4861 = vmatmul.mubr.bf16.gmra.mrb[0].mxu0 %v4823
        %v4862 = vpop.f32.mrb[0].mxu0
        %v4863 = vadd.f32 0.0, %v4862
        %v4864 = vpop.f32.mrb[0].mxu0
        %v4865 = vpop.f32.mrb[0].mxu0
        %v4866 = vadd.f32 0.0, %v4865
        %v4867 = vpop.f32.mrb[0].mxu0
        %4868 = vdwg.mxu0
        %4869 = vrot.lane.b32.xlu0 %v4488, 96
        %v4870 = vpop.permute.xlu0 %4869
        %v4872 = vsel %vm2034, %v4769, 0
        %v4875 = vand.u32 %v4870, %v2135
        %4877 = vmatprep.subr.bf16.mxu0 0
        %4878 = vmatpush1.bf16.msra.mxu0 %v4875
        %4879 = vmatprep.subr.bf16.mxu0 0
        %4880 = vmatpush1.bf16.msra.mxu0 0
        %4881 = vmatprep.subr.bf16.mxu0 0
        %4882 = vmatpush1.bf16.msra.mxu0 0
        %4883 = vmatprep.subr.bf16.mxu0 0
        %4884 = vmatpush1.bf16.msra.mxu0 0
        %4885 = vmatprep.subr.bf16.mxu0 0
        %4886 = vmatpush1.bf16.msra.mxu0 0
        %4887 = vmatprep.subr.bf16.mxu0 0
        %4888 = vmatpush1.bf16.msra.mxu0 0
        %4889 = vmatprep.subr.bf16.mxu0 0
        %4890 = vmatpush1.bf16.msra.mxu0 0
        %4891 = vmatprep.subr.bf16.mxu0 0
        %4892 = vmatpush1.bf16.msra.mxu0 0
        %4893 = vmatprep.subr.bf16.mxu0 0
        %4894 = vmatpush1.bf16.msra.mxu0 0
        %4895 = vmatprep.subr.bf16.mxu0 0
        %4896 = vmatpush1.bf16.msra.mxu0 0
        %4897 = vmatprep.subr.bf16.mxu0 0
        %4898 = vmatpush1.bf16.msra.mxu0 0
        %4899 = vmatprep.subr.bf16.mxu0 0
        %4900 = vmatpush1.bf16.msra.mxu0 0
        %4901 = vmatprep.subr.bf16.mxu0 0
        %4902 = vmatpush1.bf16.msra.mxu0 0
        %4903 = vmatprep.subr.bf16.mxu0 0
        %4904 = vmatpush1.bf16.msra.mxu0 0
        %4905 = vmatprep.subr.bf16.mxu0 0
        %4906 = vmatpush1.bf16.msra.mxu0 0
        %4907 = vmatprep.subr.bf16.mxu0 0
        %4908 = vmatpush1.bf16.msra.mxu0 0
        %4909 = vmatprep.mubr.bf16.mxu0 0
        %4910 = vmatmul.mubr.bf16.gmra.mrb[0].mxu0 %v4872
        %v4911 = vpop.f32.mrb[0].mxu0
        %v4912 = vadd.f32 0.0, %v4911
        %v4913 = vpop.f32.mrb[0].mxu0
        %v4914 = vpop.f32.mrb[0].mxu0
        %v4915 = vadd.f32 0.0, %v4914
        %v4916 = vpop.f32.mrb[0].mxu0
        %4917 = vdwg.mxu0
        %4918 = vrot.lane.b32.xlu0 %v4490, 96
        %v4919 = vpop.permute.xlu0 %4918
        %v4921 = vsel %vm2034, %v4770, 0
        %v4924 = vand.u32 %v4919, %v2135
        %4926 = vmatprep.subr.bf16.mxu0 0
        %4927 = vmatpush1.bf16.msra.mxu0 %v4924
        %4928 = vmatprep.subr.bf16.mxu0 0
        %4929 = vmatpush1.bf16.msra.mxu0 0
        %4930 = vmatprep.subr.bf16.mxu0 0
        %4931 = vmatpush1.bf16.msra.mxu0 0
        %4932 = vmatprep.subr.bf16.mxu0 0
        %4933 = vmatpush1.bf16.msra.mxu0 0
        %4934 = vmatprep.subr.bf16.mxu0 0
        %4935 = vmatpush1.bf16.msra.mxu0 0
        %4936 = vmatprep.subr.bf16.mxu0 0
        %4937 = vmatpush1.bf16.msra.mxu0 0
        %4938 = vmatprep.subr.bf16.mxu0 0
        %4939 = vmatpush1.bf16.msra.mxu0 0
        %4940 = vmatprep.subr.bf16.mxu0 0
        %4941 = vmatpush1.bf16.msra.mxu0 0
        %4942 = vmatprep.subr.bf16.mxu0 0
        %4943 = vmatpush1.bf16.msra.mxu0 0
        %4944 = vmatprep.subr.bf16.mxu0 0
        %4945 = vmatpush1.bf16.msra.mxu0 0
        %4946 = vmatprep.subr.bf16.mxu0 0
        %4947 = vmatpush1.bf16.msra.mxu0 0
        %4948 = vmatprep.subr.bf16.mxu0 0
        %4949 = vmatpush1.bf16.msra.mxu0 0
        %4950 = vmatprep.subr.bf16.mxu0 0
        %4951 = vmatpush1.bf16.msra.mxu0 0
        %4952 = vmatprep.subr.bf16.mxu0 0
        %4953 = vmatpush1.bf16.msra.mxu0 0
        %4954 = vmatprep.subr.bf16.mxu0 0
        %4955 = vmatpush1.bf16.msra.mxu0 0
        %4956 = vmatprep.subr.bf16.mxu0 0
        %4957 = vmatpush1.bf16.msra.mxu0 0
        %4958 = vmatprep.mubr.bf16.mxu0 0
        %4959 = vmatmul.mubr.bf16.gmra.mrb[0].mxu0 %v4921
        %v4960 = vpop.f32.mrb[0].mxu0
        %v4961 = vadd.f32 0.0, %v4960
        %v4962 = vpop.f32.mrb[0].mxu0
        %v4963 = vpop.f32.mrb[0].mxu0
        %v4964 = vadd.f32 0.0, %v4963
        %v4965 = vpop.f32.mrb[0].mxu0
        %4966 = vdwg.mxu0
        %4969 = vrot.lane.b32.xlu0 %v4863, 8
        %v4970 = vpop.permute.xlu0 %4969
        %4971 = vrot.lane.b32.xlu0 %v4866, 8
        %v4972 = vpop.permute.xlu0 %4971
        %4977 = vrot.lane.b32.xlu0 %v4912, 16
        %v4978 = vpop.permute.xlu0 %4977
        %4979 = vrot.lane.b32.xlu0 %v4915, 16
        %v4980 = vpop.permute.xlu0 %4979
        %4985 = vrot.lane.b32.xlu0 %v4961, 24
        %v4986 = vpop.permute.xlu0 %4985
        %4987 = vrot.lane.b32.xlu0 %v4964, 24
        %v4988 = vpop.permute.xlu0 %4987
        %v4991 = vsel %vm1839, %v4814, %v4970
        %v4992 = vsel %vm1839, %v4817, %v4972
        %v4993 = vsel %vm2353, %v4991, %v4978
        %v4994 = vsel %vm2353, %v4992, %v4980
        %v4995 = vsel %vm2356, %v4993, %v4986
        %v4996 = vsel %vm2356, %v4994, %v4988
        %v4997 = vpack.c.bf16 %v4996, %v4995
        %v4998 = vlaneseq
        %v4999 = vshrl.u32 %v4998, 7
        %v5000 = vsub.s32 4, %v4999
        %v5001 = vrot.slane %v3660, %v5000
        %v5006 = vunpack.c.l.b16 %v3636
        %v5007 = vunpack.c.l.b16 %v3637
        %v5008 = vunpack.c.l.b16 %v3638
        %v5009 = vunpack.c.l.b16 %v3639
        %v5010 = vpack.c.b16 %v5007, %v5006
        %v5011 = vpack.c.b16 %v5009, %v5008
        %v5015 = vsel %vm1464, %v4997, 0
        %5017 = vmatprep.subr.bf16.mxu0 0
        %5018 = vmatpush1.bf16.msra.mxu0 %v5010
        %5019 = vmatprep.subr.bf16.mxu0 0
        %5020 = vmatpush1.bf16.msra.mxu0 %v5011
        %5021 = vmatprep.subr.bf16.mxu0 0
        %5022 = vmatpush1.bf16.msra.mxu0 0
        %5023 = vmatprep.subr.bf16.mxu0 0
        %5024 = vmatpush1.bf16.msra.mxu0 0
        %5025 = vmatprep.subr.bf16.mxu0 0
        %5026 = vmatpush1.bf16.msra.mxu0 0
        %5027 = vmatprep.subr.bf16.mxu0 0
        %5028 = vmatpush1.bf16.msra.mxu0 0
        %5029 = vmatprep.subr.bf16.mxu0 0
        %5030 = vmatpush1.bf16.msra.mxu0 0
        %5031 = vmatprep.subr.bf16.mxu0 0
        %5032 = vmatpush1.bf16.msra.mxu0 0
        %5033 = vmatprep.subr.bf16.mxu0 0
        %5034 = vmatpush1.bf16.msra.mxu0 0
        %5035 = vmatprep.subr.bf16.mxu0 0
        %5036 = vmatpush1.bf16.msra.mxu0 0
        %5037 = vmatprep.subr.bf16.mxu0 0
        %5038 = vmatpush1.bf16.msra.mxu0 0
        %5039 = vmatprep.subr.bf16.mxu0 0
        %5040 = vmatpush1.bf16.msra.mxu0 0
        %5041 = vmatprep.subr.bf16.mxu0 0
        %5042 = vmatpush1.bf16.msra.mxu0 0
        %5043 = vmatprep.subr.bf16.mxu0 0
        %5044 = vmatpush1.bf16.msra.mxu0 0
        %5045 = vmatprep.subr.bf16.mxu0 0
        %5046 = vmatpush1.bf16.msra.mxu0 0
        %5047 = vmatprep.subr.bf16.mxu0 0
        %5048 = vmatpush1.bf16.msra.mxu0 0
        %5049 = vmatprep.mubr.bf16.mxu0 0
        %5050 = vmatmul.mubr.bf16.gmra.mrb[0].mxu0 %v5015
        %v5051 = vpop.f32.mrb[0].mxu0
        %v5052 = vadd.f32 %v5001, %v5051
        %v5053 = vpop.f32.mrb[0].mxu0
        %v5054 = vpop.f32.mrb[0].mxu0
        %v5055 = vadd.f32 %v5001, %v5054
        %v5056 = vpop.f32.mrb[0].mxu0
        %5057 = vdwg.mxu0
        %v5058 = vadd.f32 %v4350, %v5052
        %v5059 = vadd.f32 %v4351, %v5055
        %v5060 = vsel %vm1464, %v5058, 0.0
        %5061 = vadd.xlane.f32.xlu0 %v5060
        %v5062 = vpop.xlane.xlu0 %5061
        %v5063 = vsel %vm2425, %v5059, 0.0
        %5064 = vadd.xlane.f32.xlu0 %v5063
        %v5065 = vpop.xlane.xlu0 %5064
        %v5066 = vmul.f32 %v5062, %v2429
        %v5067 = vmul.f32 %v5065, %v2429
        %v5068 = vsub.f32 %v5058, %v5066
        %v5069 = vsub.f32 %v5059, %v5067
        %v5070 = vmul.f32 %v5068, %v5068
        %v5071 = vmul.f32 %v5069, %v5069
        %v5072 = vsel %vm1464, %v5070, 0.0
        %5073 = vadd.xlane.f32.xlu0 %v5072
        %v5074 = vpop.xlane.xlu0 %5073
        %v5075 = vsel %vm2425, %v5071, 0.0
        %5076 = vadd.xlane.f32.xlu0 %v5075
        %v5077 = vpop.xlane.xlu0 %5076
        %v5078 = vmul.f32 %v5074, %v2429
        %v5079 = vmul.f32 %v5077, %v2429
        %v5080 = vadd.f32 %v5078, 1e-05
        %v5081 = vadd.f32 %v5079, 1e-05
        %v5082 = vrsqrt.pop %v5080
        %v5083 = vrsqrt.pop %v5081
        %v5084 = vmul.f32 %v5068, %v5082
        %v5085 = vmul.f32 %v5069, %v5083
        %v5086 = vlaneseq
        %v5087 = vshrl.u32 %v5086, 7
        %v5088 = vsub.s32 1, %v5087
        %v5089 = vrot.slane %v3661, %v5088
        %v5090 = vmul.f32 %v5084, %v5089
        %v5091 = vmul.f32 %v5085, %v5089
        %v5092 = vlaneseq
        %v5093 = vshrl.u32 %v5092, 7
        %v5094 = vsub.s32 2, %v5093
        %v5095 = vrot.slane %v3661, %v5094
        %v5096 = vadd.f32 %v5090, %v5095
        %v5097 = vadd.f32 %v5091, %v5095
        %v5098 = vpack.c.bf16 %v5097, %v5096
        %v5099 = vlaneseq
        %v5100 = vshrl.u32 %v5099, 7
        %v5101 = vsub.s32 5, %v5100
        %v5102 = vrot.slane %v3660, %v5101
        %v5107 = vunpack.c.l.b16 %v3640
        %v5108 = vunpack.c.l.b16 %v3641
        %v5109 = vunpack.c.l.b16 %v3642
        %v5110 = vunpack.c.l.b16 %v3643
        %v5111 = vpack.c.b16 %v5108, %v5107
        %v5112 = vpack.c.b16 %v5110, %v5109
        %v5116 = vsel %vm1464, %v5098, 0
        %5118 = vmatprep.subr.bf16.mxu0 0
        %5119 = vmatpush1.bf16.msra.mxu0 %v5111
        %5120 = vmatprep.subr.bf16.mxu0 0
        %5121 = vmatpush1.bf16.msra.mxu0 %v5112
        %5122 = vmatprep.subr.bf16.mxu0 0
        %5123 = vmatpush1.bf16.msra.mxu0 0
        %5124 = vmatprep.subr.bf16.mxu0 0
        %5125 = vmatpush1.bf16.msra.mxu0 0
        %5126 = vmatprep.subr.bf16.mxu0 0
        %5127 = vmatpush1.bf16.msra.mxu0 0
        %5128 = vmatprep.subr.bf16.mxu0 0
        %5129 = vmatpush1.bf16.msra.mxu0 0
        %5130 = vmatprep.subr.bf16.mxu0 0
        %5131 = vmatpush1.bf16.msra.mxu0 0
        %5132 = vmatprep.subr.bf16.mxu0 0
        %5133 = vmatpush1.bf16.msra.mxu0 0
        %5134 = vmatprep.subr.bf16.mxu0 0
        %5135 = vmatpush1.bf16.msra.mxu0 0
        %5136 = vmatprep.subr.bf16.mxu0 0
        %5137 = vmatpush1.bf16.msra.mxu0 0
        %5138 = vmatprep.subr.bf16.mxu0 0
        %5139 = vmatpush1.bf16.msra.mxu0 0
        %5140 = vmatprep.subr.bf16.mxu0 0
        %5141 = vmatpush1.bf16.msra.mxu0 0
        %5142 = vmatprep.subr.bf16.mxu0 0
        %5143 = vmatpush1.bf16.msra.mxu0 0
        %5144 = vmatprep.subr.bf16.mxu0 0
        %5145 = vmatpush1.bf16.msra.mxu0 0
        %5146 = vmatprep.subr.bf16.mxu0 0
        %5147 = vmatpush1.bf16.msra.mxu0 0
        %5148 = vmatprep.subr.bf16.mxu0 0
        %5149 = vmatpush1.bf16.msra.mxu0 0
        %5150 = vmatprep.mubr.bf16.mxu0 0
        %5151 = vmatmul.mubr.bf16.gmra.mrb[0].mxu0 %v5116
        %v5152 = vpop.f32.mrb[0].mxu0
        %v5153 = vadd.f32 %v5102, %v5152
        %v5154 = vpop.f32.mrb[0].mxu0
        %v5155 = vpop.f32.mrb[0].mxu0
        %v5156 = vadd.f32 %v5102, %v5155
        %v5157 = vpop.f32.mrb[0].mxu0
        %5158 = vdwg.mxu0
        %v5159 = vmax.f32 %v5153, 0.0
        %v5160 = vmax.f32 %v5156, 0.0
        %v5161 = vpack.c.bf16 %v5160, %v5159
        %v5162 = vlaneseq
        %v5163 = vshrl.u32 %v5162, 7
        %v5164 = vsub.s32 6, %v5163
        %v5165 = vrot.slane %v3660, %v5164
        %v5182 = vunpack.c.l.b16 %v3644
        %v5183 = vunpack.c.l.b16 %v3645
        %v5184 = vunpack.c.l.b16 %v3646
        %v5185 = vunpack.c.l.b16 %v3647
        %v5186 = vunpack.c.l.b16 %v3648
        %v5187 = vunpack.c.l.b16 %v3649
        %v5188 = vunpack.c.l.b16 %v3650
        %v5189 = vunpack.c.l.b16 %v3651
        %v5190 = vunpack.c.l.b16 %v3652
        %v5191 = vunpack.c.l.b16 %v3653
        %v5192 = vunpack.c.l.b16 %v3654
        %v5193 = vunpack.c.l.b16 %v3655
        %v5194 = vunpack.c.l.b16 %v3656
        %v5195 = vunpack.c.l.b16 %v3657
        %v5196 = vunpack.c.l.b16 %v3658
        %v5197 = vunpack.c.l.b16 %v3659
        %v5198 = vpack.c.b16 %v5183, %v5182
        %v5199 = vpack.c.b16 %v5185, %v5184
        %v5200 = vpack.c.b16 %v5187, %v5186
        %v5201 = vpack.c.b16 %v5189, %v5188
        %v5202 = vpack.c.b16 %v5191, %v5190
        %v5203 = vpack.c.b16 %v5193, %v5192
        %v5204 = vpack.c.b16 %v5195, %v5194
        %v5205 = vpack.c.b16 %v5197, %v5196
        %5214 = vmatprep.subr.bf16.mxu0 0
        %5215 = vmatpush1.bf16.msra.mxu0 %v5198
        %5216 = vmatprep.subr.bf16.mxu0 0
        %5217 = vmatpush1.bf16.msra.mxu0 %v5199
        %5218 = vmatprep.subr.bf16.mxu0 0
        %5219 = vmatpush1.bf16.msra.mxu0 %v5200
        %5220 = vmatprep.subr.bf16.mxu0 0
        %5221 = vmatpush1.bf16.msra.mxu0 %v5201
        %5222 = vmatprep.subr.bf16.mxu0 0
        %5223 = vmatpush1.bf16.msra.mxu0 %v5202
        %5224 = vmatprep.subr.bf16.mxu0 0
        %5225 = vmatpush1.bf16.msra.mxu0 %v5203
        %5226 = vmatprep.subr.bf16.mxu0 0
        %5227 = vmatpush1.bf16.msra.mxu0 %v5204
        %5228 = vmatprep.subr.bf16.mxu0 0
        %5229 = vmatpush1.bf16.msra.mxu0 %v5205
        %5230 = vmatprep.subr.bf16.mxu0 0
        %5231 = vmatpush1.bf16.msra.mxu0 0
        %5232 = vmatprep.subr.bf16.mxu0 0
        %5233 = vmatpush1.bf16.msra.mxu0 0
        %5234 = vmatprep.subr.bf16.mxu0 0
        %5235 = vmatpush1.bf16.msra.mxu0 0
        %5236 = vmatprep.subr.bf16.mxu0 0
        %5237 = vmatpush1.bf16.msra.mxu0 0
        %5238 = vmatprep.subr.bf16.mxu0 0
        %5239 = vmatpush1.bf16.msra.mxu0 0
        %5240 = vmatprep.subr.bf16.mxu0 0
        %5241 = vmatpush1.bf16.msra.mxu0 0
        %5242 = vmatprep.subr.bf16.mxu0 0
        %5243 = vmatpush1.bf16.msra.mxu0 0
        %5244 = vmatprep.subr.bf16.mxu0 0
        %5245 = vmatpush1.bf16.msra.mxu0 0
        %5246 = vmatprep.mubr.bf16.mxu0 0
        %5247 = vmatmul.mubr.bf16.gmra.mrb[0].mxu0 %v5161
        %v5248 = vpop.f32.mrb[0].mxu0
        %v5249 = vadd.f32 %v5165, %v5248
        %v5250 = vpop.f32.mrb[0].mxu0
        %v5251 = vpop.f32.mrb[0].mxu0
        %v5252 = vadd.f32 %v5165, %v5251
        %v5253 = vpop.f32.mrb[0].mxu0
        %5254 = vdwg.mxu0
        %v5255 = vadd.f32 %v5096, %v5249
        %v5256 = vadd.f32 %v5097, %v5252
        %v5257 = vsel %vm1464, %v5255, 0.0
        %5258 = vadd.xlane.f32.xlu0 %v5257
        %v5259 = vpop.xlane.xlu0 %5258
        %v5260 = vsel %vm2425, %v5256, 0.0
        %5261 = vadd.xlane.f32.xlu0 %v5260
        %v5262 = vpop.xlane.xlu0 %5261
        %v5263 = vmul.f32 %v5259, %v2429
        %v5264 = vmul.f32 %v5262, %v2429
        %v5265 = vsub.f32 %v5255, %v5263
        %v5266 = vsub.f32 %v5256, %v5264
        %v5267 = vmul.f32 %v5265, %v5265
        %v5268 = vmul.f32 %v5266, %v5266
        %v5269 = vsel %vm1464, %v5267, 0.0
        %5270 = vadd.xlane.f32.xlu0 %v5269
        %v5271 = vpop.xlane.xlu0 %5270
        %v5272 = vsel %vm2425, %v5268, 0.0
        %5273 = vadd.xlane.f32.xlu0 %v5272
        %v5274 = vpop.xlane.xlu0 %5273
        %v5275 = vmul.f32 %v5271, %v2429
        %v5276 = vmul.f32 %v5274, %v2429
        %v5277 = vadd.f32 %v5275, 1e-05
        %v5278 = vadd.f32 %v5276, 1e-05
        %v5279 = vrsqrt.pop %v5277
        %v5280 = vrsqrt.pop %v5278
        %v5281 = vmul.f32 %v5265, %v5279
        %v5282 = vmul.f32 %v5266, %v5280
        %v5283 = vlaneseq
        %v5284 = vshrl.u32 %v5283, 7
        %v5285 = vsub.s32 3, %v5284
        %v5286 = vrot.slane %v3661, %v5285
        %v5287 = vmul.f32 %v5281, %v5286
        %v5288 = vmul.f32 %v5282, %v5286
        %v5289 = vlaneseq
        %v5290 = vshrl.u32 %v5289, 7
        %v5291 = vsub.s32 4, %v5290
        %v5292 = vrot.slane %v3661, %v5291
        %v5293 = vadd.f32 %v5287, %v5292
        %v5294 = vadd.f32 %v5288, %v5292
        %s5295 = scalar_lea.vmem %s6, 160
        %v5296 = vld [vmem:[%s5295] sm:$0xf]
        %v5297 = vld [vmem:[%s5295 + $0x4] sm:$0xf]
        %v5298 = vld [vmem:[%s5295 + $0x8] sm:$0xf]
        %v5299 = vld [vmem:[%s5295 + $0xc] sm:$0xf]
        %v5300 = vld [vmem:[%s5295 + $0x10] sm:$0xf]
        %v5301 = vld [vmem:[%s5295 + $0x14] sm:$0xf]
        %v5302 = vld [vmem:[%s5295 + $0x18] sm:$0xf]
        %v5303 = vld [vmem:[%s5295 + $0x1c] sm:$0xf]
        %v5304 = vld [vmem:[%s5295 + $0x20] sm:$0xf]
        %v5305 = vld [vmem:[%s5295 + $0x24] sm:$0xf]
        %v5306 = vld [vmem:[%s5295 + $0x28] sm:$0xf]
        %v5307 = vld [vmem:[%s5295 + $0x2c] sm:$0xf]
        %v5308 = vld [vmem:[%s5295 + $0x30] sm:$0xf]
        %v5309 = vld [vmem:[%s5295 + $0x34] sm:$0xf]
        %v5310 = vld [vmem:[%s5295 + $0x38] sm:$0xf]
        %v5311 = vld [vmem:[%s5295 + $0x3c] sm:$0xf]
        %v5312 = vld [vmem:[%s5295 + $0x40] sm:$0xf]
        %v5313 = vld [vmem:[%s5295 + $0x44] sm:$0xf]
        %v5314 = vld [vmem:[%s5295 + $0x48] sm:$0xf]
        %v5315 = vld [vmem:[%s5295 + $0x4c] sm:$0xf]
        %v5316 = vld [vmem:[%s5295 + $0x50] sm:$0xf]
        %v5317 = vld [vmem:[%s5295 + $0x54] sm:$0xf]
        %v5318 = vld [vmem:[%s5295 + $0x58] sm:$0xf]
        %v5319 = vld [vmem:[%s5295 + $0x5c] sm:$0xf]
        %v5320 = vld [vmem:[%s5295 + $0x60] sm:$0xf]
        %v5321 = vld [vmem:[%s5295 + $0x64] sm:$0xf]
        %v5322 = vld [vmem:[%s5295 + $0x68] sm:$0xf]
        %v5323 = vld [vmem:[%s5295 + $0x6c] sm:$0xf]
        %v5324 = vld [vmem:[%s5295 + $0x70] sm:$0xf]
        %v5325 = vld [vmem:[%s5295 + $0x74] sm:$0xf]
        %v5326 = vld [vmem:[%s5295 + $0x78] sm:$0xf]
        %v5327 = vld [vmem:[%s5295 + $0x7c] sm:$0xf]
        %v5328 = vld [vmem:[%s5295 + $0x80] sm:$0xf]
        %v5329 = vld [vmem:[%s5295 + $0x84] sm:$0xf]
        %v5330 = vld [vmem:[%s5295 + $0x88] sm:$0xf]
        %v5331 = vld [vmem:[%s5295 + $0x8c] sm:$0xf]
        %v5332 = vld [vmem:[%s5295 + $0x90] sm:$0xf]
        %v5333 = vld [vmem:[%s5295 + $0x94] sm:$0xf]
        %v5334 = vld [vmem:[%s5295 + $0x98] sm:$0xf]
        %v5335 = vld [vmem:[%s5295 + $0x9c] sm:$0xf]
        %s5336 = scalar_lea.vmem %s7, 16
        %v5337 = vld [vmem:[%s5336] sm:$0xff]
        %v5338 = vld [vmem:[%s5336 + $0x8] sm:$0x1f]
        %v5339 = vpack.c.bf16 %v5294, %v5293
        %v5340 = vlaneseq
        %v5341 = vshrl.u32 %v5340, 7
        %v5342 = vsub.s32 0, %v5341
        %v5343 = vrot.slane %v5337, %v5342
        %v5348 = vunpack.c.l.b16 %v5296
        %v5349 = vunpack.c.l.b16 %v5297
        %v5350 = vunpack.c.l.b16 %v5298
        %v5351 = vunpack.c.l.b16 %v5299
        %v5352 = vpack.c.b16 %v5349, %v5348
        %v5353 = vpack.c.b16 %v5351, %v5350
        %v5357 = vsel %vm1464, %v5339, 0
        %5359 = vmatprep.subr.bf16.mxu0 0
        %5360 = vmatpush1.bf16.msra.mxu0 %v5352
        %5361 = vmatprep.subr.bf16.mxu0 0
        %5362 = vmatpush1.bf16.msra.mxu0 %v5353
        %5363 = vmatprep.subr.bf16.mxu0 0
        %5364 = vmatpush1.bf16.msra.mxu0 0
        %5365 = vmatprep.subr.bf16.mxu0 0
        %5366 = vmatpush1.bf16.msra.mxu0 0
        %5367 = vmatprep.subr.bf16.mxu0 0
        %5368 = vmatpush1.bf16.msra.mxu0 0
        %5369 = vmatprep.subr.bf16.mxu0 0
        %5370 = vmatpush1.bf16.msra.mxu0 0
        %5371 = vmatprep.subr.bf16.mxu0 0
        %5372 = vmatpush1.bf16.msra.mxu0 0
        %5373 = vmatprep.subr.bf16.mxu0 0
        %5374 = vmatpush1.bf16.msra.mxu0 0
        %5375 = vmatprep.subr.bf16.mxu0 0
        %5376 = vmatpush1.bf16.msra.mxu0 0
        %5377 = vmatprep.subr.bf16.mxu0 0
        %5378 = vmatpush1.bf16.msra.mxu0 0
        %5379 = vmatprep.subr.bf16.mxu0 0
        %5380 = vmatpush1.bf16.msra.mxu0 0
        %5381 = vmatprep.subr.bf16.mxu0 0
        %5382 = vmatpush1.bf16.msra.mxu0 0
        %5383 = vmatprep.subr.bf16.mxu0 0
        %5384 = vmatpush1.bf16.msra.mxu0 0
        %5385 = vmatprep.subr.bf16.mxu0 0
        %5386 = vmatpush1.bf16.msra.mxu0 0
        %5387 = vmatprep.subr.bf16.mxu0 0
        %5388 = vmatpush1.bf16.msra.mxu0 0
        %5389 = vmatprep.subr.bf16.mxu0 0
        %5390 = vmatpush1.bf16.msra.mxu0 0
        %5391 = vmatprep.mubr.bf16.mxu0 0
        %5392 = vmatmul.mubr.bf16.gmra.mrb[0].mxu0 %v5357
        %v5393 = vpop.f32.mrb[0].mxu0
        %v5394 = vadd.f32 %v5343, %v5393
        %v5395 = vpop.f32.mrb[0].mxu0
        %v5396 = vpop.f32.mrb[0].mxu0
        %v5397 = vadd.f32 %v5343, %v5396
        %v5398 = vpop.f32.mrb[0].mxu0
        %5399 = vdwg.mxu0
        %v5400 = vmul.f32 %v5394, 0.35355338
        %v5401 = vmul.f32 %v5397, 0.35355338
        %v5402 = vpack.c.bf16 %v5401, %v5400
        %v5403 = vpack.c.bf16 %v5397, %v5394
        %5405 = vrot.lane.b32.xlu0 %v5402, 120
        %v5406 = vpop.permute.xlu0 %5405
        %5407 = vrot.lane.b32.xlu0 %v5402, 112
        %v5408 = vpop.permute.xlu0 %5407
        %5409 = vrot.lane.b32.xlu0 %v5402, 104
        %v5410 = vpop.permute.xlu0 %5409
        %5412 = vrot.lane.b32.xlu0 %v5403, 120
        %v5413 = vpop.permute.xlu0 %5412
        %5414 = vrot.lane.b32.xlu0 %v5403, 112
        %v5415 = vpop.permute.xlu0 %5414
        %5416 = vrot.lane.b32.xlu0 %v5403, 104
        %v5417 = vpop.permute.xlu0 %5416
        %5418 = vrot.lane.b32.xlu0 %v5403, 96
        %v5419 = vpop.permute.xlu0 %5418
        %v5421 = vsel %vm1839, %v5402, 0
        %v5424 = vsel %vm1839, %v5419, 0
        %5426 = vmatprep.subr.bf16.mxu0 0
        %5427 = vmatpush1.bf16.xpose.msra.mxu0 %v5424
        %5428 = vmatprep.subr.bf16.mxu0 0
        %5429 = vmatpush1.bf16.xpose.msra.mxu0 0
        %5430 = vmatprep.subr.bf16.mxu0 0
        %5431 = vmatpush1.bf16.xpose.msra.mxu0 0
        %5432 = vmatprep.subr.bf16.mxu0 0
        %5433 = vmatpush1.bf16.xpose.msra.mxu0 0
        %5434 = vmatprep.subr.bf16.mxu0 0
        %5435 = vmatpush1.bf16.xpose.msra.mxu0 0
        %5436 = vmatprep.subr.bf16.mxu0 0
        %5437 = vmatpush1.bf16.xpose.msra.mxu0 0
        %5438 = vmatprep.subr.bf16.mxu0 0
        %5439 = vmatpush1.bf16.xpose.msra.mxu0 0
        %5440 = vmatprep.subr.bf16.mxu0 0
        %5441 = vmatpush1.bf16.xpose.msra.mxu0 0
        %5442 = vmatprep.subr.bf16.mxu0 0
        %5443 = vmatpush1.bf16.xpose.msra.mxu0 0
        %5444 = vmatprep.subr.bf16.mxu0 0
        %5445 = vmatpush1.bf16.xpose.msra.mxu0 0
        %5446 = vmatprep.subr.bf16.mxu0 0
        %5447 = vmatpush1.bf16.xpose.msra.mxu0 0
        %5448 = vmatprep.subr.bf16.mxu0 0
        %5449 = vmatpush1.bf16.xpose.msra.mxu0 0
        %5450 = vmatprep.subr.bf16.mxu0 0
        %5451 = vmatpush1.bf16.xpose.msra.mxu0 0
        %5452 = vmatprep.subr.bf16.mxu0 0
        %5453 = vmatpush1.bf16.xpose.msra.mxu0 0
        %5454 = vmatprep.subr.bf16.mxu0 0
        %5455 = vmatpush1.bf16.xpose.msra.mxu0 0
        %5456 = vmatprep.subr.bf16.mxu0 0
        %5457 = vmatpush1.bf16.xpose.msra.mxu0 0
        %5458 = vmatprep.mubr.bf16.mxu0 0
        %5459 = vmatmul.mubr.bf16.gmra.mrb[0].mxu0 %v5421
        %v5460 = vpop.f32.mrb[0].mxu0
        %v5461 = vadd.f32 %v1727, %v5460
        %v5462 = vpop.f32.mrb[0].mxu0
        %v5463 = vpop.f32.mrb[0].mxu0
        %v5464 = vadd.f32 %v1728, %v5463
        %v5465 = vpop.f32.mrb[0].mxu0
        %5466 = vdwg.mxu0
        %5467 = vrot.lane.b32.xlu0 %v5413, 96
        %v5468 = vpop.permute.xlu0 %5467
        %v5470 = vsel %vm1839, %v5406, 0
        %v5473 = vsel %vm1839, %v5468, 0
        %5475 = vmatprep.subr.bf16.mxu0 0
        %5476 = vmatpush1.bf16.xpose.msra.mxu0 %v5473
        %5477 = vmatprep.subr.bf16.mxu0 0
        %5478 = vmatpush1.bf16.xpose.msra.mxu0 0
        %5479 = vmatprep.subr.bf16.mxu0 0
        %5480 = vmatpush1.bf16.xpose.msra.mxu0 0
        %5481 = vmatprep.subr.bf16.mxu0 0
        %5482 = vmatpush1.bf16.xpose.msra.mxu0 0
        %5483 = vmatprep.subr.bf16.mxu0 0
        %5484 = vmatpush1.bf16.xpose.msra.mxu0 0
        %5485 = vmatprep.subr.bf16.mxu0 0
        %5486 = vmatpush1.bf16.xpose.msra.mxu0 0
        %5487 = vmatprep.subr.bf16.mxu0 0
        %5488 = vmatpush1.bf16.xpose.msra.mxu0 0
        %5489 = vmatprep.subr.bf16.mxu0 0
        %5490 = vmatpush1.bf16.xpose.msra.mxu0 0
        %5491 = vmatprep.subr.bf16.mxu0 0
        %5492 = vmatpush1.bf16.xpose.msra.mxu0 0
        %5493 = vmatprep.subr.bf16.mxu0 0
        %5494 = vmatpush1.bf16.xpose.msra.mxu0 0
        %5495 = vmatprep.subr.bf16.mxu0 0
        %5496 = vmatpush1.bf16.xpose.msra.mxu0 0
        %5497 = vmatprep.subr.bf16.mxu0 0
        %5498 = vmatpush1.bf16.xpose.msra.mxu0 0
        %5499 = vmatprep.subr.bf16.mxu0 0
        %5500 = vmatpush1.bf16.xpose.msra.mxu0 0
        %5501 = vmatprep.subr.bf16.mxu0 0
        %5502 = vmatpush1.bf16.xpose.msra.mxu0 0
        %5503 = vmatprep.subr.bf16.mxu0 0
        %5504 = vmatpush1.bf16.xpose.msra.mxu0 0
        %5505 = vmatprep.subr.bf16.mxu0 0
        %5506 = vmatpush1.bf16.xpose.msra.mxu0 0
        %5507 = vmatprep.mubr.bf16.mxu0 0
        %5508 = vmatmul.mubr.bf16.gmra.mrb[0].mxu0 %v5470
        %v5509 = vpop.f32.mrb[0].mxu0
        %v5510 = vadd.f32 %v1727, %v5509
        %v5511 = vpop.f32.mrb[0].mxu0
        %v5512 = vpop.f32.mrb[0].mxu0
        %v5513 = vadd.f32 %v1728, %v5512
        %v5514 = vpop.f32.mrb[0].mxu0
        %5515 = vdwg.mxu0
        %5516 = vrot.lane.b32.xlu0 %v5415, 96
        %v5517 = vpop.permute.xlu0 %5516
        %v5519 = vsel %vm1839, %v5408, 0
        %v5522 = vsel %vm1839, %v5517, 0
        %5524 = vmatprep.subr.bf16.mxu0 0
        %5525 = vmatpush1.bf16.xpose.msra.mxu0 %v5522
        %5526 = vmatprep.subr.bf16.mxu0 0
        %5527 = vmatpush1.bf16.xpose.msra.mxu0 0
        %5528 = vmatprep.subr.bf16.mxu0 0
        %5529 = vmatpush1.bf16.xpose.msra.mxu0 0
        %5530 = vmatprep.subr.bf16.mxu0 0
        %5531 = vmatpush1.bf16.xpose.msra.mxu0 0
        %5532 = vmatprep.subr.bf16.mxu0 0
        %5533 = vmatpush1.bf16.xpose.msra.mxu0 0
        %5534 = vmatprep.subr.bf16.mxu0 0
        %5535 = vmatpush1.bf16.xpose.msra.mxu0 0
        %5536 = vmatprep.subr.bf16.mxu0 0
        %5537 = vmatpush1.bf16.xpose.msra.mxu0 0
        %5538 = vmatprep.subr.bf16.mxu0 0
        %5539 = vmatpush1.bf16.xpose.msra.mxu0 0
        %5540 = vmatprep.subr.bf16.mxu0 0
        %5541 = vmatpush1.bf16.xpose.msra.mxu0 0
        %5542 = vmatprep.subr.bf16.mxu0 0
        %5543 = vmatpush1.bf16.xpose.msra.mxu0 0
        %5544 = vmatprep.subr.bf16.mxu0 0
        %5545 = vmatpush1.bf16.xpose.msra.mxu0 0
        %5546 = vmatprep.subr.bf16.mxu0 0
        %5547 = vmatpush1.bf16.xpose.msra.mxu0 0
        %5548 = vmatprep.subr.bf16.mxu0 0
        %5549 = vmatpush1.bf16.xpose.msra.mxu0 0
        %5550 = vmatprep.subr.bf16.mxu0 0
        %5551 = vmatpush1.bf16.xpose.msra.mxu0 0
        %5552 = vmatprep.subr.bf16.mxu0 0
        %5553 = vmatpush1.bf16.xpose.msra.mxu0 0
        %5554 = vmatprep.subr.bf16.mxu0 0
        %5555 = vmatpush1.bf16.xpose.msra.mxu0 0
        %5556 = vmatprep.mubr.bf16.mxu0 0
        %5557 = vmatmul.mubr.bf16.gmra.mrb[0].mxu0 %v5519
        %v5558 = vpop.f32.mrb[0].mxu0
        %v5559 = vadd.f32 %v1727, %v5558
        %v5560 = vpop.f32.mrb[0].mxu0
        %v5561 = vpop.f32.mrb[0].mxu0
        %v5562 = vadd.f32 %v1728, %v5561
        %v5563 = vpop.f32.mrb[0].mxu0
        %5564 = vdwg.mxu0
        %5565 = vrot.lane.b32.xlu0 %v5417, 96
        %v5566 = vpop.permute.xlu0 %5565
        %v5568 = vsel %vm1839, %v5410, 0
        %v5571 = vsel %vm1839, %v5566, 0
        %5573 = vmatprep.subr.bf16.mxu0 0
        %5574 = vmatpush1.bf16.xpose.msra.mxu0 %v5571
        %5575 = vmatprep.subr.bf16.mxu0 0
        %5576 = vmatpush1.bf16.xpose.msra.mxu0 0
        %5577 = vmatprep.subr.bf16.mxu0 0
        %5578 = vmatpush1.bf16.xpose.msra.mxu0 0
        %5579 = vmatprep.subr.bf16.mxu0 0
        %5580 = vmatpush1.bf16.xpose.msra.mxu0 0
        %5581 = vmatprep.subr.bf16.mxu0 0
        %5582 = vmatpush1.bf16.xpose.msra.mxu0 0
        %5583 = vmatprep.subr.bf16.mxu0 0
        %5584 = vmatpush1.bf16.xpose.msra.mxu0 0
        %5585 = vmatprep.subr.bf16.mxu0 0
        %5586 = vmatpush1.bf16.xpose.msra.mxu0 0
        %5587 = vmatprep.subr.bf16.mxu0 0
        %5588 = vmatpush1.bf16.xpose.msra.mxu0 0
        %5589 = vmatprep.subr.bf16.mxu0 0
        %5590 = vmatpush1.bf16.xpose.msra.mxu0 0
        %5591 = vmatprep.subr.bf16.mxu0 0
        %5592 = vmatpush1.bf16.xpose.msra.mxu0 0
        %5593 = vmatprep.subr.bf16.mxu0 0
        %5594 = vmatpush1.bf16.xpose.msra.mxu0 0
        %5595 = vmatprep.subr.bf16.mxu0 0
        %5596 = vmatpush1.bf16.xpose.msra.mxu0 0
        %5597 = vmatprep.subr.bf16.mxu0 0
        %5598 = vmatpush1.bf16.xpose.msra.mxu0 0
        %5599 = vmatprep.subr.bf16.mxu0 0
        %5600 = vmatpush1.bf16.xpose.msra.mxu0 0
        %5601 = vmatprep.subr.bf16.mxu0 0
        %5602 = vmatpush1.bf16.xpose.msra.mxu0 0
        %5603 = vmatprep.subr.bf16.mxu0 0
        %5604 = vmatpush1.bf16.xpose.msra.mxu0 0
        %5605 = vmatprep.mubr.bf16.mxu0 0
        %5606 = vmatmul.mubr.bf16.gmra.mrb[0].mxu0 %v5568
        %v5607 = vpop.f32.mrb[0].mxu0
        %v5608 = vadd.f32 %v1727, %v5607
        %v5609 = vpop.f32.mrb[0].mxu0
        %v5610 = vpop.f32.mrb[0].mxu0
        %v5611 = vadd.f32 %v1728, %v5610
        %v5612 = vpop.f32.mrb[0].mxu0
        %5613 = vdwg.mxu0
        %v5614 = vsel %vm2034, %v5461, -inf
        %5615 = vmax.xlane.f32.xlu0 %v5614
        %v5616 = vpop.xlane.xlu0 %5615
        %v5617 = vsel %vm2038, %v5464, -inf
        %5618 = vmax.xlane.f32.xlu0 %v5617
        %v5619 = vpop.xlane.xlu0 %5618
        %v5620 = vsel %vm2034, %v5510, -inf
        %5621 = vmax.xlane.f32.xlu0 %v5620
        %v5622 = vpop.xlane.xlu0 %5621
        %v5623 = vsel %vm2038, %v5513, -inf
        %5624 = vmax.xlane.f32.xlu0 %v5623
        %v5625 = vpop.xlane.xlu0 %5624
        %v5626 = vsel %vm2034, %v5559, -inf
        %5627 = vmax.xlane.f32.xlu0 %v5626
        %v5628 = vpop.xlane.xlu0 %5627
        %v5629 = vsel %vm2038, %v5562, -inf
        %5630 = vmax.xlane.f32.xlu0 %v5629
        %v5631 = vpop.xlane.xlu0 %5630
        %v5632 = vsel %vm2034, %v5608, -inf
        %5633 = vmax.xlane.f32.xlu0 %v5632
        %v5634 = vpop.xlane.xlu0 %5633
        %v5635 = vsel %vm2038, %v5611, -inf
        %5636 = vmax.xlane.f32.xlu0 %v5635
        %v5637 = vpop.xlane.xlu0 %5636
        %v5638 = vsub.f32 %v5461, %v5616
        %v5639 = vsub.f32 %v5464, %v5619
        %v5640 = vsub.f32 %v5510, %v5622
        %v5641 = vsub.f32 %v5513, %v5625
        %v5642 = vsub.f32 %v5559, %v5628
        %v5643 = vsub.f32 %v5562, %v5631
        %v5644 = vsub.f32 %v5608, %v5634
        %v5645 = vsub.f32 %v5611, %v5637
        %v5646 = vmul.f32 %v5638, 1.442695
        %v5647 = vpow.pop %v5646
        %v5648 = vmul.f32 %v5639, 1.442695
        %v5649 = vpow.pop %v5648
        %v5650 = vmul.f32 %v5640, 1.442695
        %v5651 = vpow.pop %v5650
        %v5652 = vmul.f32 %v5641, 1.442695
        %v5653 = vpow.pop %v5652
        %v5654 = vmul.f32 %v5642, 1.442695
        %v5655 = vpow.pop %v5654
        %v5656 = vmul.f32 %v5643, 1.442695
        %v5657 = vpow.pop %v5656
        %v5658 = vmul.f32 %v5644, 1.442695
        %v5659 = vpow.pop %v5658
        %v5660 = vmul.f32 %v5645, 1.442695
        %v5661 = vpow.pop %v5660
        %v5662 = vsel %vm2034, %v5647, 0.0
        %5663 = vadd.xlane.f32.xlu0 %v5662
        %v5664 = vpop.xlane.xlu0 %5663
        %v5665 = vsel %vm2038, %v5649, 0.0
        %5666 = vadd.xlane.f32.xlu0 %v5665
        %v5667 = vpop.xlane.xlu0 %5666
        %v5668 = vsel %vm2034, %v5651, 0.0
        %5669 = vadd.xlane.f32.xlu0 %v5668
        %v5670 = vpop.xlane.xlu0 %5669
        %v5671 = vsel %vm2038, %v5653, 0.0
        %5672 = vadd.xlane.f32.xlu0 %v5671
        %v5673 = vpop.xlane.xlu0 %5672
        %v5674 = vsel %vm2034, %v5655, 0.0
        %5675 = vadd.xlane.f32.xlu0 %v5674
        %v5676 = vpop.xlane.xlu0 %5675
        %v5677 = vsel %vm2038, %v5657, 0.0
        %5678 = vadd.xlane.f32.xlu0 %v5677
        %v5679 = vpop.xlane.xlu0 %5678
        %v5680 = vsel %vm2034, %v5659, 0.0
        %5681 = vadd.xlane.f32.xlu0 %v5680
        %v5682 = vpop.xlane.xlu0 %5681
        %v5683 = vsel %vm2038, %v5661, 0.0
        %5684 = vadd.xlane.f32.xlu0 %v5683
        %v5685 = vpop.xlane.xlu0 %5684
        %v5686 = vrcp.pop %v5664
        %v5687 = vmul.f32 %v5647, %v5686
        %v5688 = vrcp.pop %v5667
        %v5689 = vmul.f32 %v5649, %v5688
        %v5690 = vrcp.pop %v5670
        %v5691 = vmul.f32 %v5651, %v5690
        %v5692 = vrcp.pop %v5673
        %v5693 = vmul.f32 %v5653, %v5692
        %v5694 = vrcp.pop %v5676
        %v5695 = vmul.f32 %v5655, %v5694
        %v5696 = vrcp.pop %v5679
        %v5697 = vmul.f32 %v5657, %v5696
        %v5698 = vrcp.pop %v5682
        %v5699 = vmul.f32 %v5659, %v5698
        %v5700 = vrcp.pop %v5685
        %v5701 = vmul.f32 %v5661, %v5700
        %v5702 = vpack.c.bf16 %v5689, %v5687
        %v5703 = vpack.c.bf16 %v5693, %v5691
        %v5704 = vpack.c.bf16 %v5697, %v5695
        %v5705 = vpack.c.bf16 %v5701, %v5699
        %5706 = vrot.lane.b32.xlu0 %v5403, 64
        %v5707 = vpop.permute.xlu0 %5706
        %v5709 = vsel %vm2034, %v5702, 0
        %v5712 = vand.u32 %v5707, %v2135
        %5714 = vmatprep.subr.bf16.mxu0 0
        %5715 = vmatpush1.bf16.msra.mxu0 %v5712
        %5716 = vmatprep.subr.bf16.mxu0 0
        %5717 = vmatpush1.bf16.msra.mxu0 0
        %5718 = vmatprep.subr.bf16.mxu0 0
        %5719 = vmatpush1.bf16.msra.mxu0 0
        %5720 = vmatprep.subr.bf16.mxu0 0
        %5721 = vmatpush1.bf16.msra.mxu0 0
        %5722 = vmatprep.subr.bf16.mxu0 0
        %5723 = vmatpush1.bf16.msra.mxu0 0
        %5724 = vmatprep.subr.bf16.mxu0 0
        %5725 = vmatpush1.bf16.msra.mxu0 0
        %5726 = vmatprep.subr.bf16.mxu0 0
        %5727 = vmatpush1.bf16.msra.mxu0 0
        %5728 = vmatprep.subr.bf16.mxu0 0
        %5729 = vmatpush1.bf16.msra.mxu0 0
        %5730 = vmatprep.subr.bf16.mxu0 0
        %5731 = vmatpush1.bf16.msra.mxu0 0
        %5732 = vmatprep.subr.bf16.mxu0 0
        %5733 = vmatpush1.bf16.msra.mxu0 0
        %5734 = vmatprep.subr.bf16.mxu0 0
        %5735 = vmatpush1.bf16.msra.mxu0 0
        %5736 = vmatprep.subr.bf16.mxu0 0
        %5737 = vmatpush1.bf16.msra.mxu0 0
        %5738 = vmatprep.subr.bf16.mxu0 0
        %5739 = vmatpush1.bf16.msra.mxu0 0
        %5740 = vmatprep.subr.bf16.mxu0 0
        %5741 = vmatpush1.bf16.msra.mxu0 0
        %5742 = vmatprep.subr.bf16.mxu0 0
        %5743 = vmatpush1.bf16.msra.mxu0 0
        %5744 = vmatprep.subr.bf16.mxu0 0
        %5745 = vmatpush1.bf16.msra.mxu0 0
        %5746 = vmatprep.mubr.bf16.mxu0 0
        %5747 = vmatmul.mubr.bf16.gmra.mrb[0].mxu0 %v5709
        %v5748 = vpop.f32.mrb[0].mxu0
        %v5749 = vadd.f32 0.0, %v5748
        %v5750 = vpop.f32.mrb[0].mxu0
        %v5751 = vpop.f32.mrb[0].mxu0
        %v5752 = vadd.f32 0.0, %v5751
        %v5753 = vpop.f32.mrb[0].mxu0
        %5754 = vdwg.mxu0
        %5755 = vrot.lane.b32.xlu0 %v5413, 64
        %v5756 = vpop.permute.xlu0 %5755
        %v5758 = vsel %vm2034, %v5703, 0
        %v5761 = vand.u32 %v5756, %v2135
        %5763 = vmatprep.subr.bf16.mxu0 0
        %5764 = vmatpush1.bf16.msra.mxu0 %v5761
        %5765 = vmatprep.subr.bf16.mxu0 0
        %5766 = vmatpush1.bf16.msra.mxu0 0
        %5767 = vmatprep.subr.bf16.mxu0 0
        %5768 = vmatpush1.bf16.msra.mxu0 0
        %5769 = vmatprep.subr.bf16.mxu0 0
        %5770 = vmatpush1.bf16.msra.mxu0 0
        %5771 = vmatprep.subr.bf16.mxu0 0
        %5772 = vmatpush1.bf16.msra.mxu0 0
        %5773 = vmatprep.subr.bf16.mxu0 0
        %5774 = vmatpush1.bf16.msra.mxu0 0
        %5775 = vmatprep.subr.bf16.mxu0 0
        %5776 = vmatpush1.bf16.msra.mxu0 0
        %5777 = vmatprep.subr.bf16.mxu0 0
        %5778 = vmatpush1.bf16.msra.mxu0 0
        %5779 = vmatprep.subr.bf16.mxu0 0
        %5780 = vmatpush1.bf16.msra.mxu0 0
        %5781 = vmatprep.subr.bf16.mxu0 0
        %5782 = vmatpush1.bf16.msra.mxu0 0
        %5783 = vmatprep.subr.bf16.mxu0 0
        %5784 = vmatpush1.bf16.msra.mxu0 0
        %5785 = vmatprep.subr.bf16.mxu0 0
        %5786 = vmatpush1.bf16.msra.mxu0 0
        %5787 = vmatprep.subr.bf16.mxu0 0
        %5788 = vmatpush1.bf16.msra.mxu0 0
        %5789 = vmatprep.subr.bf16.mxu0 0
        %5790 = vmatpush1.bf16.msra.mxu0 0
        %5791 = vmatprep.subr.bf16.mxu0 0
        %5792 = vmatpush1.bf16.msra.mxu0 0
        %5793 = vmatprep.subr.bf16.mxu0 0
        %5794 = vmatpush1.bf16.msra.mxu0 0
        %5795 = vmatprep.mubr.bf16.mxu0 0
        %5796 = vmatmul.mubr.bf16.gmra.mrb[0].mxu0 %v5758
        %v5797 = vpop.f32.mrb[0].mxu0
        %v5798 = vadd.f32 0.0, %v5797
        %v5799 = vpop.f32.mrb[0].mxu0
        %v5800 = vpop.f32.mrb[0].mxu0
        %v5801 = vadd.f32 0.0, %v5800
        %v5802 = vpop.f32.mrb[0].mxu0
        %5803 = vdwg.mxu0
        %5804 = vrot.lane.b32.xlu0 %v5415, 64
        %v5805 = vpop.permute.xlu0 %5804
        %v5807 = vsel %vm2034, %v5704, 0
        %v5810 = vand.u32 %v5805, %v2135
        %5812 = vmatprep.subr.bf16.mxu0 0
        %5813 = vmatpush1.bf16.msra.mxu0 %v5810
        %5814 = vmatprep.subr.bf16.mxu0 0
        %5815 = vmatpush1.bf16.msra.mxu0 0
        %5816 = vmatprep.subr.bf16.mxu0 0
        %5817 = vmatpush1.bf16.msra.mxu0 0
        %5818 = vmatprep.subr.bf16.mxu0 0
        %5819 = vmatpush1.bf16.msra.mxu0 0
        %5820 = vmatprep.subr.bf16.mxu0 0
        %5821 = vmatpush1.bf16.msra.mxu0 0
        %5822 = vmatprep.subr.bf16.mxu0 0
        %5823 = vmatpush1.bf16.msra.mxu0 0
        %5824 = vmatprep.subr.bf16.mxu0 0
        %5825 = vmatpush1.bf16.msra.mxu0 0
        %5826 = vmatprep.subr.bf16.mxu0 0
        %5827 = vmatpush1.bf16.msra.mxu0 0
        %5828 = vmatprep.subr.bf16.mxu0 0
        %5829 = vmatpush1.bf16.msra.mxu0 0
        %5830 = vmatprep.subr.bf16.mxu0 0
        %5831 = vmatpush1.bf16.msra.mxu0 0
        %5832 = vmatprep.subr.bf16.mxu0 0
        %5833 = vmatpush1.bf16.msra.mxu0 0
        %5834 = vmatprep.subr.bf16.mxu0 0
        %5835 = vmatpush1.bf16.msra.mxu0 0
        %5836 = vmatprep.subr.bf16.mxu0 0
        %5837 = vmatpush1.bf16.msra.mxu0 0
        %5838 = vmatprep.subr.bf16.mxu0 0
        %5839 = vmatpush1.bf16.msra.mxu0 0
        %5840 = vmatprep.subr.bf16.mxu0 0
        %5841 = vmatpush1.bf16.msra.mxu0 0
        %5842 = vmatprep.subr.bf16.mxu0 0
        %5843 = vmatpush1.bf16.msra.mxu0 0
        %5844 = vmatprep.mubr.bf16.mxu0 0
        %5845 = vmatmul.mubr.bf16.gmra.mrb[0].mxu0 %v5807
        %v5846 = vpop.f32.mrb[0].mxu0
        %v5847 = vadd.f32 0.0, %v5846
        %v5848 = vpop.f32.mrb[0].mxu0
        %v5849 = vpop.f32.mrb[0].mxu0
        %v5850 = vadd.f32 0.0, %v5849
        %v5851 = vpop.f32.mrb[0].mxu0
        %5852 = vdwg.mxu0
        %5853 = vrot.lane.b32.xlu0 %v5417, 64
        %v5854 = vpop.permute.xlu0 %5853
        %v5856 = vsel %vm2034, %v5705, 0
        %v5859 = vand.u32 %v5854, %v2135
        %5861 = vmatprep.subr.bf16.mxu0 0
        %5862 = vmatpush1.bf16.msra.mxu0 %v5859
        %5863 = vmatprep.subr.bf16.mxu0 0
        %5864 = vmatpush1.bf16.msra.mxu0 0
        %5865 = vmatprep.subr.bf16.mxu0 0
        %5866 = vmatpush1.bf16.msra.mxu0 0
        %5867 = vmatprep.subr.bf16.mxu0 0
        %5868 = vmatpush1.bf16.msra.mxu0 0
        %5869 = vmatprep.subr.bf16.mxu0 0
        %5870 = vmatpush1.bf16.msra.mxu0 0
        %5871 = vmatprep.subr.bf16.mxu0 0
        %5872 = vmatpush1.bf16.msra.mxu0 0
        %5873 = vmatprep.subr.bf16.mxu0 0
        %5874 = vmatpush1.bf16.msra.mxu0 0
        %5875 = vmatprep.subr.bf16.mxu0 0
        %5876 = vmatpush1.bf16.msra.mxu0 0
        %5877 = vmatprep.subr.bf16.mxu0 0
        %5878 = vmatpush1.bf16.msra.mxu0 0
        %5879 = vmatprep.subr.bf16.mxu0 0
        %5880 = vmatpush1.bf16.msra.mxu0 0
        %5881 = vmatprep.subr.bf16.mxu0 0
        %5882 = vmatpush1.bf16.msra.mxu0 0
        %5883 = vmatprep.subr.bf16.mxu0 0
        %5884 = vmatpush1.bf16.msra.mxu0 0
        %5885 = vmatprep.subr.bf16.mxu0 0
        %5886 = vmatpush1.bf16.msra.mxu0 0
        %5887 = vmatprep.subr.bf16.mxu0 0
        %5888 = vmatpush1.bf16.msra.mxu0 0
        %5889 = vmatprep.subr.bf16.mxu0 0
        %5890 = vmatpush1.bf16.msra.mxu0 0
        %5891 = vmatprep.subr.bf16.mxu0 0
        %5892 = vmatpush1.bf16.msra.mxu0 0
        %5893 = vmatprep.mubr.bf16.mxu0 0
        %5894 = vmatmul.mubr.bf16.gmra.mrb[0].mxu0 %v5856
        %v5895 = vpop.f32.mrb[0].mxu0
        %v5896 = vadd.f32 0.0, %v5895
        %v5897 = vpop.f32.mrb[0].mxu0
        %v5898 = vpop.f32.mrb[0].mxu0
        %v5899 = vadd.f32 0.0, %v5898
        %v5900 = vpop.f32.mrb[0].mxu0
        %5901 = vdwg.mxu0
        %5904 = vrot.lane.b32.xlu0 %v5798, 8
        %v5905 = vpop.permute.xlu0 %5904
        %5906 = vrot.lane.b32.xlu0 %v5801, 8
        %v5907 = vpop.permute.xlu0 %5906
        %5912 = vrot.lane.b32.xlu0 %v5847, 16
        %v5913 = vpop.permute.xlu0 %5912
        %5914 = vrot.lane.b32.xlu0 %v5850, 16
        %v5915 = vpop.permute.xlu0 %5914
        %5920 = vrot.lane.b32.xlu0 %v5896, 24
        %v5921 = vpop.permute.xlu0 %5920
        %5922 = vrot.lane.b32.xlu0 %v5899, 24
        %v5923 = vpop.permute.xlu0 %5922
        %v5926 = vsel %vm1839, %v5749, %v5905
        %v5927 = vsel %vm1839, %v5752, %v5907
        %v5928 = vsel %vm2353, %v5926, %v5913
        %v5929 = vsel %vm2353, %v5927, %v5915
        %v5930 = vsel %vm2356, %v5928, %v5921
        %v5931 = vsel %vm2356, %v5929, %v5923
        %v5932 = vpack.c.bf16 %v5931, %v5930
        %v5933 = vlaneseq
        %v5934 = vshrl.u32 %v5933, 7
        %v5935 = vsub.s32 1, %v5934
        %v5936 = vrot.slane %v5337, %v5935
        %v5941 = vunpack.c.l.b16 %v5300
        %v5942 = vunpack.c.l.b16 %v5301
        %v5943 = vunpack.c.l.b16 %v5302
        %v5944 = vunpack.c.l.b16 %v5303
        %v5945 = vpack.c.b16 %v5942, %v5941
        %v5946 = vpack.c.b16 %v5944, %v5943
        %v5950 = vsel %vm1464, %v5932, 0
        %5952 = vmatprep.subr.bf16.mxu0 0
        %5953 = vmatpush1.bf16.msra.mxu0 %v5945
        %5954 = vmatprep.subr.bf16.mxu0 0
        %5955 = vmatpush1.bf16.msra.mxu0 %v5946
        %5956 = vmatprep.subr.bf16.mxu0 0
        %5957 = vmatpush1.bf16.msra.mxu0 0
        %5958 = vmatprep.subr.bf16.mxu0 0
        %5959 = vmatpush1.bf16.msra.mxu0 0
        %5960 = vmatprep.subr.bf16.mxu0 0
        %5961 = vmatpush1.bf16.msra.mxu0 0
        %5962 = vmatprep.subr.bf16.mxu0 0
        %5963 = vmatpush1.bf16.msra.mxu0 0
        %5964 = vmatprep.subr.bf16.mxu0 0
        %5965 = vmatpush1.bf16.msra.mxu0 0
        %5966 = vmatprep.subr.bf16.mxu0 0
        %5967 = vmatpush1.bf16.msra.mxu0 0
        %5968 = vmatprep.subr.bf16.mxu0 0
        %5969 = vmatpush1.bf16.msra.mxu0 0
        %5970 = vmatprep.subr.bf16.mxu0 0
        %5971 = vmatpush1.bf16.msra.mxu0 0
        %5972 = vmatprep.subr.bf16.mxu0 0
        %5973 = vmatpush1.bf16.msra.mxu0 0
        %5974 = vmatprep.subr.bf16.mxu0 0
        %5975 = vmatpush1.bf16.msra.mxu0 0
        %5976 = vmatprep.subr.bf16.mxu0 0
        %5977 = vmatpush1.bf16.msra.mxu0 0
        %5978 = vmatprep.subr.bf16.mxu0 0
        %5979 = vmatpush1.bf16.msra.mxu0 0
        %5980 = vmatprep.subr.bf16.mxu0 0
        %5981 = vmatpush1.bf16.msra.mxu0 0
        %5982 = vmatprep.subr.bf16.mxu0 0
        %5983 = vmatpush1.bf16.msra.mxu0 0
        %5984 = vmatprep.mubr.bf16.mxu0 0
        %5985 = vmatmul.mubr.bf16.gmra.mrb[0].mxu0 %v5950
        %v5986 = vpop.f32.mrb[0].mxu0
        %v5987 = vadd.f32 %v5936, %v5986
        %v5988 = vpop.f32.mrb[0].mxu0
        %v5989 = vpop.f32.mrb[0].mxu0
        %v5990 = vadd.f32 %v5936, %v5989
        %v5991 = vpop.f32.mrb[0].mxu0
        %5992 = vdwg.mxu0
        %v5993 = vadd.f32 %v5293, %v5987
        %v5994 = vadd.f32 %v5294, %v5990
        %v5995 = vsel %vm1464, %v5993, 0.0
        %5996 = vadd.xlane.f32.xlu0 %v5995
        %v5997 = vpop.xlane.xlu0 %5996
        %v5998 = vsel %vm2425, %v5994, 0.0
        %5999 = vadd.xlane.f32.xlu0 %v5998
        %v6000 = vpop.xlane.xlu0 %5999
        %v6001 = vmul.f32 %v5997, %v2429
        %v6002 = vmul.f32 %v6000, %v2429
        %v6003 = vsub.f32 %v5993, %v6001
        %v6004 = vsub.f32 %v5994, %v6002
        %v6005 = vmul.f32 %v6003, %v6003
        %v6006 = vmul.f32 %v6004, %v6004
        %v6007 = vsel %vm1464, %v6005, 0.0
        %6008 = vadd.xlane.f32.xlu0 %v6007
        %v6009 = vpop.xlane.xlu0 %6008
        %v6010 = vsel %vm2425, %v6006, 0.0
        %6011 = vadd.xlane.f32.xlu0 %v6010
        %v6012 = vpop.xlane.xlu0 %6011
        %v6013 = vmul.f32 %v6009, %v2429
        %v6014 = vmul.f32 %v6012, %v2429
        %v6015 = vadd.f32 %v6013, 1e-05
        %v6016 = vadd.f32 %v6014, 1e-05
        %v6017 = vrsqrt.pop %v6015
        %v6018 = vrsqrt.pop %v6016
        %v6019 = vmul.f32 %v6003, %v6017
        %v6020 = vmul.f32 %v6004, %v6018
        %v6021 = vlaneseq
        %v6022 = vshrl.u32 %v6021, 7
        %v6023 = vsub.s32 7, %v6022
        %v6024 = vrot.slane %v5337, %v6023
        %v6025 = vmul.f32 %v6019, %v6024
        %v6026 = vmul.f32 %v6020, %v6024
        %v6027 = vlaneseq
        %v6028 = vshrl.u32 %v6027, 7
        %v6029 = vsub.s32 0, %v6028
        %v6030 = vrot.slane %v5338, %v6029
        %v6031 = vadd.f32 %v6025, %v6030
        %v6032 = vadd.f32 %v6026, %v6030
        %v6033 = vpack.c.bf16 %v6032, %v6031
        %v6034 = vlaneseq
        %v6035 = vshrl.u32 %v6034, 7
        %v6036 = vsub.s32 2, %v6035
        %v6037 = vrot.slane %v5337, %v6036
        %v6042 = vunpack.c.l.b16 %v5304
        %v6043 = vunpack.c.l.b16 %v5305
        %v6044 = vunpack.c.l.b16 %v5306
        %v6045 = vunpack.c.l.b16 %v5307
        %v6046 = vpack.c.b16 %v6043, %v6042
        %v6047 = vpack.c.b16 %v6045, %v6044
        %v6051 = vsel %vm1464, %v6033, 0
        %6053 = vmatprep.subr.bf16.mxu0 0
        %6054 = vmatpush1.bf16.msra.mxu0 %v6046
        %6055 = vmatprep.subr.bf16.mxu0 0
        %6056 = vmatpush1.bf16.msra.mxu0 %v6047
        %6057 = vmatprep.subr.bf16.mxu0 0
        %6058 = vmatpush1.bf16.msra.mxu0 0
        %6059 = vmatprep.subr.bf16.mxu0 0
        %6060 = vmatpush1.bf16.msra.mxu0 0
        %6061 = vmatprep.subr.bf16.mxu0 0
        %6062 = vmatpush1.bf16.msra.mxu0 0
        %6063 = vmatprep.subr.bf16.mxu0 0
        %6064 = vmatpush1.bf16.msra.mxu0 0
        %6065 = vmatprep.subr.bf16.mxu0 0
        %6066 = vmatpush1.bf16.msra.mxu0 0
        %6067 = vmatprep.subr.bf16.mxu0 0
        %6068 = vmatpush1.bf16.msra.mxu0 0
        %6069 = vmatprep.subr.bf16.mxu0 0
        %6070 = vmatpush1.bf16.msra.mxu0 0
        %6071 = vmatprep.subr.bf16.mxu0 0
        %6072 = vmatpush1.bf16.msra.mxu0 0
        %6073 = vmatprep.subr.bf16.mxu0 0
        %6074 = vmatpush1.bf16.msra.mxu0 0
        %6075 = vmatprep.subr.bf16.mxu0 0
        %6076 = vmatpush1.bf16.msra.mxu0 0
        %6077 = vmatprep.subr.bf16.mxu0 0
        %6078 = vmatpush1.bf16.msra.mxu0 0
        %6079 = vmatprep.subr.bf16.mxu0 0
        %6080 = vmatpush1.bf16.msra.mxu0 0
        %6081 = vmatprep.subr.bf16.mxu0 0
        %6082 = vmatpush1.bf16.msra.mxu0 0
        %6083 = vmatprep.subr.bf16.mxu0 0
        %6084 = vmatpush1.bf16.msra.mxu0 0
        %6085 = vmatprep.mubr.bf16.mxu0 0
        %6086 = vmatmul.mubr.bf16.gmra.mrb[0].mxu0 %v6051
        %v6087 = vpop.f32.mrb[0].mxu0
        %v6088 = vadd.f32 %v6037, %v6087
        %v6089 = vpop.f32.mrb[0].mxu0
        %v6090 = vpop.f32.mrb[0].mxu0
        %v6091 = vadd.f32 %v6037, %v6090
        %v6092 = vpop.f32.mrb[0].mxu0
        %6093 = vdwg.mxu0
        %v6094 = vlaneseq
        %v6095 = vshrl.u32 %v6094, 7
        %v6096 = vsub.s32 3, %v6095
        %v6097 = vrot.slane %v5337, %v6096
        %v6102 = vunpack.c.l.b16 %v5308
        %v6103 = vunpack.c.l.b16 %v5309
        %v6104 = vunpack.c.l.b16 %v5310
        %v6105 = vunpack.c.l.b16 %v5311
        %v6106 = vpack.c.b16 %v6103, %v6102
        %v6107 = vpack.c.b16 %v6105, %v6104
        %6110 = vmatprep.subr.bf16.mxu0 0
        %6111 = vmatpush1.bf16.msra.mxu0 %v6106
        %6112 = vmatprep.subr.bf16.mxu0 0
        %6113 = vmatpush1.bf16.msra.mxu0 %v6107
        %6114 = vmatprep.subr.bf16.mxu0 0
        %6115 = vmatpush1.bf16.msra.mxu0 0
        %6116 = vmatprep.subr.bf16.mxu0 0
        %6117 = vmatpush1.bf16.msra.mxu0 0
        %6118 = vmatprep.subr.bf16.mxu0 0
        %6119 = vmatpush1.bf16.msra.mxu0 0
        %6120 = vmatprep.subr.bf16.mxu0 0
        %6121 = vmatpush1.bf16.msra.mxu0 0
        %6122 = vmatprep.subr.bf16.mxu0 0
        %6123 = vmatpush1.bf16.msra.mxu0 0
        %6124 = vmatprep.subr.bf16.mxu0 0
        %6125 = vmatpush1.bf16.msra.mxu0 0
        %6126 = vmatprep.subr.bf16.mxu0 0
        %6127 = vmatpush1.bf16.msra.mxu0 0
        %6128 = vmatprep.subr.bf16.mxu0 0
        %6129 = vmatpush1.bf16.msra.mxu0 0
        %6130 = vmatprep.subr.bf16.mxu0 0
        %6131 = vmatpush1.bf16.msra.mxu0 0
        %6132 = vmatprep.subr.bf16.mxu0 0
        %6133 = vmatpush1.bf16.msra.mxu0 0
        %6134 = vmatprep.subr.bf16.mxu0 0
        %6135 = vmatpush1.bf16.msra.mxu0 0
        %6136 = vmatprep.subr.bf16.mxu0 0
        %6137 = vmatpush1.bf16.msra.mxu0 0
        %6138 = vmatprep.subr.bf16.mxu0 0
        %6139 = vmatpush1.bf16.msra.mxu0 0
        %6140 = vmatprep.subr.bf16.mxu0 0
        %6141 = vmatpush1.bf16.msra.mxu0 0
        %6142 = vmatprep.mubr.bf16.mxu0 0
        %6143 = vmatmul.mubr.bf16.gmra.mrb[0].mxu0 %v4430
        %v6144 = vpop.f32.mrb[0].mxu0
        %v6145 = vadd.f32 %v6097, %v6144
        %v6146 = vpop.f32.mrb[0].mxu0
        %v6147 = vpop.f32.mrb[0].mxu0
        %v6148 = vadd.f32 %v6097, %v6147
        %v6149 = vpop.f32.mrb[0].mxu0
        %6150 = vdwg.mxu0
        %v6151 = vmul.f32 %v6088, 0.35355338
        %v6152 = vmul.f32 %v6091, 0.35355338
        %v6153 = vpack.c.bf16 %v6152, %v6151
        %v6154 = vpack.c.bf16 %v6148, %v6145
        %6156 = vrot.lane.b32.xlu0 %v6153, 120
        %v6157 = vpop.permute.xlu0 %6156
        %6158 = vrot.lane.b32.xlu0 %v6153, 112
        %v6159 = vpop.permute.xlu0 %6158
        %6160 = vrot.lane.b32.xlu0 %v6153, 104
        %v6161 = vpop.permute.xlu0 %6160
        %6163 = vrot.lane.b32.xlu0 %v6154, 120
        %v6164 = vpop.permute.xlu0 %6163
        %6165 = vrot.lane.b32.xlu0 %v6154, 112
        %v6166 = vpop.permute.xlu0 %6165
        %6167 = vrot.lane.b32.xlu0 %v6154, 104
        %v6168 = vpop.permute.xlu0 %6167
        %v6170 = vsel %vm1839, %v6153, 0
        %v6173 = vsel %vm1839, %v6154, 0
        %6175 = vmatprep.subr.bf16.mxu0 0
        %6176 = vmatpush1.bf16.xpose.msra.mxu0 %v6173
        %6177 = vmatprep.subr.bf16.mxu0 0
        %6178 = vmatpush1.bf16.xpose.msra.mxu0 0
        %6179 = vmatprep.subr.bf16.mxu0 0
        %6180 = vmatpush1.bf16.xpose.msra.mxu0 0
        %6181 = vmatprep.subr.bf16.mxu0 0
        %6182 = vmatpush1.bf16.xpose.msra.mxu0 0
        %6183 = vmatprep.subr.bf16.mxu0 0
        %6184 = vmatpush1.bf16.xpose.msra.mxu0 0
        %6185 = vmatprep.subr.bf16.mxu0 0
        %6186 = vmatpush1.bf16.xpose.msra.mxu0 0
        %6187 = vmatprep.subr.bf16.mxu0 0
        %6188 = vmatpush1.bf16.xpose.msra.mxu0 0
        %6189 = vmatprep.subr.bf16.mxu0 0
        %6190 = vmatpush1.bf16.xpose.msra.mxu0 0
        %6191 = vmatprep.subr.bf16.mxu0 0
        %6192 = vmatpush1.bf16.xpose.msra.mxu0 0
        %6193 = vmatprep.subr.bf16.mxu0 0
        %6194 = vmatpush1.bf16.xpose.msra.mxu0 0
        %6195 = vmatprep.subr.bf16.mxu0 0
        %6196 = vmatpush1.bf16.xpose.msra.mxu0 0
        %6197 = vmatprep.subr.bf16.mxu0 0
        %6198 = vmatpush1.bf16.xpose.msra.mxu0 0
        %6199 = vmatprep.subr.bf16.mxu0 0
        %6200 = vmatpush1.bf16.xpose.msra.mxu0 0
        %6201 = vmatprep.subr.bf16.mxu0 0
        %6202 = vmatpush1.bf16.xpose.msra.mxu0 0
        %6203 = vmatprep.subr.bf16.mxu0 0
        %6204 = vmatpush1.bf16.xpose.msra.mxu0 0
        %6205 = vmatprep.subr.bf16.mxu0 0
        %6206 = vmatpush1.bf16.xpose.msra.mxu0 0
        %6207 = vmatprep.mubr.bf16.mxu0 0
        %6208 = vmatmul.mubr.bf16.gmra.mrb[0].mxu0 %v6170
        %v6209 = vpop.f32.mrb[0].mxu0
        %v6210 = vadd.f32 0.0, %v6209
        %v6211 = vpop.f32.mrb[0].mxu0
        %v6212 = vpop.f32.mrb[0].mxu0
        %v6213 = vadd.f32 0.0, %v6212
        %v6214 = vpop.f32.mrb[0].mxu0
        %6215 = vdwg.mxu0
        %v6217 = vsel %vm1839, %v6157, 0
        %v6220 = vsel %vm1839, %v6164, 0
        %6222 = vmatprep.subr.bf16.mxu0 0
        %6223 = vmatpush1.bf16.xpose.msra.mxu0 %v6220
        %6224 = vmatprep.subr.bf16.mxu0 0
        %6225 = vmatpush1.bf16.xpose.msra.mxu0 0
        %6226 = vmatprep.subr.bf16.mxu0 0
        %6227 = vmatpush1.bf16.xpose.msra.mxu0 0
        %6228 = vmatprep.subr.bf16.mxu0 0
        %6229 = vmatpush1.bf16.xpose.msra.mxu0 0
        %6230 = vmatprep.subr.bf16.mxu0 0
        %6231 = vmatpush1.bf16.xpose.msra.mxu0 0
        %6232 = vmatprep.subr.bf16.mxu0 0
        %6233 = vmatpush1.bf16.xpose.msra.mxu0 0
        %6234 = vmatprep.subr.bf16.mxu0 0
        %6235 = vmatpush1.bf16.xpose.msra.mxu0 0
        %6236 = vmatprep.subr.bf16.mxu0 0
        %6237 = vmatpush1.bf16.xpose.msra.mxu0 0
        %6238 = vmatprep.subr.bf16.mxu0 0
        %6239 = vmatpush1.bf16.xpose.msra.mxu0 0
        %6240 = vmatprep.subr.bf16.mxu0 0
        %6241 = vmatpush1.bf16.xpose.msra.mxu0 0
        %6242 = vmatprep.subr.bf16.mxu0 0
        %6243 = vmatpush1.bf16.xpose.msra.mxu0 0
        %6244 = vmatprep.subr.bf16.mxu0 0
        %6245 = vmatpush1.bf16.xpose.msra.mxu0 0
        %6246 = vmatprep.subr.bf16.mxu0 0
        %6247 = vmatpush1.bf16.xpose.msra.mxu0 0
        %6248 = vmatprep.subr.bf16.mxu0 0
        %6249 = vmatpush1.bf16.xpose.msra.mxu0 0
        %6250 = vmatprep.subr.bf16.mxu0 0
        %6251 = vmatpush1.bf16.xpose.msra.mxu0 0
        %6252 = vmatprep.subr.bf16.mxu0 0
        %6253 = vmatpush1.bf16.xpose.msra.mxu0 0
        %6254 = vmatprep.mubr.bf16.mxu0 0
        %6255 = vmatmul.mubr.bf16.gmra.mrb[0].mxu0 %v6217
        %v6256 = vpop.f32.mrb[0].mxu0
        %v6257 = vadd.f32 0.0, %v6256
        %v6258 = vpop.f32.mrb[0].mxu0
        %v6259 = vpop.f32.mrb[0].mxu0
        %v6260 = vadd.f32 0.0, %v6259
        %v6261 = vpop.f32.mrb[0].mxu0
        %6262 = vdwg.mxu0
        %v6264 = vsel %vm1839, %v6159, 0
        %v6267 = vsel %vm1839, %v6166, 0
        %6269 = vmatprep.subr.bf16.mxu0 0
        %6270 = vmatpush1.bf16.xpose.msra.mxu0 %v6267
        %6271 = vmatprep.subr.bf16.mxu0 0
        %6272 = vmatpush1.bf16.xpose.msra.mxu0 0
        %6273 = vmatprep.subr.bf16.mxu0 0
        %6274 = vmatpush1.bf16.xpose.msra.mxu0 0
        %6275 = vmatprep.subr.bf16.mxu0 0
        %6276 = vmatpush1.bf16.xpose.msra.mxu0 0
        %6277 = vmatprep.subr.bf16.mxu0 0
        %6278 = vmatpush1.bf16.xpose.msra.mxu0 0
        %6279 = vmatprep.subr.bf16.mxu0 0
        %6280 = vmatpush1.bf16.xpose.msra.mxu0 0
        %6281 = vmatprep.subr.bf16.mxu0 0
        %6282 = vmatpush1.bf16.xpose.msra.mxu0 0
        %6283 = vmatprep.subr.bf16.mxu0 0
        %6284 = vmatpush1.bf16.xpose.msra.mxu0 0
        %6285 = vmatprep.subr.bf16.mxu0 0
        %6286 = vmatpush1.bf16.xpose.msra.mxu0 0
        %6287 = vmatprep.subr.bf16.mxu0 0
        %6288 = vmatpush1.bf16.xpose.msra.mxu0 0
        %6289 = vmatprep.subr.bf16.mxu0 0
        %6290 = vmatpush1.bf16.xpose.msra.mxu0 0
        %6291 = vmatprep.subr.bf16.mxu0 0
        %6292 = vmatpush1.bf16.xpose.msra.mxu0 0
        %6293 = vmatprep.subr.bf16.mxu0 0
        %6294 = vmatpush1.bf16.xpose.msra.mxu0 0
        %6295 = vmatprep.subr.bf16.mxu0 0
        %6296 = vmatpush1.bf16.xpose.msra.mxu0 0
        %6297 = vmatprep.subr.bf16.mxu0 0
        %6298 = vmatpush1.bf16.xpose.msra.mxu0 0
        %6299 = vmatprep.subr.bf16.mxu0 0
        %6300 = vmatpush1.bf16.xpose.msra.mxu0 0
        %6301 = vmatprep.mubr.bf16.mxu0 0
        %6302 = vmatmul.mubr.bf16.gmra.mrb[0].mxu0 %v6264
        %v6303 = vpop.f32.mrb[0].mxu0
        %v6304 = vadd.f32 0.0, %v6303
        %v6305 = vpop.f32.mrb[0].mxu0
        %v6306 = vpop.f32.mrb[0].mxu0
        %v6307 = vadd.f32 0.0, %v6306
        %v6308 = vpop.f32.mrb[0].mxu0
        %6309 = vdwg.mxu0
        %v6311 = vsel %vm1839, %v6161, 0
        %v6314 = vsel %vm1839, %v6168, 0
        %6316 = vmatprep.subr.bf16.mxu0 0
        %6317 = vmatpush1.bf16.xpose.msra.mxu0 %v6314
        %6318 = vmatprep.subr.bf16.mxu0 0
        %6319 = vmatpush1.bf16.xpose.msra.mxu0 0
        %6320 = vmatprep.subr.bf16.mxu0 0
        %6321 = vmatpush1.bf16.xpose.msra.mxu0 0
        %6322 = vmatprep.subr.bf16.mxu0 0
        %6323 = vmatpush1.bf16.xpose.msra.mxu0 0
        %6324 = vmatprep.subr.bf16.mxu0 0
        %6325 = vmatpush1.bf16.xpose.msra.mxu0 0
        %6326 = vmatprep.subr.bf16.mxu0 0
        %6327 = vmatpush1.bf16.xpose.msra.mxu0 0
        %6328 = vmatprep.subr.bf16.mxu0 0
        %6329 = vmatpush1.bf16.xpose.msra.mxu0 0
        %6330 = vmatprep.subr.bf16.mxu0 0
        %6331 = vmatpush1.bf16.xpose.msra.mxu0 0
        %6332 = vmatprep.subr.bf16.mxu0 0
        %6333 = vmatpush1.bf16.xpose.msra.mxu0 0
        %6334 = vmatprep.subr.bf16.mxu0 0
        %6335 = vmatpush1.bf16.xpose.msra.mxu0 0
        %6336 = vmatprep.subr.bf16.mxu0 0
        %6337 = vmatpush1.bf16.xpose.msra.mxu0 0
        %6338 = vmatprep.subr.bf16.mxu0 0
        %6339 = vmatpush1.bf16.xpose.msra.mxu0 0
        %6340 = vmatprep.subr.bf16.mxu0 0
        %6341 = vmatpush1.bf16.xpose.msra.mxu0 0
        %6342 = vmatprep.subr.bf16.mxu0 0
        %6343 = vmatpush1.bf16.xpose.msra.mxu0 0
        %6344 = vmatprep.subr.bf16.mxu0 0
        %6345 = vmatpush1.bf16.xpose.msra.mxu0 0
        %6346 = vmatprep.subr.bf16.mxu0 0
        %6347 = vmatpush1.bf16.xpose.msra.mxu0 0
        %6348 = vmatprep.mubr.bf16.mxu0 0
        %6349 = vmatmul.mubr.bf16.gmra.mrb[0].mxu0 %v6311
        %v6350 = vpop.f32.mrb[0].mxu0
        %v6351 = vadd.f32 0.0, %v6350
        %v6352 = vpop.f32.mrb[0].mxu0
        %v6353 = vpop.f32.mrb[0].mxu0
        %v6354 = vadd.f32 0.0, %v6353
        %v6355 = vpop.f32.mrb[0].mxu0
        %6356 = vdwg.mxu0
        %v6357 = vsel %vm2034, %v6210, -inf
        %6358 = vmax.xlane.f32.xlu0 %v6357
        %v6359 = vpop.xlane.xlu0 %6358
        %v6360 = vsel %vm2038, %v6213, -inf
        %6361 = vmax.xlane.f32.xlu0 %v6360
        %v6362 = vpop.xlane.xlu0 %6361
        %v6363 = vsel %vm2034, %v6257, -inf
        %6364 = vmax.xlane.f32.xlu0 %v6363
        %v6365 = vpop.xlane.xlu0 %6364
        %v6366 = vsel %vm2038, %v6260, -inf
        %6367 = vmax.xlane.f32.xlu0 %v6366
        %v6368 = vpop.xlane.xlu0 %6367
        %v6369 = vsel %vm2034, %v6304, -inf
        %6370 = vmax.xlane.f32.xlu0 %v6369
        %v6371 = vpop.xlane.xlu0 %6370
        %v6372 = vsel %vm2038, %v6307, -inf
        %6373 = vmax.xlane.f32.xlu0 %v6372
        %v6374 = vpop.xlane.xlu0 %6373
        %v6375 = vsel %vm2034, %v6351, -inf
        %6376 = vmax.xlane.f32.xlu0 %v6375
        %v6377 = vpop.xlane.xlu0 %6376
        %v6378 = vsel %vm2038, %v6354, -inf
        %6379 = vmax.xlane.f32.xlu0 %v6378
        %v6380 = vpop.xlane.xlu0 %6379
        %v6381 = vsub.f32 %v6210, %v6359
        %v6382 = vsub.f32 %v6213, %v6362
        %v6383 = vsub.f32 %v6257, %v6365
        %v6384 = vsub.f32 %v6260, %v6368
        %v6385 = vsub.f32 %v6304, %v6371
        %v6386 = vsub.f32 %v6307, %v6374
        %v6387 = vsub.f32 %v6351, %v6377
        %v6388 = vsub.f32 %v6354, %v6380
        %v6389 = vmul.f32 %v6381, 1.442695
        %v6390 = vpow.pop %v6389
        %v6391 = vmul.f32 %v6382, 1.442695
        %v6392 = vpow.pop %v6391
        %v6393 = vmul.f32 %v6383, 1.442695
        %v6394 = vpow.pop %v6393
        %v6395 = vmul.f32 %v6384, 1.442695
        %v6396 = vpow.pop %v6395
        %v6397 = vmul.f32 %v6385, 1.442695
        %v6398 = vpow.pop %v6397
        %v6399 = vmul.f32 %v6386, 1.442695
        %v6400 = vpow.pop %v6399
        %v6401 = vmul.f32 %v6387, 1.442695
        %v6402 = vpow.pop %v6401
        %v6403 = vmul.f32 %v6388, 1.442695
        %v6404 = vpow.pop %v6403
        %v6405 = vsel %vm2034, %v6390, 0.0
        %6406 = vadd.xlane.f32.xlu0 %v6405
        %v6407 = vpop.xlane.xlu0 %6406
        %v6408 = vsel %vm2038, %v6392, 0.0
        %6409 = vadd.xlane.f32.xlu0 %v6408
        %v6410 = vpop.xlane.xlu0 %6409
        %v6411 = vsel %vm2034, %v6394, 0.0
        %6412 = vadd.xlane.f32.xlu0 %v6411
        %v6413 = vpop.xlane.xlu0 %6412
        %v6414 = vsel %vm2038, %v6396, 0.0
        %6415 = vadd.xlane.f32.xlu0 %v6414
        %v6416 = vpop.xlane.xlu0 %6415
        %v6417 = vsel %vm2034, %v6398, 0.0
        %6418 = vadd.xlane.f32.xlu0 %v6417
        %v6419 = vpop.xlane.xlu0 %6418
        %v6420 = vsel %vm2038, %v6400, 0.0
        %6421 = vadd.xlane.f32.xlu0 %v6420
        %v6422 = vpop.xlane.xlu0 %6421
        %v6423 = vsel %vm2034, %v6402, 0.0
        %6424 = vadd.xlane.f32.xlu0 %v6423
        %v6425 = vpop.xlane.xlu0 %6424
        %v6426 = vsel %vm2038, %v6404, 0.0
        %6427 = vadd.xlane.f32.xlu0 %v6426
        %v6428 = vpop.xlane.xlu0 %6427
        %v6429 = vrcp.pop %v6407
        %v6430 = vmul.f32 %v6390, %v6429
        %v6431 = vrcp.pop %v6410
        %v6432 = vmul.f32 %v6392, %v6431
        %v6433 = vrcp.pop %v6413
        %v6434 = vmul.f32 %v6394, %v6433
        %v6435 = vrcp.pop %v6416
        %v6436 = vmul.f32 %v6396, %v6435
        %v6437 = vrcp.pop %v6419
        %v6438 = vmul.f32 %v6398, %v6437
        %v6439 = vrcp.pop %v6422
        %v6440 = vmul.f32 %v6400, %v6439
        %v6441 = vrcp.pop %v6425
        %v6442 = vmul.f32 %v6402, %v6441
        %v6443 = vrcp.pop %v6428
        %v6444 = vmul.f32 %v6404, %v6443
        %v6445 = vpack.c.bf16 %v6432, %v6430
        %v6446 = vpack.c.bf16 %v6436, %v6434
        %v6447 = vpack.c.bf16 %v6440, %v6438
        %v6448 = vpack.c.bf16 %v6444, %v6442
        %6449 = vrot.lane.b32.xlu0 %v6154, 96
        %v6450 = vpop.permute.xlu0 %6449
        %v6452 = vsel %vm2034, %v6445, 0
        %v6455 = vand.u32 %v6450, %v2135
        %6457 = vmatprep.subr.bf16.mxu0 0
        %6458 = vmatpush1.bf16.msra.mxu0 %v6455
        %6459 = vmatprep.subr.bf16.mxu0 0
        %6460 = vmatpush1.bf16.msra.mxu0 0
        %6461 = vmatprep.subr.bf16.mxu0 0
        %6462 = vmatpush1.bf16.msra.mxu0 0
        %6463 = vmatprep.subr.bf16.mxu0 0
        %6464 = vmatpush1.bf16.msra.mxu0 0
        %6465 = vmatprep.subr.bf16.mxu0 0
        %6466 = vmatpush1.bf16.msra.mxu0 0
        %6467 = vmatprep.subr.bf16.mxu0 0
        %6468 = vmatpush1.bf16.msra.mxu0 0
        %6469 = vmatprep.subr.bf16.mxu0 0
        %6470 = vmatpush1.bf16.msra.mxu0 0
        %6471 = vmatprep.subr.bf16.mxu0 0
        %6472 = vmatpush1.bf16.msra.mxu0 0
        %6473 = vmatprep.subr.bf16.mxu0 0
        %6474 = vmatpush1.bf16.msra.mxu0 0
        %6475 = vmatprep.subr.bf16.mxu0 0
        %6476 = vmatpush1.bf16.msra.mxu0 0
        %6477 = vmatprep.subr.bf16.mxu0 0
        %6478 = vmatpush1.bf16.msra.mxu0 0
        %6479 = vmatprep.subr.bf16.mxu0 0
        %6480 = vmatpush1.bf16.msra.mxu0 0
        %6481 = vmatprep.subr.bf16.mxu0 0
        %6482 = vmatpush1.bf16.msra.mxu0 0
        %6483 = vmatprep.subr.bf16.mxu0 0
        %6484 = vmatpush1.bf16.msra.mxu0 0
        %6485 = vmatprep.subr.bf16.mxu0 0
        %6486 = vmatpush1.bf16.msra.mxu0 0
        %6487 = vmatprep.subr.bf16.mxu0 0
        %6488 = vmatpush1.bf16.msra.mxu0 0
        %6489 = vmatprep.mubr.bf16.mxu0 0
        %6490 = vmatmul.mubr.bf16.gmra.mrb[0].mxu0 %v6452
        %v6491 = vpop.f32.mrb[0].mxu0
        %v6492 = vadd.f32 0.0, %v6491
        %v6493 = vpop.f32.mrb[0].mxu0
        %v6494 = vpop.f32.mrb[0].mxu0
        %v6495 = vadd.f32 0.0, %v6494
        %v6496 = vpop.f32.mrb[0].mxu0
        %6497 = vdwg.mxu0
        %6498 = vrot.lane.b32.xlu0 %v6164, 96
        %v6499 = vpop.permute.xlu0 %6498
        %v6501 = vsel %vm2034, %v6446, 0
        %v6504 = vand.u32 %v6499, %v2135
        %6506 = vmatprep.subr.bf16.mxu0 0
        %6507 = vmatpush1.bf16.msra.mxu0 %v6504
        %6508 = vmatprep.subr.bf16.mxu0 0
        %6509 = vmatpush1.bf16.msra.mxu0 0
        %6510 = vmatprep.subr.bf16.mxu0 0
        %6511 = vmatpush1.bf16.msra.mxu0 0
        %6512 = vmatprep.subr.bf16.mxu0 0
        %6513 = vmatpush1.bf16.msra.mxu0 0
        %6514 = vmatprep.subr.bf16.mxu0 0
        %6515 = vmatpush1.bf16.msra.mxu0 0
        %6516 = vmatprep.subr.bf16.mxu0 0
        %6517 = vmatpush1.bf16.msra.mxu0 0
        %6518 = vmatprep.subr.bf16.mxu0 0
        %6519 = vmatpush1.bf16.msra.mxu0 0
        %6520 = vmatprep.subr.bf16.mxu0 0
        %6521 = vmatpush1.bf16.msra.mxu0 0
        %6522 = vmatprep.subr.bf16.mxu0 0
        %6523 = vmatpush1.bf16.msra.mxu0 0
        %6524 = vmatprep.subr.bf16.mxu0 0
        %6525 = vmatpush1.bf16.msra.mxu0 0
        %6526 = vmatprep.subr.bf16.mxu0 0
        %6527 = vmatpush1.bf16.msra.mxu0 0
        %6528 = vmatprep.subr.bf16.mxu0 0
        %6529 = vmatpush1.bf16.msra.mxu0 0
        %6530 = vmatprep.subr.bf16.mxu0 0
        %6531 = vmatpush1.bf16.msra.mxu0 0
        %6532 = vmatprep.subr.bf16.mxu0 0
        %6533 = vmatpush1.bf16.msra.mxu0 0
        %6534 = vmatprep.subr.bf16.mxu0 0
        %6535 = vmatpush1.bf16.msra.mxu0 0
        %6536 = vmatprep.subr.bf16.mxu0 0
        %6537 = vmatpush1.bf16.msra.mxu0 0
        %6538 = vmatprep.mubr.bf16.mxu0 0
        %6539 = vmatmul.mubr.bf16.gmra.mrb[0].mxu0 %v6501
        %v6540 = vpop.f32.mrb[0].mxu0
        %v6541 = vadd.f32 0.0, %v6540
        %v6542 = vpop.f32.mrb[0].mxu0
        %v6543 = vpop.f32.mrb[0].mxu0
        %v6544 = vadd.f32 0.0, %v6543
        %v6545 = vpop.f32.mrb[0].mxu0
        %6546 = vdwg.mxu0
        %6547 = vrot.lane.b32.xlu0 %v6166, 96
        %v6548 = vpop.permute.xlu0 %6547
        %v6550 = vsel %vm2034, %v6447, 0
        %v6553 = vand.u32 %v6548, %v2135
        %6555 = vmatprep.subr.bf16.mxu0 0
        %6556 = vmatpush1.bf16.msra.mxu0 %v6553
        %6557 = vmatprep.subr.bf16.mxu0 0
        %6558 = vmatpush1.bf16.msra.mxu0 0
        %6559 = vmatprep.subr.bf16.mxu0 0
        %6560 = vmatpush1.bf16.msra.mxu0 0
        %6561 = vmatprep.subr.bf16.mxu0 0
        %6562 = vmatpush1.bf16.msra.mxu0 0
        %6563 = vmatprep.subr.bf16.mxu0 0
        %6564 = vmatpush1.bf16.msra.mxu0 0
        %6565 = vmatprep.subr.bf16.mxu0 0
        %6566 = vmatpush1.bf16.msra.mxu0 0
        %6567 = vmatprep.subr.bf16.mxu0 0
        %6568 = vmatpush1.bf16.msra.mxu0 0
        %6569 = vmatprep.subr.bf16.mxu0 0
        %6570 = vmatpush1.bf16.msra.mxu0 0
        %6571 = vmatprep.subr.bf16.mxu0 0
        %6572 = vmatpush1.bf16.msra.mxu0 0
        %6573 = vmatprep.subr.bf16.mxu0 0
        %6574 = vmatpush1.bf16.msra.mxu0 0
        %6575 = vmatprep.subr.bf16.mxu0 0
        %6576 = vmatpush1.bf16.msra.mxu0 0
        %6577 = vmatprep.subr.bf16.mxu0 0
        %6578 = vmatpush1.bf16.msra.mxu0 0
        %6579 = vmatprep.subr.bf16.mxu0 0
        %6580 = vmatpush1.bf16.msra.mxu0 0
        %6581 = vmatprep.subr.bf16.mxu0 0
        %6582 = vmatpush1.bf16.msra.mxu0 0
        %6583 = vmatprep.subr.bf16.mxu0 0
        %6584 = vmatpush1.bf16.msra.mxu0 0
        %6585 = vmatprep.subr.bf16.mxu0 0
        %6586 = vmatpush1.bf16.msra.mxu0 0
        %6587 = vmatprep.mubr.bf16.mxu0 0
        %6588 = vmatmul.mubr.bf16.gmra.mrb[0].mxu0 %v6550
        %v6589 = vpop.f32.mrb[0].mxu0
        %v6590 = vadd.f32 0.0, %v6589
        %v6591 = vpop.f32.mrb[0].mxu0
        %v6592 = vpop.f32.mrb[0].mxu0
        %v6593 = vadd.f32 0.0, %v6592
        %v6594 = vpop.f32.mrb[0].mxu0
        %6595 = vdwg.mxu0
        %6596 = vrot.lane.b32.xlu0 %v6168, 96
        %v6597 = vpop.permute.xlu0 %6596
        %v6599 = vsel %vm2034, %v6448, 0
        %v6602 = vand.u32 %v6597, %v2135
        %6604 = vmatprep.subr.bf16.mxu0 0
        %6605 = vmatpush1.bf16.msra.mxu0 %v6602
        %6606 = vmatprep.subr.bf16.mxu0 0
        %6607 = vmatpush1.bf16.msra.mxu0 0
        %6608 = vmatprep.subr.bf16.mxu0 0
        %6609 = vmatpush1.bf16.msra.mxu0 0
        %6610 = vmatprep.subr.bf16.mxu0 0
        %6611 = vmatpush1.bf16.msra.mxu0 0
        %6612 = vmatprep.subr.bf16.mxu0 0
        %6613 = vmatpush1.bf16.msra.mxu0 0
        %6614 = vmatprep.subr.bf16.mxu0 0
        %6615 = vmatpush1.bf16.msra.mxu0 0
        %6616 = vmatprep.subr.bf16.mxu0 0
        %6617 = vmatpush1.bf16.msra.mxu0 0
        %6618 = vmatprep.subr.bf16.mxu0 0
        %6619 = vmatpush1.bf16.msra.mxu0 0
        %6620 = vmatprep.subr.bf16.mxu0 0
        %6621 = vmatpush1.bf16.msra.mxu0 0
        %6622 = vmatprep.subr.bf16.mxu0 0
        %6623 = vmatpush1.bf16.msra.mxu0 0
        %6624 = vmatprep.subr.bf16.mxu0 0
        %6625 = vmatpush1.bf16.msra.mxu0 0
        %6626 = vmatprep.subr.bf16.mxu0 0
        %6627 = vmatpush1.bf16.msra.mxu0 0
        %6628 = vmatprep.subr.bf16.mxu0 0
        %6629 = vmatpush1.bf16.msra.mxu0 0
        %6630 = vmatprep.subr.bf16.mxu0 0
        %6631 = vmatpush1.bf16.msra.mxu0 0
        %6632 = vmatprep.subr.bf16.mxu0 0
        %6633 = vmatpush1.bf16.msra.mxu0 0
        %6634 = vmatprep.subr.bf16.mxu0 0
        %6635 = vmatpush1.bf16.msra.mxu0 0
        %6636 = vmatprep.mubr.bf16.mxu0 0
        %6637 = vmatmul.mubr.bf16.gmra.mrb[0].mxu0 %v6599
        %v6638 = vpop.f32.mrb[0].mxu0
        %v6639 = vadd.f32 0.0, %v6638
        %v6640 = vpop.f32.mrb[0].mxu0
        %v6641 = vpop.f32.mrb[0].mxu0
        %v6642 = vadd.f32 0.0, %v6641
        %v6643 = vpop.f32.mrb[0].mxu0
        %6644 = vdwg.mxu0
        %6647 = vrot.lane.b32.xlu0 %v6541, 8
        %v6648 = vpop.permute.xlu0 %6647
        %6649 = vrot.lane.b32.xlu0 %v6544, 8
        %v6650 = vpop.permute.xlu0 %6649
        %6655 = vrot.lane.b32.xlu0 %v6590, 16
        %v6656 = vpop.permute.xlu0 %6655
        %6657 = vrot.lane.b32.xlu0 %v6593, 16
        %v6658 = vpop.permute.xlu0 %6657
        %6663 = vrot.lane.b32.xlu0 %v6639, 24
        %v6664 = vpop.permute.xlu0 %6663
        %6665 = vrot.lane.b32.xlu0 %v6642, 24
        %v6666 = vpop.permute.xlu0 %6665
        %v6669 = vsel %vm1839, %v6492, %v6648
        %v6670 = vsel %vm1839, %v6495, %v6650
        %v6671 = vsel %vm2353, %v6669, %v6656
        %v6672 = vsel %vm2353, %v6670, %v6658
        %v6673 = vsel %vm2356, %v6671, %v6664
        %v6674 = vsel %vm2356, %v6672, %v6666
        %v6675 = vpack.c.bf16 %v6674, %v6673
        %v6676 = vlaneseq
        %v6677 = vshrl.u32 %v6676, 7
        %v6678 = vsub.s32 4, %v6677
        %v6679 = vrot.slane %v5337, %v6678
        %v6684 = vunpack.c.l.b16 %v5312
        %v6685 = vunpack.c.l.b16 %v5313
        %v6686 = vunpack.c.l.b16 %v5314
        %v6687 = vunpack.c.l.b16 %v5315
        %v6688 = vpack.c.b16 %v6685, %v6684
        %v6689 = vpack.c.b16 %v6687, %v6686
        %v6693 = vsel %vm1464, %v6675, 0
        %6695 = vmatprep.subr.bf16.mxu0 0
        %6696 = vmatpush1.bf16.msra.mxu0 %v6688
        %6697 = vmatprep.subr.bf16.mxu0 0
        %6698 = vmatpush1.bf16.msra.mxu0 %v6689
        %6699 = vmatprep.subr.bf16.mxu0 0
        %6700 = vmatpush1.bf16.msra.mxu0 0
        %6701 = vmatprep.subr.bf16.mxu0 0
        %6702 = vmatpush1.bf16.msra.mxu0 0
        %6703 = vmatprep.subr.bf16.mxu0 0
        %6704 = vmatpush1.bf16.msra.mxu0 0
        %6705 = vmatprep.subr.bf16.mxu0 0
        %6706 = vmatpush1.bf16.msra.mxu0 0
        %6707 = vmatprep.subr.bf16.mxu0 0
        %6708 = vmatpush1.bf16.msra.mxu0 0
        %6709 = vmatprep.subr.bf16.mxu0 0
        %6710 = vmatpush1.bf16.msra.mxu0 0
        %6711 = vmatprep.subr.bf16.mxu0 0
        %6712 = vmatpush1.bf16.msra.mxu0 0
        %6713 = vmatprep.subr.bf16.mxu0 0
        %6714 = vmatpush1.bf16.msra.mxu0 0
        %6715 = vmatprep.subr.bf16.mxu0 0
        %6716 = vmatpush1.bf16.msra.mxu0 0
        %6717 = vmatprep.subr.bf16.mxu0 0
        %6718 = vmatpush1.bf16.msra.mxu0 0
        %6719 = vmatprep.subr.bf16.mxu0 0
        %6720 = vmatpush1.bf16.msra.mxu0 0
        %6721 = vmatprep.subr.bf16.mxu0 0
        %6722 = vmatpush1.bf16.msra.mxu0 0
        %6723 = vmatprep.subr.bf16.mxu0 0
        %6724 = vmatpush1.bf16.msra.mxu0 0
        %6725 = vmatprep.subr.bf16.mxu0 0
        %6726 = vmatpush1.bf16.msra.mxu0 0
        %6727 = vmatprep.mubr.bf16.mxu0 0
        %6728 = vmatmul.mubr.bf16.gmra.mrb[0].mxu0 %v6693
        %v6729 = vpop.f32.mrb[0].mxu0
        %v6730 = vadd.f32 %v6679, %v6729
        %v6731 = vpop.f32.mrb[0].mxu0
        %v6732 = vpop.f32.mrb[0].mxu0
        %v6733 = vadd.f32 %v6679, %v6732
        %v6734 = vpop.f32.mrb[0].mxu0
        %6735 = vdwg.mxu0
        %v6736 = vadd.f32 %v6031, %v6730
        %v6737 = vadd.f32 %v6032, %v6733
        %v6738 = vsel %vm1464, %v6736, 0.0
        %6739 = vadd.xlane.f32.xlu0 %v6738
        %v6740 = vpop.xlane.xlu0 %6739
        %v6741 = vsel %vm2425, %v6737, 0.0
        %6742 = vadd.xlane.f32.xlu0 %v6741
        %v6743 = vpop.xlane.xlu0 %6742
        %v6744 = vmul.f32 %v6740, %v2429
        %v6745 = vmul.f32 %v6743, %v2429
        %v6746 = vsub.f32 %v6736, %v6744
        %v6747 = vsub.f32 %v6737, %v6745
        %v6748 = vmul.f32 %v6746, %v6746
        %v6749 = vmul.f32 %v6747, %v6747
        %v6750 = vsel %vm1464, %v6748, 0.0
        %6751 = vadd.xlane.f32.xlu0 %v6750
        %v6752 = vpop.xlane.xlu0 %6751
        %v6753 = vsel %vm2425, %v6749, 0.0
        %6754 = vadd.xlane.f32.xlu0 %v6753
        %v6755 = vpop.xlane.xlu0 %6754
        %v6756 = vmul.f32 %v6752, %v2429
        %v6757 = vmul.f32 %v6755, %v2429
        %v6758 = vadd.f32 %v6756, 1e-05
        %v6759 = vadd.f32 %v6757, 1e-05
        %v6760 = vrsqrt.pop %v6758
        %v6761 = vrsqrt.pop %v6759
        %v6762 = vmul.f32 %v6746, %v6760
        %v6763 = vmul.f32 %v6747, %v6761
        %v6764 = vlaneseq
        %v6765 = vshrl.u32 %v6764, 7
        %v6766 = vsub.s32 1, %v6765
        %v6767 = vrot.slane %v5338, %v6766
        %v6768 = vmul.f32 %v6762, %v6767
        %v6769 = vmul.f32 %v6763, %v6767
        %v6770 = vlaneseq
        %v6771 = vshrl.u32 %v6770, 7
        %v6772 = vsub.s32 2, %v6771
        %v6773 = vrot.slane %v5338, %v6772
        %v6774 = vadd.f32 %v6768, %v6773
        %v6775 = vadd.f32 %v6769, %v6773
        %v6776 = vpack.c.bf16 %v6775, %v6774
        %v6777 = vlaneseq
        %v6778 = vshrl.u32 %v6777, 7
        %v6779 = vsub.s32 5, %v6778
        %v6780 = vrot.slane %v5337, %v6779
        %v6785 = vunpack.c.l.b16 %v5316
        %v6786 = vunpack.c.l.b16 %v5317
        %v6787 = vunpack.c.l.b16 %v5318
        %v6788 = vunpack.c.l.b16 %v5319
        %v6789 = vpack.c.b16 %v6786, %v6785
        %v6790 = vpack.c.b16 %v6788, %v6787
        %v6794 = vsel %vm1464, %v6776, 0
        %6796 = vmatprep.subr.bf16.mxu0 0
        %6797 = vmatpush1.bf16.msra.mxu0 %v6789
        %6798 = vmatprep.subr.bf16.mxu0 0
        %6799 = vmatpush1.bf16.msra.mxu0 %v6790
        %6800 = vmatprep.subr.bf16.mxu0 0
        %6801 = vmatpush1.bf16.msra.mxu0 0
        %6802 = vmatprep.subr.bf16.mxu0 0
        %6803 = vmatpush1.bf16.msra.mxu0 0
        %6804 = vmatprep.subr.bf16.mxu0 0
        %6805 = vmatpush1.bf16.msra.mxu0 0
        %6806 = vmatprep.subr.bf16.mxu0 0
        %6807 = vmatpush1.bf16.msra.mxu0 0
        %6808 = vmatprep.subr.bf16.mxu0 0
        %6809 = vmatpush1.bf16.msra.mxu0 0
        %6810 = vmatprep.subr.bf16.mxu0 0
        %6811 = vmatpush1.bf16.msra.mxu0 0
        %6812 = vmatprep.subr.bf16.mxu0 0
        %6813 = vmatpush1.bf16.msra.mxu0 0
        %6814 = vmatprep.subr.bf16.mxu0 0
        %6815 = vmatpush1.bf16.msra.mxu0 0
        %6816 = vmatprep.subr.bf16.mxu0 0
        %6817 = vmatpush1.bf16.msra.mxu0 0
        %6818 = vmatprep.subr.bf16.mxu0 0
        %6819 = vmatpush1.bf16.msra.mxu0 0
        %6820 = vmatprep.subr.bf16.mxu0 0
        %6821 = vmatpush1.bf16.msra.mxu0 0
        %6822 = vmatprep.subr.bf16.mxu0 0
        %6823 = vmatpush1.bf16.msra.mxu0 0
        %6824 = vmatprep.subr.bf16.mxu0 0
        %6825 = vmatpush1.bf16.msra.mxu0 0
        %6826 = vmatprep.subr.bf16.mxu0 0
        %6827 = vmatpush1.bf16.msra.mxu0 0
        %6828 = vmatprep.mubr.bf16.mxu0 0
        %6829 = vmatmul.mubr.bf16.gmra.mrb[0].mxu0 %v6794
        %v6830 = vpop.f32.mrb[0].mxu0
        %v6831 = vadd.f32 %v6780, %v6830
        %v6832 = vpop.f32.mrb[0].mxu0
        %v6833 = vpop.f32.mrb[0].mxu0
        %v6834 = vadd.f32 %v6780, %v6833
        %v6835 = vpop.f32.mrb[0].mxu0
        %6836 = vdwg.mxu0
        %v6837 = vmax.f32 %v6831, 0.0
        %v6838 = vmax.f32 %v6834, 0.0
        %v6839 = vpack.c.bf16 %v6838, %v6837
        %v6840 = vlaneseq
        %v6841 = vshrl.u32 %v6840, 7
        %v6842 = vsub.s32 6, %v6841
        %v6843 = vrot.slane %v5337, %v6842
        %v6860 = vunpack.c.l.b16 %v5320
        %v6861 = vunpack.c.l.b16 %v5321
        %v6862 = vunpack.c.l.b16 %v5322
        %v6863 = vunpack.c.l.b16 %v5323
        %v6864 = vunpack.c.l.b16 %v5324
        %v6865 = vunpack.c.l.b16 %v5325
        %v6866 = vunpack.c.l.b16 %v5326
        %v6867 = vunpack.c.l.b16 %v5327
        %v6868 = vunpack.c.l.b16 %v5328
        %v6869 = vunpack.c.l.b16 %v5329
        %v6870 = vunpack.c.l.b16 %v5330
        %v6871 = vunpack.c.l.b16 %v5331
        %v6872 = vunpack.c.l.b16 %v5332
        %v6873 = vunpack.c.l.b16 %v5333
        %v6874 = vunpack.c.l.b16 %v5334
        %v6875 = vunpack.c.l.b16 %v5335
        %v6876 = vpack.c.b16 %v6861, %v6860
        %v6877 = vpack.c.b16 %v6863, %v6862
        %v6878 = vpack.c.b16 %v6865, %v6864
        %v6879 = vpack.c.b16 %v6867, %v6866
        %v6880 = vpack.c.b16 %v6869, %v6868
        %v6881 = vpack.c.b16 %v6871, %v6870
        %v6882 = vpack.c.b16 %v6873, %v6872
        %v6883 = vpack.c.b16 %v6875, %v6874
        %6892 = vmatprep.subr.bf16.mxu0 0
        %6893 = vmatpush1.bf16.msra.mxu0 %v6876
        %6894 = vmatprep.subr.bf16.mxu0 0
        %6895 = vmatpush1.bf16.msra.mxu0 %v6877
        %6896 = vmatprep.subr.bf16.mxu0 0
        %6897 = vmatpush1.bf16.msra.mxu0 %v6878
        %6898 = vmatprep.subr.bf16.mxu0 0
        %6899 = vmatpush1.bf16.msra.mxu0 %v6879
        %6900 = vmatprep.subr.bf16.mxu0 0
        %6901 = vmatpush1.bf16.msra.mxu0 %v6880
        %6902 = vmatprep.subr.bf16.mxu0 0
        %6903 = vmatpush1.bf16.msra.mxu0 %v6881
        %6904 = vmatprep.subr.bf16.mxu0 0
        %6905 = vmatpush1.bf16.msra.mxu0 %v6882
        %6906 = vmatprep.subr.bf16.mxu0 0
        %6907 = vmatpush1.bf16.msra.mxu0 %v6883
        %6908 = vmatprep.subr.bf16.mxu0 0
        %6909 = vmatpush1.bf16.msra.mxu0 0
        %6910 = vmatprep.subr.bf16.mxu0 0
        %6911 = vmatpush1.bf16.msra.mxu0 0
        %6912 = vmatprep.subr.bf16.mxu0 0
        %6913 = vmatpush1.bf16.msra.mxu0 0
        %6914 = vmatprep.subr.bf16.mxu0 0
        %6915 = vmatpush1.bf16.msra.mxu0 0
        %6916 = vmatprep.subr.bf16.mxu0 0
        %6917 = vmatpush1.bf16.msra.mxu0 0
        %6918 = vmatprep.subr.bf16.mxu0 0
        %6919 = vmatpush1.bf16.msra.mxu0 0
        %6920 = vmatprep.subr.bf16.mxu0 0
        %6921 = vmatpush1.bf16.msra.mxu0 0
        %6922 = vmatprep.subr.bf16.mxu0 0
        %6923 = vmatpush1.bf16.msra.mxu0 0
        %6924 = vmatprep.mubr.bf16.mxu0 0
        %6925 = vmatmul.mubr.bf16.gmra.mrb[0].mxu0 %v6839
        %v6926 = vpop.f32.mrb[0].mxu0
        %v6927 = vadd.f32 %v6843, %v6926
        %v6928 = vpop.f32.mrb[0].mxu0
        %v6929 = vpop.f32.mrb[0].mxu0
        %v6930 = vadd.f32 %v6843, %v6929
        %v6931 = vpop.f32.mrb[0].mxu0
        %6932 = vdwg.mxu0
        %v6933 = vadd.f32 %v6774, %v6927
        %v6934 = vadd.f32 %v6775, %v6930
        %v6935 = vsel %vm1464, %v6933, 0.0
        %6936 = vadd.xlane.f32.xlu0 %v6935
        %v6937 = vpop.xlane.xlu0 %6936
        %v6938 = vsel %vm2425, %v6934, 0.0
        %6939 = vadd.xlane.f32.xlu0 %v6938
        %v6940 = vpop.xlane.xlu0 %6939
        %v6941 = vmul.f32 %v6937, %v2429
        %v6942 = vmul.f32 %v6940, %v2429
        %v6943 = vsub.f32 %v6933, %v6941
        %v6944 = vsub.f32 %v6934, %v6942
        %v6945 = vmul.f32 %v6943, %v6943
        %v6946 = vmul.f32 %v6944, %v6944
        %v6947 = vsel %vm1464, %v6945, 0.0
        %6948 = vadd.xlane.f32.xlu0 %v6947
        %v6949 = vpop.xlane.xlu0 %6948
        %v6950 = vsel %vm2425, %v6946, 0.0
        %6951 = vadd.xlane.f32.xlu0 %v6950
        %v6952 = vpop.xlane.xlu0 %6951
        %v6953 = vmul.f32 %v6949, %v2429
        %v6954 = vmul.f32 %v6952, %v2429
        %v6955 = vadd.f32 %v6953, 1e-05
        %v6956 = vadd.f32 %v6954, 1e-05
        %v6957 = vrsqrt.pop %v6955
        %v6958 = vrsqrt.pop %v6956
        %v6959 = vmul.f32 %v6943, %v6957
        %v6960 = vmul.f32 %v6944, %v6958
        %v6961 = vlaneseq
        %v6962 = vshrl.u32 %v6961, 7
        %v6963 = vsub.s32 3, %v6962
        %v6964 = vrot.slane %v5338, %v6963
        %v6965 = vmul.f32 %v6959, %v6964
        %v6966 = vmul.f32 %v6960, %v6964
        %v6967 = vlaneseq
        %v6968 = vshrl.u32 %v6967, 7
        %v6969 = vsub.s32 4, %v6968
        %v6970 = vrot.slane %v5338, %v6969
        %v6971 = vadd.f32 %v6965, %v6970
        %v6972 = vadd.f32 %v6966, %v6970
        %v6973 = vsel %vm1464, %v6971, 0.0
        %6974 = vadd.xlane.f32.xlu0 %v6973
        %v6975 = vpop.xlane.xlu0 %6974
        %v6976 = vsel %vm2425, %v6972, 0.0
        %6977 = vadd.xlane.f32.xlu0 %v6976
        %v6978 = vpop.xlane.xlu0 %6977
        %v6979 = vmul.f32 %v6975, %v2429
        %v6980 = vmul.f32 %v6978, %v2429
        %v6981 = vsub.f32 %v6971, %v6979
        %v6982 = vsub.f32 %v6972, %v6980
        %v6983 = vmul.f32 %v6981, %v6981
        %v6984 = vmul.f32 %v6982, %v6982
        %v6985 = vsel %vm1464, %v6983, 0.0
        %6986 = vadd.xlane.f32.xlu0 %v6985
        %v6987 = vpop.xlane.xlu0 %6986
        %v6988 = vsel %vm2425, %v6984, 0.0
        %6989 = vadd.xlane.f32.xlu0 %v6988
        %v6990 = vpop.xlane.xlu0 %6989
        %v6991 = vmul.f32 %v6987, %v2429
        %v6992 = vmul.f32 %v6990, %v2429
        %v6993 = vadd.f32 %v6991, 1e-05
        %v6994 = vadd.f32 %v6992, 1e-05
        %v6995 = vrsqrt.pop %v6993
        %v6996 = vrsqrt.pop %v6994
        %v6997 = vmul.f32 %v6981, %v6995
        %v6998 = vmul.f32 %v6982, %v6996
        %v6999 = vlaneseq
        %v7000 = vshrl.u32 %v6999, 7
        %v7001 = vsub.s32 6, %v7000
        %v7002 = vrot.slane %v417, %v7001
        %v7003 = vmul.f32 %v6997, %v7002
        %v7004 = vmul.f32 %v6998, %v7002
        %v7005 = vlaneseq
        %v7006 = vshrl.u32 %v7005, 7
        %v7007 = vsub.s32 7, %v7006
        %v7008 = vrot.slane %v417, %v7007
        %v7009 = vadd.f32 %v7003, %v7008
        %v7010 = vadd.f32 %v7004, %v7008
        %v7011 = vlaneseq
        %v7012 = vshrl.u32 %v7011, 7
        %v7013 = vsub.s32 0, %v7012
        %v7014 = vrot.slane %v418, %v7013
        %v7016 = vsel %vm1464, %v7009, 0
        %v7019 = vsel %vm1464, %v7010, 0
        %7021 = vmatprep.subr.mxu0 0.0
        %7022 = vmatpush1.msra.mxu0 %v409
        %7023 = vmatprep.subr.mxu0 0.0
        %7024 = vmatpush1.msra.mxu0 %v410
        %7025 = vmatprep.subr.mxu0 0.0
        %7026 = vmatpush1.msra.mxu0 %v411
        %7027 = vmatprep.subr.mxu0 0.0
        %7028 = vmatpush1.msra.mxu0 %v412
        %7029 = vmatprep.subr.mxu0 0.0
        %7030 = vmatpush1.msra.mxu0 0.0
        %7031 = vmatprep.subr.mxu0 0.0
        %7032 = vmatpush1.msra.mxu0 0.0
        %7033 = vmatprep.subr.mxu0 0.0
        %7034 = vmatpush1.msra.mxu0 0.0
        %7035 = vmatprep.subr.mxu0 0.0
        %7036 = vmatpush1.msra.mxu0 0.0
        %7037 = vmatprep.subr.mxu0 0.0
        %7038 = vmatpush1.msra.mxu0 0.0
        %7039 = vmatprep.subr.mxu0 0.0
        %7040 = vmatpush1.msra.mxu0 0.0
        %7041 = vmatprep.subr.mxu0 0.0
        %7042 = vmatpush1.msra.mxu0 0.0
        %7043 = vmatprep.subr.mxu0 0.0
        %7044 = vmatpush1.msra.mxu0 0.0
        %7045 = vmatprep.subr.mxu0 0.0
        %7046 = vmatpush1.msra.mxu0 0.0
        %7047 = vmatprep.subr.mxu0 0.0
        %7048 = vmatpush1.msra.mxu0 0.0
        %7049 = vmatprep.subr.mxu0 0.0
        %7050 = vmatpush1.msra.mxu0 0.0
        %7051 = vmatprep.subr.mxu0 0.0
        %7052 = vmatpush1.msra.mxu0 0.0
        %7053 = vmatprep.subr.mxu0 0.0
        %7054 = vmatpush1.msra.mxu0 0.0
        %7055 = vmatprep.subr.mxu0 0.0
        %7056 = vmatpush1.msra.mxu0 0.0
        %7057 = vmatprep.subr.mxu0 0.0
        %7058 = vmatpush1.msra.mxu0 0.0
        %7059 = vmatprep.subr.mxu0 0.0
        %7060 = vmatpush1.msra.mxu0 0.0
        %7061 = vmatprep.subr.mxu0 0.0
        %7062 = vmatpush1.msra.mxu0 0.0
        %7063 = vmatprep.subr.mxu0 0.0
        %7064 = vmatpush1.msra.mxu0 0.0
        %7065 = vmatprep.subr.mxu0 0.0
        %7066 = vmatpush1.msra.mxu0 0.0
        %7067 = vmatprep.subr.mxu0 0.0
        %7068 = vmatpush1.msra.mxu0 0.0
        %7069 = vmatprep.subr.mxu0 0.0
        %7070 = vmatpush1.msra.mxu0 0.0
        %7071 = vmatprep.subr.mxu0 0.0
        %7072 = vmatpush1.msra.mxu0 0.0
        %7073 = vmatprep.subr.mxu0 0.0
        %7074 = vmatpush1.msra.mxu0 0.0
        %7075 = vmatprep.subr.mxu0 0.0
        %7076 = vmatpush1.msra.mxu0 0.0
        %7077 = vmatprep.subr.mxu0 0.0
        %7078 = vmatpush1.msra.mxu0 0.0
        %7079 = vmatprep.subr.mxu0 0.0
        %7080 = vmatpush1.msra.mxu0 0.0
        %7081 = vmatprep.subr.mxu0 0.0
        %7082 = vmatpush1.msra.mxu0 0.0
        %7083 = vmatprep.subr.mxu0 0.0
        %7084 = vmatpush1.msra.mxu0 0.0
        %7085 = vmatprep.mubr.f32.mxu0 0.0
        %7086 = vmatmul.mubr.f32.gmra.mrb[0].mxu0 %v7016
        %v7087 = vpop.f32.mrb[0].mxu0
        %v7088 = vadd.f32 %v7014, %v7087
        %v7089 = vpop.f32.mrb[0].mxu0
        %7090 = vmatprep.mubr.f32.mxu0 0.0
        %7091 = vmatmul.mubr.f32.gmra.mrb[0].mxu0 %v7019
        %v7092 = vpop.f32.mrb[0].mxu0
        %v7093 = vadd.f32 %v7014, %v7092
        %v7094 = vpop.f32.mrb[0].mxu0
        %7095 = vdwg.mxu0
        %7096 = vst [vmem:[%s407] sm:$0xff] %v7088
        %7097 = vst [vmem:[%s407 + $0x8] sm:$0x1] %v7093
        %p7098 = scmp.lt.s32.totalorder %s22, 1
        %s7099 = scalar_select %p7098, %s22, 1
        %s7100 = smul.addr %s7099, 2
        %s7101 = smul.addr %s7100, 8
        %s7102 = scalar_lea.vmem %s9, %s7101
        // Predicated region
        $region65: #{transformer_generator_forward.1} parent=55 // pred_check
          %p7103 = pneg %p249
        $region66: #{transformer_generator_forward.1} parent=55 // pred_check_branch
          %7105 = sbr.rel (%p7103) target = $region68
        $region67: #{transformer_generator_forward.1} parent=55 // pred_region
          _
        $region68: #{transformer_generator_forward.1} parent=55 // pred_fallthru
          _
      $region56: #{transformer_generator_forward.1} parent=5 // pred_fallthru
        _
      %p7106 = scmp.le.s32.totalorder 2, %s17
      // Predicated region
      $region69: #{transformer_generator_forward.1} parent=5 // pred_check
        %p7107 = pneg %p7106
      $region70: #{transformer_generator_forward.1} parent=5 // pred_check_branch
        %7109 = sbr.rel (%p7107) target = $region72
      $region71: #{transformer_generator_forward.1} parent=5 // pred_region
        %s7110 = ssub.s32 %s17, 2
        // Predicated region
        $region73: #{transformer_generator_forward.1} parent=71 // pred_check
          %p7111 = pneg %p255
        $region74: #{transformer_generator_forward.1} parent=71 // pred_check_branch
          %7113 = sbr.rel (%p7111) target = $region76
        $region75: #{transformer_generator_forward.1} parent=71 // pred_region
          %p7114 = scmp.lt.s32.totalorder %s23, 1
          %s7115 = scalar_select %p7114, %s23, 1
          %s7116 = smul.addr %s7115, 2
          %s7117 = smul.addr %s7116, 8
          %s7118 = scalar_lea.vmem %s9, %s7117
        $region76: #{transformer_generator_forward.1} parent=71 // pred_fallthru
          _
      $region72: #{transformer_generator_forward.1} parent=5 // pred_fallthru
        _
    $region6: #{transformer_generator_forward.1} parent=1 // loop_footer
      %s21 = sadd.s32 1, %s17
    $region7: #{transformer_generator_forward.1} parent=1 // loop_footer_branch
      %16 = sbr.rel target = $region3
    $region8: #{transformer_generator_forward.1} parent=1 // loop_exit
      _
    %7119 = vsyncpa [#allocation3], 1
    %s7120 = scalar_lea.sflag [#allocation3], 1
    %7121 = vsyncpa %s7120, 1
    %7122 = vsyncpa [#allocation5], 1

</llo_original>
